<compile_context>
chip_gen: v7x
topology: tpu7x:2x2x1
jax: 0.10.0
libtpu: 0.0.40
codegen_flags: <defaults>
</compile_context>

<pallas_src>
import functools

import jax
import jax.numpy as jnp
from jax.experimental import pallas as pl
from jax.experimental.pallas import tpu as pltpu

_VMEM_LIMIT = 32 * 1024 * 1024  # explicit scoped-VMEM budget, safe on v5e/v6e/v7x


# ---------------------------------------------------------------------------
# helpers
# ---------------------------------------------------------------------------
def _pick_nb(n, rows_per_img, target_rows=1024):
    """Images per grid step: aim for ~target_rows matmul rows, divide n."""
    nb = max(1, min(n, target_rows // max(rows_per_img, 1)))
    while nb > 1 and n % nb:
        nb -= 1
    return max(nb, 1)


def _pick_tile_rows(m, target=2048):
    """Row-tile for the BN kernels: divisor of m, multiple of 8, <= target."""
    if m <= target:
        return m
    t = (target // 8) * 8
    while t >= 8:
        if m % t == 0:
            return t
        t -= 8
    return m


# ---------------------------------------------------------------------------
# ConvTranspose2d(Cin, Cout, kernel=4, stride=2, padding=1, bias=False)
# ---------------------------------------------------------------------------
# Output y = 2p + a, x = 2q + b (a, b = output parity).  Then
#   out[n, 2p+a, 2q+b, co] =
#     sum_{r,s in {0,1}} xp[n, p+a+r, q+b+s, :] @ W[:, co, 3-a-2r, 3-b-2s]
# where xp is the input zero-padded by 1.  Column shifts (q+b+s) live on the
# lane axis of the glue tensor xg; row shifts (p+a+r) are contiguous row
# offsets of the flattened (padded-row, col) dimension.


def _prep_weight(w):
    """w: (Cin, Cout, 4, 4) PyTorch ConvTranspose2d -> (2, 2*Cin, 4*Cout) bf16.

    w_stack[b][s*Cin + ci, (2a + r)*Cout + co] = w[ci, co, 3-a-2r, 3-b-2s]
    """
    stacks = []
    for b in range(2):
        cols = []
        for a in range(2):
            for r in range(2):
                kh = 3 - a - 2 * r
                blk = jnp.concatenate(
                    [w[:, :, kh, 3 - b - 2 * s] for s in range(2)], axis=0)
                cols.append(blk)                      # (2*Cin, Cout)
        stacks.append(jnp.concatenate(cols, axis=1))  # (2*Cin, 4*Cout)
    return jnp.stack(stacks, axis=0).astype(jnp.bfloat16)


def _convt_kernel(x_ref, w_ref, o_ref, acc_ref, *, w_sp, cin, cout, activation):
    # x_ref : (rows, 3*Cin)  bf16; rows = nb*(H+2)*W, lanes = 3 column shifts
    # w_ref : (2, 2*Cin, 4*Cout) bf16 (index 0/1 = output column parity b)
    # o_ref : (rows, 4*Cout) f32; lane block 2a+b = output parity
    # acc_ref: (rows, 4*Cout) f32 VMEM scratch
    rows = o_ref.shape[0]
    valid = rows - 2 * w_sp
    for b in range(2):
        xs = x_ref[:, b * cin:(b + 2) * cin]                 # (rows, 2*Cin)
        acc_ref[...] = jnp.dot(xs, w_ref[b],
                               preferred_element_type=jnp.float32)
        for a in range(2):
            r0 = acc_ref[a * w_sp:a * w_sp + valid,
                         (2 * a + 0) * cout:(2 * a + 1) * cout]
            r1 = acc_ref[(a + 1) * w_sp:(a + 1) * w_sp + valid,
                         (2 * a + 1) * cout:(2 * a + 2) * cout]
            res = r0 + r1
            if activation == "relu":
                res = jnp.maximum(res, 0.0)
            elif activation == "tanh":
                res = jnp.tanh(res)
            p = 2 * a + b
            o_ref[0:valid, p * cout:(p + 1) * cout] = res
    # trailing 2*W rows are pad-base rows of the last image (discarded by glue)
    o_ref[valid:rows, :] = jnp.zeros((2 * w_sp, 4 * cout), o_ref.dtype)


def conv_transpose_4x4_s2_p1(x, w_pt, activation="none", target_rows=1024):
    """x: (N, H, W, Cin) NHWC. w_pt: (Cin, Cout, 4, 4). -> (N, 2H, 2W, Cout)."""
    n, h, w_sp, cin = x.shape
    cout = w_pt.shape[1]
    rows_per_img = (h + 2) * w_sp

    # glue: pad, triple column-shift concat on lanes, flatten rows, bf16.
    xp = jnp.pad(x, ((0, 0), (1, 1), (1, 1), (0, 0))).astype(jnp.bfloat16)
    xg = jnp.concatenate([xp[:, :, s:s + w_sp, :] for s in range(3)], axis=-1)
    xg = xg.reshape(n * rows_per_img, 3 * cin)               # (N*(H+2)*W, 3Cin)

    w_stack = _prep_weight(w_pt)                             # (2, 2Cin, 4Cout)

    nb = _pick_nb(n, rows_per_img, target_rows)
    rows = nb * rows_per_img
    grid = (n // nb,)

    out = pl.pallas_call(
        functools.partial(_convt_kernel, w_sp=w_sp, cin=cin, cout=cout,
                          activation=activation),
        out_shape=jax.ShapeDtypeStruct((n * rows_per_img, 4 * cout),
                                       jnp.float32),
        grid=grid,
        in_specs=[
            pl.BlockSpec((rows, 3 * cin), lambda i: (i, 0)),
            pl.BlockSpec((2, 2 * cin, 4 * cout), lambda i: (0, 0, 0)),
        ],
        out_specs=pl.BlockSpec((rows, 4 * cout), lambda i: (i, 0)),
        scratch_shapes=[pltpu.VMEM((rows, 4 * cout), jnp.float32)],
        compiler_params=pltpu.CompilerParams(
            dimension_semantics=("parallel",),
            vmem_limit_bytes=_VMEM_LIMIT),
    )(xg, w_stack)

    # glue: drop pad-base rows + depth-to-space (parity interleave) to NHWC.
    o = out.reshape(n, h + 2, w_sp, 2, 2, cout)[:, :h]
    o = jnp.transpose(o, (0, 1, 3, 2, 4, 5)).reshape(n, 2 * h, 2 * w_sp, cout)
    return o


# ---------------------------------------------------------------------------
# Layer 1 special case: ConvTranspose2d on a 1x1 spatial input + fused ReLU
# (only the central 2x2 kernel taps contribute) == one dense matmul.
# ---------------------------------------------------------------------------
def _dense_relu_kernel(z_ref, w_ref, o_ref):
    acc = jnp.dot(z_ref[...], w_ref[...], preferred_element_type=jnp.float32)
    o_ref[...] = jnp.maximum(acc, 0.0)


def convt_1x1_relu(x, w_pt):
    """x: (N, 1, 1, Cin) NHWC. w_pt: (Cin, Cout, 4, 4). -> (N, 2, 2, Cout)."""
    n, cin = x.shape[0], x.shape[-1]
    cout = w_pt.shape[1]
    zf = x.reshape(n, cin).astype(jnp.bfloat16)
    # wc[ci, (2a+b)*Cout + co] = w[ci, co, 1+a, 1+b]
    wc = jnp.transpose(w_pt[:, :, 1:3, 1:3], (0, 2, 3, 1))
    wc = wc.reshape(cin, 4 * cout).astype(jnp.bfloat16)
    out = pl.pallas_call(
        _dense_relu_kernel,
        out_shape=jax.ShapeDtypeStruct((n, 4 * cout), jnp.float32),
        grid=(1,),
        in_specs=[pl.BlockSpec((n, cin), lambda i: (0, 0)),
                  pl.BlockSpec((cin, 4 * cout), lambda i: (0, 0))],
        out_specs=pl.BlockSpec((n, 4 * cout), lambda i: (0, 0)),
        compiler_params=pltpu.CompilerParams(vmem_limit_bytes=_VMEM_LIMIT),
    )(zf, wc)
    return out.reshape(n, 2, 2, cout)


# ---------------------------------------------------------------------------
# BatchNorm2d (training-mode batch statistics, eps=1e-5) + ReLU, tiled
# ---------------------------------------------------------------------------
def _bn_stats_kernel(x_ref, s_ref):
    @pl.when(pl.program_id(0) == 0)
    def _init():
        s_ref[...] = jnp.zeros_like(s_ref)

    x = x_ref[...]                                           # (TM, C) f32
    s_ref[0:1, :] += jnp.sum(x, axis=0, keepdims=True)
    s_ref[1:2, :] += jnp.sum(x * x, axis=0, keepdims=True)


def _bn_apply_relu_kernel(x_ref, scale_ref, shift_ref, o_ref):
    o_ref[...] = jnp.maximum(x_ref[...] * scale_ref[...] + shift_ref[...], 0.0)


def batchnorm2d_relu(x, gamma, beta, eps=1e-5):
    """x: (N, H, W, C) NHWC, training-mode (biased) batch statistics."""
    n, h, w, c = x.shape
    m = n * h * w
    xf = x.reshape(m, c)
    tm = _pick_tile_rows(m)
    grid = (m // tm,)

    stats = pl.pallas_call(
        _bn_stats_kernel,
        out_shape=jax.ShapeDtypeStruct((2, c), jnp.float32),
        grid=grid,
        in_specs=[pl.BlockSpec((tm, c), lambda i: (i, 0))],
        out_specs=pl.BlockSpec((2, c), lambda i: (0, 0)),
        compiler_params=pltpu.CompilerParams(
            dimension_semantics=("arbitrary",),
            vmem_limit_bytes=_VMEM_LIMIT),
    )(xf)

    mean = stats[0] * (1.0 / m)
    var = jnp.maximum(stats[1] * (1.0 / m) - mean * mean, 0.0)
    inv = jax.lax.rsqrt(var + eps)
    scale = (gamma * inv).reshape(1, c)
    shift = (beta - mean * gamma * inv).reshape(1, c)

    out = pl.pallas_call(
        _bn_apply_relu_kernel,
        out_shape=jax.ShapeDtypeStruct((m, c), jnp.float32),
        grid=grid,
        in_specs=[pl.BlockSpec((tm, c), lambda i: (i, 0)),
                  pl.BlockSpec((1, c), lambda i: (0, 0)),
                  pl.BlockSpec((1, c), lambda i: (0, 0))],
        out_specs=pl.BlockSpec((tm, c), lambda i: (i, 0)),
        compiler_params=pltpu.CompilerParams(
            dimension_semantics=("parallel",),
            vmem_limit_bytes=_VMEM_LIMIT),
    )(xf, scale, shift)
    return out.reshape(n, h, w, c)


# ---------------------------------------------------------------------------
# _netG parameters + forward
# ---------------------------------------------------------------------------
def init_params(key, nz, nc, ngf):
    ks = jax.random.split(key, 8)

    def w_init(k, cin, cout):  # PyTorch ConvTranspose2d weight: (Cin, Cout, 4, 4)
        return (0.02 * jax.random.normal(k, (cin, cout, 4, 4))).astype(jnp.float32)

    return {
        "w1": w_init(ks[0], nz, ngf * 8),
        "w2": w_init(ks[1], ngf * 8, ngf * 4),
        "g2": (1.0 + 0.02 * jax.random.normal(ks[5], (ngf * 4,))).astype(jnp.float32),
        "b2": jnp.zeros((ngf * 4,), jnp.float32),
        "w3": w_init(ks[2], ngf * 4, ngf * 2),
        "g3": (1.0 + 0.02 * jax.random.normal(ks[6], (ngf * 2,))).astype(jnp.float32),
        "b3": jnp.zeros((ngf * 2,), jnp.float32),
        "w4": w_init(ks[3], ngf * 2, ngf),
        "g4": (1.0 + 0.02 * jax.random.normal(ks[7], (ngf,))).astype(jnp.float32),
        "b4": jnp.zeros((ngf,), jnp.float32),
        "w5": w_init(ks[4], ngf, nc),
    }


def netg_forward(z, params):
    """z: (N, nz, H, W) NCHW (PyTorch convention). Returns NCHW."""
    x = jnp.transpose(z, (0, 2, 3, 1))                                   # NHWC
    if x.shape[1] == 1 and x.shape[2] == 1:
        x = convt_1x1_relu(x, params["w1"])                              # ConvT+ReLU
    else:
        x = conv_transpose_4x4_s2_p1(x, params["w1"], activation="relu")
    x = conv_transpose_4x4_s2_p1(x, params["w2"], activation="none")
    x = batchnorm2d_relu(x, params["g2"], params["b2"])
    x = conv_transpose_4x4_s2_p1(x, params["w3"], activation="none")
    x = batchnorm2d_relu(x, params["g3"], params["b3"])
    x = conv_transpose_4x4_s2_p1(x, params["w4"], activation="none")
    x = batchnorm2d_relu(x, params["g4"], params["b4"])
    x = conv_transpose_4x4_s2_p1(x, params["w5"], activation="tanh")
    return jnp.transpose(x, (0, 3, 1, 2))                                # NCHW


# ---------------------------------------------------------------------------
# Pure-JAX reference (correctness sanity check)
# ---------------------------------------------------------------------------
def _ref_convt(x, w):
    w_f = jnp.transpose(w[:, :, ::-1, ::-1], (2, 3, 0, 1))  # flipped, HWIO
    return jax.lax.conv_general_dilated(
        x, w_f, window_strides=(1, 1), padding=((2, 2), (2, 2)),
        lhs_dilation=(2, 2), dimension_numbers=("NHWC", "HWIO", "NHWC"),
        precision=jax.lax.Precision.HIGHEST)


def _ref_bn_relu(x, g, b, eps=1e-5):
    mean = jnp.mean(x, axis=(0, 1, 2), keepdims=True)
    var = jnp.mean((x - mean) ** 2, axis=(0, 1, 2), keepdims=True)
    return jnp.maximum((x - mean) * jax.lax.rsqrt(var + eps) * g + b, 0.0)


def _ref_forward(z, p):
    x = jnp.transpose(z, (0, 2, 3, 1))
    x = jnp.maximum(_ref_convt(x, p["w1"]), 0.0)
    x = _ref_bn_relu(_ref_convt(x, p["w2"]), p["g2"], p["b2"])
    x = _ref_bn_relu(_ref_convt(x, p["w3"]), p["g3"], p["b3"])
    x = _ref_bn_relu(_ref_convt(x, p["w4"]), p["g4"], p["b4"])
    x = jnp.tanh(_ref_convt(x, p["w5"]))
    return jnp.transpose(x, (0, 3, 1, 2))


if __name__ == "__main__":
    # Small shapes consistent with the (parametric) module: nz=16, nc=3, ngf=8,
    # batch=2, latent spatial 1x1 -> output (2, 3, 32, 32).
    N, NZ, NC, NGF = 2, 16, 3, 8
    key = jax.random.PRNGKey(0)
    k_z, k_p = jax.random.split(key)
    z = jax.random.normal(k_z, (N, NZ, 1, 1), dtype=jnp.float32)
    params = init_params(k_p, NZ, NC, NGF)

    fwd = jax.jit(netg_forward)
    out = jax.block_until_ready(fwd(z, params))
    assert out.shape == (N, NC, 32, 32), out.shape

    ref = jax.block_until_ready(_ref_forward(z, params))
    max_err = float(jnp.max(jnp.abs(out - ref)))
    # bf16 MXU inputs with f32 accumulation vs. f32-HIGHEST reference.
    assert max_err < 3e-2, max_err

    print("KERNEL_OK")
</pallas_src>

<mosaic_0001>
module attributes {stable_mosaic.version = 11 : i64} {
  func.func @_dense_relu_kernel(%arg0: i32, %arg1: memref<2x16xbf16, #tpu.memory_space<vmem>>, %arg2: memref<16x256xbf16, #tpu.memory_space<vmem>>, %arg3: memref<2x256xf32, #tpu.memory_space<vmem>>) attributes {dimension_semantics = [#tpu.dimension_semantics<arbitrary>], iteration_bounds = array<i64: 1>, scalar_prefetch = 0 : i64, scratch_operands = 0 : i64, tpu.core_type = #tpu.core_type<tc>, window_params = [{pipeline_mode = #tpu.pipeline_mode<synchronous>, transform_indices = @transform_0, window_bounds = array<i64: 2, 16>}, {pipeline_mode = #tpu.pipeline_mode<synchronous>, transform_indices = @transform_1, window_bounds = array<i64: 16, 256>}, {pipeline_mode = #tpu.pipeline_mode<synchronous>, transform_indices = @transform_2, window_bounds = array<i64: 2, 256>}]} {
    %c0 = arith.constant 0 : index
    %c0_0 = arith.constant 0 : index
    %0 = vector.load %arg1[%c0, %c0_0] : memref<2x16xbf16, #tpu.memory_space<vmem>>, vector<2x16xbf16>
    %c0_1 = arith.constant 0 : index
    %c0_2 = arith.constant 0 : index
    %1 = vector.load %arg2[%c0_1, %c0_2] : memref<16x256xbf16, #tpu.memory_space<vmem>>, vector<16x256xbf16>
    %cst = arith.constant dense<0.000000e+00> : vector<2x256xf32>
    %2 = tpu.matmul %0, %1, %cst {dimension_numbers = #tpu.dot_dimension_numbers<[1], [0], [0], [1], [0, 0, 1, 1], [], []>} : vector<2x16xbf16>, vector<16x256xbf16>, vector<2x256xf32> -> vector<2x256xf32>
    %cst_3 = arith.constant 0.000000e+00 : f32
    %3 = vector.broadcast %cst_3 : f32 to vector<2x256xf32>
    %4 = arith.maximumf %2, %3 : vector<2x256xf32>
    %c0_4 = arith.constant 0 : index
    %c0_5 = arith.constant 0 : index
    %5 = vector.load %arg3[%c0_4, %c0_5] : memref<2x256xf32, #tpu.memory_space<vmem>>, vector<2x256xf32>
    tpu.vector_store %arg3[%c0_4, %c0_5], %4 {strides = array<i32>} : memref<2x256xf32, #tpu.memory_space<vmem>>, vector<2x256xf32>,
    return
  }
  func.func @transform_0(%arg0: i32) -> (i32, i32) {
    %c0_i32 = arith.constant 0 : i32
    %c0_i32_0 = arith.constant 0 : i32
    %c0_i32_1 = arith.constant 0 : i32
    return %c0_i32, %c0_i32_0 : i32, i32
  }
  func.func @transform_1(%arg0: i32) -> (i32, i32) {
    %c0_i32 = arith.constant 0 : i32
    %c0_i32_0 = arith.constant 0 : i32
    %c0_i32_1 = arith.constant 0 : i32
    return %c0_i32, %c0_i32_0 : i32, i32
  }
  func.func @transform_2(%arg0: i32) -> (i32, i32) {
    %c0_i32 = arith.constant 0 : i32
    %c0_i32_0 = arith.constant 0 : i32
    %c0_i32_1 = arith.constant 0 : i32
    return %c0_i32, %c0_i32_0 : i32, i32
  }
}

module attributes {stable_mosaic.version = 11 : i64} {
  func.func @_convt_kernel(%arg0: i32, %arg1: memref<16x192xbf16, #tpu.memory_space<vmem>>, %arg2: memref<2x128x128xbf16, #tpu.memory_space<vmem>>, %arg3: memref<16x128xf32, #tpu.memory_space<vmem>>, %arg4: memref<16x128xf32, #tpu.memory_space<vmem>>) attributes {dimension_semantics = [#tpu.dimension_semantics<parallel>], iteration_bounds = array<i64: 1>, scalar_prefetch = 0 : i64, scratch_operands = 1 : i64, tpu.core_type = #tpu.core_type<tc>, window_params = [{transform_indices = @transform_0, window_bounds = array<i64: 16, 192>}, {pipeline_mode = #tpu.pipeline_mode<synchronous>, transform_indices = @transform_1, window_bounds = array<i64: 2, 128, 128>}, {transform_indices = @transform_2, window_bounds = array<i64: 16, 128>}]} {
    %c0 = arith.constant 0 : index
    %c0_0 = arith.constant 0 : index
    %0 = vector.load %arg1[%c0, %c0_0] : memref<16x192xbf16, #tpu.memory_space<vmem>>, vector<16x128xbf16>
    %c0_1 = arith.constant 0 : index
    %c0_2 = arith.constant 0 : index
    %c0_3 = arith.constant 0 : index
    %1 = vector.load %arg2[%c0_1, %c0_2, %c0_3] : memref<2x128x128xbf16, #tpu.memory_space<vmem>>, vector<1x128x128xbf16>
    %2 = vector.shape_cast %1 : vector<1x128x128xbf16> to vector<128x128xbf16>
    %cst = arith.constant dense<0.000000e+00> : vector<16x128xf32>
    %3 = tpu.matmul %0, %2, %cst {dimension_numbers = #tpu.dot_dimension_numbers<[1], [0], [0], [1], [0, 0, 1, 1], [], []>} : vector<16x128xbf16>, vector<128x128xbf16>, vector<16x128xf32> -> vector<16x128xf32>
    %c0_4 = arith.constant 0 : index
    %c0_5 = arith.constant 0 : index
    %4 = vector.load %arg4[%c0_4, %c0_5] : memref<16x128xf32, #tpu.memory_space<vmem>>, vector<16x128xf32>
    tpu.vector_store %arg4[%c0_4, %c0_5], %3 {strides = array<i32>} : memref<16x128xf32, #tpu.memory_space<vmem>>, vector<16x128xf32>,
    %c0_6 = arith.constant 0 : index
    %c0_7 = arith.constant 0 : index
    %5 = vector.load %arg4[%c0_6, %c0_7] : memref<16x128xf32, #tpu.memory_space<vmem>>, vector<12x32xf32>
    %c2 = arith.constant 2 : index
    %c32 = arith.constant 32 : index
    %6 = vector.load %arg4[%c2, %c32] : memref<16x128xf32, #tpu.memory_space<vmem>>, vector<12x32xf32>
    %7 = arith.addf %5, %6 : vector<12x32xf32>
    %c0_8 = arith.constant 0 : index
    %c0_9 = arith.constant 0 : index
    %8 = vector.load %arg3[%c0_8, %c0_9] : memref<16x128xf32, #tpu.memory_space<vmem>>, vector<12x32xf32>
    tpu.vector_store %arg3[%c0_8, %c0_9], %7 {strides = array<i32>} : memref<16x128xf32, #tpu.memory_space<vmem>>, vector<12x32xf32>,
    %c2_10 = arith.constant 2 : index
    %c64 = arith.constant 64 : index
    %9 = vector.load %arg4[%c2_10, %c64] : memref<16x128xf32, #tpu.memory_space<vmem>>, vector<12x32xf32>
    %c4 = arith.constant 4 : index
    %c96 = arith.constant 96 : index
    %10 = vector.load %arg4[%c4, %c96] : memref<16x128xf32, #tpu.memory_space<vmem>>, vector<12x32xf32>
    %11 = arith.addf %9, %10 : vector<12x32xf32>
    %c0_11 = arith.constant 0 : index
    %c64_12 = arith.constant 64 : index
    %12 = vector.load %arg3[%c0_11, %c64_12] : memref<16x128xf32, #tpu.memory_space<vmem>>, vector<12x32xf32>
    tpu.vector_store %arg3[%c0_11, %c64_12], %11 {strides = array<i32>} : memref<16x128xf32, #tpu.memory_space<vmem>>, vector<12x32xf32>,
    %c0_13 = arith.constant 0 : index
    %c64_14 = arith.constant 64 : index
    %13 = vector.load %arg1[%c0_13, %c64_14] : memref<16x192xbf16, #tpu.memory_space<vmem>>, vector<16x128xbf16>
    %c1 = arith.constant 1 : index
    %c0_15 = arith.constant 0 : index
    %c0_16 = arith.constant 0 : index
    %14 = vector.load %arg2[%c1, %c0_15, %c0_16] : memref<2x128x128xbf16, #tpu.memory_space<vmem>>, vector<1x128x128xbf16>
    %15 = vector.shape_cast %14 : vector<1x128x128xbf16> to vector<128x128xbf16>
    %cst_17 = arith.constant dense<0.000000e+00> : vector<16x128xf32>
    %16 = tpu.matmul %13, %15, %cst_17 {dimension_numbers = #tpu.dot_dimension_numbers<[1], [0], [0], [1], [0, 0, 1, 1], [], []>} : vector<16x128xbf16>, vector<128x128xbf16>, vector<16x128xf32> -> vector<16x128xf32>
    %c0_18 = arith.constant 0 : index
    %c0_19 = arith.constant 0 : index
    %17 = vector.load %arg4[%c0_18, %c0_19] : memref<16x128xf32, #tpu.memory_space<vmem>>, vector<16x128xf32>
    tpu.vector_store %arg4[%c0_18, %c0_19], %16 {strides = array<i32>} : memref<16x128xf32, #tpu.memory_space<vmem>>, vector<16x128xf32>,
    %c0_20 = arith.constant 0 : index
    %c0_21 = arith.constant 0 : index
    %18 = vector.load %arg4[%c0_20, %c0_21] : memref<16x128xf32, #tpu.memory_space<vmem>>, vector<12x32xf32>
    %c2_22 = arith.constant 2 : index
    %c32_23 = arith.constant 32 : index
    %19 = vector.load %arg4[%c2_22, %c32_23] : memref<16x128xf32, #tpu.memory_space<vmem>>, vector<12x32xf32>
    %20 = arith.addf %18, %19 : vector<12x32xf32>
    %c0_24 = arith.constant 0 : index
    %c32_25 = arith.constant 32 : index
    %21 = vector.load %arg3[%c0_24, %c32_25] : memref<16x128xf32, #tpu.memory_space<vmem>>, vector<12x32xf32>
    tpu.vector_store %arg3[%c0_24, %c32_25], %20 {strides = array<i32>} : memref<16x128xf32, #tpu.memory_space<vmem>>, vector<12x32xf32>,
    %c2_26 = arith.constant 2 : index
    %c64_27 = arith.constant 64 : index
    %22 = vector.load %arg4[%c2_26, %c64_27] : memref<16x128xf32, #tpu.memory_space<vmem>>, vector<12x32xf32>
    %c4_28 = arith.constant 4 : index
    %c96_29 = arith.constant 96 : index
    %23 = vector.load %arg4[%c4_28, %c96_29] : memref<16x128xf32, #tpu.memory_space<vmem>>, vector<12x32xf32>
    %24 = arith.addf %22, %23 : vector<12x32xf32>
    %c0_30 = arith.constant 0 : index
    %c96_31 = arith.constant 96 : index
    %25 = vector.load %arg3[%c0_30, %c96_31] : memref<16x128xf32, #tpu.memory_space<vmem>>, vector<12x32xf32>
    tpu.vector_store %arg3[%c0_30, %c96_31], %24 {strides = array<i32>} : memref<16x128xf32, #tpu.memory_space<vmem>>, vector<12x32xf32>,
    %cst_32 = arith.constant 0.000000e+00 : f32
    %26 = vector.broadcast %cst_32 : f32 to vector<4x128xf32>
    %c12 = arith.constant 12 : index
    %c0_33 = arith.constant 0 : index
    %27 = vector.load %arg3[%c12, %c0_33] : memref<16x128xf32, #tpu.memory_space<vmem>>, vector<4x128xf32>
    tpu.vector_store %arg3[%c12, %c0_33], %26 {strides = array<i32>} : memref<16x128xf32, #tpu.memory_space<vmem>>, vector<4x128xf32>,
    return
  }
  func.func @transform_0(%arg0: i32) -> (i32, i32) {
    %c0_i32 = arith.constant 0 : i32
    %c0_i32_0 = arith.constant 0 : i32
    return %arg0, %c0_i32 : i32, i32
  }
  func.func @transform_1(%arg0: i32) -> (i32, i32, i32) {
    %c0_i32 = arith.constant 0 : i32
    %c0_i32_0 = arith.constant 0 : i32
    %c0_i32_1 = arith.constant 0 : i32
    %c0_i32_2 = arith.constant 0 : i32
    return %c0_i32, %c0_i32_0, %c0_i32_1 : i32, i32, i32
  }
  func.func @transform_2(%arg0: i32) -> (i32, i32) {
    %c0_i32 = arith.constant 0 : i32
    %c0_i32_0 = arith.constant 0 : i32
    return %arg0, %c0_i32 : i32, i32
  }
}

module attributes {stable_mosaic.version = 11 : i64} {
  func.func @_bn_stats_kernel(%arg0: i32, %arg1: memref<32x32xf32, #tpu.memory_space<vmem>>, %arg2: memref<2x32xf32, #tpu.memory_space<vmem>>) attributes {dimension_semantics = [#tpu.dimension_semantics<arbitrary>], iteration_bounds = array<i64: 1>, scalar_prefetch = 0 : i64, scratch_operands = 0 : i64, tpu.core_type = #tpu.core_type<tc>, window_params = [{transform_indices = @transform_0, window_bounds = array<i64: 32, 32>}, {pipeline_mode = #tpu.pipeline_mode<synchronous>, transform_indices = @transform_1, window_bounds = array<i64: 2, 32>}]} {
    %c0_i32 = arith.constant 0 : i32
    %0 = arith.cmpi eq, %arg0, %c0_i32 : i32
    %1 = arith.extui %0 : i1 to i32
    %c0_i32_0 = arith.constant 0 : i32
    %2 = arith.cmpi ne, %1, %c0_i32_0 : i32
    scf.if %2 {
      %cst_10 = arith.constant 0.000000e+00 : f32
      %15 = vector.broadcast %cst_10 : f32 to vector<2x32xf32>
      %c0_11 = arith.constant 0 : index
      %c0_12 = arith.constant 0 : index
      %16 = vector.load %arg2[%c0_11, %c0_12] : memref<2x32xf32, #tpu.memory_space<vmem>>, vector<2x32xf32>
      tpu.vector_store %arg2[%c0_11, %c0_12], %15 {strides = array<i32>} : memref<2x32xf32, #tpu.memory_space<vmem>>, vector<2x32xf32>,
    } else {
    }
    %c0 = arith.constant 0 : index
    %c0_1 = arith.constant 0 : index
    %3 = vector.load %arg1[%c0, %c0_1] : memref<32x32xf32, #tpu.memory_space<vmem>>, vector<32x32xf32>
    %c0_2 = arith.constant 0 : index
    %c0_3 = arith.constant 0 : index
    %4 = vector.load %arg2[%c0_2, %c0_3] : memref<2x32xf32, #tpu.memory_space<vmem>>, vector<1x32xf32>
    %cst = arith.constant dense<0.000000e+00> : vector<32xf32>
    %5 = vector.multi_reduction <add>, %3, %cst [0] : vector<32x32xf32> to vector<32xf32>
    %6 = vector.shape_cast %5 : vector<32xf32> to vector<1x32xf32>
    %7 = arith.addf %4, %6 : vector<1x32xf32>
    %c0_4 = arith.constant 0 : index
    %c0_5 = arith.constant 0 : index
    %8 = vector.load %arg2[%c0_4, %c0_5] : memref<2x32xf32, #tpu.memory_space<vmem>>, vector<1x32xf32>
    tpu.vector_store %arg2[%c0_4, %c0_5], %7 {strides = array<i32>} : memref<2x32xf32, #tpu.memory_space<vmem>>, vector<1x32xf32>,
    %c1 = arith.constant 1 : index
    %c0_6 = arith.constant 0 : index
    %9 = vector.load %arg2[%c1, %c0_6] : memref<2x32xf32, #tpu.memory_space<vmem>>, vector<1x32xf32>
    %10 = arith.mulf %3, %3 : vector<32x32xf32>
    %cst_7 = arith.constant dense<0.000000e+00> : vector<32xf32>
    %11 = vector.multi_reduction <add>, %10, %cst_7 [0] : vector<32x32xf32> to vector<32xf32>
    %12 = vector.shape_cast %11 : vector<32xf32> to vector<1x32xf32>
    %13 = arith.addf %9, %12 : vector<1x32xf32>
    %c1_8 = arith.constant 1 : index
    %c0_9 = arith.constant 0 : index
    %14 = vector.load %arg2[%c1_8, %c0_9] : memref<2x32xf32, #tpu.memory_space<vmem>>, vector<1x32xf32>
    tpu.vector_store %arg2[%c1_8, %c0_9], %13 {strides = array<i32>} : memref<2x32xf32, #tpu.memory_space<vmem>>, vector<1x32xf32>,
    return
  }
  func.func @transform_0(%arg0: i32) -> (i32, i32) {
    %c0_i32 = arith.constant 0 : i32
    %c0_i32_0 = arith.constant 0 : i32
    return %arg0, %c0_i32 : i32, i32
  }
  func.func @transform_1(%arg0: i32) -> (i32, i32) {
    %c0_i32 = arith.constant 0 : i32
    %c0_i32_0 = arith.constant 0 : i32
    %c0_i32_1 = arith.constant 0 : i32
    return %c0_i32, %c0_i32_0 : i32, i32
  }
}

module attributes {stable_mosaic.version = 11 : i64} {
  func.func @_bn_apply_relu_kernel(%arg0: i32, %arg1: memref<32x32xf32, #tpu.memory_space<vmem>>, %arg2: memref<1x32xf32, #tpu.memory_space<vmem>>, %arg3: memref<1x32xf32, #tpu.memory_space<vmem>>, %arg4: memref<32x32xf32, #tpu.memory_space<vmem>>) attributes {dimension_semantics = [#tpu.dimension_semantics<parallel>], iteration_bounds = array<i64: 1>, scalar_prefetch = 0 : i64, scratch_operands = 0 : i64, tpu.core_type = #tpu.core_type<tc>, window_params = [{transform_indices = @transform_0, window_bounds = array<i64: 32, 32>}, {pipeline_mode = #tpu.pipeline_mode<synchronous>, transform_indices = @transform_1, window_bounds = array<i64: 1, 32>}, {pipeline_mode = #tpu.pipeline_mode<synchronous>, transform_indices = @transform_2, window_bounds = array<i64: 1, 32>}, {transform_indices = @transform_3, window_bounds = array<i64: 32, 32>}]} {
    %c0 = arith.constant 0 : index
    %c0_0 = arith.constant 0 : index
    %0 = vector.load %arg1[%c0, %c0_0] : memref<32x32xf32, #tpu.memory_space<vmem>>, vector<32x32xf32>
    %c0_1 = arith.constant 0 : index
    %c0_2 = arith.constant 0 : index
    %1 = vector.load %arg2[%c0_1, %c0_2] : memref<1x32xf32, #tpu.memory_space<vmem>>, vector<1x32xf32>
    %2 = vector.broadcast %1 : vector<1x32xf32> to vector<32x32xf32>
    %3 = arith.mulf %0, %2 : vector<32x32xf32>
    %c0_3 = arith.constant 0 : index
    %c0_4 = arith.constant 0 : index
    %4 = vector.load %arg3[%c0_3, %c0_4] : memref<1x32xf32, #tpu.memory_space<vmem>>, vector<1x32xf32>
    %5 = vector.broadcast %4 : vector<1x32xf32> to vector<32x32xf32>
    %6 = arith.addf %3, %5 : vector<32x32xf32>
    %cst = arith.constant 0.000000e+00 : f32
    %7 = vector.broadcast %cst : f32 to vector<32x32xf32>
    %8 = arith.maximumf %6, %7 : vector<32x32xf32>
    %c0_5 = arith.constant 0 : index
    %c0_6 = arith.constant 0 : index
    %9 = vector.load %arg4[%c0_5, %c0_6] : memref<32x32xf32, #tpu.memory_space<vmem>>, vector<32x32xf32>
    tpu.vector_store %arg4[%c0_5, %c0_6], %8 {strides = array<i32>} : memref<32x32xf32, #tpu.memory_space<vmem>>, vector<32x32xf32>,
    return
  }
  func.func @transform_0(%arg0: i32) -> (i32, i32) {
    %c0_i32 = arith.constant 0 : i32
    %c0_i32_0 = arith.constant 0 : i32
    return %arg0, %c0_i32 : i32, i32
  }
  func.func @transform_1(%arg0: i32) -> (i32, i32) {
    %c0_i32 = arith.constant 0 : i32
    %c0_i32_0 = arith.constant 0 : i32
    %c0_i32_1 = arith.constant 0 : i32
    return %c0_i32, %c0_i32_0 : i32, i32
  }
  func.func @transform_2(%arg0: i32) -> (i32, i32) {
    %c0_i32 = arith.constant 0 : i32
    %c0_i32_0 = arith.constant 0 : i32
    %c0_i32_1 = arith.constant 0 : i32
    return %c0_i32, %c0_i32_0 : i32, i32
  }
  func.func @transform_3(%arg0: i32) -> (i32, i32) {
    %c0_i32 = arith.constant 0 : i32
    %c0_i32_0 = arith.constant 0 : i32
    return %arg0, %c0_i32 : i32, i32
  }
}

module attributes {stable_mosaic.version = 11 : i64} {
  func.func @_convt_kernel(%arg0: i32, %arg1: memref<48x96xbf16, #tpu.memory_space<vmem>>, %arg2: memref<2x64x64xbf16, #tpu.memory_space<vmem>>, %arg3: memref<48x64xf32, #tpu.memory_space<vmem>>, %arg4: memref<48x64xf32, #tpu.memory_space<vmem>>) attributes {dimension_semantics = [#tpu.dimension_semantics<parallel>], iteration_bounds = array<i64: 1>, scalar_prefetch = 0 : i64, scratch_operands = 1 : i64, tpu.core_type = #tpu.core_type<tc>, window_params = [{transform_indices = @transform_0, window_bounds = array<i64: 48, 96>}, {pipeline_mode = #tpu.pipeline_mode<synchronous>, transform_indices = @transform_1, window_bounds = array<i64: 2, 64, 64>}, {transform_indices = @transform_2, window_bounds = array<i64: 48, 64>}]} {
    %c0 = arith.constant 0 : index
    %c0_0 = arith.constant 0 : index
    %0 = vector.load %arg1[%c0, %c0_0] : memref<48x96xbf16, #tpu.memory_space<vmem>>, vector<48x64xbf16>
    %c0_1 = arith.constant 0 : index
    %c0_2 = arith.constant 0 : index
    %c0_3 = arith.constant 0 : index
    %1 = vector.load %arg2[%c0_1, %c0_2, %c0_3] : memref<2x64x64xbf16, #tpu.memory_space<vmem>>, vector<1x64x64xbf16>
    %2 = vector.shape_cast %1 : vector<1x64x64xbf16> to vector<64x64xbf16>
    %cst = arith.constant dense<0.000000e+00> : vector<48x64xf32>
    %3 = tpu.matmul %0, %2, %cst {dimension_numbers = #tpu.dot_dimension_numbers<[1], [0], [0], [1], [0, 0, 1, 1], [], []>} : vector<48x64xbf16>, vector<64x64xbf16>, vector<48x64xf32> -> vector<48x64xf32>
    %c0_4 = arith.constant 0 : index
    %c0_5 = arith.constant 0 : index
    %4 = vector.load %arg4[%c0_4, %c0_5] : memref<48x64xf32, #tpu.memory_space<vmem>>, vector<48x64xf32>
    tpu.vector_store %arg4[%c0_4, %c0_5], %3 {strides = array<i32>} : memref<48x64xf32, #tpu.memory_space<vmem>>, vector<48x64xf32>,
    %c0_6 = arith.constant 0 : index
    %c0_7 = arith.constant 0 : index
    %5 = vector.load %arg4[%c0_6, %c0_7] : memref<48x64xf32, #tpu.memory_space<vmem>>, vector<40x16xf32>
    %c4 = arith.constant 4 : index
    %c16 = arith.constant 16 : index
    %6 = vector.load %arg4[%c4, %c16] : memref<48x64xf32, #tpu.memory_space<vmem>>, vector<40x16xf32>
    %7 = arith.addf %5, %6 : vector<40x16xf32>
    %c0_8 = arith.constant 0 : index
    %c0_9 = arith.constant 0 : index
    %8 = vector.load %arg3[%c0_8, %c0_9] : memref<48x64xf32, #tpu.memory_space<vmem>>, vector<40x16xf32>
    tpu.vector_store %arg3[%c0_8, %c0_9], %7 {strides = array<i32>} : memref<48x64xf32, #tpu.memory_space<vmem>>, vector<40x16xf32>,
    %c4_10 = arith.constant 4 : index
    %c32 = arith.constant 32 : index
    %9 = vector.load %arg4[%c4_10, %c32] : memref<48x64xf32, #tpu.memory_space<vmem>>, vector<40x16xf32>
    %c8 = arith.constant 8 : index
    %c48 = arith.constant 48 : index
    %10 = vector.load %arg4[%c8, %c48] : memref<48x64xf32, #tpu.memory_space<vmem>>, vector<40x16xf32>
    %11 = arith.addf %9, %10 : vector<40x16xf32>
    %c0_11 = arith.constant 0 : index
    %c32_12 = arith.constant 32 : index
    %12 = vector.load %arg3[%c0_11, %c32_12] : memref<48x64xf32, #tpu.memory_space<vmem>>, vector<40x16xf32>
    tpu.vector_store %arg3[%c0_11, %c32_12], %11 {strides = array<i32>} : memref<48x64xf32, #tpu.memory_space<vmem>>, vector<40x16xf32>,
    %c0_13 = arith.constant 0 : index
    %c32_14 = arith.constant 32 : index
    %13 = vector.load %arg1[%c0_13, %c32_14] : memref<48x96xbf16, #tpu.memory_space<vmem>>, vector<48x64xbf16>
    %c1 = arith.constant 1 : index
    %c0_15 = arith.constant 0 : index
    %c0_16 = arith.constant 0 : index
    %14 = vector.load %arg2[%c1, %c0_15, %c0_16] : memref<2x64x64xbf16, #tpu.memory_space<vmem>>, vector<1x64x64xbf16>
    %15 = vector.shape_cast %14 : vector<1x64x64xbf16> to vector<64x64xbf16>
    %cst_17 = arith.constant dense<0.000000e+00> : vector<48x64xf32>
    %16 = tpu.matmul %13, %15, %cst_17 {dimension_numbers = #tpu.dot_dimension_numbers<[1], [0], [0], [1], [0, 0, 1, 1], [], []>} : vector<48x64xbf16>, vector<64x64xbf16>, vector<48x64xf32> -> vector<48x64xf32>
    %c0_18 = arith.constant 0 : index
    %c0_19 = arith.constant 0 : index
    %17 = vector.load %arg4[%c0_18, %c0_19] : memref<48x64xf32, #tpu.memory_space<vmem>>, vector<48x64xf32>
    tpu.vector_store %arg4[%c0_18, %c0_19], %16 {strides = array<i32>} : memref<48x64xf32, #tpu.memory_space<vmem>>, vector<48x64xf32>,
    %c0_20 = arith.constant 0 : index
    %c0_21 = arith.constant 0 : index
    %18 = vector.load %arg4[%c0_20, %c0_21] : memref<48x64xf32, #tpu.memory_space<vmem>>, vector<40x16xf32>
    %c4_22 = arith.constant 4 : index
    %c16_23 = arith.constant 16 : index
    %19 = vector.load %arg4[%c4_22, %c16_23] : memref<48x64xf32, #tpu.memory_space<vmem>>, vector<40x16xf32>
    %20 = arith.addf %18, %19 : vector<40x16xf32>
    %c0_24 = arith.constant 0 : index
    %c16_25 = arith.constant 16 : index
    %21 = vector.load %arg3[%c0_24, %c16_25] : memref<48x64xf32, #tpu.memory_space<vmem>>, vector<40x16xf32>
    tpu.vector_store %arg3[%c0_24, %c16_25], %20 {strides = array<i32>} : memref<48x64xf32, #tpu.memory_space<vmem>>, vector<40x16xf32>,
    %c4_26 = arith.constant 4 : index
    %c32_27 = arith.constant 32 : index
    %22 = vector.load %arg4[%c4_26, %c32_27] : memref<48x64xf32, #tpu.memory_space<vmem>>, vector<40x16xf32>
    %c8_28 = arith.constant 8 : index
    %c48_29 = arith.constant 48 : index
    %23 = vector.load %arg4[%c8_28, %c48_29] : memref<48x64xf32, #tpu.memory_space<vmem>>, vector<40x16xf32>
    %24 = arith.addf %22, %23 : vector<40x16xf32>
    %c0_30 = arith.constant 0 : index
    %c48_31 = arith.constant 48 : index
    %25 = vector.load %arg3[%c0_30, %c48_31] : memref<48x64xf32, #tpu.memory_space<vmem>>, vector<40x16xf32>
    tpu.vector_store %arg3[%c0_30, %c48_31], %24 {strides = array<i32>} : memref<48x64xf32, #tpu.memory_space<vmem>>, vector<40x16xf32>,
    %cst_32 = arith.constant 0.000000e+00 : f32
    %26 = vector.broadcast %cst_32 : f32 to vector<8x64xf32>
    %c40 = arith.constant 40 : index
    %c0_33 = arith.constant 0 : index
    %27 = vector.load %arg3[%c40, %c0_33] : memref<48x64xf32, #tpu.memory_space<vmem>>, vector<8x64xf32>
    tpu.vector_store %arg3[%c40, %c0_33], %26 {strides = array<i32>} : memref<48x64xf32, #tpu.memory_space<vmem>>, vector<8x64xf32>,
    return
  }
  func.func @transform_0(%arg0: i32) -> (i32, i32) {
    %c0_i32 = arith.constant 0 : i32
    %c0_i32_0 = arith.constant 0 : i32
    return %arg0, %c0_i32 : i32, i32
  }
  func.func @transform_1(%arg0: i32) -> (i32, i32, i32) {
    %c0_i32 = arith.constant 0 : i32
    %c0_i32_0 = arith.constant 0 : i32
    %c0_i32_1 = arith.constant 0 : i32
    %c0_i32_2 = arith.constant 0 : i32
    return %c0_i32, %c0_i32_0, %c0_i32_1 : i32, i32, i32
  }
  func.func @transform_2(%arg0: i32) -> (i32, i32) {
    %c0_i32 = arith.constant 0 : i32
    %c0_i32_0 = arith.constant 0 : i32
    return %arg0, %c0_i32 : i32, i32
  }
}

module attributes {stable_mosaic.version = 11 : i64} {
  func.func @_bn_apply_relu_kernel(%arg0: i32, %arg1: memref<128x16xf32, #tpu.memory_space<vmem>>, %arg2: memref<1x16xf32, #tpu.memory_space<vmem>>, %arg3: memref<1x16xf32, #tpu.memory_space<vmem>>, %arg4: memref<128x16xf32, #tpu.memory_space<vmem>>) attributes {dimension_semantics = [#tpu.dimension_semantics<parallel>], iteration_bounds = array<i64: 1>, scalar_prefetch = 0 : i64, scratch_operands = 0 : i64, tpu.core_type = #tpu.core_type<tc>, window_params = [{transform_indices = @transform_0, window_bounds = array<i64: 128, 16>}, {pipeline_mode = #tpu.pipeline_mode<synchronous>, transform_indices = @transform_1, window_bounds = array<i64: 1, 16>}, {pipeline_mode = #tpu.pipeline_mode<synchronous>, transform_indices = @transform_2, window_bounds = array<i64: 1, 16>}, {transform_indices = @transform_3, window_bounds = array<i64: 128, 16>}]} {
    %c0 = arith.constant 0 : index
    %c0_0 = arith.constant 0 : index
    %0 = vector.load %arg1[%c0, %c0_0] : memref<128x16xf32, #tpu.memory_space<vmem>>, vector<128x16xf32>
    %c0_1 = arith.constant 0 : index
    %c0_2 = arith.constant 0 : index
    %1 = vector.load %arg2[%c0_1, %c0_2] : memref<1x16xf32, #tpu.memory_space<vmem>>, vector<1x16xf32>
    %2 = vector.broadcast %1 : vector<1x16xf32> to vector<128x16xf32>
    %3 = arith.mulf %0, %2 : vector<128x16xf32>
    %c0_3 = arith.constant 0 : index
    %c0_4 = arith.constant 0 : index
    %4 = vector.load %arg3[%c0_3, %c0_4] : memref<1x16xf32, #tpu.memory_space<vmem>>, vector<1x16xf32>
    %5 = vector.broadcast %4 : vector<1x16xf32> to vector<128x16xf32>
    %6 = arith.addf %3, %5 : vector<128x16xf32>
    %cst = arith.constant 0.000000e+00 : f32
    %7 = vector.broadcast %cst : f32 to vector<128x16xf32>
    %8 = arith.maximumf %6, %7 : vector<128x16xf32>
    %c0_5 = arith.constant 0 : index
    %c0_6 = arith.constant 0 : index
    %9 = vector.load %arg4[%c0_5, %c0_6] : memref<128x16xf32, #tpu.memory_space<vmem>>, vector<128x16xf32>
    tpu.vector_store %arg4[%c0_5, %c0_6], %8 {strides = array<i32>} : memref<128x16xf32, #tpu.memory_space<vmem>>, vector<128x16xf32>,
    return
  }
  func.func @transform_0(%arg0: i32) -> (i32, i32) {
    %c0_i32 = arith.constant 0 : i32
    %c0_i32_0 = arith.constant 0 : i32
    return %arg0, %c0_i32 : i32, i32
  }
  func.func @transform_1(%arg0: i32) -> (i32, i32) {
    %c0_i32 = arith.constant 0 : i32
    %c0_i32_0 = arith.constant 0 : i32
    %c0_i32_1 = arith.constant 0 : i32
    return %c0_i32, %c0_i32_0 : i32, i32
  }
  func.func @transform_2(%arg0: i32) -> (i32, i32) {
    %c0_i32 = arith.constant 0 : i32
    %c0_i32_0 = arith.constant 0 : i32
    %c0_i32_1 = arith.constant 0 : i32
    return %c0_i32, %c0_i32_0 : i32, i32
  }
  func.func @transform_3(%arg0: i32) -> (i32, i32) {
    %c0_i32 = arith.constant 0 : i32
    %c0_i32_0 = arith.constant 0 : i32
    return %arg0, %c0_i32 : i32, i32
  }
}

module attributes {stable_mosaic.version = 11 : i64} {
  func.func @_bn_stats_kernel(%arg0: i32, %arg1: memref<128x16xf32, #tpu.memory_space<vmem>>, %arg2: memref<2x16xf32, #tpu.memory_space<vmem>>) attributes {dimension_semantics = [#tpu.dimension_semantics<arbitrary>], iteration_bounds = array<i64: 1>, scalar_prefetch = 0 : i64, scratch_operands = 0 : i64, tpu.core_type = #tpu.core_type<tc>, window_params = [{transform_indices = @transform_0, window_bounds = array<i64: 128, 16>}, {pipeline_mode = #tpu.pipeline_mode<synchronous>, transform_indices = @transform_1, window_bounds = array<i64: 2, 16>}]} {
    %c0_i32 = arith.constant 0 : i32
    %0 = arith.cmpi eq, %arg0, %c0_i32 : i32
    %1 = arith.extui %0 : i1 to i32
    %c0_i32_0 = arith.constant 0 : i32
    %2 = arith.cmpi ne, %1, %c0_i32_0 : i32
    scf.if %2 {
      %cst_10 = arith.constant 0.000000e+00 : f32
      %15 = vector.broadcast %cst_10 : f32 to vector<2x16xf32>
      %c0_11 = arith.constant 0 : index
      %c0_12 = arith.constant 0 : index
      %16 = vector.load %arg2[%c0_11, %c0_12] : memref<2x16xf32, #tpu.memory_space<vmem>>, vector<2x16xf32>
      tpu.vector_store %arg2[%c0_11, %c0_12], %15 {strides = array<i32>} : memref<2x16xf32, #tpu.memory_space<vmem>>, vector<2x16xf32>,
    } else {
    }
    %c0 = arith.constant 0 : index
    %c0_1 = arith.constant 0 : index
    %3 = vector.load %arg1[%c0, %c0_1] : memref<128x16xf32, #tpu.memory_space<vmem>>, vector<128x16xf32>
    %c0_2 = arith.constant 0 : index
    %c0_3 = arith.constant 0 : index
    %4 = vector.load %arg2[%c0_2, %c0_3] : memref<2x16xf32, #tpu.memory_space<vmem>>, vector<1x16xf32>
    %cst = arith.constant dense<0.000000e+00> : vector<16xf32>
    %5 = vector.multi_reduction <add>, %3, %cst [0] : vector<128x16xf32> to vector<16xf32>
    %6 = vector.shape_cast %5 : vector<16xf32> to vector<1x16xf32>
    %7 = arith.addf %4, %6 : vector<1x16xf32>
    %c0_4 = arith.constant 0 : index
    %c0_5 = arith.constant 0 : index
    %8 = vector.load %arg2[%c0_4, %c0_5] : memref<2x16xf32, #tpu.memory_space<vmem>>, vector<1x16xf32>
    tpu.vector_store %arg2[%c0_4, %c0_5], %7 {strides = array<i32>} : memref<2x16xf32, #tpu.memory_space<vmem>>, vector<1x16xf32>,
    %c1 = arith.constant 1 : index
    %c0_6 = arith.constant 0 : index
    %9 = vector.load %arg2[%c1, %c0_6] : memref<2x16xf32, #tpu.memory_space<vmem>>, vector<1x16xf32>
    %10 = arith.mulf %3, %3 : vector<128x16xf32>
    %cst_7 = arith.constant dense<0.000000e+00> : vector<16xf32>
    %11 = vector.multi_reduction <add>, %10, %cst_7 [0] : vector<128x16xf32> to vector<16xf32>
    %12 = vector.shape_cast %11 : vector<16xf32> to vector<1x16xf32>
    %13 = arith.addf %9, %12 : vector<1x16xf32>
    %c1_8 = arith.constant 1 : index
    %c0_9 = arith.constant 0 : index
    %14 = vector.load %arg2[%c1_8, %c0_9] : memref<2x16xf32, #tpu.memory_space<vmem>>, vector<1x16xf32>
    tpu.vector_store %arg2[%c1_8, %c0_9], %13 {strides = array<i32>} : memref<2x16xf32, #tpu.memory_space<vmem>>, vector<1x16xf32>,
    return
  }
  func.func @transform_0(%arg0: i32) -> (i32, i32) {
    %c0_i32 = arith.constant 0 : i32
    %c0_i32_0 = arith.constant 0 : i32
    return %arg0, %c0_i32 : i32, i32
  }
  func.func @transform_1(%arg0: i32) -> (i32, i32) {
    %c0_i32 = arith.constant 0 : i32
    %c0_i32_0 = arith.constant 0 : i32
    %c0_i32_1 = arith.constant 0 : i32
    return %c0_i32, %c0_i32_0 : i32, i32
  }
}

module attributes {stable_mosaic.version = 11 : i64} {
  func.func @_convt_kernel(%arg0: i32, %arg1: memref<160x48xbf16, #tpu.memory_space<vmem>>, %arg2: memref<2x32x32xbf16, #tpu.memory_space<vmem>>, %arg3: memref<160x32xf32, #tpu.memory_space<vmem>>, %arg4: memref<160x32xf32, #tpu.memory_space<vmem>>) attributes {dimension_semantics = [#tpu.dimension_semantics<parallel>], iteration_bounds = array<i64: 1>, scalar_prefetch = 0 : i64, scratch_operands = 1 : i64, tpu.core_type = #tpu.core_type<tc>, window_params = [{transform_indices = @transform_0, window_bounds = array<i64: 160, 48>}, {pipeline_mode = #tpu.pipeline_mode<synchronous>, transform_indices = @transform_1, window_bounds = array<i64: 2, 32, 32>}, {transform_indices = @transform_2, window_bounds = array<i64: 160, 32>}]} {
    %c0 = arith.constant 0 : index
    %c0_0 = arith.constant 0 : index
    %0 = vector.load %arg1[%c0, %c0_0] : memref<160x48xbf16, #tpu.memory_space<vmem>>, vector<160x32xbf16>
    %c0_1 = arith.constant 0 : index
    %c0_2 = arith.constant 0 : index
    %c0_3 = arith.constant 0 : index
    %1 = vector.load %arg2[%c0_1, %c0_2, %c0_3] : memref<2x32x32xbf16, #tpu.memory_space<vmem>>, vector<1x32x32xbf16>
    %2 = vector.shape_cast %1 : vector<1x32x32xbf16> to vector<32x32xbf16>
    %cst = arith.constant dense<0.000000e+00> : vector<160x32xf32>
    %3 = tpu.matmul %0, %2, %cst {dimension_numbers = #tpu.dot_dimension_numbers<[1], [0], [0], [1], [0, 0, 1, 1], [], []>} : vector<160x32xbf16>, vector<32x32xbf16>, vector<160x32xf32> -> vector<160x32xf32>
    %c0_4 = arith.constant 0 : index
    %c0_5 = arith.constant 0 : index
    %4 = vector.load %arg4[%c0_4, %c0_5] : memref<160x32xf32, #tpu.memory_space<vmem>>, vector<160x32xf32>
    tpu.vector_store %arg4[%c0_4, %c0_5], %3 {strides = array<i32>} : memref<160x32xf32, #tpu.memory_space<vmem>>, vector<160x32xf32>,
    %c0_6 = arith.constant 0 : index
    %c0_7 = arith.constant 0 : index
    %5 = vector.load %arg4[%c0_6, %c0_7] : memref<160x32xf32, #tpu.memory_space<vmem>>, vector<144x8xf32>
    %c8 = arith.constant 8 : index
    %c8_8 = arith.constant 8 : index
    %6 = vector.load %arg4[%c8, %c8_8] : memref<160x32xf32, #tpu.memory_space<vmem>>, vector<144x8xf32>
    %7 = arith.addf %5, %6 : vector<144x8xf32>
    %c0_9 = arith.constant 0 : index
    %c0_10 = arith.constant 0 : index
    %8 = vector.load %arg3[%c0_9, %c0_10] : memref<160x32xf32, #tpu.memory_space<vmem>>, vector<144x8xf32>
    tpu.vector_store %arg3[%c0_9, %c0_10], %7 {strides = array<i32>} : memref<160x32xf32, #tpu.memory_space<vmem>>, vector<144x8xf32>,
    %c8_11 = arith.constant 8 : index
    %c16 = arith.constant 16 : index
    %9 = vector.load %arg4[%c8_11, %c16] : memref<160x32xf32, #tpu.memory_space<vmem>>, vector<144x8xf32>
    %c16_12 = arith.constant 16 : index
    %c24 = arith.constant 24 : index
    %10 = vector.load %arg4[%c16_12, %c24] : memref<160x32xf32, #tpu.memory_space<vmem>>, vector<144x8xf32>
    %11 = arith.addf %9, %10 : vector<144x8xf32>
    %c0_13 = arith.constant 0 : index
    %c16_14 = arith.constant 16 : index
    %12 = vector.load %arg3[%c0_13, %c16_14] : memref<160x32xf32, #tpu.memory_space<vmem>>, vector<144x8xf32>
    tpu.vector_store %arg3[%c0_13, %c16_14], %11 {strides = array<i32>} : memref<160x32xf32, #tpu.memory_space<vmem>>, vector<144x8xf32>,
    %c0_15 = arith.constant 0 : index
    %c16_16 = arith.constant 16 : index
    %13 = vector.load %arg1[%c0_15, %c16_16] : memref<160x48xbf16, #tpu.memory_space<vmem>>, vector<160x32xbf16>
    %c1 = arith.constant 1 : index
    %c0_17 = arith.constant 0 : index
    %c0_18 = arith.constant 0 : index
    %14 = vector.load %arg2[%c1, %c0_17, %c0_18] : memref<2x32x32xbf16, #tpu.memory_space<vmem>>, vector<1x32x32xbf16>
    %15 = vector.shape_cast %14 : vector<1x32x32xbf16> to vector<32x32xbf16>
    %cst_19 = arith.constant dense<0.000000e+00> : vector<160x32xf32>
    %16 = tpu.matmul %13, %15, %cst_19 {dimension_numbers = #tpu.dot_dimension_numbers<[1], [0], [0], [1], [0, 0, 1, 1], [], []>} : vector<160x32xbf16>, vector<32x32xbf16>, vector<160x32xf32> -> vector<160x32xf32>
    %c0_20 = arith.constant 0 : index
    %c0_21 = arith.constant 0 : index
    %17 = vector.load %arg4[%c0_20, %c0_21] : memref<160x32xf32, #tpu.memory_space<vmem>>, vector<160x32xf32>
    tpu.vector_store %arg4[%c0_20, %c0_21], %16 {strides = array<i32>} : memref<160x32xf32, #tpu.memory_space<vmem>>, vector<160x32xf32>,
    %c0_22 = arith.constant 0 : index
    %c0_23 = arith.constant 0 : index
    %18 = vector.load %arg4[%c0_22, %c0_23] : memref<160x32xf32, #tpu.memory_space<vmem>>, vector<144x8xf32>
    %c8_24 = arith.constant 8 : index
    %c8_25 = arith.constant 8 : index
    %19 = vector.load %arg4[%c8_24, %c8_25] : memref<160x32xf32, #tpu.memory_space<vmem>>, vector<144x8xf32>
    %20 = arith.addf %18, %19 : vector<144x8xf32>
    %c0_26 = arith.constant 0 : index
    %c8_27 = arith.constant 8 : index
    %21 = vector.load %arg3[%c0_26, %c8_27] : memref<160x32xf32, #tpu.memory_space<vmem>>, vector<144x8xf32>
    tpu.vector_store %arg3[%c0_26, %c8_27], %20 {strides = array<i32>} : memref<160x32xf32, #tpu.memory_space<vmem>>, vector<144x8xf32>,
    %c8_28 = arith.constant 8 : index
    %c16_29 = arith.constant 16 : index
    %22 = vector.load %arg4[%c8_28, %c16_29] : memref<160x32xf32, #tpu.memory_space<vmem>>, vector<144x8xf32>
    %c16_30 = arith.constant 16 : index
    %c24_31 = arith.constant 24 : index
    %23 = vector.load %arg4[%c16_30, %c24_31] : memref<160x32xf32, #tpu.memory_space<vmem>>, vector<144x8xf32>
    %24 = arith.addf %22, %23 : vector<144x8xf32>
    %c0_32 = arith.constant 0 : index
    %c24_33 = arith.constant 24 : index
    %25 = vector.load %arg3[%c0_32, %c24_33] : memref<160x32xf32, #tpu.memory_space<vmem>>, vector<144x8xf32>
    tpu.vector_store %arg3[%c0_32, %c24_33], %24 {strides = array<i32>} : memref<160x32xf32, #tpu.memory_space<vmem>>, vector<144x8xf32>,
    %cst_34 = arith.constant 0.000000e+00 : f32
    %26 = vector.broadcast %cst_34 : f32 to vector<16x32xf32>
    %c144 = arith.constant 144 : index
    %c0_35 = arith.constant 0 : index
    %27 = vector.load %arg3[%c144, %c0_35] : memref<160x32xf32, #tpu.memory_space<vmem>>, vector<16x32xf32>
    tpu.vector_store %arg3[%c144, %c0_35], %26 {strides = array<i32>} : memref<160x32xf32, #tpu.memory_space<vmem>>, vector<16x32xf32>,
    return
  }
  func.func @transform_0(%arg0: i32) -> (i32, i32) {
    %c0_i32 = arith.constant 0 : i32
    %c0_i32_0 = arith.constant 0 : i32
    return %arg0, %c0_i32 : i32, i32
  }
  func.func @transform_1(%arg0: i32) -> (i32, i32, i32) {
    %c0_i32 = arith.constant 0 : i32
    %c0_i32_0 = arith.constant 0 : i32
    %c0_i32_1 = arith.constant 0 : i32
    %c0_i32_2 = arith.constant 0 : i32
    return %c0_i32, %c0_i32_0, %c0_i32_1 : i32, i32, i32
  }
  func.func @transform_2(%arg0: i32) -> (i32, i32) {
    %c0_i32 = arith.constant 0 : i32
    %c0_i32_0 = arith.constant 0 : i32
    return %arg0, %c0_i32 : i32, i32
  }
}

module attributes {stable_mosaic.version = 11 : i64} {
  func.func @_bn_stats_kernel(%arg0: i32, %arg1: memref<512x8xf32, #tpu.memory_space<vmem>>, %arg2: memref<2x8xf32, #tpu.memory_space<vmem>>) attributes {dimension_semantics = [#tpu.dimension_semantics<arbitrary>], iteration_bounds = array<i64: 1>, scalar_prefetch = 0 : i64, scratch_operands = 0 : i64, tpu.core_type = #tpu.core_type<tc>, window_params = [{transform_indices = @transform_0, window_bounds = array<i64: 512, 8>}, {pipeline_mode = #tpu.pipeline_mode<synchronous>, transform_indices = @transform_1, window_bounds = array<i64: 2, 8>}]} {
    %c0_i32 = arith.constant 0 : i32
    %0 = arith.cmpi eq, %arg0, %c0_i32 : i32
    %1 = arith.extui %0 : i1 to i32
    %c0_i32_0 = arith.constant 0 : i32
    %2 = arith.cmpi ne, %1, %c0_i32_0 : i32
    scf.if %2 {
      %cst_10 = arith.constant 0.000000e+00 : f32
      %15 = vector.broadcast %cst_10 : f32 to vector<2x8xf32>
      %c0_11 = arith.constant 0 : index
      %c0_12 = arith.constant 0 : index
      %16 = vector.load %arg2[%c0_11, %c0_12] : memref<2x8xf32, #tpu.memory_space<vmem>>, vector<2x8xf32>
      tpu.vector_store %arg2[%c0_11, %c0_12], %15 {strides = array<i32>} : memref<2x8xf32, #tpu.memory_space<vmem>>, vector<2x8xf32>,
    } else {
    }
    %c0 = arith.constant 0 : index
    %c0_1 = arith.constant 0 : index
    %3 = vector.load %arg1[%c0, %c0_1] : memref<512x8xf32, #tpu.memory_space<vmem>>, vector<512x8xf32>
    %c0_2 = arith.constant 0 : index
    %c0_3 = arith.constant 0 : index
    %4 = vector.load %arg2[%c0_2, %c0_3] : memref<2x8xf32, #tpu.memory_space<vmem>>, vector<1x8xf32>
    %cst = arith.constant dense<0.000000e+00> : vector<8xf32>
    %5 = vector.multi_reduction <add>, %3, %cst [0] : vector<512x8xf32> to vector<8xf32>
    %6 = vector.shape_cast %5 : vector<8xf32> to vector<1x8xf32>
    %7 = arith.addf %4, %6 : vector<1x8xf32>
    %c0_4 = arith.constant 0 : index
    %c0_5 = arith.constant 0 : index
    %8 = vector.load %arg2[%c0_4, %c0_5] : memref<2x8xf32, #tpu.memory_space<vmem>>, vector<1x8xf32>
    tpu.vector_store %arg2[%c0_4, %c0_5], %7 {strides = array<i32>} : memref<2x8xf32, #tpu.memory_space<vmem>>, vector<1x8xf32>,
    %c1 = arith.constant 1 : index
    %c0_6 = arith.constant 0 : index
    %9 = vector.load %arg2[%c1, %c0_6] : memref<2x8xf32, #tpu.memory_space<vmem>>, vector<1x8xf32>
    %10 = arith.mulf %3, %3 : vector<512x8xf32>
    %cst_7 = arith.constant dense<0.000000e+00> : vector<8xf32>
    %11 = vector.multi_reduction <add>, %10, %cst_7 [0] : vector<512x8xf32> to vector<8xf32>
    %12 = vector.shape_cast %11 : vector<8xf32> to vector<1x8xf32>
    %13 = arith.addf %9, %12 : vector<1x8xf32>
    %c1_8 = arith.constant 1 : index
    %c0_9 = arith.constant 0 : index
    %14 = vector.load %arg2[%c1_8, %c0_9] : memref<2x8xf32, #tpu.memory_space<vmem>>, vector<1x8xf32>
    tpu.vector_store %arg2[%c1_8, %c0_9], %13 {strides = array<i32>} : memref<2x8xf32, #tpu.memory_space<vmem>>, vector<1x8xf32>,
    return
  }
  func.func @transform_0(%arg0: i32) -> (i32, i32) {
    %c0_i32 = arith.constant 0 : i32
    %c0_i32_0 = arith.constant 0 : i32
    return %arg0, %c0_i32 : i32, i32
  }
  func.func @transform_1(%arg0: i32) -> (i32, i32) {
    %c0_i32 = arith.constant 0 : i32
    %c0_i32_0 = arith.constant 0 : i32
    %c0_i32_1 = arith.constant 0 : i32
    return %c0_i32, %c0_i32_0 : i32, i32
  }
}

module attributes {stable_mosaic.version = 11 : i64} {
  func.func @_bn_apply_relu_kernel(%arg0: i32, %arg1: memref<512x8xf32, #tpu.memory_space<vmem>>, %arg2: memref<1x8xf32, #tpu.memory_space<vmem>>, %arg3: memref<1x8xf32, #tpu.memory_space<vmem>>, %arg4: memref<512x8xf32, #tpu.memory_space<vmem>>) attributes {dimension_semantics = [#tpu.dimension_semantics<parallel>], iteration_bounds = array<i64: 1>, scalar_prefetch = 0 : i64, scratch_operands = 0 : i64, tpu.core_type = #tpu.core_type<tc>, window_params = [{transform_indices = @transform_0, window_bounds = array<i64: 512, 8>}, {pipeline_mode = #tpu.pipeline_mode<synchronous>, transform_indices = @transform_1, window_bounds = array<i64: 1, 8>}, {pipeline_mode = #tpu.pipeline_mode<synchronous>, transform_indices = @transform_2, window_bounds = array<i64: 1, 8>}, {transform_indices = @transform_3, window_bounds = array<i64: 512, 8>}]} {
    %c0 = arith.constant 0 : index
    %c0_0 = arith.constant 0 : index
    %0 = vector.load %arg1[%c0, %c0_0] : memref<512x8xf32, #tpu.memory_space<vmem>>, vector<512x8xf32>
    %c0_1 = arith.constant 0 : index
    %c0_2 = arith.constant 0 : index
    %1 = vector.load %arg2[%c0_1, %c0_2] : memref<1x8xf32, #tpu.memory_space<vmem>>, vector<1x8xf32>
    %2 = vector.broadcast %1 : vector<1x8xf32> to vector<512x8xf32>
    %3 = arith.mulf %0, %2 : vector<512x8xf32>
    %c0_3 = arith.constant 0 : index
    %c0_4 = arith.constant 0 : index
    %4 = vector.load %arg3[%c0_3, %c0_4] : memref<1x8xf32, #tpu.memory_space<vmem>>, vector<1x8xf32>
    %5 = vector.broadcast %4 : vector<1x8xf32> to vector<512x8xf32>
    %6 = arith.addf %3, %5 : vector<512x8xf32>
    %cst = arith.constant 0.000000e+00 : f32
    %7 = vector.broadcast %cst : f32 to vector<512x8xf32>
    %8 = arith.maximumf %6, %7 : vector<512x8xf32>
    %c0_5 = arith.constant 0 : index
    %c0_6 = arith.constant 0 : index
    %9 = vector.load %arg4[%c0_5, %c0_6] : memref<512x8xf32, #tpu.memory_space<vmem>>, vector<512x8xf32>
    tpu.vector_store %arg4[%c0_5, %c0_6], %8 {strides = array<i32>} : memref<512x8xf32, #tpu.memory_space<vmem>>, vector<512x8xf32>,
    return
  }
  func.func @transform_0(%arg0: i32) -> (i32, i32) {
    %c0_i32 = arith.constant 0 : i32
    %c0_i32_0 = arith.constant 0 : i32
    return %arg0, %c0_i32 : i32, i32
  }
  func.func @transform_1(%arg0: i32) -> (i32, i32) {
    %c0_i32 = arith.constant 0 : i32
    %c0_i32_0 = arith.constant 0 : i32
    %c0_i32_1 = arith.constant 0 : i32
    return %c0_i32, %c0_i32_0 : i32, i32
  }
  func.func @transform_2(%arg0: i32) -> (i32, i32) {
    %c0_i32 = arith.constant 0 : i32
    %c0_i32_0 = arith.constant 0 : i32
    %c0_i32_1 = arith.constant 0 : i32
    return %c0_i32, %c0_i32_0 : i32, i32
  }
  func.func @transform_3(%arg0: i32) -> (i32, i32) {
    %c0_i32 = arith.constant 0 : i32
    %c0_i32_0 = arith.constant 0 : i32
    return %arg0, %c0_i32 : i32, i32
  }
}

module attributes {stable_mosaic.version = 11 : i64} {
  func.func @_convt_kernel(%arg0: i32, %arg1: memref<576x24xbf16, #tpu.memory_space<vmem>>, %arg2: memref<2x16x12xbf16, #tpu.memory_space<vmem>>, %arg3: memref<576x12xf32, #tpu.memory_space<vmem>>, %arg4: memref<576x12xf32, #tpu.memory_space<vmem>>) attributes {dimension_semantics = [#tpu.dimension_semantics<parallel>], iteration_bounds = array<i64: 1>, scalar_prefetch = 0 : i64, scratch_operands = 1 : i64, tpu.core_type = #tpu.core_type<tc>, window_params = [{transform_indices = @transform_0, window_bounds = array<i64: 576, 24>}, {pipeline_mode = #tpu.pipeline_mode<synchronous>, transform_indices = @transform_1, window_bounds = array<i64: 2, 16, 12>}, {transform_indices = @transform_2, window_bounds = array<i64: 576, 12>}]} {
    %c0 = arith.constant 0 : index
    %c0_0 = arith.constant 0 : index
    %0 = vector.load %arg1[%c0, %c0_0] : memref<576x24xbf16, #tpu.memory_space<vmem>>, vector<576x16xbf16>
    %c0_1 = arith.constant 0 : index
    %c0_2 = arith.constant 0 : index
    %c0_3 = arith.constant 0 : index
    %1 = vector.load %arg2[%c0_1, %c0_2, %c0_3] : memref<2x16x12xbf16, #tpu.memory_space<vmem>>, vector<1x16x12xbf16>
    %2 = vector.shape_cast %1 : vector<1x16x12xbf16> to vector<16x12xbf16>
    %cst = arith.constant dense<0.000000e+00> : vector<576x12xf32>
    %3 = tpu.matmul %0, %2, %cst {dimension_numbers = #tpu.dot_dimension_numbers<[1], [0], [0], [1], [0, 0, 1, 1], [], []>} : vector<576x16xbf16>, vector<16x12xbf16>, vector<576x12xf32> -> vector<576x12xf32>
    %c0_4 = arith.constant 0 : index
    %c0_5 = arith.constant 0 : index
    %4 = vector.load %arg4[%c0_4, %c0_5] : memref<576x12xf32, #tpu.memory_space<vmem>>, vector<576x12xf32>
    tpu.vector_store %arg4[%c0_4, %c0_5], %3 {strides = array<i32>} : memref<576x12xf32, #tpu.memory_space<vmem>>, vector<576x12xf32>,
    %c0_6 = arith.constant 0 : index
    %c0_7 = arith.constant 0 : index
    %5 = vector.load %arg4[%c0_6, %c0_7] : memref<576x12xf32, #tpu.memory_space<vmem>>, vector<544x3xf32>
    %c16 = arith.constant 16 : index
    %c3 = arith.constant 3 : index
    %6 = vector.load %arg4[%c16, %c3] : memref<576x12xf32, #tpu.memory_space<vmem>>, vector<544x3xf32>
    %7 = arith.addf %5, %6 : vector<544x3xf32>
    %8 = math.tanh %7 : vector<544x3xf32>
    %c0_8 = arith.constant 0 : index
    %c0_9 = arith.constant 0 : index
    %9 = vector.load %arg3[%c0_8, %c0_9] : memref<576x12xf32, #tpu.memory_space<vmem>>, vector<544x3xf32>
    tpu.vector_store %arg3[%c0_8, %c0_9], %8 {strides = array<i32>} : memref<576x12xf32, #tpu.memory_space<vmem>>, vector<544x3xf32>,
    %c16_10 = arith.constant 16 : index
    %c6 = arith.constant 6 : index
    %10 = vector.load %arg4[%c16_10, %c6] : memref<576x12xf32, #tpu.memory_space<vmem>>, vector<544x3xf32>
    %c32 = arith.constant 32 : index
    %c9 = arith.constant 9 : index
    %11 = vector.load %arg4[%c32, %c9] : memref<576x12xf32, #tpu.memory_space<vmem>>, vector<544x3xf32>
    %12 = arith.addf %10, %11 : vector<544x3xf32>
    %13 = math.tanh %12 : vector<544x3xf32>
    %c0_11 = arith.constant 0 : index
    %c6_12 = arith.constant 6 : index
    %14 = vector.load %arg3[%c0_11, %c6_12] : memref<576x12xf32, #tpu.memory_space<vmem>>, vector<544x3xf32>
    tpu.vector_store %arg3[%c0_11, %c6_12], %13 {strides = array<i32>} : memref<576x12xf32, #tpu.memory_space<vmem>>, vector<544x3xf32>,
    %c0_13 = arith.constant 0 : index
    %c8 = arith.constant 8 : index
    %15 = vector.load %arg1[%c0_13, %c8] : memref<576x24xbf16, #tpu.memory_space<vmem>>, vector<576x16xbf16>
    %c1 = arith.constant 1 : index
    %c0_14 = arith.constant 0 : index
    %c0_15 = arith.constant 0 : index
    %16 = vector.load %arg2[%c1, %c0_14, %c0_15] : memref<2x16x12xbf16, #tpu.memory_space<vmem>>, vector<1x16x12xbf16>
    %17 = vector.shape_cast %16 : vector<1x16x12xbf16> to vector<16x12xbf16>
    %cst_16 = arith.constant dense<0.000000e+00> : vector<576x12xf32>
    %18 = tpu.matmul %15, %17, %cst_16 {dimension_numbers = #tpu.dot_dimension_numbers<[1], [0], [0], [1], [0, 0, 1, 1], [], []>} : vector<576x16xbf16>, vector<16x12xbf16>, vector<576x12xf32> -> vector<576x12xf32>
    %c0_17 = arith.constant 0 : index
    %c0_18 = arith.constant 0 : index
    %19 = vector.load %arg4[%c0_17, %c0_18] : memref<576x12xf32, #tpu.memory_space<vmem>>, vector<576x12xf32>
    tpu.vector_store %arg4[%c0_17, %c0_18], %18 {strides = array<i32>} : memref<576x12xf32, #tpu.memory_space<vmem>>, vector<576x12xf32>,
    %c0_19 = arith.constant 0 : index
    %c0_20 = arith.constant 0 : index
    %20 = vector.load %arg4[%c0_19, %c0_20] : memref<576x12xf32, #tpu.memory_space<vmem>>, vector<544x3xf32>
    %c16_21 = arith.constant 16 : index
    %c3_22 = arith.constant 3 : index
    %21 = vector.load %arg4[%c16_21, %c3_22] : memref<576x12xf32, #tpu.memory_space<vmem>>, vector<544x3xf32>
    %22 = arith.addf %20, %21 : vector<544x3xf32>
    %23 = math.tanh %22 : vector<544x3xf32>
    %c0_23 = arith.constant 0 : index
    %c3_24 = arith.constant 3 : index
    %24 = vector.load %arg3[%c0_23, %c3_24] : memref<576x12xf32, #tpu.memory_space<vmem>>, vector<544x3xf32>
    tpu.vector_store %arg3[%c0_23, %c3_24], %23 {strides = array<i32>} : memref<576x12xf32, #tpu.memory_space<vmem>>, vector<544x3xf32>,
    %c16_25 = arith.constant 16 : index
    %c6_26 = arith.constant 6 : index
    %25 = vector.load %arg4[%c16_25, %c6_26] : memref<576x12xf32, #tpu.memory_space<vmem>>, vector<544x3xf32>
    %c32_27 = arith.constant 32 : index
    %c9_28 = arith.constant 9 : index
    %26 = vector.load %arg4[%c32_27, %c9_28] : memref<576x12xf32, #tpu.memory_space<vmem>>, vector<544x3xf32>
    %27 = arith.addf %25, %26 : vector<544x3xf32>
    %28 = math.tanh %27 : vector<544x3xf32>
    %c0_29 = arith.constant 0 : index
    %c9_30 = arith.constant 9 : index
    %29 = vector.load %arg3[%c0_29, %c9_30] : memref<576x12xf32, #tpu.memory_space<vmem>>, vector<544x3xf32>
    tpu.vector_store %arg3[%c0_29, %c9_30], %28 {strides = array<i32>} : memref<576x12xf32, #tpu.memory_space<vmem>>, vector<544x3xf32>,
    %cst_31 = arith.constant 0.000000e+00 : f32
    %30 = vector.broadcast %cst_31 : f32 to vector<32x12xf32>
    %c544 = arith.constant 544 : index
    %c0_32 = arith.constant 0 : index
    %31 = vector.load %arg3[%c544, %c0_32] : memref<576x12xf32, #tpu.memory_space<vmem>>, vector<32x12xf32>
    tpu.vector_store %arg3[%c544, %c0_32], %30 {strides = array<i32>} : memref<576x12xf32, #tpu.memory_space<vmem>>, vector<32x12xf32>,
    return
  }
  func.func @transform_0(%arg0: i32) -> (i32, i32) {
    %c0_i32 = arith.constant 0 : i32
    %c0_i32_0 = arith.constant 0 : i32
    return %arg0, %c0_i32 : i32, i32
  }
  func.func @transform_1(%arg0: i32) -> (i32, i32, i32) {
    %c0_i32 = arith.constant 0 : i32
    %c0_i32_0 = arith.constant 0 : i32
    %c0_i32_1 = arith.constant 0 : i32
    %c0_i32_2 = arith.constant 0 : i32
    return %c0_i32, %c0_i32_0, %c0_i32_1 : i32, i32, i32
  }
  func.func @transform_2(%arg0: i32) -> (i32, i32) {
    %c0_i32 = arith.constant 0 : i32
    %c0_i32_0 = arith.constant 0 : i32
    return %arg0, %c0_i32 : i32, i32
  }
}

</mosaic_0001>

<llo_original>
// kernel: netg_forward.11
$region0: #{netg_forward.11}
  #allocation0 [shape = 'u32[]', space=smem, size = 0x4, offset = 0x4, fixed_abs, tag = 'smem constant byte address 0x4 - core index']
  #allocation1 [shape = 'u32[144,128]{1,0:T(1,128)}', space=vmem, size = 0x12000, scoped, tag = 'internal scratch']
  %s0 = inlined_call_operand.vmem [shape: bf16[2,16], index: 0, kind: input, shape index: {}]
  %s1 = inlined_call_operand.vmem [shape: bf16[16,256], index: 1, kind: input, shape index: {}]
  %s2 = inlined_call_operand.vmem [shape: f32[2,256], index: 2, kind: output, shape index: {}]
  %s3 = sld [smem:[#allocation0]]
  $region18: #{netg_forward.11} parent=0
    _
  %s5 = ssub.s32 1, %s3
  %s6 = scalar_select 0, %s5, %s3
  // Predicated region
  $region2: #{netg_forward.11} parent=0 // pred_check
    _
  $region3: #{netg_forward.11} parent=0 // pred_check_branch
    %8 = sbr.rel (0) target = $region5
  $region4: #{netg_forward.11} parent=0 // pred_region
    _
  $region5: #{netg_forward.11} parent=0 // pred_fallthru
    _
  // Predicated region
  $region6: #{netg_forward.11} parent=0 // pred_check
    _
  $region7: #{netg_forward.11} parent=0 // pred_check_branch
    %10 = sbr.rel (0) target = $region9
  $region8: #{netg_forward.11} parent=0 // pred_region
    _
  $region9: #{netg_forward.11} parent=0 // pred_fallthru
    _
  %v12 = vld [vmem:[%s0] sm:$0x1]
  %v13 = vld [vmem:[%s1] sm:$0xff]
  %v14 = vld [vmem:[%s1 + $0x8] sm:$0xff]
  %v17 = vunpack.c.l.b16 %v13
  %v18 = vunpack.c.h.b16 %v13
  %v19 = vunpack.c.l.b16 %v14
  %v20 = vunpack.c.h.b16 %v14
  %v21 = vpack.c.b16 %v19, %v17
  %v22 = vpack.c.b16 %v20, %v18
  %vm25 = vcmask 130048
  %v27 = vsel %vm25, %v12, 0
  %29 = vmatprep.subr.bf16.mxu0 %v22
  %30 = vmatpush1.bf16.msra.mxu0 %v21
  %31 = vmatprep.subr.bf16.mxu0 0
  %32 = vmatpush1.bf16.msra.mxu0 0
  %33 = vmatprep.subr.bf16.mxu0 0
  %34 = vmatpush1.bf16.msra.mxu0 0
  %35 = vmatprep.subr.bf16.mxu0 0
  %36 = vmatpush1.bf16.msra.mxu0 0
  %37 = vmatprep.subr.bf16.mxu0 0
  %38 = vmatpush1.bf16.msra.mxu0 0
  %39 = vmatprep.subr.bf16.mxu0 0
  %40 = vmatpush1.bf16.msra.mxu0 0
  %41 = vmatprep.subr.bf16.mxu0 0
  %42 = vmatpush1.bf16.msra.mxu0 0
  %43 = vmatprep.subr.bf16.mxu0 0
  %44 = vmatpush1.bf16.msra.mxu0 0
  %45 = vmatprep.subr.bf16.mxu0 0
  %46 = vmatpush1.bf16.msra.mxu0 0
  %47 = vmatprep.subr.bf16.mxu0 0
  %48 = vmatpush1.bf16.msra.mxu0 0
  %49 = vmatprep.subr.bf16.mxu0 0
  %50 = vmatpush1.bf16.msra.mxu0 0
  %51 = vmatprep.subr.bf16.mxu0 0
  %52 = vmatpush1.bf16.msra.mxu0 0
  %53 = vmatprep.subr.bf16.mxu0 0
  %54 = vmatpush1.bf16.msra.mxu0 0
  %55 = vmatprep.subr.bf16.mxu0 0
  %56 = vmatpush1.bf16.msra.mxu0 0
  %57 = vmatprep.subr.bf16.mxu0 0
  %58 = vmatpush1.bf16.msra.mxu0 0
  %59 = vmatprep.subr.bf16.mxu0 0
  %60 = vmatpush1.bf16.msra.mxu0 0
  %61 = vmatprep.mubr.bf16.mxu0 0
  %62 = vmatmul.mubr.bf16.gmra.mrb[0].mxu0 %v27
  %v63 = vpop.f32.mrb[0].mxu0
  %v64 = vadd.f32 0.0, %v63
  %v65 = vpop.f32.mrb[0].mxu0
  %v66 = vadd.f32 0.0, %v65
  %v67 = vpop.f32.mrb[0].mxu0
  %v68 = vpop.f32.mrb[0].mxu0
  %69 = vdwg.mxu0
  %v70 = vmax.f32 %v64, 0.0
  %v71 = vmax.f32 %v66, 0.0
  %v74 = vcombine.low %v70, %v71
  %v76 = vunpack.c.l.s4 1983009808
  %v77 = vunpack.c.0.s8 %v76
  %v78 = vlaneseq
  %v79 = vshrl.u32 %v78, 7
  %v80 = vsub.s32 %v77, %v79
  %v81 = vrot.slane %v74, %v80
  %83 = vst [vmem:[%s2] sm:$0xf] %v81
  // Predicated region
  $region10: #{netg_forward.11} parent=0 // pred_check
    _
  $region11: #{netg_forward.11} parent=0 // pred_check_branch
    %85 = sbr.rel (0) target = $region13
  $region12: #{netg_forward.11} parent=0 // pred_region
    _
  $region13: #{netg_forward.11} parent=0 // pred_fallthru
    _
  // Predicated region
  $region14: #{netg_forward.11} parent=0 // pred_check
    _
  $region15: #{netg_forward.11} parent=0 // pred_check_branch
    %87 = sbr.rel (0) target = $region17
  $region16: #{netg_forward.11} parent=0 // pred_region
    _
  $region17: #{netg_forward.11} parent=0 // pred_fallthru
    _

// kernel: netg_forward.12
$region0: #{netg_forward.12}
  #allocation0 [shape = 'u32[]', space=smem, size = 0x4, offset = 0x4, fixed_abs, tag = 'smem constant byte address 0x4 - core index']
  #allocation1 [shape = 'u32[144,128]{1,0:T(1,128)}', space=vmem, size = 0x12000, scoped, tag = 'internal scratch']
  #allocation2 [shape = 'f32[16,128]{1,0:T(8,128)}', space=vmem, size = 0x2000, scoped, tag = 'scratch operand']
  %s0 = inlined_call_operand.vmem [shape: bf16[16,192], index: 0, kind: input, shape index: {}]
  %s1 = inlined_call_operand.vmem [shape: bf16[2,128,128], index: 1, kind: input, shape index: {}]
  %s2 = inlined_call_operand.vmem [shape: f32[16,128], index: 2, kind: output, shape index: {}]
  %s3 = sld [smem:[#allocation0]]
  $region18: #{netg_forward.12} parent=0
    _
  %s5 = ssub.s32 1, %s3
  %s6 = scalar_select 0, %s5, %s3
  // Predicated region
  $region2: #{netg_forward.12} parent=0 // pred_check
    _
  $region3: #{netg_forward.12} parent=0 // pred_check_branch
    %8 = sbr.rel (0) target = $region5
  $region4: #{netg_forward.12} parent=0 // pred_region
    _
  $region5: #{netg_forward.12} parent=0 // pred_fallthru
    _
  // Predicated region
  $region6: #{netg_forward.12} parent=0 // pred_check
    _
  $region7: #{netg_forward.12} parent=0 // pred_check_branch
    %10 = sbr.rel (0) target = $region9
  $region8: #{netg_forward.12} parent=0 // pred_region
    _
  $region9: #{netg_forward.12} parent=0 // pred_fallthru
    _
  %v12 = vld [vmem:[%s0] sm:$0xf]
  %v13 = vld [vmem:[%s0 + $0x8] sm:$0xf]
  %v14 = vld [vmem:[%s1] sm:$0xf]
  %v15 = vld [vmem:[%s1 + $0x4] sm:$0xf]
  %v16 = vld [vmem:[%s1 + $0x8] sm:$0xf]
  %v17 = vld [vmem:[%s1 + $0xc] sm:$0xf]
  %v18 = vld [vmem:[%s1 + $0x10] sm:$0xf]
  %v19 = vld [vmem:[%s1 + $0x14] sm:$0xf]
  %v20 = vld [vmem:[%s1 + $0x18] sm:$0xf]
  %v21 = vld [vmem:[%s1 + $0x1c] sm:$0xf]
  %v22 = vld [vmem:[%s1 + $0x20] sm:$0xf]
  %v23 = vld [vmem:[%s1 + $0x24] sm:$0xf]
  %v24 = vld [vmem:[%s1 + $0x28] sm:$0xf]
  %v25 = vld [vmem:[%s1 + $0x2c] sm:$0xf]
  %v26 = vld [vmem:[%s1 + $0x30] sm:$0xf]
  %v27 = vld [vmem:[%s1 + $0x34] sm:$0xf]
  %v28 = vld [vmem:[%s1 + $0x38] sm:$0xf]
  %v29 = vld [vmem:[%s1 + $0x3c] sm:$0xf]
  %v32 = vunpack.c.l.b16 %v12
  %v33 = vunpack.c.l.b16 %v13
  %v34 = vpack.c.b16 %v33, %v32
  %v52 = vunpack.c.l.b16 %v14
  %v53 = vunpack.c.l.b16 %v15
  %v54 = vunpack.c.l.b16 %v16
  %v55 = vunpack.c.l.b16 %v17
  %v56 = vunpack.c.l.b16 %v18
  %v57 = vunpack.c.l.b16 %v19
  %v58 = vunpack.c.l.b16 %v20
  %v59 = vunpack.c.l.b16 %v21
  %v60 = vunpack.c.l.b16 %v22
  %v61 = vunpack.c.l.b16 %v23
  %v62 = vunpack.c.l.b16 %v24
  %v63 = vunpack.c.l.b16 %v25
  %v64 = vunpack.c.l.b16 %v26
  %v65 = vunpack.c.l.b16 %v27
  %v66 = vunpack.c.l.b16 %v28
  %v67 = vunpack.c.l.b16 %v29
  %v68 = vpack.c.b16 %v53, %v52
  %v69 = vpack.c.b16 %v55, %v54
  %v70 = vpack.c.b16 %v57, %v56
  %v71 = vpack.c.b16 %v59, %v58
  %v72 = vpack.c.b16 %v61, %v60
  %v73 = vpack.c.b16 %v63, %v62
  %v74 = vpack.c.b16 %v65, %v64
  %v75 = vpack.c.b16 %v67, %v66
  %84 = vmatprep.subr.bf16.mxu0 0
  %85 = vmatpush1.bf16.msra.mxu0 %v68
  %86 = vmatprep.subr.bf16.mxu0 0
  %87 = vmatpush1.bf16.msra.mxu0 %v69
  %88 = vmatprep.subr.bf16.mxu0 0
  %89 = vmatpush1.bf16.msra.mxu0 %v70
  %90 = vmatprep.subr.bf16.mxu0 0
  %91 = vmatpush1.bf16.msra.mxu0 %v71
  %92 = vmatprep.subr.bf16.mxu0 0
  %93 = vmatpush1.bf16.msra.mxu0 %v72
  %94 = vmatprep.subr.bf16.mxu0 0
  %95 = vmatpush1.bf16.msra.mxu0 %v73
  %96 = vmatprep.subr.bf16.mxu0 0
  %97 = vmatpush1.bf16.msra.mxu0 %v74
  %98 = vmatprep.subr.bf16.mxu0 0
  %99 = vmatpush1.bf16.msra.mxu0 %v75
  %100 = vmatprep.subr.bf16.mxu0 0
  %101 = vmatpush1.bf16.msra.mxu0 0
  %102 = vmatprep.subr.bf16.mxu0 0
  %103 = vmatpush1.bf16.msra.mxu0 0
  %104 = vmatprep.subr.bf16.mxu0 0
  %105 = vmatpush1.bf16.msra.mxu0 0
  %106 = vmatprep.subr.bf16.mxu0 0
  %107 = vmatpush1.bf16.msra.mxu0 0
  %108 = vmatprep.subr.bf16.mxu0 0
  %109 = vmatpush1.bf16.msra.mxu0 0
  %110 = vmatprep.subr.bf16.mxu0 0
  %111 = vmatpush1.bf16.msra.mxu0 0
  %112 = vmatprep.subr.bf16.mxu0 0
  %113 = vmatpush1.bf16.msra.mxu0 0
  %114 = vmatprep.subr.bf16.mxu0 0
  %115 = vmatpush1.bf16.msra.mxu0 0
  %116 = vmatprep.mubr.bf16.mxu0 0
  %117 = vmatmul.mubr.bf16.gmra.mrb[0].mxu0 %v34
  %v118 = vpop.f32.mrb[0].mxu0
  %v119 = vadd.f32 0.0, %v118
  %v120 = vpop.f32.mrb[0].mxu0
  %v121 = vpop.f32.mrb[0].mxu0
  %v122 = vadd.f32 0.0, %v121
  %v123 = vpop.f32.mrb[0].mxu0
  %124 = vdwg.mxu0
  %125 = vst [vmem:[#allocation2] sm:$0xff] %v119
  %126 = vst [vmem:[#allocation2 + $0x8] sm:$0xff] %v122
  %v127 = vld [vmem:[#allocation2] sm:$0xff]
  %v128 = vld [vmem:[#allocation2 + $0x8] sm:$0xf]
  %v129 = vld [vmem:[#allocation2 + $0x2] sm:$0xff]
  %v130 = vld [vmem:[#allocation2 + $0xa] sm:$0xf]
  %133 = vrot.lane.b32.xlu0 %v129, 96
  %v134 = vpop.permute.xlu0 %133
  %135 = vrot.lane.b32.xlu0 %v130, 96
  %v136 = vpop.permute.xlu0 %135
  %v139 = vadd.f32 %v127, %v134
  %v140 = vadd.f32 %v128, %v136
  %vm141 = vcmask 261120
  %142 = vst.msk [vmem:[%s2] sm:$0xff] %vm141, %v139
  %vm143 = vcmask 257024
  %144 = vst.msk [vmem:[%s2 + $0x8] sm:$0xf] %vm143, %v140
  %v145 = vld [vmem:[#allocation2 + $0x2] sm:$0xff]
  %v146 = vld [vmem:[#allocation2 + $0xa] sm:$0xf]
  %v147 = vld [vmem:[#allocation2 + $0x4] sm:$0xff]
  %v148 = vld [vmem:[#allocation2 + $0xc] sm:$0xf]
  %151 = vrot.lane.b32.xlu0 %v147, 96
  %v152 = vpop.permute.xlu0 %151
  %153 = vrot.lane.b32.xlu0 %v148, 96
  %v154 = vpop.permute.xlu0 %153
  %v157 = vadd.f32 %v145, %v152
  %v158 = vadd.f32 %v146, %v154
  %vm159 = vcmask 785920
  %160 = vst.msk [vmem:[%s2] sm:$0xff] %vm159, %v157
  %vm161 = vcmask 781824
  %162 = vst.msk [vmem:[%s2 + $0x8] sm:$0xf] %vm161, %v158
  %v163 = vld [vmem:[%s0] sm:$0xff]
  %v164 = vld [vmem:[%s0 + $0x8] sm:$0xff]
  %s165 = scalar_lea.vmem %s1, 64
  %v166 = vld [vmem:[%s165] sm:$0xf]
  %v167 = vld [vmem:[%s165 + $0x4] sm:$0xf]
  %v168 = vld [vmem:[%s165 + $0x8] sm:$0xf]
  %v169 = vld [vmem:[%s165 + $0xc] sm:$0xf]
  %v170 = vld [vmem:[%s165 + $0x10] sm:$0xf]
  %v171 = vld [vmem:[%s165 + $0x14] sm:$0xf]
  %v172 = vld [vmem:[%s165 + $0x18] sm:$0xf]
  %v173 = vld [vmem:[%s165 + $0x1c] sm:$0xf]
  %v174 = vld [vmem:[%s165 + $0x20] sm:$0xf]
  %v175 = vld [vmem:[%s165 + $0x24] sm:$0xf]
  %v176 = vld [vmem:[%s165 + $0x28] sm:$0xf]
  %v177 = vld [vmem:[%s165 + $0x2c] sm:$0xf]
  %v178 = vld [vmem:[%s165 + $0x30] sm:$0xf]
  %v179 = vld [vmem:[%s165 + $0x34] sm:$0xf]
  %v180 = vld [vmem:[%s165 + $0x38] sm:$0xf]
  %v181 = vld [vmem:[%s165 + $0x3c] sm:$0xf]
  %v184 = vunpack.c.l.b16 %v163
  %v185 = vunpack.c.h.b16 %v163
  %v186 = vunpack.c.l.b16 %v164
  %v187 = vunpack.c.h.b16 %v164
  %v188 = vpack.c.b16 %v186, %v184
  %v189 = vpack.c.b16 %v187, %v185
  %190 = vrot.lane.b32.xlu0 %v188, 64
  %v191 = vpop.permute.xlu0 %190
  %192 = vrot.lane.b32.xlu0 %v189, 64
  %v193 = vpop.permute.xlu0 %192
  %vm194 = vcmask 523264
  %v195 = vsel %vm194, %v191, %v193
  %v213 = vunpack.c.l.b16 %v166
  %v214 = vunpack.c.l.b16 %v167
  %v215 = vunpack.c.l.b16 %v168
  %v216 = vunpack.c.l.b16 %v169
  %v217 = vunpack.c.l.b16 %v170
  %v218 = vunpack.c.l.b16 %v171
  %v219 = vunpack.c.l.b16 %v172
  %v220 = vunpack.c.l.b16 %v173
  %v221 = vunpack.c.l.b16 %v174
  %v222 = vunpack.c.l.b16 %v175
  %v223 = vunpack.c.l.b16 %v176
  %v224 = vunpack.c.l.b16 %v177
  %v225 = vunpack.c.l.b16 %v178
  %v226 = vunpack.c.l.b16 %v179
  %v227 = vunpack.c.l.b16 %v180
  %v228 = vunpack.c.l.b16 %v181
  %v229 = vpack.c.b16 %v214, %v213
  %v230 = vpack.c.b16 %v216, %v215
  %v231 = vpack.c.b16 %v218, %v217
  %v232 = vpack.c.b16 %v220, %v219
  %v233 = vpack.c.b16 %v222, %v221
  %v234 = vpack.c.b16 %v224, %v223
  %v235 = vpack.c.b16 %v226, %v225
  %v236 = vpack.c.b16 %v228, %v227
  %245 = vmatprep.subr.bf16.mxu0 0
  %246 = vmatpush1.bf16.msra.mxu0 %v229
  %247 = vmatprep.subr.bf16.mxu0 0
  %248 = vmatpush1.bf16.msra.mxu0 %v230
  %249 = vmatprep.subr.bf16.mxu0 0
  %250 = vmatpush1.bf16.msra.mxu0 %v231
  %251 = vmatprep.subr.bf16.mxu0 0
  %252 = vmatpush1.bf16.msra.mxu0 %v232
  %253 = vmatprep.subr.bf16.mxu0 0
  %254 = vmatpush1.bf16.msra.mxu0 %v233
  %255 = vmatprep.subr.bf16.mxu0 0
  %256 = vmatpush1.bf16.msra.mxu0 %v234
  %257 = vmatprep.subr.bf16.mxu0 0
  %258 = vmatpush1.bf16.msra.mxu0 %v235
  %259 = vmatprep.subr.bf16.mxu0 0
  %260 = vmatpush1.bf16.msra.mxu0 %v236
  %261 = vmatprep.subr.bf16.mxu0 0
  %262 = vmatpush1.bf16.msra.mxu0 0
  %263 = vmatprep.subr.bf16.mxu0 0
  %264 = vmatpush1.bf16.msra.mxu0 0
  %265 = vmatprep.subr.bf16.mxu0 0
  %266 = vmatpush1.bf16.msra.mxu0 0
  %267 = vmatprep.subr.bf16.mxu0 0
  %268 = vmatpush1.bf16.msra.mxu0 0
  %269 = vmatprep.subr.bf16.mxu0 0
  %270 = vmatpush1.bf16.msra.mxu0 0
  %271 = vmatprep.subr.bf16.mxu0 0
  %272 = vmatpush1.bf16.msra.mxu0 0
  %273 = vmatprep.subr.bf16.mxu0 0
  %274 = vmatpush1.bf16.msra.mxu0 0
  %275 = vmatprep.subr.bf16.mxu0 0
  %276 = vmatpush1.bf16.msra.mxu0 0
  %277 = vmatprep.mubr.bf16.mxu0 0
  %278 = vmatmul.mubr.bf16.gmra.mrb[0].mxu0 %v195
  %v279 = vpop.f32.mrb[0].mxu0
  %v280 = vadd.f32 0.0, %v279
  %v281 = vpop.f32.mrb[0].mxu0
  %v282 = vpop.f32.mrb[0].mxu0
  %v283 = vadd.f32 0.0, %v282
  %v284 = vpop.f32.mrb[0].mxu0
  %285 = vdwg.mxu0
  %286 = vst [vmem:[#allocation2] sm:$0xff] %v280
  %287 = vst [vmem:[#allocation2 + $0x8] sm:$0xff] %v283
  %v288 = vld [vmem:[#allocation2] sm:$0xff]
  %v289 = vld [vmem:[#allocation2 + $0x8] sm:$0xf]
  %v290 = vld [vmem:[#allocation2 + $0x2] sm:$0xff]
  %v291 = vld [vmem:[#allocation2 + $0xa] sm:$0xf]
  %294 = vrot.lane.b32.xlu0 %v290, 96
  %v295 = vpop.permute.xlu0 %294
  %296 = vrot.lane.b32.xlu0 %v291, 96
  %v297 = vpop.permute.xlu0 %296
  %v300 = vadd.f32 %v288, %v295
  %v301 = vadd.f32 %v289, %v297
  %304 = vrot.lane.b32.xlu0 %v300, 32
  %v305 = vpop.permute.xlu0 %304
  %306 = vrot.lane.b32.xlu0 %v301, 32
  %v307 = vpop.permute.xlu0 %306
  %vm310 = vcmask 523520
  %311 = vst.msk [vmem:[%s2] sm:$0xff] %vm310, %v305
  %vm312 = vcmask 519424
  %313 = vst.msk [vmem:[%s2 + $0x8] sm:$0xf] %vm312, %v307
  %v314 = vld [vmem:[#allocation2 + $0x2] sm:$0xff]
  %v315 = vld [vmem:[#allocation2 + $0xa] sm:$0xf]
  %v316 = vld [vmem:[#allocation2 + $0x4] sm:$0xff]
  %v317 = vld [vmem:[#allocation2 + $0xc] sm:$0xf]
  %320 = vrot.lane.b32.xlu0 %v316, 96
  %v321 = vpop.permute.xlu0 %320
  %322 = vrot.lane.b32.xlu0 %v317, 96
  %v323 = vpop.permute.xlu0 %322
  %v326 = vadd.f32 %v314, %v321
  %v327 = vadd.f32 %v315, %v323
  %330 = vrot.lane.b32.xlu0 %v326, 32
  %v331 = vpop.permute.xlu0 %330
  %332 = vrot.lane.b32.xlu0 %v327, 32
  %v333 = vpop.permute.xlu0 %332
  %vm336 = vcmask 1048320
  %337 = vst.msk [vmem:[%s2] sm:$0xff] %vm336, %v331
  %vm338 = vcmask 1044224
  %339 = vst.msk [vmem:[%s2 + $0x8] sm:$0xf] %vm338, %v333
  %340 = vst [vmem:[%s2 + $0xc] sm:$0xf] 0.0
  // Predicated region
  $region10: #{netg_forward.12} parent=0 // pred_check
    _
  $region11: #{netg_forward.12} parent=0 // pred_check_branch
    %342 = sbr.rel (0) target = $region13
  $region12: #{netg_forward.12} parent=0 // pred_region
    _
  $region13: #{netg_forward.12} parent=0 // pred_fallthru
    _
  // Predicated region
  $region14: #{netg_forward.12} parent=0 // pred_check
    _
  $region15: #{netg_forward.12} parent=0 // pred_check_branch
    %344 = sbr.rel (0) target = $region17
  $region16: #{netg_forward.12} parent=0 // pred_region
    _
  $region17: #{netg_forward.12} parent=0 // pred_fallthru
    _

// kernel: netg_forward.13
$region0: #{netg_forward.13}
  #allocation0 [shape = 'u32[]', space=smem, size = 0x4, offset = 0x4, fixed_abs, tag = 'smem constant byte address 0x4 - core index']
  #allocation1 [shape = 'u32[144,128]{1,0:T(1,128)}', space=vmem, size = 0x12000, scoped, tag = 'internal scratch']
  %s0 = inlined_call_operand.vmem [shape: f32[32,32], index: 0, kind: input, shape index: {}]
  %s1 = inlined_call_operand.vmem [shape: f32[2,32], index: 1, kind: output, shape index: {}]
  %s2 = sld [smem:[#allocation0]]
  $region18: #{netg_forward.13} parent=0
    _
  %s4 = ssub.s32 1, %s2
  %s5 = scalar_select 0, %s4, %s2
  // Predicated region
  $region2: #{netg_forward.13} parent=0 // pred_check
    _
  $region3: #{netg_forward.13} parent=0 // pred_check_branch
    %7 = sbr.rel (0) target = $region5
  $region4: #{netg_forward.13} parent=0 // pred_region
    _
  $region5: #{netg_forward.13} parent=0 // pred_fallthru
    _
  %p8 = scmp.eq.s32.totalorder 0, 0
  // Predicated region
  $region6: #{netg_forward.13} parent=0 // pred_check
    %p9 = pneg %p8
  $region7: #{netg_forward.13} parent=0 // pred_check_branch
    %11 = sbr.rel (%p9) target = $region9
  $region8: #{netg_forward.13} parent=0 // pred_region
    %vm12 = vcmask 254976
    %13 = vst.msk [vmem:[%s1] sm:$0x3] %vm12, 0.0
  $region9: #{netg_forward.13} parent=0 // pred_fallthru
    _
  %v14 = vld [vmem:[%s0] sm:$0xff]
  %v15 = vld [vmem:[%s0 + $0x8] sm:$0xff]
  %v16 = vld [vmem:[%s0 + $0x10] sm:$0xff]
  %v17 = vld [vmem:[%s0 + $0x18] sm:$0xff]
  %v18 = vld [vmem:[%s1] sm:$0x1]
  %vm19 = vcmask 261120
  %v20 = vsel %vm19, %v14, 0.0
  %v21 = vsel %vm19, %v15, 0.0
  %v22 = vadd.f32 %v20, %v21
  %v23 = vsel %vm19, %v16, 0.0
  %v24 = vadd.f32 %v22, %v23
  %v25 = vsel %vm19, %v17, 0.0
  %v26 = vadd.f32 %v24, %v25
  %v27 = vrot.slane %v26, 4
  %v28 = vadd.f32 %v26, %v27
  %v29 = vrot.slane %v28, 2
  %v30 = vadd.f32 %v28, %v29
  %v31 = vrot.slane %v30, 1
  %v32 = vadd.f32 %v30, %v31
  %v33 = vadd.f32 %v18, %v32
  %vm34 = vcmask 253952
  %35 = vst.msk [vmem:[%s1] sm:$0x1] %vm34, %v33
  %v36 = vld [vmem:[%s1 + $0x1] sm:$0x1]
  %v37 = vmul.f32 %v14, %v14
  %v38 = vmul.f32 %v15, %v15
  %v39 = vmul.f32 %v16, %v16
  %v40 = vmul.f32 %v17, %v17
  %v41 = vsel %vm19, %v37, 0.0
  %v42 = vsel %vm19, %v38, 0.0
  %v43 = vadd.f32 %v41, %v42
  %v44 = vsel %vm19, %v39, 0.0
  %v45 = vadd.f32 %v43, %v44
  %v46 = vsel %vm19, %v40, 0.0
  %v47 = vadd.f32 %v45, %v46
  %v48 = vrot.slane %v47, 4
  %v49 = vadd.f32 %v47, %v48
  %v50 = vrot.slane %v49, 2
  %v51 = vadd.f32 %v49, %v50
  %v52 = vrot.slane %v51, 1
  %v53 = vadd.f32 %v51, %v52
  %v54 = vadd.f32 %v36, %v53
  %55 = vst.msk [vmem:[%s1 + $0x1] sm:$0x1] %vm34, %v54
  // Predicated region
  $region10: #{netg_forward.13} parent=0 // pred_check
    _
  $region11: #{netg_forward.13} parent=0 // pred_check_branch
    %57 = sbr.rel (0) target = $region13
  $region12: #{netg_forward.13} parent=0 // pred_region
    _
  $region13: #{netg_forward.13} parent=0 // pred_fallthru
    _
  // Predicated region
  $region14: #{netg_forward.13} parent=0 // pred_check
    _
  $region15: #{netg_forward.13} parent=0 // pred_check_branch
    %59 = sbr.rel (0) target = $region17
  $region16: #{netg_forward.13} parent=0 // pred_region
    _
  $region17: #{netg_forward.13} parent=0 // pred_fallthru
    _

// kernel: netg_forward.14
$region0: #{netg_forward.14}
  #allocation0 [shape = 'u32[]', space=smem, size = 0x4, offset = 0x4, fixed_abs, tag = 'smem constant byte address 0x4 - core index']
  #allocation1 [shape = 'u32[144,128]{1,0:T(1,128)}', space=vmem, size = 0x12000, scoped, tag = 'internal scratch']
  %s0 = inlined_call_operand.vmem [shape: f32[32,32], index: 0, kind: input, shape index: {}]
  %s1 = inlined_call_operand.vmem [shape: f32[1,32], index: 1, kind: input, shape index: {}]
  %s2 = inlined_call_operand.vmem [shape: f32[1,32], index: 2, kind: input, shape index: {}]
  %s3 = inlined_call_operand.vmem [shape: f32[32,32], index: 3, kind: output, shape index: {}]
  %s4 = sld [smem:[#allocation0]]
  $region22: #{netg_forward.14} parent=0
    _
  %s6 = ssub.s32 1, %s4
  %s7 = scalar_select 0, %s6, %s4
  // Predicated region
  $region2: #{netg_forward.14} parent=0 // pred_check
    _
  $region3: #{netg_forward.14} parent=0 // pred_check_branch
    %9 = sbr.rel (0) target = $region5
  $region4: #{netg_forward.14} parent=0 // pred_region
    _
  $region5: #{netg_forward.14} parent=0 // pred_fallthru
    _
  // Predicated region
  $region6: #{netg_forward.14} parent=0 // pred_check
    _
  $region7: #{netg_forward.14} parent=0 // pred_check_branch
    %11 = sbr.rel (0) target = $region9
  $region8: #{netg_forward.14} parent=0 // pred_region
    _
  $region9: #{netg_forward.14} parent=0 // pred_fallthru
    _
  // Predicated region
  $region10: #{netg_forward.14} parent=0 // pred_check
    _
  $region11: #{netg_forward.14} parent=0 // pred_check_branch
    %13 = sbr.rel (0) target = $region13
  $region12: #{netg_forward.14} parent=0 // pred_region
    _
  $region13: #{netg_forward.14} parent=0 // pred_fallthru
    _
  %v14 = vld [vmem:[%s0] sm:$0xff]
  %v15 = vld [vmem:[%s0 + $0x8] sm:$0xff]
  %v16 = vld [vmem:[%s0 + $0x10] sm:$0xff]
  %v17 = vld [vmem:[%s0 + $0x18] sm:$0xff]
  %v18 = vld [vmem:[%s1] sm:$0x1]
  %v20 = vlaneseq
  %v21 = vshrl.u32 %v20, 7
  %v22 = vsub.s32 0, %v21
  %v23 = vrot.slane %v18, %v22
  %v25 = vmul.f32 %v14, %v23
  %v26 = vmul.f32 %v15, %v23
  %v27 = vmul.f32 %v16, %v23
  %v28 = vmul.f32 %v17, %v23
  %v29 = vld [vmem:[%s2] sm:$0x1]
  %v31 = vlaneseq
  %v32 = vshrl.u32 %v31, 7
  %v33 = vsub.s32 0, %v32
  %v34 = vrot.slane %v29, %v33
  %v36 = vadd.f32 %v25, %v34
  %v37 = vadd.f32 %v26, %v34
  %v38 = vadd.f32 %v27, %v34
  %v39 = vadd.f32 %v28, %v34
  %v40 = vmax.f32 %v36, 0.0
  %v41 = vmax.f32 %v37, 0.0
  %v42 = vmax.f32 %v38, 0.0
  %v43 = vmax.f32 %v39, 0.0
  %vm44 = vcmask 261120
  %45 = vst.msk [vmem:[%s3] sm:$0xff] %vm44, %v40
  %46 = vst.msk [vmem:[%s3 + $0x8] sm:$0xff] %vm44, %v41
  %47 = vst.msk [vmem:[%s3 + $0x10] sm:$0xff] %vm44, %v42
  %48 = vst.msk [vmem:[%s3 + $0x18] sm:$0xff] %vm44, %v43
  // Predicated region
  $region14: #{netg_forward.14} parent=0 // pred_check
    _
  $region15: #{netg_forward.14} parent=0 // pred_check_branch
    %50 = sbr.rel (0) target = $region17
  $region16: #{netg_forward.14} parent=0 // pred_region
    _
  $region17: #{netg_forward.14} parent=0 // pred_fallthru
    _
  // Predicated region
  $region18: #{netg_forward.14} parent=0 // pred_check
    _
  $region19: #{netg_forward.14} parent=0 // pred_check_branch
    %52 = sbr.rel (0) target = $region21
  $region20: #{netg_forward.14} parent=0 // pred_region
    _
  $region21: #{netg_forward.14} parent=0 // pred_fallthru
    _

// kernel: netg_forward.15
$region0: #{netg_forward.15}
  #allocation0 [shape = 'u32[]', space=smem, size = 0x4, offset = 0x4, fixed_abs, tag = 'smem constant byte address 0x4 - core index']
  #allocation1 [shape = 'u32[144,128]{1,0:T(1,128)}', space=vmem, size = 0x12000, scoped, tag = 'internal scratch']
  #allocation2 [shape = 'f32[48,64]{1,0:T(8,128)}', space=vmem, size = 0x6000, scoped, tag = 'scratch operand']
  %s0 = inlined_call_operand.vmem [shape: bf16[48,96], index: 0, kind: input, shape index: {}]
  %s1 = inlined_call_operand.vmem [shape: bf16[2,64,64], index: 1, kind: input, shape index: {}]
  %s2 = inlined_call_operand.vmem [shape: f32[48,64], index: 2, kind: output, shape index: {}]
  %s3 = sld [smem:[#allocation0]]
  $region18: #{netg_forward.15} parent=0
    _
  %s5 = ssub.s32 1, %s3
  %s6 = scalar_select 0, %s5, %s3
  // Predicated region
  $region2: #{netg_forward.15} parent=0 // pred_check
    _
  $region3: #{netg_forward.15} parent=0 // pred_check_branch
    %8 = sbr.rel (0) target = $region5
  $region4: #{netg_forward.15} parent=0 // pred_region
    _
  $region5: #{netg_forward.15} parent=0 // pred_fallthru
    _
  // Predicated region
  $region6: #{netg_forward.15} parent=0 // pred_check
    _
  $region7: #{netg_forward.15} parent=0 // pred_check_branch
    %10 = sbr.rel (0) target = $region9
  $region8: #{netg_forward.15} parent=0 // pred_region
    _
  $region9: #{netg_forward.15} parent=0 // pred_fallthru
    _
  %v12 = vld [vmem:[%s0] sm:$0xf]
  %v13 = vld [vmem:[%s0 + $0x4] sm:$0xf]
  %v14 = vld [vmem:[%s0 + $0x8] sm:$0xf]
  %v15 = vld [vmem:[%s0 + $0xc] sm:$0xf]
  %v16 = vld [vmem:[%s0 + $0x10] sm:$0xf]
  %v17 = vld [vmem:[%s0 + $0x14] sm:$0xf]
  %v18 = vld [vmem:[%s1] sm:$0xf]
  %v19 = vld [vmem:[%s1 + $0x4] sm:$0xf]
  %v20 = vld [vmem:[%s1 + $0x8] sm:$0xf]
  %v21 = vld [vmem:[%s1 + $0xc] sm:$0xf]
  %v22 = vld [vmem:[%s1 + $0x10] sm:$0xf]
  %v23 = vld [vmem:[%s1 + $0x14] sm:$0xf]
  %v24 = vld [vmem:[%s1 + $0x18] sm:$0xf]
  %v25 = vld [vmem:[%s1 + $0x1c] sm:$0xf]
  %v32 = vunpack.c.l.b16 %v12
  %v33 = vunpack.c.l.b16 %v13
  %v34 = vunpack.c.l.b16 %v14
  %v35 = vunpack.c.l.b16 %v15
  %v36 = vunpack.c.l.b16 %v16
  %v37 = vunpack.c.l.b16 %v17
  %v38 = vpack.c.b16 %v33, %v32
  %v39 = vpack.c.b16 %v35, %v34
  %v40 = vpack.c.b16 %v37, %v36
  %v49 = vunpack.c.l.b16 %v18
  %v50 = vunpack.c.l.b16 %v19
  %v51 = vunpack.c.l.b16 %v20
  %v52 = vunpack.c.l.b16 %v21
  %v53 = vunpack.c.l.b16 %v22
  %v54 = vunpack.c.l.b16 %v23
  %v55 = vunpack.c.l.b16 %v24
  %v56 = vunpack.c.l.b16 %v25
  %v57 = vpack.c.b16 %v50, %v49
  %v58 = vpack.c.b16 %v52, %v51
  %v59 = vpack.c.b16 %v54, %v53
  %v60 = vpack.c.b16 %v56, %v55
  %vm65 = vcmask 523264
  %v67 = vsel %vm65, %v38, 0
  %v70 = vsel %vm65, %v39, 0
  %v73 = vsel %vm65, %v40, 0
  %75 = vmatprep.subr.bf16.mxu0 0
  %76 = vmatpush1.bf16.msra.mxu0 %v57
  %77 = vmatprep.subr.bf16.mxu0 0
  %78 = vmatpush1.bf16.msra.mxu0 %v58
  %79 = vmatprep.subr.bf16.mxu0 0
  %80 = vmatpush1.bf16.msra.mxu0 %v59
  %81 = vmatprep.subr.bf16.mxu0 0
  %82 = vmatpush1.bf16.msra.mxu0 %v60
  %83 = vmatprep.subr.bf16.mxu0 0
  %84 = vmatpush1.bf16.msra.mxu0 0
  %85 = vmatprep.subr.bf16.mxu0 0
  %86 = vmatpush1.bf16.msra.mxu0 0
  %87 = vmatprep.subr.bf16.mxu0 0
  %88 = vmatpush1.bf16.msra.mxu0 0
  %89 = vmatprep.subr.bf16.mxu0 0
  %90 = vmatpush1.bf16.msra.mxu0 0
  %91 = vmatprep.subr.bf16.mxu0 0
  %92 = vmatpush1.bf16.msra.mxu0 0
  %93 = vmatprep.subr.bf16.mxu0 0
  %94 = vmatpush1.bf16.msra.mxu0 0
  %95 = vmatprep.subr.bf16.mxu0 0
  %96 = vmatpush1.bf16.msra.mxu0 0
  %97 = vmatprep.subr.bf16.mxu0 0
  %98 = vmatpush1.bf16.msra.mxu0 0
  %99 = vmatprep.subr.bf16.mxu0 0
  %100 = vmatpush1.bf16.msra.mxu0 0
  %101 = vmatprep.subr.bf16.mxu0 0
  %102 = vmatpush1.bf16.msra.mxu0 0
  %103 = vmatprep.subr.bf16.mxu0 0
  %104 = vmatpush1.bf16.msra.mxu0 0
  %105 = vmatprep.subr.bf16.mxu0 0
  %106 = vmatpush1.bf16.msra.mxu0 0
  %107 = vmatprep.mubr.bf16.mxu0 0
  %108 = vmatmul.mubr.bf16.gmra.mrb[0].mxu0 %v67
  %v109 = vpop.f32.mrb[0].mxu0
  %v110 = vadd.f32 0.0, %v109
  %v111 = vpop.f32.mrb[0].mxu0
  %v112 = vpop.f32.mrb[0].mxu0
  %v113 = vadd.f32 0.0, %v112
  %v114 = vpop.f32.mrb[0].mxu0
  %115 = vmatprep.mubr.bf16.mxu0 0
  %116 = vmatmul.mubr.bf16.gmra.mrb[0].mxu0 %v70
  %v117 = vpop.f32.mrb[0].mxu0
  %v118 = vadd.f32 0.0, %v117
  %v119 = vpop.f32.mrb[0].mxu0
  %v120 = vpop.f32.mrb[0].mxu0
  %v121 = vadd.f32 0.0, %v120
  %v122 = vpop.f32.mrb[0].mxu0
  %123 = vmatprep.mubr.bf16.mxu0 0
  %124 = vmatmul.mubr.bf16.gmra.mrb[0].mxu0 %v73
  %v125 = vpop.f32.mrb[0].mxu0
  %v126 = vadd.f32 0.0, %v125
  %v127 = vpop.f32.mrb[0].mxu0
  %v128 = vpop.f32.mrb[0].mxu0
  %v129 = vadd.f32 0.0, %v128
  %v130 = vpop.f32.mrb[0].mxu0
  %131 = vdwg.mxu0
  %132 = vst.msk [vmem:[#allocation2] sm:$0xff] %vm65, %v110
  %133 = vst.msk [vmem:[#allocation2 + $0x8] sm:$0xff] %vm65, %v113
  %134 = vst.msk [vmem:[#allocation2 + $0x10] sm:$0xff] %vm65, %v118
  %135 = vst.msk [vmem:[#allocation2 + $0x18] sm:$0xff] %vm65, %v121
  %136 = vst.msk [vmem:[#allocation2 + $0x20] sm:$0xff] %vm65, %v126
  %137 = vst.msk [vmem:[#allocation2 + $0x28] sm:$0xff] %vm65, %v129
  %v138 = vld [vmem:[#allocation2] sm:$0xff]
  %v139 = vld [vmem:[#allocation2 + $0x8] sm:$0xff]
  %v140 = vld [vmem:[#allocation2 + $0x10] sm:$0xff]
  %v141 = vld [vmem:[#allocation2 + $0x18] sm:$0xff]
  %v142 = vld [vmem:[#allocation2 + $0x20] sm:$0xff]
  %v143 = vld [vmem:[#allocation2 + $0x4] sm:$0xff]
  %v144 = vld [vmem:[#allocation2 + $0xc] sm:$0xff]
  %v145 = vld [vmem:[#allocation2 + $0x14] sm:$0xff]
  %v146 = vld [vmem:[#allocation2 + $0x1c] sm:$0xff]
  %v147 = vld [vmem:[#allocation2 + $0x24] sm:$0xff]
  %153 = vrot.lane.b32.xlu0 %v143, 112
  %v154 = vpop.permute.xlu0 %153
  %155 = vrot.lane.b32.xlu0 %v144, 112
  %v156 = vpop.permute.xlu0 %155
  %157 = vrot.lane.b32.xlu0 %v145, 112
  %v158 = vpop.permute.xlu0 %157
  %159 = vrot.lane.b32.xlu0 %v146, 112
  %v160 = vpop.permute.xlu0 %159
  %161 = vrot.lane.b32.xlu0 %v147, 112
  %v162 = vpop.permute.xlu0 %161
  %v168 = vadd.f32 %v138, %v154
  %v169 = vadd.f32 %v139, %v156
  %v170 = vadd.f32 %v140, %v158
  %v171 = vadd.f32 %v141, %v160
  %v172 = vadd.f32 %v142, %v162
  %vm173 = vcmask 130048
  %174 = vst.msk [vmem:[%s2] sm:$0xff] %vm173, %v168
  %175 = vst.msk [vmem:[%s2 + $0x8] sm:$0xff] %vm173, %v169
  %176 = vst.msk [vmem:[%s2 + $0x10] sm:$0xff] %vm173, %v170
  %177 = vst.msk [vmem:[%s2 + $0x18] sm:$0xff] %vm173, %v171
  %178 = vst.msk [vmem:[%s2 + $0x20] sm:$0xff] %vm173, %v172
  %v179 = vld [vmem:[#allocation2 + $0x4] sm:$0xff]
  %v180 = vld [vmem:[#allocation2 + $0xc] sm:$0xff]
  %v181 = vld [vmem:[#allocation2 + $0x14] sm:$0xff]
  %v182 = vld [vmem:[#allocation2 + $0x1c] sm:$0xff]
  %v183 = vld [vmem:[#allocation2 + $0x24] sm:$0xff]
  %v184 = vld [vmem:[#allocation2 + $0x8] sm:$0xff]
  %v185 = vld [vmem:[#allocation2 + $0x10] sm:$0xff]
  %v186 = vld [vmem:[#allocation2 + $0x18] sm:$0xff]
  %v187 = vld [vmem:[#allocation2 + $0x20] sm:$0xff]
  %v188 = vld [vmem:[#allocation2 + $0x28] sm:$0xff]
  %194 = vrot.lane.b32.xlu0 %v184, 112
  %v195 = vpop.permute.xlu0 %194
  %196 = vrot.lane.b32.xlu0 %v185, 112
  %v197 = vpop.permute.xlu0 %196
  %198 = vrot.lane.b32.xlu0 %v186, 112
  %v199 = vpop.permute.xlu0 %198
  %200 = vrot.lane.b32.xlu0 %v187, 112
  %v201 = vpop.permute.xlu0 %200
  %202 = vrot.lane.b32.xlu0 %v188, 112
  %v203 = vpop.permute.xlu0 %202
  %v209 = vadd.f32 %v179, %v195
  %v210 = vadd.f32 %v180, %v197
  %v211 = vadd.f32 %v181, %v199
  %v212 = vadd.f32 %v182, %v201
  %v213 = vadd.f32 %v183, %v203
  %vm214 = vcmask 392448
  %215 = vst.msk [vmem:[%s2] sm:$0xff] %vm214, %v209
  %216 = vst.msk [vmem:[%s2 + $0x8] sm:$0xff] %vm214, %v210
  %217 = vst.msk [vmem:[%s2 + $0x10] sm:$0xff] %vm214, %v211
  %218 = vst.msk [vmem:[%s2 + $0x18] sm:$0xff] %vm214, %v212
  %219 = vst.msk [vmem:[%s2 + $0x20] sm:$0xff] %vm214, %v213
  %v220 = vld [vmem:[%s0] sm:$0xf]
  %v221 = vld [vmem:[%s0 + $0x4] sm:$0xf]
  %v222 = vld [vmem:[%s0 + $0x8] sm:$0xf]
  %v223 = vld [vmem:[%s0 + $0xc] sm:$0xf]
  %v224 = vld [vmem:[%s0 + $0x10] sm:$0xf]
  %v225 = vld [vmem:[%s0 + $0x14] sm:$0xf]
  %s226 = scalar_lea.vmem %s1, 32
  %v227 = vld [vmem:[%s226] sm:$0xf]
  %v228 = vld [vmem:[%s226 + $0x4] sm:$0xf]
  %v229 = vld [vmem:[%s226 + $0x8] sm:$0xf]
  %v230 = vld [vmem:[%s226 + $0xc] sm:$0xf]
  %v231 = vld [vmem:[%s226 + $0x10] sm:$0xf]
  %v232 = vld [vmem:[%s226 + $0x14] sm:$0xf]
  %v233 = vld [vmem:[%s226 + $0x18] sm:$0xf]
  %v234 = vld [vmem:[%s226 + $0x1c] sm:$0xf]
  %v241 = vunpack.c.l.b16 %v220
  %v242 = vunpack.c.l.b16 %v221
  %v243 = vunpack.c.l.b16 %v222
  %v244 = vunpack.c.l.b16 %v223
  %v245 = vunpack.c.l.b16 %v224
  %v246 = vunpack.c.l.b16 %v225
  %v247 = vpack.c.b16 %v242, %v241
  %v248 = vpack.c.b16 %v244, %v243
  %v249 = vpack.c.b16 %v246, %v245
  %250 = vrot.lane.b32.xlu0 %v247, 96
  %v251 = vpop.permute.xlu0 %250
  %252 = vrot.lane.b32.xlu0 %v248, 96
  %v253 = vpop.permute.xlu0 %252
  %254 = vrot.lane.b32.xlu0 %v249, 96
  %v255 = vpop.permute.xlu0 %254
  %v264 = vunpack.c.l.b16 %v227
  %v265 = vunpack.c.l.b16 %v228
  %v266 = vunpack.c.l.b16 %v229
  %v267 = vunpack.c.l.b16 %v230
  %v268 = vunpack.c.l.b16 %v231
  %v269 = vunpack.c.l.b16 %v232
  %v270 = vunpack.c.l.b16 %v233
  %v271 = vunpack.c.l.b16 %v234
  %v272 = vpack.c.b16 %v265, %v264
  %v273 = vpack.c.b16 %v267, %v266
  %v274 = vpack.c.b16 %v269, %v268
  %v275 = vpack.c.b16 %v271, %v270
  %v281 = vsel %vm65, %v251, 0
  %v284 = vsel %vm65, %v253, 0
  %v287 = vsel %vm65, %v255, 0
  %289 = vmatprep.subr.bf16.mxu0 0
  %290 = vmatpush1.bf16.msra.mxu0 %v272
  %291 = vmatprep.subr.bf16.mxu0 0
  %292 = vmatpush1.bf16.msra.mxu0 %v273
  %293 = vmatprep.subr.bf16.mxu0 0
  %294 = vmatpush1.bf16.msra.mxu0 %v274
  %295 = vmatprep.subr.bf16.mxu0 0
  %296 = vmatpush1.bf16.msra.mxu0 %v275
  %297 = vmatprep.subr.bf16.mxu0 0
  %298 = vmatpush1.bf16.msra.mxu0 0
  %299 = vmatprep.subr.bf16.mxu0 0
  %300 = vmatpush1.bf16.msra.mxu0 0
  %301 = vmatprep.subr.bf16.mxu0 0
  %302 = vmatpush1.bf16.msra.mxu0 0
  %303 = vmatprep.subr.bf16.mxu0 0
  %304 = vmatpush1.bf16.msra.mxu0 0
  %305 = vmatprep.subr.bf16.mxu0 0
  %306 = vmatpush1.bf16.msra.mxu0 0
  %307 = vmatprep.subr.bf16.mxu0 0
  %308 = vmatpush1.bf16.msra.mxu0 0
  %309 = vmatprep.subr.bf16.mxu0 0
  %310 = vmatpush1.bf16.msra.mxu0 0
  %311 = vmatprep.subr.bf16.mxu0 0
  %312 = vmatpush1.bf16.msra.mxu0 0
  %313 = vmatprep.subr.bf16.mxu0 0
  %314 = vmatpush1.bf16.msra.mxu0 0
  %315 = vmatprep.subr.bf16.mxu0 0
  %316 = vmatpush1.bf16.msra.mxu0 0
  %317 = vmatprep.subr.bf16.mxu0 0
  %318 = vmatpush1.bf16.msra.mxu0 0
  %319 = vmatprep.subr.bf16.mxu0 0
  %320 = vmatpush1.bf16.msra.mxu0 0
  %321 = vmatprep.mubr.bf16.mxu0 0
  %322 = vmatmul.mubr.bf16.gmra.mrb[0].mxu0 %v281
  %v323 = vpop.f32.mrb[0].mxu0
  %v324 = vadd.f32 0.0, %v323
  %v325 = vpop.f32.mrb[0].mxu0
  %v326 = vpop.f32.mrb[0].mxu0
  %v327 = vadd.f32 0.0, %v326
  %v328 = vpop.f32.mrb[0].mxu0
  %329 = vmatprep.mubr.bf16.mxu0 0
  %330 = vmatmul.mubr.bf16.gmra.mrb[0].mxu0 %v284
  %v331 = vpop.f32.mrb[0].mxu0
  %v332 = vadd.f32 0.0, %v331
  %v333 = vpop.f32.mrb[0].mxu0
  %v334 = vpop.f32.mrb[0].mxu0
  %v335 = vadd.f32 0.0, %v334
  %v336 = vpop.f32.mrb[0].mxu0
  %337 = vmatprep.mubr.bf16.mxu0 0
  %338 = vmatmul.mubr.bf16.gmra.mrb[0].mxu0 %v287
  %v339 = vpop.f32.mrb[0].mxu0
  %v340 = vadd.f32 0.0, %v339
  %v341 = vpop.f32.mrb[0].mxu0
  %v342 = vpop.f32.mrb[0].mxu0
  %v343 = vadd.f32 0.0, %v342
  %v344 = vpop.f32.mrb[0].mxu0
  %345 = vdwg.mxu0
  %346 = vst.msk [vmem:[#allocation2] sm:$0xff] %vm65, %v324
  %347 = vst.msk [vmem:[#allocation2 + $0x8] sm:$0xff] %vm65, %v327
  %348 = vst.msk [vmem:[#allocation2 + $0x10] sm:$0xff] %vm65, %v332
  %349 = vst.msk [vmem:[#allocation2 + $0x18] sm:$0xff] %vm65, %v335
  %350 = vst.msk [vmem:[#allocation2 + $0x20] sm:$0xff] %vm65, %v340
  %351 = vst.msk [vmem:[#allocation2 + $0x28] sm:$0xff] %vm65, %v343
  %v352 = vld [vmem:[#allocation2] sm:$0xff]
  %v353 = vld [vmem:[#allocation2 + $0x8] sm:$0xff]
  %v354 = vld [vmem:[#allocation2 + $0x10] sm:$0xff]
  %v355 = vld [vmem:[#allocation2 + $0x18] sm:$0xff]
  %v356 = vld [vmem:[#allocation2 + $0x20] sm:$0xff]
  %v357 = vld [vmem:[#allocation2 + $0x4] sm:$0xff]
  %v358 = vld [vmem:[#allocation2 + $0xc] sm:$0xff]
  %v359 = vld [vmem:[#allocation2 + $0x14] sm:$0xff]
  %v360 = vld [vmem:[#allocation2 + $0x1c] sm:$0xff]
  %v361 = vld [vmem:[#allocation2 + $0x24] sm:$0xff]
  %367 = vrot.lane.b32.xlu0 %v357, 112
  %v368 = vpop.permute.xlu0 %367
  %369 = vrot.lane.b32.xlu0 %v358, 112
  %v370 = vpop.permute.xlu0 %369
  %371 = vrot.lane.b32.xlu0 %v359, 112
  %v372 = vpop.permute.xlu0 %371
  %373 = vrot.lane.b32.xlu0 %v360, 112
  %v374 = vpop.permute.xlu0 %373
  %375 = vrot.lane.b32.xlu0 %v361, 112
  %v376 = vpop.permute.xlu0 %375
  %v382 = vadd.f32 %v352, %v368
  %v383 = vadd.f32 %v353, %v370
  %v384 = vadd.f32 %v354, %v372
  %v385 = vadd.f32 %v355, %v374
  %v386 = vadd.f32 %v356, %v376
  %392 = vrot.lane.b32.xlu0 %v382, 16
  %v393 = vpop.permute.xlu0 %392
  %394 = vrot.lane.b32.xlu0 %v383, 16
  %v395 = vpop.permute.xlu0 %394
  %396 = vrot.lane.b32.xlu0 %v384, 16
  %v397 = vpop.permute.xlu0 %396
  %398 = vrot.lane.b32.xlu0 %v385, 16
  %v399 = vpop.permute.xlu0 %398
  %400 = vrot.lane.b32.xlu0 %v386, 16
  %v401 = vpop.permute.xlu0 %400
  %vm407 = vcmask 261248
  %408 = vst.msk [vmem:[%s2] sm:$0xff] %vm407, %v393
  %409 = vst.msk [vmem:[%s2 + $0x8] sm:$0xff] %vm407, %v395
  %410 = vst.msk [vmem:[%s2 + $0x10] sm:$0xff] %vm407, %v397
  %411 = vst.msk [vmem:[%s2 + $0x18] sm:$0xff] %vm407, %v399
  %412 = vst.msk [vmem:[%s2 + $0x20] sm:$0xff] %vm407, %v401
  %v413 = vld [vmem:[#allocation2 + $0x4] sm:$0xff]
  %v414 = vld [vmem:[#allocation2 + $0xc] sm:$0xff]
  %v415 = vld [vmem:[#allocation2 + $0x14] sm:$0xff]
  %v416 = vld [vmem:[#allocation2 + $0x1c] sm:$0xff]
  %v417 = vld [vmem:[#allocation2 + $0x24] sm:$0xff]
  %v418 = vld [vmem:[#allocation2 + $0x8] sm:$0xff]
  %v419 = vld [vmem:[#allocation2 + $0x10] sm:$0xff]
  %v420 = vld [vmem:[#allocation2 + $0x18] sm:$0xff]
  %v421 = vld [vmem:[#allocation2 + $0x20] sm:$0xff]
  %v422 = vld [vmem:[#allocation2 + $0x28] sm:$0xff]
  %428 = vrot.lane.b32.xlu0 %v418, 112
  %v429 = vpop.permute.xlu0 %428
  %430 = vrot.lane.b32.xlu0 %v419, 112
  %v431 = vpop.permute.xlu0 %430
  %432 = vrot.lane.b32.xlu0 %v420, 112
  %v433 = vpop.permute.xlu0 %432
  %434 = vrot.lane.b32.xlu0 %v421, 112
  %v435 = vpop.permute.xlu0 %434
  %436 = vrot.lane.b32.xlu0 %v422, 112
  %v437 = vpop.permute.xlu0 %436
  %v443 = vadd.f32 %v413, %v429
  %v444 = vadd.f32 %v414, %v431
  %v445 = vadd.f32 %v415, %v433
  %v446 = vadd.f32 %v416, %v435
  %v447 = vadd.f32 %v417, %v437
  %453 = vrot.lane.b32.xlu0 %v443, 16
  %v454 = vpop.permute.xlu0 %453
  %455 = vrot.lane.b32.xlu0 %v444, 16
  %v456 = vpop.permute.xlu0 %455
  %457 = vrot.lane.b32.xlu0 %v445, 16
  %v458 = vpop.permute.xlu0 %457
  %459 = vrot.lane.b32.xlu0 %v446, 16
  %v460 = vpop.permute.xlu0 %459
  %461 = vrot.lane.b32.xlu0 %v447, 16
  %v462 = vpop.permute.xlu0 %461
  %vm468 = vcmask 523648
  %469 = vst.msk [vmem:[%s2] sm:$0xff] %vm468, %v454
  %470 = vst.msk [vmem:[%s2 + $0x8] sm:$0xff] %vm468, %v456
  %471 = vst.msk [vmem:[%s2 + $0x10] sm:$0xff] %vm468, %v458
  %472 = vst.msk [vmem:[%s2 + $0x18] sm:$0xff] %vm468, %v460
  %473 = vst.msk [vmem:[%s2 + $0x20] sm:$0xff] %vm468, %v462
  %474 = vst.msk [vmem:[%s2 + $0x28] sm:$0xff] %vm65, 0.0
  // Predicated region
  $region10: #{netg_forward.15} parent=0 // pred_check
    _
  $region11: #{netg_forward.15} parent=0 // pred_check_branch
    %476 = sbr.rel (0) target = $region13
  $region12: #{netg_forward.15} parent=0 // pred_region
    _
  $region13: #{netg_forward.15} parent=0 // pred_fallthru
    _
  // Predicated region
  $region14: #{netg_forward.15} parent=0 // pred_check
    _
  $region15: #{netg_forward.15} parent=0 // pred_check_branch
    %478 = sbr.rel (0) target = $region17
  $region16: #{netg_forward.15} parent=0 // pred_region
    _
  $region17: #{netg_forward.15} parent=0 // pred_fallthru
    _

// kernel: netg_forward.17
$region0: #{netg_forward.17}
  #allocation0 [shape = 'u32[]', space=smem, size = 0x4, offset = 0x4, fixed_abs, tag = 'smem constant byte address 0x4 - core index']
  #allocation1 [shape = 'u32[144,128]{1,0:T(1,128)}', space=vmem, size = 0x12000, scoped, tag = 'internal scratch']
  %s0 = inlined_call_operand.vmem [shape: f32[128,16], index: 0, kind: input, shape index: {}]
  %s1 = inlined_call_operand.vmem [shape: f32[1,16], index: 1, kind: input, shape index: {}]
  %s2 = inlined_call_operand.vmem [shape: f32[1,16], index: 2, kind: input, shape index: {}]
  %s3 = inlined_call_operand.vmem [shape: f32[128,16], index: 3, kind: output, shape index: {}]
  %s4 = sld [smem:[#allocation0]]
  $region22: #{netg_forward.17} parent=0
    _
  %s6 = ssub.s32 1, %s4
  %s7 = scalar_select 0, %s6, %s4
  // Predicated region
  $region2: #{netg_forward.17} parent=0 // pred_check
    _
  $region3: #{netg_forward.17} parent=0 // pred_check_branch
    %9 = sbr.rel (0) target = $region5
  $region4: #{netg_forward.17} parent=0 // pred_region
    _
  $region5: #{netg_forward.17} parent=0 // pred_fallthru
    _
  // Predicated region
  $region6: #{netg_forward.17} parent=0 // pred_check
    _
  $region7: #{netg_forward.17} parent=0 // pred_check_branch
    %11 = sbr.rel (0) target = $region9
  $region8: #{netg_forward.17} parent=0 // pred_region
    _
  $region9: #{netg_forward.17} parent=0 // pred_fallthru
    _
  // Predicated region
  $region10: #{netg_forward.17} parent=0 // pred_check
    _
  $region11: #{netg_forward.17} parent=0 // pred_check_branch
    %13 = sbr.rel (0) target = $region13
  $region12: #{netg_forward.17} parent=0 // pred_region
    _
  $region13: #{netg_forward.17} parent=0 // pred_fallthru
    _
  %v14 = vld [vmem:[%s0] sm:$0xff]
  %v15 = vld [vmem:[%s0 + $0x8] sm:$0xff]
  %v16 = vld [vmem:[%s0 + $0x10] sm:$0xff]
  %v17 = vld [vmem:[%s0 + $0x18] sm:$0xff]
  %v18 = vld [vmem:[%s0 + $0x20] sm:$0xff]
  %v19 = vld [vmem:[%s0 + $0x28] sm:$0xff]
  %v20 = vld [vmem:[%s0 + $0x30] sm:$0xff]
  %v21 = vld [vmem:[%s0 + $0x38] sm:$0xff]
  %v22 = vld [vmem:[%s0 + $0x40] sm:$0xff]
  %v23 = vld [vmem:[%s0 + $0x48] sm:$0xff]
  %v24 = vld [vmem:[%s0 + $0x50] sm:$0xff]
  %v25 = vld [vmem:[%s0 + $0x58] sm:$0xff]
  %v26 = vld [vmem:[%s0 + $0x60] sm:$0xff]
  %v27 = vld [vmem:[%s0 + $0x68] sm:$0xff]
  %v28 = vld [vmem:[%s0 + $0x70] sm:$0xff]
  %v29 = vld [vmem:[%s0 + $0x78] sm:$0xff]
  %v30 = vld [vmem:[%s1] sm:$0x1]
  %v32 = vlaneseq
  %v33 = vshrl.u32 %v32, 7
  %v34 = vsub.s32 0, %v33
  %v35 = vrot.slane %v30, %v34
  %v37 = vmul.f32 %v14, %v35
  %v38 = vmul.f32 %v15, %v35
  %v39 = vmul.f32 %v16, %v35
  %v40 = vmul.f32 %v17, %v35
  %v41 = vmul.f32 %v18, %v35
  %v42 = vmul.f32 %v19, %v35
  %v43 = vmul.f32 %v20, %v35
  %v44 = vmul.f32 %v21, %v35
  %v45 = vmul.f32 %v22, %v35
  %v46 = vmul.f32 %v23, %v35
  %v47 = vmul.f32 %v24, %v35
  %v48 = vmul.f32 %v25, %v35
  %v49 = vmul.f32 %v26, %v35
  %v50 = vmul.f32 %v27, %v35
  %v51 = vmul.f32 %v28, %v35
  %v52 = vmul.f32 %v29, %v35
  %v53 = vld [vmem:[%s2] sm:$0x1]
  %v55 = vlaneseq
  %v56 = vshrl.u32 %v55, 7
  %v57 = vsub.s32 0, %v56
  %v58 = vrot.slane %v53, %v57
  %v60 = vadd.f32 %v37, %v58
  %v61 = vadd.f32 %v38, %v58
  %v62 = vadd.f32 %v39, %v58
  %v63 = vadd.f32 %v40, %v58
  %v64 = vadd.f32 %v41, %v58
  %v65 = vadd.f32 %v42, %v58
  %v66 = vadd.f32 %v43, %v58
  %v67 = vadd.f32 %v44, %v58
  %v68 = vadd.f32 %v45, %v58
  %v69 = vadd.f32 %v46, %v58
  %v70 = vadd.f32 %v47, %v58
  %v71 = vadd.f32 %v48, %v58
  %v72 = vadd.f32 %v49, %v58
  %v73 = vadd.f32 %v50, %v58
  %v74 = vadd.f32 %v51, %v58
  %v75 = vadd.f32 %v52, %v58
  %v76 = vmax.f32 %v60, 0.0
  %v77 = vmax.f32 %v61, 0.0
  %v78 = vmax.f32 %v62, 0.0
  %v79 = vmax.f32 %v63, 0.0
  %v80 = vmax.f32 %v64, 0.0
  %v81 = vmax.f32 %v65, 0.0
  %v82 = vmax.f32 %v66, 0.0
  %v83 = vmax.f32 %v67, 0.0
  %v84 = vmax.f32 %v68, 0.0
  %v85 = vmax.f32 %v69, 0.0
  %v86 = vmax.f32 %v70, 0.0
  %v87 = vmax.f32 %v71, 0.0
  %v88 = vmax.f32 %v72, 0.0
  %v89 = vmax.f32 %v73, 0.0
  %v90 = vmax.f32 %v74, 0.0
  %v91 = vmax.f32 %v75, 0.0
  %vm92 = vcmask 130048
  %93 = vst.msk [vmem:[%s3] sm:$0xff] %vm92, %v76
  %94 = vst.msk [vmem:[%s3 + $0x8] sm:$0xff] %vm92, %v77
  %95 = vst.msk [vmem:[%s3 + $0x10] sm:$0xff] %vm92, %v78
  %96 = vst.msk [vmem:[%s3 + $0x18] sm:$0xff] %vm92, %v79
  %97 = vst.msk [vmem:[%s3 + $0x20] sm:$0xff] %vm92, %v80
  %98 = vst.msk [vmem:[%s3 + $0x28] sm:$0xff] %vm92, %v81
  %99 = vst.msk [vmem:[%s3 + $0x30] sm:$0xff] %vm92, %v82
  %100 = vst.msk [vmem:[%s3 + $0x38] sm:$0xff] %vm92, %v83
  %101 = vst.msk [vmem:[%s3 + $0x40] sm:$0xff] %vm92, %v84
  %102 = vst.msk [vmem:[%s3 + $0x48] sm:$0xff] %vm92, %v85
  %103 = vst.msk [vmem:[%s3 + $0x50] sm:$0xff] %vm92, %v86
  %104 = vst.msk [vmem:[%s3 + $0x58] sm:$0xff] %vm92, %v87
  %105 = vst.msk [vmem:[%s3 + $0x60] sm:$0xff] %vm92, %v88
  %106 = vst.msk [vmem:[%s3 + $0x68] sm:$0xff] %vm92, %v89
  %107 = vst.msk [vmem:[%s3 + $0x70] sm:$0xff] %vm92, %v90
  %108 = vst.msk [vmem:[%s3 + $0x78] sm:$0xff] %vm92, %v91
  // Predicated region
  $region14: #{netg_forward.17} parent=0 // pred_check
    _
  $region15: #{netg_forward.17} parent=0 // pred_check_branch
    %110 = sbr.rel (0) target = $region17
  $region16: #{netg_forward.17} parent=0 // pred_region
    _
  $region17: #{netg_forward.17} parent=0 // pred_fallthru
    _
  // Predicated region
  $region18: #{netg_forward.17} parent=0 // pred_check
    _
  $region19: #{netg_forward.17} parent=0 // pred_check_branch
    %112 = sbr.rel (0) target = $region21
  $region20: #{netg_forward.17} parent=0 // pred_region
    _
  $region21: #{netg_forward.17} parent=0 // pred_fallthru
    _

// kernel: netg_forward.16
$region0: #{netg_forward.16}
  #allocation0 [shape = 'u32[]', space=smem, size = 0x4, offset = 0x4, fixed_abs, tag = 'smem constant byte address 0x4 - core index']
  #allocation1 [shape = 'u32[144,128]{1,0:T(1,128)}', space=vmem, size = 0x12000, scoped, tag = 'internal scratch']
  %s0 = inlined_call_operand.vmem [shape: f32[128,16], index: 0, kind: input, shape index: {}]
  %s1 = inlined_call_operand.vmem [shape: f32[2,16], index: 1, kind: output, shape index: {}]
  %s2 = sld [smem:[#allocation0]]
  $region18: #{netg_forward.16} parent=0
    _
  %s4 = ssub.s32 1, %s2
  %s5 = scalar_select 0, %s4, %s2
  // Predicated region
  $region2: #{netg_forward.16} parent=0 // pred_check
    _
  $region3: #{netg_forward.16} parent=0 // pred_check_branch
    %7 = sbr.rel (0) target = $region5
  $region4: #{netg_forward.16} parent=0 // pred_region
    _
  $region5: #{netg_forward.16} parent=0 // pred_fallthru
    _
  %p8 = scmp.eq.s32.totalorder 0, 0
  // Predicated region
  $region6: #{netg_forward.16} parent=0 // pred_check
    %p9 = pneg %p8
  $region7: #{netg_forward.16} parent=0 // pred_check_branch
    %11 = sbr.rel (%p9) target = $region9
  $region8: #{netg_forward.16} parent=0 // pred_region
    %vm12 = vcmask 123904
    %13 = vst.msk [vmem:[%s1] sm:$0x3] %vm12, 0.0
  $region9: #{netg_forward.16} parent=0 // pred_fallthru
    _
  %v14 = vld [vmem:[%s0] sm:$0xff]
  %v15 = vld [vmem:[%s0 + $0x8] sm:$0xff]
  %v16 = vld [vmem:[%s0 + $0x10] sm:$0xff]
  %v17 = vld [vmem:[%s0 + $0x18] sm:$0xff]
  %v18 = vld [vmem:[%s0 + $0x20] sm:$0xff]
  %v19 = vld [vmem:[%s0 + $0x28] sm:$0xff]
  %v20 = vld [vmem:[%s0 + $0x30] sm:$0xff]
  %v21 = vld [vmem:[%s0 + $0x38] sm:$0xff]
  %v22 = vld [vmem:[%s0 + $0x40] sm:$0xff]
  %v23 = vld [vmem:[%s0 + $0x48] sm:$0xff]
  %v24 = vld [vmem:[%s0 + $0x50] sm:$0xff]
  %v25 = vld [vmem:[%s0 + $0x58] sm:$0xff]
  %v26 = vld [vmem:[%s0 + $0x60] sm:$0xff]
  %v27 = vld [vmem:[%s0 + $0x68] sm:$0xff]
  %v28 = vld [vmem:[%s0 + $0x70] sm:$0xff]
  %v29 = vld [vmem:[%s0 + $0x78] sm:$0xff]
  %v30 = vld [vmem:[%s1] sm:$0x1]
  %vm31 = vcmask 130048
  %v32 = vsel %vm31, %v14, 0.0
  %v33 = vsel %vm31, %v15, 0.0
  %v34 = vadd.f32 %v32, %v33
  %v35 = vsel %vm31, %v16, 0.0
  %v36 = vadd.f32 %v34, %v35
  %v37 = vsel %vm31, %v17, 0.0
  %v38 = vadd.f32 %v36, %v37
  %v39 = vsel %vm31, %v18, 0.0
  %v40 = vadd.f32 %v38, %v39
  %v41 = vsel %vm31, %v19, 0.0
  %v42 = vadd.f32 %v40, %v41
  %v43 = vsel %vm31, %v20, 0.0
  %v44 = vadd.f32 %v42, %v43
  %v45 = vsel %vm31, %v21, 0.0
  %v46 = vadd.f32 %v44, %v45
  %v47 = vsel %vm31, %v22, 0.0
  %v48 = vadd.f32 %v46, %v47
  %v49 = vsel %vm31, %v23, 0.0
  %v50 = vadd.f32 %v48, %v49
  %v51 = vsel %vm31, %v24, 0.0
  %v52 = vadd.f32 %v50, %v51
  %v53 = vsel %vm31, %v25, 0.0
  %v54 = vadd.f32 %v52, %v53
  %v55 = vsel %vm31, %v26, 0.0
  %v56 = vadd.f32 %v54, %v55
  %v57 = vsel %vm31, %v27, 0.0
  %v58 = vadd.f32 %v56, %v57
  %v59 = vsel %vm31, %v28, 0.0
  %v60 = vadd.f32 %v58, %v59
  %v61 = vsel %vm31, %v29, 0.0
  %v62 = vadd.f32 %v60, %v61
  %v63 = vrot.slane %v62, 4
  %v64 = vadd.f32 %v62, %v63
  %v65 = vrot.slane %v64, 2
  %v66 = vadd.f32 %v64, %v65
  %v67 = vrot.slane %v66, 1
  %v68 = vadd.f32 %v66, %v67
  %v69 = vadd.f32 %v30, %v68
  %vm70 = vcmask 122880
  %71 = vst.msk [vmem:[%s1] sm:$0x1] %vm70, %v69
  %v72 = vld [vmem:[%s1 + $0x1] sm:$0x1]
  %v73 = vmul.f32 %v14, %v14
  %v74 = vmul.f32 %v15, %v15
  %v75 = vmul.f32 %v16, %v16
  %v76 = vmul.f32 %v17, %v17
  %v77 = vmul.f32 %v18, %v18
  %v78 = vmul.f32 %v19, %v19
  %v79 = vmul.f32 %v20, %v20
  %v80 = vmul.f32 %v21, %v21
  %v81 = vmul.f32 %v22, %v22
  %v82 = vmul.f32 %v23, %v23
  %v83 = vmul.f32 %v24, %v24
  %v84 = vmul.f32 %v25, %v25
  %v85 = vmul.f32 %v26, %v26
  %v86 = vmul.f32 %v27, %v27
  %v87 = vmul.f32 %v28, %v28
  %v88 = vmul.f32 %v29, %v29
  %v89 = vsel %vm31, %v73, 0.0
  %v90 = vsel %vm31, %v74, 0.0
  %v91 = vadd.f32 %v89, %v90
  %v92 = vsel %vm31, %v75, 0.0
  %v93 = vadd.f32 %v91, %v92
  %v94 = vsel %vm31, %v76, 0.0
  %v95 = vadd.f32 %v93, %v94
  %v96 = vsel %vm31, %v77, 0.0
  %v97 = vadd.f32 %v95, %v96
  %v98 = vsel %vm31, %v78, 0.0
  %v99 = vadd.f32 %v97, %v98
  %v100 = vsel %vm31, %v79, 0.0
  %v101 = vadd.f32 %v99, %v100
  %v102 = vsel %vm31, %v80, 0.0
  %v103 = vadd.f32 %v101, %v102
  %v104 = vsel %vm31, %v81, 0.0
  %v105 = vadd.f32 %v103, %v104
  %v106 = vsel %vm31, %v82, 0.0
  %v107 = vadd.f32 %v105, %v106
  %v108 = vsel %vm31, %v83, 0.0
  %v109 = vadd.f32 %v107, %v108
  %v110 = vsel %vm31, %v84, 0.0
  %v111 = vadd.f32 %v109, %v110
  %v112 = vsel %vm31, %v85, 0.0
  %v113 = vadd.f32 %v111, %v112
  %v114 = vsel %vm31, %v86, 0.0
  %v115 = vadd.f32 %v113, %v114
  %v116 = vsel %vm31, %v87, 0.0
  %v117 = vadd.f32 %v115, %v116
  %v118 = vsel %vm31, %v88, 0.0
  %v119 = vadd.f32 %v117, %v118
  %v120 = vrot.slane %v119, 4
  %v121 = vadd.f32 %v119, %v120
  %v122 = vrot.slane %v121, 2
  %v123 = vadd.f32 %v121, %v122
  %v124 = vrot.slane %v123, 1
  %v125 = vadd.f32 %v123, %v124
  %v126 = vadd.f32 %v72, %v125
  %127 = vst.msk [vmem:[%s1 + $0x1] sm:$0x1] %vm70, %v126
  // Predicated region
  $region10: #{netg_forward.16} parent=0 // pred_check
    _
  $region11: #{netg_forward.16} parent=0 // pred_check_branch
    %129 = sbr.rel (0) target = $region13
  $region12: #{netg_forward.16} parent=0 // pred_region
    _
  $region13: #{netg_forward.16} parent=0 // pred_fallthru
    _
  // Predicated region
  $region14: #{netg_forward.16} parent=0 // pred_check
    _
  $region15: #{netg_forward.16} parent=0 // pred_check_branch
    %131 = sbr.rel (0) target = $region17
  $region16: #{netg_forward.16} parent=0 // pred_region
    _
  $region17: #{netg_forward.16} parent=0 // pred_fallthru
    _

// kernel: netg_forward.18
$region0: #{netg_forward.18}
  #allocation0 [shape = 'u32[]', space=smem, size = 0x4, offset = 0x4, fixed_abs, tag = 'smem constant byte address 0x4 - core index']
  #allocation1 [shape = 'u32[144,128]{1,0:T(1,128)}', space=vmem, size = 0x12000, scoped, tag = 'internal scratch']
  #allocation2 [shape = 'f32[160,32]{1,0:T(8,128)}', space=vmem, size = 0x14000, scoped, tag = 'scratch operand']
  %s0 = inlined_call_operand.vmem [shape: bf16[160,48], index: 0, kind: input, shape index: {}]
  %s1 = inlined_call_operand.vmem [shape: bf16[2,32,32], index: 1, kind: input, shape index: {}]
  %s2 = inlined_call_operand.vmem [shape: f32[160,32], index: 2, kind: output, shape index: {}]
  %s3 = sld [smem:[#allocation0]]
  $region18: #{netg_forward.18} parent=0
    _
  %s5 = ssub.s32 1, %s3
  %s6 = scalar_select 0, %s5, %s3
  // Predicated region
  $region2: #{netg_forward.18} parent=0 // pred_check
    _
  $region3: #{netg_forward.18} parent=0 // pred_check_branch
    %8 = sbr.rel (0) target = $region5
  $region4: #{netg_forward.18} parent=0 // pred_region
    _
  $region5: #{netg_forward.18} parent=0 // pred_fallthru
    _
  // Predicated region
  $region6: #{netg_forward.18} parent=0 // pred_check
    _
  $region7: #{netg_forward.18} parent=0 // pred_check_branch
    %10 = sbr.rel (0) target = $region9
  $region8: #{netg_forward.18} parent=0 // pred_region
    _
  $region9: #{netg_forward.18} parent=0 // pred_fallthru
    _
  %v12 = vld [vmem:[%s0] sm:$0xf]
  %v13 = vld [vmem:[%s0 + $0x4] sm:$0xf]
  %v14 = vld [vmem:[%s0 + $0x8] sm:$0xf]
  %v15 = vld [vmem:[%s0 + $0xc] sm:$0xf]
  %v16 = vld [vmem:[%s0 + $0x10] sm:$0xf]
  %v17 = vld [vmem:[%s0 + $0x14] sm:$0xf]
  %v18 = vld [vmem:[%s0 + $0x18] sm:$0xf]
  %v19 = vld [vmem:[%s0 + $0x1c] sm:$0xf]
  %v20 = vld [vmem:[%s0 + $0x20] sm:$0xf]
  %v21 = vld [vmem:[%s0 + $0x24] sm:$0xf]
  %v22 = vld [vmem:[%s0 + $0x28] sm:$0xf]
  %v23 = vld [vmem:[%s0 + $0x2c] sm:$0xf]
  %v24 = vld [vmem:[%s0 + $0x30] sm:$0xf]
  %v25 = vld [vmem:[%s0 + $0x34] sm:$0xf]
  %v26 = vld [vmem:[%s0 + $0x38] sm:$0xf]
  %v27 = vld [vmem:[%s0 + $0x3c] sm:$0xf]
  %v28 = vld [vmem:[%s0 + $0x40] sm:$0xf]
  %v29 = vld [vmem:[%s0 + $0x44] sm:$0xf]
  %v30 = vld [vmem:[%s0 + $0x48] sm:$0xf]
  %v31 = vld [vmem:[%s0 + $0x4c] sm:$0xf]
  %v32 = vld [vmem:[%s1] sm:$0xf]
  %v33 = vld [vmem:[%s1 + $0x4] sm:$0xf]
  %v34 = vld [vmem:[%s1 + $0x8] sm:$0xf]
  %v35 = vld [vmem:[%s1 + $0xc] sm:$0xf]
  %v56 = vunpack.c.l.b16 %v12
  %v57 = vunpack.c.l.b16 %v13
  %v58 = vunpack.c.l.b16 %v14
  %v59 = vunpack.c.l.b16 %v15
  %v60 = vunpack.c.l.b16 %v16
  %v61 = vunpack.c.l.b16 %v17
  %v62 = vunpack.c.l.b16 %v18
  %v63 = vunpack.c.l.b16 %v19
  %v64 = vunpack.c.l.b16 %v20
  %v65 = vunpack.c.l.b16 %v21
  %v66 = vunpack.c.l.b16 %v22
  %v67 = vunpack.c.l.b16 %v23
  %v68 = vunpack.c.l.b16 %v24
  %v69 = vunpack.c.l.b16 %v25
  %v70 = vunpack.c.l.b16 %v26
  %v71 = vunpack.c.l.b16 %v27
  %v72 = vunpack.c.l.b16 %v28
  %v73 = vunpack.c.l.b16 %v29
  %v74 = vunpack.c.l.b16 %v30
  %v75 = vunpack.c.l.b16 %v31
  %v76 = vpack.c.b16 %v57, %v56
  %v77 = vpack.c.b16 %v59, %v58
  %v78 = vpack.c.b16 %v61, %v60
  %v79 = vpack.c.b16 %v63, %v62
  %v80 = vpack.c.b16 %v65, %v64
  %v81 = vpack.c.b16 %v67, %v66
  %v82 = vpack.c.b16 %v69, %v68
  %v83 = vpack.c.b16 %v71, %v70
  %v84 = vpack.c.b16 %v73, %v72
  %v85 = vpack.c.b16 %v75, %v74
  %v90 = vunpack.c.l.b16 %v32
  %v91 = vunpack.c.l.b16 %v33
  %v92 = vunpack.c.l.b16 %v34
  %v93 = vunpack.c.l.b16 %v35
  %v94 = vpack.c.b16 %v91, %v90
  %v95 = vpack.c.b16 %v93, %v92
  %vm98 = vcmask 261120
  %v100 = vsel %vm98, %v76, 0
  %v103 = vsel %vm98, %v77, 0
  %v106 = vsel %vm98, %v78, 0
  %v109 = vsel %vm98, %v79, 0
  %v112 = vsel %vm98, %v80, 0
  %v115 = vsel %vm98, %v81, 0
  %v118 = vsel %vm98, %v82, 0
  %v121 = vsel %vm98, %v83, 0
  %v124 = vsel %vm98, %v84, 0
  %v127 = vsel %vm98, %v85, 0
  %129 = vmatprep.subr.bf16.mxu0 0
  %130 = vmatpush1.bf16.msra.mxu0 %v94
  %131 = vmatprep.subr.bf16.mxu0 0
  %132 = vmatpush1.bf16.msra.mxu0 %v95
  %133 = vmatprep.subr.bf16.mxu0 0
  %134 = vmatpush1.bf16.msra.mxu0 0
  %135 = vmatprep.subr.bf16.mxu0 0
  %136 = vmatpush1.bf16.msra.mxu0 0
  %137 = vmatprep.subr.bf16.mxu0 0
  %138 = vmatpush1.bf16.msra.mxu0 0
  %139 = vmatprep.subr.bf16.mxu0 0
  %140 = vmatpush1.bf16.msra.mxu0 0
  %141 = vmatprep.subr.bf16.mxu0 0
  %142 = vmatpush1.bf16.msra.mxu0 0
  %143 = vmatprep.subr.bf16.mxu0 0
  %144 = vmatpush1.bf16.msra.mxu0 0
  %145 = vmatprep.subr.bf16.mxu0 0
  %146 = vmatpush1.bf16.msra.mxu0 0
  %147 = vmatprep.subr.bf16.mxu0 0
  %148 = vmatpush1.bf16.msra.mxu0 0
  %149 = vmatprep.subr.bf16.mxu0 0
  %150 = vmatpush1.bf16.msra.mxu0 0
  %151 = vmatprep.subr.bf16.mxu0 0
  %152 = vmatpush1.bf16.msra.mxu0 0
  %153 = vmatprep.subr.bf16.mxu0 0
  %154 = vmatpush1.bf16.msra.mxu0 0
  %155 = vmatprep.subr.bf16.mxu0 0
  %156 = vmatpush1.bf16.msra.mxu0 0
  %157 = vmatprep.subr.bf16.mxu0 0
  %158 = vmatpush1.bf16.msra.mxu0 0
  %159 = vmatprep.subr.bf16.mxu0 0
  %160 = vmatpush1.bf16.msra.mxu0 0
  %161 = vmatprep.mubr.bf16.mxu0 0
  %162 = vmatmul.mubr.bf16.gmra.mrb[0].mxu0 %v100
  %v163 = vpop.f32.mrb[0].mxu0
  %v164 = vadd.f32 0.0, %v163
  %v165 = vpop.f32.mrb[0].mxu0
  %v166 = vpop.f32.mrb[0].mxu0
  %v167 = vadd.f32 0.0, %v166
  %v168 = vpop.f32.mrb[0].mxu0
  %169 = vmatprep.mubr.bf16.mxu0 0
  %170 = vmatmul.mubr.bf16.gmra.mrb[0].mxu0 %v103
  %v171 = vpop.f32.mrb[0].mxu0
  %v172 = vadd.f32 0.0, %v171
  %v173 = vpop.f32.mrb[0].mxu0
  %v174 = vpop.f32.mrb[0].mxu0
  %v175 = vadd.f32 0.0, %v174
  %v176 = vpop.f32.mrb[0].mxu0
  %177 = vmatprep.mubr.bf16.mxu0 0
  %178 = vmatmul.mubr.bf16.gmra.mrb[0].mxu0 %v106
  %v179 = vpop.f32.mrb[0].mxu0
  %v180 = vadd.f32 0.0, %v179
  %v181 = vpop.f32.mrb[0].mxu0
  %v182 = vpop.f32.mrb[0].mxu0
  %v183 = vadd.f32 0.0, %v182
  %v184 = vpop.f32.mrb[0].mxu0
  %185 = vmatprep.mubr.bf16.mxu0 0
  %186 = vmatmul.mubr.bf16.gmra.mrb[0].mxu0 %v109
  %v187 = vpop.f32.mrb[0].mxu0
  %v188 = vadd.f32 0.0, %v187
  %v189 = vpop.f32.mrb[0].mxu0
  %v190 = vpop.f32.mrb[0].mxu0
  %v191 = vadd.f32 0.0, %v190
  %v192 = vpop.f32.mrb[0].mxu0
  %193 = vmatprep.mubr.bf16.mxu0 0
  %194 = vmatmul.mubr.bf16.gmra.mrb[0].mxu0 %v112
  %v195 = vpop.f32.mrb[0].mxu0
  %v196 = vadd.f32 0.0, %v195
  %v197 = vpop.f32.mrb[0].mxu0
  %v198 = vpop.f32.mrb[0].mxu0
  %v199 = vadd.f32 0.0, %v198
  %v200 = vpop.f32.mrb[0].mxu0
  %201 = vmatprep.mubr.bf16.mxu0 0
  %202 = vmatmul.mubr.bf16.gmra.mrb[0].mxu0 %v115
  %v203 = vpop.f32.mrb[0].mxu0
  %v204 = vadd.f32 0.0, %v203
  %v205 = vpop.f32.mrb[0].mxu0
  %v206 = vpop.f32.mrb[0].mxu0
  %v207 = vadd.f32 0.0, %v206
  %v208 = vpop.f32.mrb[0].mxu0
  %209 = vmatprep.mubr.bf16.mxu0 0
  %210 = vmatmul.mubr.bf16.gmra.mrb[0].mxu0 %v118
  %v211 = vpop.f32.mrb[0].mxu0
  %v212 = vadd.f32 0.0, %v211
  %v213 = vpop.f32.mrb[0].mxu0
  %v214 = vpop.f32.mrb[0].mxu0
  %v215 = vadd.f32 0.0, %v214
  %v216 = vpop.f32.mrb[0].mxu0
  %217 = vmatprep.mubr.bf16.mxu0 0
  %218 = vmatmul.mubr.bf16.gmra.mrb[0].mxu0 %v121
  %v219 = vpop.f32.mrb[0].mxu0
  %v220 = vadd.f32 0.0, %v219
  %v221 = vpop.f32.mrb[0].mxu0
  %v222 = vpop.f32.mrb[0].mxu0
  %v223 = vadd.f32 0.0, %v222
  %v224 = vpop.f32.mrb[0].mxu0
  %225 = vmatprep.mubr.bf16.mxu0 0
  %226 = vmatmul.mubr.bf16.gmra.mrb[0].mxu0 %v124
  %v227 = vpop.f32.mrb[0].mxu0
  %v228 = vadd.f32 0.0, %v227
  %v229 = vpop.f32.mrb[0].mxu0
  %v230 = vpop.f32.mrb[0].mxu0
  %v231 = vadd.f32 0.0, %v230
  %v232 = vpop.f32.mrb[0].mxu0
  %233 = vmatprep.mubr.bf16.mxu0 0
  %234 = vmatmul.mubr.bf16.gmra.mrb[0].mxu0 %v127
  %v235 = vpop.f32.mrb[0].mxu0
  %v236 = vadd.f32 0.0, %v235
  %v237 = vpop.f32.mrb[0].mxu0
  %v238 = vpop.f32.mrb[0].mxu0
  %v239 = vadd.f32 0.0, %v238
  %v240 = vpop.f32.mrb[0].mxu0
  %241 = vdwg.mxu0
  %242 = vst.msk [vmem:[#allocation2] sm:$0xff] %vm98, %v164
  %243 = vst.msk [vmem:[#allocation2 + $0x8] sm:$0xff] %vm98, %v167
  %244 = vst.msk [vmem:[#allocation2 + $0x10] sm:$0xff] %vm98, %v172
  %245 = vst.msk [vmem:[#allocation2 + $0x18] sm:$0xff] %vm98, %v175
  %246 = vst.msk [vmem:[#allocation2 + $0x20] sm:$0xff] %vm98, %v180
  %247 = vst.msk [vmem:[#allocation2 + $0x28] sm:$0xff] %vm98, %v183
  %248 = vst.msk [vmem:[#allocation2 + $0x30] sm:$0xff] %vm98, %v188
  %249 = vst.msk [vmem:[#allocation2 + $0x38] sm:$0xff] %vm98, %v191
  %250 = vst.msk [vmem:[#allocation2 + $0x40] sm:$0xff] %vm98, %v196
  %251 = vst.msk [vmem:[#allocation2 + $0x48] sm:$0xff] %vm98, %v199
  %252 = vst.msk [vmem:[#allocation2 + $0x50] sm:$0xff] %vm98, %v204
  %253 = vst.msk [vmem:[#allocation2 + $0x58] sm:$0xff] %vm98, %v207
  %254 = vst.msk [vmem:[#allocation2 + $0x60] sm:$0xff] %vm98, %v212
  %255 = vst.msk [vmem:[#allocation2 + $0x68] sm:$0xff] %vm98, %v215
  %256 = vst.msk [vmem:[#allocation2 + $0x70] sm:$0xff] %vm98, %v220
  %257 = vst.msk [vmem:[#allocation2 + $0x78] sm:$0xff] %vm98, %v223
  %258 = vst.msk [vmem:[#allocation2 + $0x80] sm:$0xff] %vm98, %v228
  %259 = vst.msk [vmem:[#allocation2 + $0x88] sm:$0xff] %vm98, %v231
  %260 = vst.msk [vmem:[#allocation2 + $0x90] sm:$0xff] %vm98, %v236
  %261 = vst.msk [vmem:[#allocation2 + $0x98] sm:$0xff] %vm98, %v239
  %v262 = vld [vmem:[#allocation2] sm:$0xff]
  %v263 = vld [vmem:[#allocation2 + $0x8] sm:$0xff]
  %v264 = vld [vmem:[#allocation2 + $0x10] sm:$0xff]
  %v265 = vld [vmem:[#allocation2 + $0x18] sm:$0xff]
  %v266 = vld [vmem:[#allocation2 + $0x20] sm:$0xff]
  %v267 = vld [vmem:[#allocation2 + $0x28] sm:$0xff]
  %v268 = vld [vmem:[#allocation2 + $0x30] sm:$0xff]
  %v269 = vld [vmem:[#allocation2 + $0x38] sm:$0xff]
  %v270 = vld [vmem:[#allocation2 + $0x40] sm:$0xff]
  %v271 = vld [vmem:[#allocation2 + $0x48] sm:$0xff]
  %v272 = vld [vmem:[#allocation2 + $0x50] sm:$0xff]
  %v273 = vld [vmem:[#allocation2 + $0x58] sm:$0xff]
  %v274 = vld [vmem:[#allocation2 + $0x60] sm:$0xff]
  %v275 = vld [vmem:[#allocation2 + $0x68] sm:$0xff]
  %v276 = vld [vmem:[#allocation2 + $0x70] sm:$0xff]
  %v277 = vld [vmem:[#allocation2 + $0x78] sm:$0xff]
  %v278 = vld [vmem:[#allocation2 + $0x80] sm:$0xff]
  %v279 = vld [vmem:[#allocation2 + $0x88] sm:$0xff]
  %v280 = vld [vmem:[#allocation2 + $0x90] sm:$0xff]
  %299 = vrot.lane.b32.xlu0 %v263, 120
  %v300 = vpop.permute.xlu0 %299
  %301 = vrot.lane.b32.xlu0 %v264, 120
  %v302 = vpop.permute.xlu0 %301
  %303 = vrot.lane.b32.xlu0 %v265, 120
  %v304 = vpop.permute.xlu0 %303
  %305 = vrot.lane.b32.xlu0 %v266, 120
  %v306 = vpop.permute.xlu0 %305
  %307 = vrot.lane.b32.xlu0 %v267, 120
  %v308 = vpop.permute.xlu0 %307
  %309 = vrot.lane.b32.xlu0 %v268, 120
  %v310 = vpop.permute.xlu0 %309
  %311 = vrot.lane.b32.xlu0 %v269, 120
  %v312 = vpop.permute.xlu0 %311
  %313 = vrot.lane.b32.xlu0 %v270, 120
  %v314 = vpop.permute.xlu0 %313
  %315 = vrot.lane.b32.xlu0 %v271, 120
  %v316 = vpop.permute.xlu0 %315
  %317 = vrot.lane.b32.xlu0 %v272, 120
  %v318 = vpop.permute.xlu0 %317
  %319 = vrot.lane.b32.xlu0 %v273, 120
  %v320 = vpop.permute.xlu0 %319
  %321 = vrot.lane.b32.xlu0 %v274, 120
  %v322 = vpop.permute.xlu0 %321
  %323 = vrot.lane.b32.xlu0 %v275, 120
  %v324 = vpop.permute.xlu0 %323
  %325 = vrot.lane.b32.xlu0 %v276, 120
  %v326 = vpop.permute.xlu0 %325
  %327 = vrot.lane.b32.xlu0 %v277, 120
  %v328 = vpop.permute.xlu0 %327
  %329 = vrot.lane.b32.xlu0 %v278, 120
  %v330 = vpop.permute.xlu0 %329
  %331 = vrot.lane.b32.xlu0 %v279, 120
  %v332 = vpop.permute.xlu0 %331
  %333 = vrot.lane.b32.xlu0 %v280, 120
  %v334 = vpop.permute.xlu0 %333
  %v353 = vadd.f32 %v262, %v300
  %v354 = vadd.f32 %v263, %v302
  %v355 = vadd.f32 %v264, %v304
  %v356 = vadd.f32 %v265, %v306
  %v357 = vadd.f32 %v266, %v308
  %v358 = vadd.f32 %v267, %v310
  %v359 = vadd.f32 %v268, %v312
  %v360 = vadd.f32 %v269, %v314
  %v361 = vadd.f32 %v270, %v316
  %v362 = vadd.f32 %v271, %v318
  %v363 = vadd.f32 %v272, %v320
  %v364 = vadd.f32 %v273, %v322
  %v365 = vadd.f32 %v274, %v324
  %v366 = vadd.f32 %v275, %v326
  %v367 = vadd.f32 %v276, %v328
  %v368 = vadd.f32 %v277, %v330
  %v369 = vadd.f32 %v278, %v332
  %v370 = vadd.f32 %v279, %v334
  %vm371 = vcmask 64512
  %372 = vst.msk [vmem:[%s2] sm:$0xff] %vm371, %v353
  %373 = vst.msk [vmem:[%s2 + $0x8] sm:$0xff] %vm371, %v354
  %374 = vst.msk [vmem:[%s2 + $0x10] sm:$0xff] %vm371, %v355
  %375 = vst.msk [vmem:[%s2 + $0x18] sm:$0xff] %vm371, %v356
  %376 = vst.msk [vmem:[%s2 + $0x20] sm:$0xff] %vm371, %v357
  %377 = vst.msk [vmem:[%s2 + $0x28] sm:$0xff] %vm371, %v358
  %378 = vst.msk [vmem:[%s2 + $0x30] sm:$0xff] %vm371, %v359
  %379 = vst.msk [vmem:[%s2 + $0x38] sm:$0xff] %vm371, %v360
  %380 = vst.msk [vmem:[%s2 + $0x40] sm:$0xff] %vm371, %v361
  %381 = vst.msk [vmem:[%s2 + $0x48] sm:$0xff] %vm371, %v362
  %382 = vst.msk [vmem:[%s2 + $0x50] sm:$0xff] %vm371, %v363
  %383 = vst.msk [vmem:[%s2 + $0x58] sm:$0xff] %vm371, %v364
  %384 = vst.msk [vmem:[%s2 + $0x60] sm:$0xff] %vm371, %v365
  %385 = vst.msk [vmem:[%s2 + $0x68] sm:$0xff] %vm371, %v366
  %386 = vst.msk [vmem:[%s2 + $0x70] sm:$0xff] %vm371, %v367
  %387 = vst.msk [vmem:[%s2 + $0x78] sm:$0xff] %vm371, %v368
  %388 = vst.msk [vmem:[%s2 + $0x80] sm:$0xff] %vm371, %v369
  %389 = vst.msk [vmem:[%s2 + $0x88] sm:$0xff] %vm371, %v370
  %v390 = vld [vmem:[#allocation2 + $0x8] sm:$0xff]
  %v391 = vld [vmem:[#allocation2 + $0x10] sm:$0xff]
  %v392 = vld [vmem:[#allocation2 + $0x18] sm:$0xff]
  %v393 = vld [vmem:[#allocation2 + $0x20] sm:$0xff]
  %v394 = vld [vmem:[#allocation2 + $0x28] sm:$0xff]
  %v395 = vld [vmem:[#allocation2 + $0x30] sm:$0xff]
  %v396 = vld [vmem:[#allocation2 + $0x38] sm:$0xff]
  %v397 = vld [vmem:[#allocation2 + $0x40] sm:$0xff]
  %v398 = vld [vmem:[#allocation2 + $0x48] sm:$0xff]
  %v399 = vld [vmem:[#allocation2 + $0x50] sm:$0xff]
  %v400 = vld [vmem:[#allocation2 + $0x58] sm:$0xff]
  %v401 = vld [vmem:[#allocation2 + $0x60] sm:$0xff]
  %v402 = vld [vmem:[#allocation2 + $0x68] sm:$0xff]
  %v403 = vld [vmem:[#allocation2 + $0x70] sm:$0xff]
  %v404 = vld [vmem:[#allocation2 + $0x78] sm:$0xff]
  %v405 = vld [vmem:[#allocation2 + $0x80] sm:$0xff]
  %v406 = vld [vmem:[#allocation2 + $0x88] sm:$0xff]
  %v407 = vld [vmem:[#allocation2 + $0x90] sm:$0xff]
  %v408 = vld [vmem:[#allocation2 + $0x98] sm:$0xff]
  %427 = vrot.lane.b32.xlu0 %v391, 120
  %v428 = vpop.permute.xlu0 %427
  %429 = vrot.lane.b32.xlu0 %v392, 120
  %v430 = vpop.permute.xlu0 %429
  %431 = vrot.lane.b32.xlu0 %v393, 120
  %v432 = vpop.permute.xlu0 %431
  %433 = vrot.lane.b32.xlu0 %v394, 120
  %v434 = vpop.permute.xlu0 %433
  %435 = vrot.lane.b32.xlu0 %v395, 120
  %v436 = vpop.permute.xlu0 %435
  %437 = vrot.lane.b32.xlu0 %v396, 120
  %v438 = vpop.permute.xlu0 %437
  %439 = vrot.lane.b32.xlu0 %v397, 120
  %v440 = vpop.permute.xlu0 %439
  %441 = vrot.lane.b32.xlu0 %v398, 120
  %v442 = vpop.permute.xlu0 %441
  %443 = vrot.lane.b32.xlu0 %v399, 120
  %v444 = vpop.permute.xlu0 %443
  %445 = vrot.lane.b32.xlu0 %v400, 120
  %v446 = vpop.permute.xlu0 %445
  %447 = vrot.lane.b32.xlu0 %v401, 120
  %v448 = vpop.permute.xlu0 %447
  %449 = vrot.lane.b32.xlu0 %v402, 120
  %v450 = vpop.permute.xlu0 %449
  %451 = vrot.lane.b32.xlu0 %v403, 120
  %v452 = vpop.permute.xlu0 %451
  %453 = vrot.lane.b32.xlu0 %v404, 120
  %v454 = vpop.permute.xlu0 %453
  %455 = vrot.lane.b32.xlu0 %v405, 120
  %v456 = vpop.permute.xlu0 %455
  %457 = vrot.lane.b32.xlu0 %v406, 120
  %v458 = vpop.permute.xlu0 %457
  %459 = vrot.lane.b32.xlu0 %v407, 120
  %v460 = vpop.permute.xlu0 %459
  %461 = vrot.lane.b32.xlu0 %v408, 120
  %v462 = vpop.permute.xlu0 %461
  %v481 = vadd.f32 %v390, %v428
  %v482 = vadd.f32 %v391, %v430
  %v483 = vadd.f32 %v392, %v432
  %v484 = vadd.f32 %v393, %v434
  %v485 = vadd.f32 %v394, %v436
  %v486 = vadd.f32 %v395, %v438
  %v487 = vadd.f32 %v396, %v440
  %v488 = vadd.f32 %v397, %v442
  %v489 = vadd.f32 %v398, %v444
  %v490 = vadd.f32 %v399, %v446
  %v491 = vadd.f32 %v400, %v448
  %v492 = vadd.f32 %v401, %v450
  %v493 = vadd.f32 %v402, %v452
  %v494 = vadd.f32 %v403, %v454
  %v495 = vadd.f32 %v404, %v456
  %v496 = vadd.f32 %v405, %v458
  %v497 = vadd.f32 %v406, %v460
  %v498 = vadd.f32 %v407, %v462
  %vm499 = vcmask 195712
  %500 = vst.msk [vmem:[%s2] sm:$0xff] %vm499, %v481
  %501 = vst.msk [vmem:[%s2 + $0x8] sm:$0xff] %vm499, %v482
  %502 = vst.msk [vmem:[%s2 + $0x10] sm:$0xff] %vm499, %v483
  %503 = vst.msk [vmem:[%s2 + $0x18] sm:$0xff] %vm499, %v484
  %504 = vst.msk [vmem:[%s2 + $0x20] sm:$0xff] %vm499, %v485
  %505 = vst.msk [vmem:[%s2 + $0x28] sm:$0xff] %vm499, %v486
  %506 = vst.msk [vmem:[%s2 + $0x30] sm:$0xff] %vm499, %v487
  %507 = vst.msk [vmem:[%s2 + $0x38] sm:$0xff] %vm499, %v488
  %508 = vst.msk [vmem:[%s2 + $0x40] sm:$0xff] %vm499, %v489
  %509 = vst.msk [vmem:[%s2 + $0x48] sm:$0xff] %vm499, %v490
  %510 = vst.msk [vmem:[%s2 + $0x50] sm:$0xff] %vm499, %v491
  %511 = vst.msk [vmem:[%s2 + $0x58] sm:$0xff] %vm499, %v492
  %512 = vst.msk [vmem:[%s2 + $0x60] sm:$0xff] %vm499, %v493
  %513 = vst.msk [vmem:[%s2 + $0x68] sm:$0xff] %vm499, %v494
  %514 = vst.msk [vmem:[%s2 + $0x70] sm:$0xff] %vm499, %v495
  %515 = vst.msk [vmem:[%s2 + $0x78] sm:$0xff] %vm499, %v496
  %516 = vst.msk [vmem:[%s2 + $0x80] sm:$0xff] %vm499, %v497
  %517 = vst.msk [vmem:[%s2 + $0x88] sm:$0xff] %vm499, %v498
  %v518 = vld [vmem:[%s0] sm:$0xf]
  %v519 = vld [vmem:[%s0 + $0x4] sm:$0xf]
  %v520 = vld [vmem:[%s0 + $0x8] sm:$0xf]
  %v521 = vld [vmem:[%s0 + $0xc] sm:$0xf]
  %v522 = vld [vmem:[%s0 + $0x10] sm:$0xf]
  %v523 = vld [vmem:[%s0 + $0x14] sm:$0xf]
  %v524 = vld [vmem:[%s0 + $0x18] sm:$0xf]
  %v525 = vld [vmem:[%s0 + $0x1c] sm:$0xf]
  %v526 = vld [vmem:[%s0 + $0x20] sm:$0xf]
  %v527 = vld [vmem:[%s0 + $0x24] sm:$0xf]
  %v528 = vld [vmem:[%s0 + $0x28] sm:$0xf]
  %v529 = vld [vmem:[%s0 + $0x2c] sm:$0xf]
  %v530 = vld [vmem:[%s0 + $0x30] sm:$0xf]
  %v531 = vld [vmem:[%s0 + $0x34] sm:$0xf]
  %v532 = vld [vmem:[%s0 + $0x38] sm:$0xf]
  %v533 = vld [vmem:[%s0 + $0x3c] sm:$0xf]
  %v534 = vld [vmem:[%s0 + $0x40] sm:$0xf]
  %v535 = vld [vmem:[%s0 + $0x44] sm:$0xf]
  %v536 = vld [vmem:[%s0 + $0x48] sm:$0xf]
  %v537 = vld [vmem:[%s0 + $0x4c] sm:$0xf]
  %s538 = scalar_lea.vmem %s1, 16
  %v539 = vld [vmem:[%s538] sm:$0xf]
  %v540 = vld [vmem:[%s538 + $0x4] sm:$0xf]
  %v541 = vld [vmem:[%s538 + $0x8] sm:$0xf]
  %v542 = vld [vmem:[%s538 + $0xc] sm:$0xf]
  %v563 = vunpack.c.l.b16 %v518
  %v564 = vunpack.c.l.b16 %v519
  %v565 = vunpack.c.l.b16 %v520
  %v566 = vunpack.c.l.b16 %v521
  %v567 = vunpack.c.l.b16 %v522
  %v568 = vunpack.c.l.b16 %v523
  %v569 = vunpack.c.l.b16 %v524
  %v570 = vunpack.c.l.b16 %v525
  %v571 = vunpack.c.l.b16 %v526
  %v572 = vunpack.c.l.b16 %v527
  %v573 = vunpack.c.l.b16 %v528
  %v574 = vunpack.c.l.b16 %v529
  %v575 = vunpack.c.l.b16 %v530
  %v576 = vunpack.c.l.b16 %v531
  %v577 = vunpack.c.l.b16 %v532
  %v578 = vunpack.c.l.b16 %v533
  %v579 = vunpack.c.l.b16 %v534
  %v580 = vunpack.c.l.b16 %v535
  %v581 = vunpack.c.l.b16 %v536
  %v582 = vunpack.c.l.b16 %v537
  %v583 = vpack.c.b16 %v564, %v563
  %v584 = vpack.c.b16 %v566, %v565
  %v585 = vpack.c.b16 %v568, %v567
  %v586 = vpack.c.b16 %v570, %v569
  %v587 = vpack.c.b16 %v572, %v571
  %v588 = vpack.c.b16 %v574, %v573
  %v589 = vpack.c.b16 %v576, %v575
  %v590 = vpack.c.b16 %v578, %v577
  %v591 = vpack.c.b16 %v580, %v579
  %v592 = vpack.c.b16 %v582, %v581
  %593 = vrot.lane.b32.xlu0 %v583, 112
  %v594 = vpop.permute.xlu0 %593
  %595 = vrot.lane.b32.xlu0 %v584, 112
  %v596 = vpop.permute.xlu0 %595
  %597 = vrot.lane.b32.xlu0 %v585, 112
  %v598 = vpop.permute.xlu0 %597
  %599 = vrot.lane.b32.xlu0 %v586, 112
  %v600 = vpop.permute.xlu0 %599
  %601 = vrot.lane.b32.xlu0 %v587, 112
  %v602 = vpop.permute.xlu0 %601
  %603 = vrot.lane.b32.xlu0 %v588, 112
  %v604 = vpop.permute.xlu0 %603
  %605 = vrot.lane.b32.xlu0 %v589, 112
  %v606 = vpop.permute.xlu0 %605
  %607 = vrot.lane.b32.xlu0 %v590, 112
  %v608 = vpop.permute.xlu0 %607
  %609 = vrot.lane.b32.xlu0 %v591, 112
  %v610 = vpop.permute.xlu0 %609
  %611 = vrot.lane.b32.xlu0 %v592, 112
  %v612 = vpop.permute.xlu0 %611
  %v617 = vunpack.c.l.b16 %v539
  %v618 = vunpack.c.l.b16 %v540
  %v619 = vunpack.c.l.b16 %v541
  %v620 = vunpack.c.l.b16 %v542
  %v621 = vpack.c.b16 %v618, %v617
  %v622 = vpack.c.b16 %v620, %v619
  %v626 = vsel %vm98, %v594, 0
  %v629 = vsel %vm98, %v596, 0
  %v632 = vsel %vm98, %v598, 0
  %v635 = vsel %vm98, %v600, 0
  %v638 = vsel %vm98, %v602, 0
  %v641 = vsel %vm98, %v604, 0
  %v644 = vsel %vm98, %v606, 0
  %v647 = vsel %vm98, %v608, 0
  %v650 = vsel %vm98, %v610, 0
  %v653 = vsel %vm98, %v612, 0
  %655 = vmatprep.subr.bf16.mxu0 0
  %656 = vmatpush1.bf16.msra.mxu0 %v621
  %657 = vmatprep.subr.bf16.mxu0 0
  %658 = vmatpush1.bf16.msra.mxu0 %v622
  %659 = vmatprep.subr.bf16.mxu0 0
  %660 = vmatpush1.bf16.msra.mxu0 0
  %661 = vmatprep.subr.bf16.mxu0 0
  %662 = vmatpush1.bf16.msra.mxu0 0
  %663 = vmatprep.subr.bf16.mxu0 0
  %664 = vmatpush1.bf16.msra.mxu0 0
  %665 = vmatprep.subr.bf16.mxu0 0
  %666 = vmatpush1.bf16.msra.mxu0 0
  %667 = vmatprep.subr.bf16.mxu0 0
  %668 = vmatpush1.bf16.msra.mxu0 0
  %669 = vmatprep.subr.bf16.mxu0 0
  %670 = vmatpush1.bf16.msra.mxu0 0
  %671 = vmatprep.subr.bf16.mxu0 0
  %672 = vmatpush1.bf16.msra.mxu0 0
  %673 = vmatprep.subr.bf16.mxu0 0
  %674 = vmatpush1.bf16.msra.mxu0 0
  %675 = vmatprep.subr.bf16.mxu0 0
  %676 = vmatpush1.bf16.msra.mxu0 0
  %677 = vmatprep.subr.bf16.mxu0 0
  %678 = vmatpush1.bf16.msra.mxu0 0
  %679 = vmatprep.subr.bf16.mxu0 0
  %680 = vmatpush1.bf16.msra.mxu0 0
  %681 = vmatprep.subr.bf16.mxu0 0
  %682 = vmatpush1.bf16.msra.mxu0 0
  %683 = vmatprep.subr.bf16.mxu0 0
  %684 = vmatpush1.bf16.msra.mxu0 0
  %685 = vmatprep.subr.bf16.mxu0 0
  %686 = vmatpush1.bf16.msra.mxu0 0
  %687 = vmatprep.mubr.bf16.mxu0 0
  %688 = vmatmul.mubr.bf16.gmra.mrb[0].mxu0 %v626
  %v689 = vpop.f32.mrb[0].mxu0
  %v690 = vadd.f32 0.0, %v689
  %v691 = vpop.f32.mrb[0].mxu0
  %v692 = vpop.f32.mrb[0].mxu0
  %v693 = vadd.f32 0.0, %v692
  %v694 = vpop.f32.mrb[0].mxu0
  %695 = vmatprep.mubr.bf16.mxu0 0
  %696 = vmatmul.mubr.bf16.gmra.mrb[0].mxu0 %v629
  %v697 = vpop.f32.mrb[0].mxu0
  %v698 = vadd.f32 0.0, %v697
  %v699 = vpop.f32.mrb[0].mxu0
  %v700 = vpop.f32.mrb[0].mxu0
  %v701 = vadd.f32 0.0, %v700
  %v702 = vpop.f32.mrb[0].mxu0
  %703 = vmatprep.mubr.bf16.mxu0 0
  %704 = vmatmul.mubr.bf16.gmra.mrb[0].mxu0 %v632
  %v705 = vpop.f32.mrb[0].mxu0
  %v706 = vadd.f32 0.0, %v705
  %v707 = vpop.f32.mrb[0].mxu0
  %v708 = vpop.f32.mrb[0].mxu0
  %v709 = vadd.f32 0.0, %v708
  %v710 = vpop.f32.mrb[0].mxu0
  %711 = vmatprep.mubr.bf16.mxu0 0
  %712 = vmatmul.mubr.bf16.gmra.mrb[0].mxu0 %v635
  %v713 = vpop.f32.mrb[0].mxu0
  %v714 = vadd.f32 0.0, %v713
  %v715 = vpop.f32.mrb[0].mxu0
  %v716 = vpop.f32.mrb[0].mxu0
  %v717 = vadd.f32 0.0, %v716
  %v718 = vpop.f32.mrb[0].mxu0
  %719 = vmatprep.mubr.bf16.mxu0 0
  %720 = vmatmul.mubr.bf16.gmra.mrb[0].mxu0 %v638
  %v721 = vpop.f32.mrb[0].mxu0
  %v722 = vadd.f32 0.0, %v721
  %v723 = vpop.f32.mrb[0].mxu0
  %v724 = vpop.f32.mrb[0].mxu0
  %v725 = vadd.f32 0.0, %v724
  %v726 = vpop.f32.mrb[0].mxu0
  %727 = vmatprep.mubr.bf16.mxu0 0
  %728 = vmatmul.mubr.bf16.gmra.mrb[0].mxu0 %v641
  %v729 = vpop.f32.mrb[0].mxu0
  %v730 = vadd.f32 0.0, %v729
  %v731 = vpop.f32.mrb[0].mxu0
  %v732 = vpop.f32.mrb[0].mxu0
  %v733 = vadd.f32 0.0, %v732
  %v734 = vpop.f32.mrb[0].mxu0
  %735 = vmatprep.mubr.bf16.mxu0 0
  %736 = vmatmul.mubr.bf16.gmra.mrb[0].mxu0 %v644
  %v737 = vpop.f32.mrb[0].mxu0
  %v738 = vadd.f32 0.0, %v737
  %v739 = vpop.f32.mrb[0].mxu0
  %v740 = vpop.f32.mrb[0].mxu0
  %v741 = vadd.f32 0.0, %v740
  %v742 = vpop.f32.mrb[0].mxu0
  %743 = vmatprep.mubr.bf16.mxu0 0
  %744 = vmatmul.mubr.bf16.gmra.mrb[0].mxu0 %v647
  %v745 = vpop.f32.mrb[0].mxu0
  %v746 = vadd.f32 0.0, %v745
  %v747 = vpop.f32.mrb[0].mxu0
  %v748 = vpop.f32.mrb[0].mxu0
  %v749 = vadd.f32 0.0, %v748
  %v750 = vpop.f32.mrb[0].mxu0
  %751 = vmatprep.mubr.bf16.mxu0 0
  %752 = vmatmul.mubr.bf16.gmra.mrb[0].mxu0 %v650
  %v753 = vpop.f32.mrb[0].mxu0
  %v754 = vadd.f32 0.0, %v753
  %v755 = vpop.f32.mrb[0].mxu0
  %v756 = vpop.f32.mrb[0].mxu0
  %v757 = vadd.f32 0.0, %v756
  %v758 = vpop.f32.mrb[0].mxu0
  %759 = vmatprep.mubr.bf16.mxu0 0
  %760 = vmatmul.mubr.bf16.gmra.mrb[0].mxu0 %v653
  %v761 = vpop.f32.mrb[0].mxu0
  %v762 = vadd.f32 0.0, %v761
  %v763 = vpop.f32.mrb[0].mxu0
  %v764 = vpop.f32.mrb[0].mxu0
  %v765 = vadd.f32 0.0, %v764
  %v766 = vpop.f32.mrb[0].mxu0
  %767 = vdwg.mxu0
  %768 = vst.msk [vmem:[#allocation2] sm:$0xff] %vm98, %v690
  %769 = vst.msk [vmem:[#allocation2 + $0x8] sm:$0xff] %vm98, %v693
  %770 = vst.msk [vmem:[#allocation2 + $0x10] sm:$0xff] %vm98, %v698
  %771 = vst.msk [vmem:[#allocation2 + $0x18] sm:$0xff] %vm98, %v701
  %772 = vst.msk [vmem:[#allocation2 + $0x20] sm:$0xff] %vm98, %v706
  %773 = vst.msk [vmem:[#allocation2 + $0x28] sm:$0xff] %vm98, %v709
  %774 = vst.msk [vmem:[#allocation2 + $0x30] sm:$0xff] %vm98, %v714
  %775 = vst.msk [vmem:[#allocation2 + $0x38] sm:$0xff] %vm98, %v717
  %776 = vst.msk [vmem:[#allocation2 + $0x40] sm:$0xff] %vm98, %v722
  %777 = vst.msk [vmem:[#allocation2 + $0x48] sm:$0xff] %vm98, %v725
  %778 = vst.msk [vmem:[#allocation2 + $0x50] sm:$0xff] %vm98, %v730
  %779 = vst.msk [vmem:[#allocation2 + $0x58] sm:$0xff] %vm98, %v733
  %780 = vst.msk [vmem:[#allocation2 + $0x60] sm:$0xff] %vm98, %v738
  %781 = vst.msk [vmem:[#allocation2 + $0x68] sm:$0xff] %vm98, %v741
  %782 = vst.msk [vmem:[#allocation2 + $0x70] sm:$0xff] %vm98, %v746
  %783 = vst.msk [vmem:[#allocation2 + $0x78] sm:$0xff] %vm98, %v749
  %784 = vst.msk [vmem:[#allocation2 + $0x80] sm:$0xff] %vm98, %v754
  %785 = vst.msk [vmem:[#allocation2 + $0x88] sm:$0xff] %vm98, %v757
  %786 = vst.msk [vmem:[#allocation2 + $0x90] sm:$0xff] %vm98, %v762
  %787 = vst.msk [vmem:[#allocation2 + $0x98] sm:$0xff] %vm98, %v765
  %v788 = vld [vmem:[#allocation2] sm:$0xff]
  %v789 = vld [vmem:[#allocation2 + $0x8] sm:$0xff]
  %v790 = vld [vmem:[#allocation2 + $0x10] sm:$0xff]
  %v791 = vld [vmem:[#allocation2 + $0x18] sm:$0xff]
  %v792 = vld [vmem:[#allocation2 + $0x20] sm:$0xff]
  %v793 = vld [vmem:[#allocation2 + $0x28] sm:$0xff]
  %v794 = vld [vmem:[#allocation2 + $0x30] sm:$0xff]
  %v795 = vld [vmem:[#allocation2 + $0x38] sm:$0xff]
  %v796 = vld [vmem:[#allocation2 + $0x40] sm:$0xff]
  %v797 = vld [vmem:[#allocation2 + $0x48] sm:$0xff]
  %v798 = vld [vmem:[#allocation2 + $0x50] sm:$0xff]
  %v799 = vld [vmem:[#allocation2 + $0x58] sm:$0xff]
  %v800 = vld [vmem:[#allocation2 + $0x60] sm:$0xff]
  %v801 = vld [vmem:[#allocation2 + $0x68] sm:$0xff]
  %v802 = vld [vmem:[#allocation2 + $0x70] sm:$0xff]
  %v803 = vld [vmem:[#allocation2 + $0x78] sm:$0xff]
  %v804 = vld [vmem:[#allocation2 + $0x80] sm:$0xff]
  %v805 = vld [vmem:[#allocation2 + $0x88] sm:$0xff]
  %v806 = vld [vmem:[#allocation2 + $0x90] sm:$0xff]
  %825 = vrot.lane.b32.xlu0 %v789, 120
  %v826 = vpop.permute.xlu0 %825
  %827 = vrot.lane.b32.xlu0 %v790, 120
  %v828 = vpop.permute.xlu0 %827
  %829 = vrot.lane.b32.xlu0 %v791, 120
  %v830 = vpop.permute.xlu0 %829
  %831 = vrot.lane.b32.xlu0 %v792, 120
  %v832 = vpop.permute.xlu0 %831
  %833 = vrot.lane.b32.xlu0 %v793, 120
  %v834 = vpop.permute.xlu0 %833
  %835 = vrot.lane.b32.xlu0 %v794, 120
  %v836 = vpop.permute.xlu0 %835
  %837 = vrot.lane.b32.xlu0 %v795, 120
  %v838 = vpop.permute.xlu0 %837
  %839 = vrot.lane.b32.xlu0 %v796, 120
  %v840 = vpop.permute.xlu0 %839
  %841 = vrot.lane.b32.xlu0 %v797, 120
  %v842 = vpop.permute.xlu0 %841
  %843 = vrot.lane.b32.xlu0 %v798, 120
  %v844 = vpop.permute.xlu0 %843
  %845 = vrot.lane.b32.xlu0 %v799, 120
  %v846 = vpop.permute.xlu0 %845
  %847 = vrot.lane.b32.xlu0 %v800, 120
  %v848 = vpop.permute.xlu0 %847
  %849 = vrot.lane.b32.xlu0 %v801, 120
  %v850 = vpop.permute.xlu0 %849
  %851 = vrot.lane.b32.xlu0 %v802, 120
  %v852 = vpop.permute.xlu0 %851
  %853 = vrot.lane.b32.xlu0 %v803, 120
  %v854 = vpop.permute.xlu0 %853
  %855 = vrot.lane.b32.xlu0 %v804, 120
  %v856 = vpop.permute.xlu0 %855
  %857 = vrot.lane.b32.xlu0 %v805, 120
  %v858 = vpop.permute.xlu0 %857
  %859 = vrot.lane.b32.xlu0 %v806, 120
  %v860 = vpop.permute.xlu0 %859
  %v879 = vadd.f32 %v788, %v826
  %v880 = vadd.f32 %v789, %v828
  %v881 = vadd.f32 %v790, %v830
  %v882 = vadd.f32 %v791, %v832
  %v883 = vadd.f32 %v792, %v834
  %v884 = vadd.f32 %v793, %v836
  %v885 = vadd.f32 %v794, %v838
  %v886 = vadd.f32 %v795, %v840
  %v887 = vadd.f32 %v796, %v842
  %v888 = vadd.f32 %v797, %v844
  %v889 = vadd.f32 %v798, %v846
  %v890 = vadd.f32 %v799, %v848
  %v891 = vadd.f32 %v800, %v850
  %v892 = vadd.f32 %v801, %v852
  %v893 = vadd.f32 %v802, %v854
  %v894 = vadd.f32 %v803, %v856
  %v895 = vadd.f32 %v804, %v858
  %v896 = vadd.f32 %v805, %v860
  %915 = vrot.lane.b32.xlu0 %v879, 8
  %v916 = vpop.permute.xlu0 %915
  %917 = vrot.lane.b32.xlu0 %v880, 8
  %v918 = vpop.permute.xlu0 %917
  %919 = vrot.lane.b32.xlu0 %v881, 8
  %v920 = vpop.permute.xlu0 %919
  %921 = vrot.lane.b32.xlu0 %v882, 8
  %v922 = vpop.permute.xlu0 %921
  %923 = vrot.lane.b32.xlu0 %v883, 8
  %v924 = vpop.permute.xlu0 %923
  %925 = vrot.lane.b32.xlu0 %v884, 8
  %v926 = vpop.permute.xlu0 %925
  %927 = vrot.lane.b32.xlu0 %v885, 8
  %v928 = vpop.permute.xlu0 %927
  %929 = vrot.lane.b32.xlu0 %v886, 8
  %v930 = vpop.permute.xlu0 %929
  %931 = vrot.lane.b32.xlu0 %v887, 8
  %v932 = vpop.permute.xlu0 %931
  %933 = vrot.lane.b32.xlu0 %v888, 8
  %v934 = vpop.permute.xlu0 %933
  %935 = vrot.lane.b32.xlu0 %v889, 8
  %v936 = vpop.permute.xlu0 %935
  %937 = vrot.lane.b32.xlu0 %v890, 8
  %v938 = vpop.permute.xlu0 %937
  %939 = vrot.lane.b32.xlu0 %v891, 8
  %v940 = vpop.permute.xlu0 %939
  %941 = vrot.lane.b32.xlu0 %v892, 8
  %v942 = vpop.permute.xlu0 %941
  %943 = vrot.lane.b32.xlu0 %v893, 8
  %v944 = vpop.permute.xlu0 %943
  %945 = vrot.lane.b32.xlu0 %v894, 8
  %v946 = vpop.permute.xlu0 %945
  %947 = vrot.lane.b32.xlu0 %v895, 8
  %v948 = vpop.permute.xlu0 %947
  %949 = vrot.lane.b32.xlu0 %v896, 8
  %v950 = vpop.permute.xlu0 %949
  %vm969 = vcmask 130112
  %970 = vst.msk [vmem:[%s2] sm:$0xff] %vm969, %v916
  %971 = vst.msk [vmem:[%s2 + $0x8] sm:$0xff] %vm969, %v918
  %972 = vst.msk [vmem:[%s2 + $0x10] sm:$0xff] %vm969, %v920
  %973 = vst.msk [vmem:[%s2 + $0x18] sm:$0xff] %vm969, %v922
  %974 = vst.msk [vmem:[%s2 + $0x20] sm:$0xff] %vm969, %v924
  %975 = vst.msk [vmem:[%s2 + $0x28] sm:$0xff] %vm969, %v926
  %976 = vst.msk [vmem:[%s2 + $0x30] sm:$0xff] %vm969, %v928
  %977 = vst.msk [vmem:[%s2 + $0x38] sm:$0xff] %vm969, %v930
  %978 = vst.msk [vmem:[%s2 + $0x40] sm:$0xff] %vm969, %v932
  %979 = vst.msk [vmem:[%s2 + $0x48] sm:$0xff] %vm969, %v934
  %980 = vst.msk [vmem:[%s2 + $0x50] sm:$0xff] %vm969, %v936
  %981 = vst.msk [vmem:[%s2 + $0x58] sm:$0xff] %vm969, %v938
  %982 = vst.msk [vmem:[%s2 + $0x60] sm:$0xff] %vm969, %v940
  %983 = vst.msk [vmem:[%s2 + $0x68] sm:$0xff] %vm969, %v942
  %984 = vst.msk [vmem:[%s2 + $0x70] sm:$0xff] %vm969, %v944
  %985 = vst.msk [vmem:[%s2 + $0x78] sm:$0xff] %vm969, %v946
  %986 = vst.msk [vmem:[%s2 + $0x80] sm:$0xff] %vm969, %v948
  %987 = vst.msk [vmem:[%s2 + $0x88] sm:$0xff] %vm969, %v950
  %v988 = vld [vmem:[#allocation2 + $0x8] sm:$0xff]
  %v989 = vld [vmem:[#allocation2 + $0x10] sm:$0xff]
  %v990 = vld [vmem:[#allocation2 + $0x18] sm:$0xff]
  %v991 = vld [vmem:[#allocation2 + $0x20] sm:$0xff]
  %v992 = vld [vmem:[#allocation2 + $0x28] sm:$0xff]
  %v993 = vld [vmem:[#allocation2 + $0x30] sm:$0xff]
  %v994 = vld [vmem:[#allocation2 + $0x38] sm:$0xff]
  %v995 = vld [vmem:[#allocation2 + $0x40] sm:$0xff]
  %v996 = vld [vmem:[#allocation2 + $0x48] sm:$0xff]
  %v997 = vld [vmem:[#allocation2 + $0x50] sm:$0xff]
  %v998 = vld [vmem:[#allocation2 + $0x58] sm:$0xff]
  %v999 = vld [vmem:[#allocation2 + $0x60] sm:$0xff]
  %v1000 = vld [vmem:[#allocation2 + $0x68] sm:$0xff]
  %v1001 = vld [vmem:[#allocation2 + $0x70] sm:$0xff]
  %v1002 = vld [vmem:[#allocation2 + $0x78] sm:$0xff]
  %v1003 = vld [vmem:[#allocation2 + $0x80] sm:$0xff]
  %v1004 = vld [vmem:[#allocation2 + $0x88] sm:$0xff]
  %v1005 = vld [vmem:[#allocation2 + $0x90] sm:$0xff]
  %v1006 = vld [vmem:[#allocation2 + $0x98] sm:$0xff]
  %1025 = vrot.lane.b32.xlu0 %v989, 120
  %v1026 = vpop.permute.xlu0 %1025
  %1027 = vrot.lane.b32.xlu0 %v990, 120
  %v1028 = vpop.permute.xlu0 %1027
  %1029 = vrot.lane.b32.xlu0 %v991, 120
  %v1030 = vpop.permute.xlu0 %1029
  %1031 = vrot.lane.b32.xlu0 %v992, 120
  %v1032 = vpop.permute.xlu0 %1031
  %1033 = vrot.lane.b32.xlu0 %v993, 120
  %v1034 = vpop.permute.xlu0 %1033
  %1035 = vrot.lane.b32.xlu0 %v994, 120
  %v1036 = vpop.permute.xlu0 %1035
  %1037 = vrot.lane.b32.xlu0 %v995, 120
  %v1038 = vpop.permute.xlu0 %1037
  %1039 = vrot.lane.b32.xlu0 %v996, 120
  %v1040 = vpop.permute.xlu0 %1039
  %1041 = vrot.lane.b32.xlu0 %v997, 120
  %v1042 = vpop.permute.xlu0 %1041
  %1043 = vrot.lane.b32.xlu0 %v998, 120
  %v1044 = vpop.permute.xlu0 %1043
  %1045 = vrot.lane.b32.xlu0 %v999, 120
  %v1046 = vpop.permute.xlu0 %1045
  %1047 = vrot.lane.b32.xlu0 %v1000, 120
  %v1048 = vpop.permute.xlu0 %1047
  %1049 = vrot.lane.b32.xlu0 %v1001, 120
  %v1050 = vpop.permute.xlu0 %1049
  %1051 = vrot.lane.b32.xlu0 %v1002, 120
  %v1052 = vpop.permute.xlu0 %1051
  %1053 = vrot.lane.b32.xlu0 %v1003, 120
  %v1054 = vpop.permute.xlu0 %1053
  %1055 = vrot.lane.b32.xlu0 %v1004, 120
  %v1056 = vpop.permute.xlu0 %1055
  %1057 = vrot.lane.b32.xlu0 %v1005, 120
  %v1058 = vpop.permute.xlu0 %1057
  %1059 = vrot.lane.b32.xlu0 %v1006, 120
  %v1060 = vpop.permute.xlu0 %1059
  %v1079 = vadd.f32 %v988, %v1026
  %v1080 = vadd.f32 %v989, %v1028
  %v1081 = vadd.f32 %v990, %v1030
  %v1082 = vadd.f32 %v991, %v1032
  %v1083 = vadd.f32 %v992, %v1034
  %v1084 = vadd.f32 %v993, %v1036
  %v1085 = vadd.f32 %v994, %v1038
  %v1086 = vadd.f32 %v995, %v1040
  %v1087 = vadd.f32 %v996, %v1042
  %v1088 = vadd.f32 %v997, %v1044
  %v1089 = vadd.f32 %v998, %v1046
  %v1090 = vadd.f32 %v999, %v1048
  %v1091 = vadd.f32 %v1000, %v1050
  %v1092 = vadd.f32 %v1001, %v1052
  %v1093 = vadd.f32 %v1002, %v1054
  %v1094 = vadd.f32 %v1003, %v1056
  %v1095 = vadd.f32 %v1004, %v1058
  %v1096 = vadd.f32 %v1005, %v1060
  %1115 = vrot.lane.b32.xlu0 %v1079, 8
  %v1116 = vpop.permute.xlu0 %1115
  %1117 = vrot.lane.b32.xlu0 %v1080, 8
  %v1118 = vpop.permute.xlu0 %1117
  %1119 = vrot.lane.b32.xlu0 %v1081, 8
  %v1120 = vpop.permute.xlu0 %1119
  %1121 = vrot.lane.b32.xlu0 %v1082, 8
  %v1122 = vpop.permute.xlu0 %1121
  %1123 = vrot.lane.b32.xlu0 %v1083, 8
  %v1124 = vpop.permute.xlu0 %1123
  %1125 = vrot.lane.b32.xlu0 %v1084, 8
  %v1126 = vpop.permute.xlu0 %1125
  %1127 = vrot.lane.b32.xlu0 %v1085, 8
  %v1128 = vpop.permute.xlu0 %1127
  %1129 = vrot.lane.b32.xlu0 %v1086, 8
  %v1130 = vpop.permute.xlu0 %1129
  %1131 = vrot.lane.b32.xlu0 %v1087, 8
  %v1132 = vpop.permute.xlu0 %1131
  %1133 = vrot.lane.b32.xlu0 %v1088, 8
  %v1134 = vpop.permute.xlu0 %1133
  %1135 = vrot.lane.b32.xlu0 %v1089, 8
  %v1136 = vpop.permute.xlu0 %1135
  %1137 = vrot.lane.b32.xlu0 %v1090, 8
  %v1138 = vpop.permute.xlu0 %1137
  %1139 = vrot.lane.b32.xlu0 %v1091, 8
  %v1140 = vpop.permute.xlu0 %1139
  %1141 = vrot.lane.b32.xlu0 %v1092, 8
  %v1142 = vpop.permute.xlu0 %1141
  %1143 = vrot.lane.b32.xlu0 %v1093, 8
  %v1144 = vpop.permute.xlu0 %1143
  %1145 = vrot.lane.b32.xlu0 %v1094, 8
  %v1146 = vpop.permute.xlu0 %1145
  %1147 = vrot.lane.b32.xlu0 %v1095, 8
  %v1148 = vpop.permute.xlu0 %1147
  %1149 = vrot.lane.b32.xlu0 %v1096, 8
  %v1150 = vpop.permute.xlu0 %1149
  %vm1169 = vcmask 261312
  %1170 = vst.msk [vmem:[%s2] sm:$0xff] %vm1169, %v1116
  %1171 = vst.msk [vmem:[%s2 + $0x8] sm:$0xff] %vm1169, %v1118
  %1172 = vst.msk [vmem:[%s2 + $0x10] sm:$0xff] %vm1169, %v1120
  %1173 = vst.msk [vmem:[%s2 + $0x18] sm:$0xff] %vm1169, %v1122
  %1174 = vst.msk [vmem:[%s2 + $0x20] sm:$0xff] %vm1169, %v1124
  %1175 = vst.msk [vmem:[%s2 + $0x28] sm:$0xff] %vm1169, %v1126
  %1176 = vst.msk [vmem:[%s2 + $0x30] sm:$0xff] %vm1169, %v1128
  %1177 = vst.msk [vmem:[%s2 + $0x38] sm:$0xff] %vm1169, %v1130
  %1178 = vst.msk [vmem:[%s2 + $0x40] sm:$0xff] %vm1169, %v1132
  %1179 = vst.msk [vmem:[%s2 + $0x48] sm:$0xff] %vm1169, %v1134
  %1180 = vst.msk [vmem:[%s2 + $0x50] sm:$0xff] %vm1169, %v1136
  %1181 = vst.msk [vmem:[%s2 + $0x58] sm:$0xff] %vm1169, %v1138
  %1182 = vst.msk [vmem:[%s2 + $0x60] sm:$0xff] %vm1169, %v1140
  %1183 = vst.msk [vmem:[%s2 + $0x68] sm:$0xff] %vm1169, %v1142
  %1184 = vst.msk [vmem:[%s2 + $0x70] sm:$0xff] %vm1169, %v1144
  %1185 = vst.msk [vmem:[%s2 + $0x78] sm:$0xff] %vm1169, %v1146
  %1186 = vst.msk [vmem:[%s2 + $0x80] sm:$0xff] %vm1169, %v1148
  %1187 = vst.msk [vmem:[%s2 + $0x88] sm:$0xff] %vm1169, %v1150
  %1188 = vst.msk [vmem:[%s2 + $0x90] sm:$0xff] %vm98, 0.0
  %1189 = vst.msk [vmem:[%s2 + $0x98] sm:$0xff] %vm98, 0.0
  // Predicated region
  $region10: #{netg_forward.18} parent=0 // pred_check
    _
  $region11: #{netg_forward.18} parent=0 // pred_check_branch
    %1191 = sbr.rel (0) target = $region13
  $region12: #{netg_forward.18} parent=0 // pred_region
    _
  $region13: #{netg_forward.18} parent=0 // pred_fallthru
    _
  // Predicated region
  $region14: #{netg_forward.18} parent=0 // pred_check
    _
  $region15: #{netg_forward.18} parent=0 // pred_check_branch
    %1193 = sbr.rel (0) target = $region17
  $region16: #{netg_forward.18} parent=0 // pred_region
    _
  $region17: #{netg_forward.18} parent=0 // pred_fallthru
    _

// kernel: netg_forward.20
$region0: #{netg_forward.20}
  #allocation0 [shape = 'u32[]', space=smem, size = 0x4, offset = 0x4, fixed_abs, tag = 'smem constant byte address 0x4 - core index']
  #allocation1 [shape = 'u32[144,128]{1,0:T(1,128)}', space=vmem, size = 0x12000, scoped, tag = 'internal scratch']
  %s0 = inlined_call_operand.vmem [shape: f32[512,8], index: 0, kind: input, shape index: {}]
  %s1 = inlined_call_operand.vmem [shape: f32[1,8], index: 1, kind: input, shape index: {}]
  %s2 = inlined_call_operand.vmem [shape: f32[1,8], index: 2, kind: input, shape index: {}]
  %s3 = inlined_call_operand.vmem [shape: f32[512,8], index: 3, kind: output, shape index: {}]
  %s4 = sld [smem:[#allocation0]]
  $region22: #{netg_forward.20} parent=0
    _
  %s6 = ssub.s32 1, %s4
  %s7 = scalar_select 0, %s6, %s4
  // Predicated region
  $region2: #{netg_forward.20} parent=0 // pred_check
    _
  $region3: #{netg_forward.20} parent=0 // pred_check_branch
    %9 = sbr.rel (0) target = $region5
  $region4: #{netg_forward.20} parent=0 // pred_region
    _
  $region5: #{netg_forward.20} parent=0 // pred_fallthru
    _
  // Predicated region
  $region6: #{netg_forward.20} parent=0 // pred_check
    _
  $region7: #{netg_forward.20} parent=0 // pred_check_branch
    %11 = sbr.rel (0) target = $region9
  $region8: #{netg_forward.20} parent=0 // pred_region
    _
  $region9: #{netg_forward.20} parent=0 // pred_fallthru
    _
  // Predicated region
  $region10: #{netg_forward.20} parent=0 // pred_check
    _
  $region11: #{netg_forward.20} parent=0 // pred_check_branch
    %13 = sbr.rel (0) target = $region13
  $region12: #{netg_forward.20} parent=0 // pred_region
    _
  $region13: #{netg_forward.20} parent=0 // pred_fallthru
    _
  %v14 = vld [vmem:[%s0] sm:$0xff]
  %v15 = vld [vmem:[%s0 + $0x8] sm:$0xff]
  %v16 = vld [vmem:[%s0 + $0x10] sm:$0xff]
  %v17 = vld [vmem:[%s0 + $0x18] sm:$0xff]
  %v18 = vld [vmem:[%s0 + $0x20] sm:$0xff]
  %v19 = vld [vmem:[%s0 + $0x28] sm:$0xff]
  %v20 = vld [vmem:[%s0 + $0x30] sm:$0xff]
  %v21 = vld [vmem:[%s0 + $0x38] sm:$0xff]
  %v22 = vld [vmem:[%s0 + $0x40] sm:$0xff]
  %v23 = vld [vmem:[%s0 + $0x48] sm:$0xff]
  %v24 = vld [vmem:[%s0 + $0x50] sm:$0xff]
  %v25 = vld [vmem:[%s0 + $0x58] sm:$0xff]
  %v26 = vld [vmem:[%s0 + $0x60] sm:$0xff]
  %v27 = vld [vmem:[%s0 + $0x68] sm:$0xff]
  %v28 = vld [vmem:[%s0 + $0x70] sm:$0xff]
  %v29 = vld [vmem:[%s0 + $0x78] sm:$0xff]
  %v30 = vld [vmem:[%s0 + $0x80] sm:$0xff]
  %v31 = vld [vmem:[%s0 + $0x88] sm:$0xff]
  %v32 = vld [vmem:[%s0 + $0x90] sm:$0xff]
  %v33 = vld [vmem:[%s0 + $0x98] sm:$0xff]
  %v34 = vld [vmem:[%s0 + $0xa0] sm:$0xff]
  %v35 = vld [vmem:[%s0 + $0xa8] sm:$0xff]
  %v36 = vld [vmem:[%s0 + $0xb0] sm:$0xff]
  %v37 = vld [vmem:[%s0 + $0xb8] sm:$0xff]
  %v38 = vld [vmem:[%s0 + $0xc0] sm:$0xff]
  %v39 = vld [vmem:[%s0 + $0xc8] sm:$0xff]
  %v40 = vld [vmem:[%s0 + $0xd0] sm:$0xff]
  %v41 = vld [vmem:[%s0 + $0xd8] sm:$0xff]
  %v42 = vld [vmem:[%s0 + $0xe0] sm:$0xff]
  %v43 = vld [vmem:[%s0 + $0xe8] sm:$0xff]
  %v44 = vld [vmem:[%s0 + $0xf0] sm:$0xff]
  %v45 = vld [vmem:[%s0 + $0xf8] sm:$0xff]
  %v46 = vld [vmem:[%s0 + $0x100] sm:$0xff]
  %v47 = vld [vmem:[%s0 + $0x108] sm:$0xff]
  %v48 = vld [vmem:[%s0 + $0x110] sm:$0xff]
  %v49 = vld [vmem:[%s0 + $0x118] sm:$0xff]
  %v50 = vld [vmem:[%s0 + $0x120] sm:$0xff]
  %v51 = vld [vmem:[%s0 + $0x128] sm:$0xff]
  %v52 = vld [vmem:[%s0 + $0x130] sm:$0xff]
  %v53 = vld [vmem:[%s0 + $0x138] sm:$0xff]
  %v54 = vld [vmem:[%s0 + $0x140] sm:$0xff]
  %v55 = vld [vmem:[%s0 + $0x148] sm:$0xff]
  %v56 = vld [vmem:[%s0 + $0x150] sm:$0xff]
  %v57 = vld [vmem:[%s0 + $0x158] sm:$0xff]
  %v58 = vld [vmem:[%s0 + $0x160] sm:$0xff]
  %v59 = vld [vmem:[%s0 + $0x168] sm:$0xff]
  %v60 = vld [vmem:[%s0 + $0x170] sm:$0xff]
  %v61 = vld [vmem:[%s0 + $0x178] sm:$0xff]
  %v62 = vld [vmem:[%s0 + $0x180] sm:$0xff]
  %v63 = vld [vmem:[%s0 + $0x188] sm:$0xff]
  %v64 = vld [vmem:[%s0 + $0x190] sm:$0xff]
  %v65 = vld [vmem:[%s0 + $0x198] sm:$0xff]
  %v66 = vld [vmem:[%s0 + $0x1a0] sm:$0xff]
  %v67 = vld [vmem:[%s0 + $0x1a8] sm:$0xff]
  %v68 = vld [vmem:[%s0 + $0x1b0] sm:$0xff]
  %v69 = vld [vmem:[%s0 + $0x1b8] sm:$0xff]
  %v70 = vld [vmem:[%s0 + $0x1c0] sm:$0xff]
  %v71 = vld [vmem:[%s0 + $0x1c8] sm:$0xff]
  %v72 = vld [vmem:[%s0 + $0x1d0] sm:$0xff]
  %v73 = vld [vmem:[%s0 + $0x1d8] sm:$0xff]
  %v74 = vld [vmem:[%s0 + $0x1e0] sm:$0xff]
  %v75 = vld [vmem:[%s0 + $0x1e8] sm:$0xff]
  %v76 = vld [vmem:[%s0 + $0x1f0] sm:$0xff]
  %v77 = vld [vmem:[%s0 + $0x1f8] sm:$0xff]
  %v78 = vld [vmem:[%s1] sm:$0x1]
  %v80 = vlaneseq
  %v81 = vshrl.u32 %v80, 7
  %v82 = vsub.s32 0, %v81
  %v83 = vrot.slane %v78, %v82
  %v85 = vmul.f32 %v14, %v83
  %v86 = vmul.f32 %v15, %v83
  %v87 = vmul.f32 %v16, %v83
  %v88 = vmul.f32 %v17, %v83
  %v89 = vmul.f32 %v18, %v83
  %v90 = vmul.f32 %v19, %v83
  %v91 = vmul.f32 %v20, %v83
  %v92 = vmul.f32 %v21, %v83
  %v93 = vmul.f32 %v22, %v83
  %v94 = vmul.f32 %v23, %v83
  %v95 = vmul.f32 %v24, %v83
  %v96 = vmul.f32 %v25, %v83
  %v97 = vmul.f32 %v26, %v83
  %v98 = vmul.f32 %v27, %v83
  %v99 = vmul.f32 %v28, %v83
  %v100 = vmul.f32 %v29, %v83
  %v101 = vmul.f32 %v30, %v83
  %v102 = vmul.f32 %v31, %v83
  %v103 = vmul.f32 %v32, %v83
  %v104 = vmul.f32 %v33, %v83
  %v105 = vmul.f32 %v34, %v83
  %v106 = vmul.f32 %v35, %v83
  %v107 = vmul.f32 %v36, %v83
  %v108 = vmul.f32 %v37, %v83
  %v109 = vmul.f32 %v38, %v83
  %v110 = vmul.f32 %v39, %v83
  %v111 = vmul.f32 %v40, %v83
  %v112 = vmul.f32 %v41, %v83
  %v113 = vmul.f32 %v42, %v83
  %v114 = vmul.f32 %v43, %v83
  %v115 = vmul.f32 %v44, %v83
  %v116 = vmul.f32 %v45, %v83
  %v117 = vmul.f32 %v46, %v83
  %v118 = vmul.f32 %v47, %v83
  %v119 = vmul.f32 %v48, %v83
  %v120 = vmul.f32 %v49, %v83
  %v121 = vmul.f32 %v50, %v83
  %v122 = vmul.f32 %v51, %v83
  %v123 = vmul.f32 %v52, %v83
  %v124 = vmul.f32 %v53, %v83
  %v125 = vmul.f32 %v54, %v83
  %v126 = vmul.f32 %v55, %v83
  %v127 = vmul.f32 %v56, %v83
  %v128 = vmul.f32 %v57, %v83
  %v129 = vmul.f32 %v58, %v83
  %v130 = vmul.f32 %v59, %v83
  %v131 = vmul.f32 %v60, %v83
  %v132 = vmul.f32 %v61, %v83
  %v133 = vmul.f32 %v62, %v83
  %v134 = vmul.f32 %v63, %v83
  %v135 = vmul.f32 %v64, %v83
  %v136 = vmul.f32 %v65, %v83
  %v137 = vmul.f32 %v66, %v83
  %v138 = vmul.f32 %v67, %v83
  %v139 = vmul.f32 %v68, %v83
  %v140 = vmul.f32 %v69, %v83
  %v141 = vmul.f32 %v70, %v83
  %v142 = vmul.f32 %v71, %v83
  %v143 = vmul.f32 %v72, %v83
  %v144 = vmul.f32 %v73, %v83
  %v145 = vmul.f32 %v74, %v83
  %v146 = vmul.f32 %v75, %v83
  %v147 = vmul.f32 %v76, %v83
  %v148 = vmul.f32 %v77, %v83
  %v149 = vld [vmem:[%s2] sm:$0x1]
  %v151 = vlaneseq
  %v152 = vshrl.u32 %v151, 7
  %v153 = vsub.s32 0, %v152
  %v154 = vrot.slane %v149, %v153
  %v156 = vadd.f32 %v85, %v154
  %v157 = vadd.f32 %v86, %v154
  %v158 = vadd.f32 %v87, %v154
  %v159 = vadd.f32 %v88, %v154
  %v160 = vadd.f32 %v89, %v154
  %v161 = vadd.f32 %v90, %v154
  %v162 = vadd.f32 %v91, %v154
  %v163 = vadd.f32 %v92, %v154
  %v164 = vadd.f32 %v93, %v154
  %v165 = vadd.f32 %v94, %v154
  %v166 = vadd.f32 %v95, %v154
  %v167 = vadd.f32 %v96, %v154
  %v168 = vadd.f32 %v97, %v154
  %v169 = vadd.f32 %v98, %v154
  %v170 = vadd.f32 %v99, %v154
  %v171 = vadd.f32 %v100, %v154
  %v172 = vadd.f32 %v101, %v154
  %v173 = vadd.f32 %v102, %v154
  %v174 = vadd.f32 %v103, %v154
  %v175 = vadd.f32 %v104, %v154
  %v176 = vadd.f32 %v105, %v154
  %v177 = vadd.f32 %v106, %v154
  %v178 = vadd.f32 %v107, %v154
  %v179 = vadd.f32 %v108, %v154
  %v180 = vadd.f32 %v109, %v154
  %v181 = vadd.f32 %v110, %v154
  %v182 = vadd.f32 %v111, %v154
  %v183 = vadd.f32 %v112, %v154
  %v184 = vadd.f32 %v113, %v154
  %v185 = vadd.f32 %v114, %v154
  %v186 = vadd.f32 %v115, %v154
  %v187 = vadd.f32 %v116, %v154
  %v188 = vadd.f32 %v117, %v154
  %v189 = vadd.f32 %v118, %v154
  %v190 = vadd.f32 %v119, %v154
  %v191 = vadd.f32 %v120, %v154
  %v192 = vadd.f32 %v121, %v154
  %v193 = vadd.f32 %v122, %v154
  %v194 = vadd.f32 %v123, %v154
  %v195 = vadd.f32 %v124, %v154
  %v196 = vadd.f32 %v125, %v154
  %v197 = vadd.f32 %v126, %v154
  %v198 = vadd.f32 %v127, %v154
  %v199 = vadd.f32 %v128, %v154
  %v200 = vadd.f32 %v129, %v154
  %v201 = vadd.f32 %v130, %v154
  %v202 = vadd.f32 %v131, %v154
  %v203 = vadd.f32 %v132, %v154
  %v204 = vadd.f32 %v133, %v154
  %v205 = vadd.f32 %v134, %v154
  %v206 = vadd.f32 %v135, %v154
  %v207 = vadd.f32 %v136, %v154
  %v208 = vadd.f32 %v137, %v154
  %v209 = vadd.f32 %v138, %v154
  %v210 = vadd.f32 %v139, %v154
  %v211 = vadd.f32 %v140, %v154
  %v212 = vadd.f32 %v141, %v154
  %v213 = vadd.f32 %v142, %v154
  %v214 = vadd.f32 %v143, %v154
  %v215 = vadd.f32 %v144, %v154
  %v216 = vadd.f32 %v145, %v154
  %v217 = vadd.f32 %v146, %v154
  %v218 = vadd.f32 %v147, %v154
  %v219 = vadd.f32 %v148, %v154
  %v220 = vmax.f32 %v156, 0.0
  %v221 = vmax.f32 %v157, 0.0
  %v222 = vmax.f32 %v158, 0.0
  %v223 = vmax.f32 %v159, 0.0
  %v224 = vmax.f32 %v160, 0.0
  %v225 = vmax.f32 %v161, 0.0
  %v226 = vmax.f32 %v162, 0.0
  %v227 = vmax.f32 %v163, 0.0
  %v228 = vmax.f32 %v164, 0.0
  %v229 = vmax.f32 %v165, 0.0
  %v230 = vmax.f32 %v166, 0.0
  %v231 = vmax.f32 %v167, 0.0
  %v232 = vmax.f32 %v168, 0.0
  %v233 = vmax.f32 %v169, 0.0
  %v234 = vmax.f32 %v170, 0.0
  %v235 = vmax.f32 %v171, 0.0
  %v236 = vmax.f32 %v172, 0.0
  %v237 = vmax.f32 %v173, 0.0
  %v238 = vmax.f32 %v174, 0.0
  %v239 = vmax.f32 %v175, 0.0
  %v240 = vmax.f32 %v176, 0.0
  %v241 = vmax.f32 %v177, 0.0
  %v242 = vmax.f32 %v178, 0.0
  %v243 = vmax.f32 %v179, 0.0
  %v244 = vmax.f32 %v180, 0.0
  %v245 = vmax.f32 %v181, 0.0
  %v246 = vmax.f32 %v182, 0.0
  %v247 = vmax.f32 %v183, 0.0
  %v248 = vmax.f32 %v184, 0.0
  %v249 = vmax.f32 %v185, 0.0
  %v250 = vmax.f32 %v186, 0.0
  %v251 = vmax.f32 %v187, 0.0
  %v252 = vmax.f32 %v188, 0.0
  %v253 = vmax.f32 %v189, 0.0
  %v254 = vmax.f32 %v190, 0.0
  %v255 = vmax.f32 %v191, 0.0
  %v256 = vmax.f32 %v192, 0.0
  %v257 = vmax.f32 %v193, 0.0
  %v258 = vmax.f32 %v194, 0.0
  %v259 = vmax.f32 %v195, 0.0
  %v260 = vmax.f32 %v196, 0.0
  %v261 = vmax.f32 %v197, 0.0
  %v262 = vmax.f32 %v198, 0.0
  %v263 = vmax.f32 %v199, 0.0
  %v264 = vmax.f32 %v200, 0.0
  %v265 = vmax.f32 %v201, 0.0
  %v266 = vmax.f32 %v202, 0.0
  %v267 = vmax.f32 %v203, 0.0
  %v268 = vmax.f32 %v204, 0.0
  %v269 = vmax.f32 %v205, 0.0
  %v270 = vmax.f32 %v206, 0.0
  %v271 = vmax.f32 %v207, 0.0
  %v272 = vmax.f32 %v208, 0.0
  %v273 = vmax.f32 %v209, 0.0
  %v274 = vmax.f32 %v210, 0.0
  %v275 = vmax.f32 %v211, 0.0
  %v276 = vmax.f32 %v212, 0.0
  %v277 = vmax.f32 %v213, 0.0
  %v278 = vmax.f32 %v214, 0.0
  %v279 = vmax.f32 %v215, 0.0
  %v280 = vmax.f32 %v216, 0.0
  %v281 = vmax.f32 %v217, 0.0
  %v282 = vmax.f32 %v218, 0.0
  %v283 = vmax.f32 %v219, 0.0
  %vm284 = vcmask 64512
  %285 = vst.msk [vmem:[%s3] sm:$0xff] %vm284, %v220
  %286 = vst.msk [vmem:[%s3 + $0x8] sm:$0xff] %vm284, %v221
  %287 = vst.msk [vmem:[%s3 + $0x10] sm:$0xff] %vm284, %v222
  %288 = vst.msk [vmem:[%s3 + $0x18] sm:$0xff] %vm284, %v223
  %289 = vst.msk [vmem:[%s3 + $0x20] sm:$0xff] %vm284, %v224
  %290 = vst.msk [vmem:[%s3 + $0x28] sm:$0xff] %vm284, %v225
  %291 = vst.msk [vmem:[%s3 + $0x30] sm:$0xff] %vm284, %v226
  %292 = vst.msk [vmem:[%s3 + $0x38] sm:$0xff] %vm284, %v227
  %293 = vst.msk [vmem:[%s3 + $0x40] sm:$0xff] %vm284, %v228
  %294 = vst.msk [vmem:[%s3 + $0x48] sm:$0xff] %vm284, %v229
  %295 = vst.msk [vmem:[%s3 + $0x50] sm:$0xff] %vm284, %v230
  %296 = vst.msk [vmem:[%s3 + $0x58] sm:$0xff] %vm284, %v231
  %297 = vst.msk [vmem:[%s3 + $0x60] sm:$0xff] %vm284, %v232
  %298 = vst.msk [vmem:[%s3 + $0x68] sm:$0xff] %vm284, %v233
  %299 = vst.msk [vmem:[%s3 + $0x70] sm:$0xff] %vm284, %v234
  %300 = vst.msk [vmem:[%s3 + $0x78] sm:$0xff] %vm284, %v235
  %301 = vst.msk [vmem:[%s3 + $0x80] sm:$0xff] %vm284, %v236
  %302 = vst.msk [vmem:[%s3 + $0x88] sm:$0xff] %vm284, %v237
  %303 = vst.msk [vmem:[%s3 + $0x90] sm:$0xff] %vm284, %v238
  %304 = vst.msk [vmem:[%s3 + $0x98] sm:$0xff] %vm284, %v239
  %305 = vst.msk [vmem:[%s3 + $0xa0] sm:$0xff] %vm284, %v240
  %306 = vst.msk [vmem:[%s3 + $0xa8] sm:$0xff] %vm284, %v241
  %307 = vst.msk [vmem:[%s3 + $0xb0] sm:$0xff] %vm284, %v242
  %308 = vst.msk [vmem:[%s3 + $0xb8] sm:$0xff] %vm284, %v243
  %309 = vst.msk [vmem:[%s3 + $0xc0] sm:$0xff] %vm284, %v244
  %310 = vst.msk [vmem:[%s3 + $0xc8] sm:$0xff] %vm284, %v245
  %311 = vst.msk [vmem:[%s3 + $0xd0] sm:$0xff] %vm284, %v246
  %312 = vst.msk [vmem:[%s3 + $0xd8] sm:$0xff] %vm284, %v247
  %313 = vst.msk [vmem:[%s3 + $0xe0] sm:$0xff] %vm284, %v248
  %314 = vst.msk [vmem:[%s3 + $0xe8] sm:$0xff] %vm284, %v249
  %315 = vst.msk [vmem:[%s3 + $0xf0] sm:$0xff] %vm284, %v250
  %316 = vst.msk [vmem:[%s3 + $0xf8] sm:$0xff] %vm284, %v251
  %317 = vst.msk [vmem:[%s3 + $0x100] sm:$0xff] %vm284, %v252
  %318 = vst.msk [vmem:[%s3 + $0x108] sm:$0xff] %vm284, %v253
  %319 = vst.msk [vmem:[%s3 + $0x110] sm:$0xff] %vm284, %v254
  %320 = vst.msk [vmem:[%s3 + $0x118] sm:$0xff] %vm284, %v255
  %321 = vst.msk [vmem:[%s3 + $0x120] sm:$0xff] %vm284, %v256
  %322 = vst.msk [vmem:[%s3 + $0x128] sm:$0xff] %vm284, %v257
  %323 = vst.msk [vmem:[%s3 + $0x130] sm:$0xff] %vm284, %v258
  %324 = vst.msk [vmem:[%s3 + $0x138] sm:$0xff] %vm284, %v259
  %325 = vst.msk [vmem:[%s3 + $0x140] sm:$0xff] %vm284, %v260
  %326 = vst.msk [vmem:[%s3 + $0x148] sm:$0xff] %vm284, %v261
  %327 = vst.msk [vmem:[%s3 + $0x150] sm:$0xff] %vm284, %v262
  %328 = vst.msk [vmem:[%s3 + $0x158] sm:$0xff] %vm284, %v263
  %329 = vst.msk [vmem:[%s3 + $0x160] sm:$0xff] %vm284, %v264
  %330 = vst.msk [vmem:[%s3 + $0x168] sm:$0xff] %vm284, %v265
  %331 = vst.msk [vmem:[%s3 + $0x170] sm:$0xff] %vm284, %v266
  %332 = vst.msk [vmem:[%s3 + $0x178] sm:$0xff] %vm284, %v267
  %333 = vst.msk [vmem:[%s3 + $0x180] sm:$0xff] %vm284, %v268
  %334 = vst.msk [vmem:[%s3 + $0x188] sm:$0xff] %vm284, %v269
  %335 = vst.msk [vmem:[%s3 + $0x190] sm:$0xff] %vm284, %v270
  %336 = vst.msk [vmem:[%s3 + $0x198] sm:$0xff] %vm284, %v271
  %337 = vst.msk [vmem:[%s3 + $0x1a0] sm:$0xff] %vm284, %v272
  %338 = vst.msk [vmem:[%s3 + $0x1a8] sm:$0xff] %vm284, %v273
  %339 = vst.msk [vmem:[%s3 + $0x1b0] sm:$0xff] %vm284, %v274
  %340 = vst.msk [vmem:[%s3 + $0x1b8] sm:$0xff] %vm284, %v275
  %341 = vst.msk [vmem:[%s3 + $0x1c0] sm:$0xff] %vm284, %v276
  %342 = vst.msk [vmem:[%s3 + $0x1c8] sm:$0xff] %vm284, %v277
  %343 = vst.msk [vmem:[%s3 + $0x1d0] sm:$0xff] %vm284, %v278
  %344 = vst.msk [vmem:[%s3 + $0x1d8] sm:$0xff] %vm284, %v279
  %345 = vst.msk [vmem:[%s3 + $0x1e0] sm:$0xff] %vm284, %v280
  %346 = vst.msk [vmem:[%s3 + $0x1e8] sm:$0xff] %vm284, %v281
  %347 = vst.msk [vmem:[%s3 + $0x1f0] sm:$0xff] %vm284, %v282
  %348 = vst.msk [vmem:[%s3 + $0x1f8] sm:$0xff] %vm284, %v283
  // Predicated region
  $region14: #{netg_forward.20} parent=0 // pred_check
    _
  $region15: #{netg_forward.20} parent=0 // pred_check_branch
    %350 = sbr.rel (0) target = $region17
  $region16: #{netg_forward.20} parent=0 // pred_region
    _
  $region17: #{netg_forward.20} parent=0 // pred_fallthru
    _
  // Predicated region
  $region18: #{netg_forward.20} parent=0 // pred_check
    _
  $region19: #{netg_forward.20} parent=0 // pred_check_branch
    %352 = sbr.rel (0) target = $region21
  $region20: #{netg_forward.20} parent=0 // pred_region
    _
  $region21: #{netg_forward.20} parent=0 // pred_fallthru
    _

// kernel: netg_forward.19
$region0: #{netg_forward.19}
  #allocation0 [shape = 'u32[]', space=smem, size = 0x4, offset = 0x4, fixed_abs, tag = 'smem constant byte address 0x4 - core index']
  #allocation1 [shape = 'u32[144,128]{1,0:T(1,128)}', space=vmem, size = 0x12000, scoped, tag = 'internal scratch']
  %s0 = inlined_call_operand.vmem [shape: f32[512,8], index: 0, kind: input, shape index: {}]
  %s1 = inlined_call_operand.vmem [shape: f32[2,8], index: 1, kind: output, shape index: {}]
  %s2 = sld [smem:[#allocation0]]
  $region18: #{netg_forward.19} parent=0
    _
  %s4 = ssub.s32 1, %s2
  %s5 = scalar_select 0, %s4, %s2
  // Predicated region
  $region2: #{netg_forward.19} parent=0 // pred_check
    _
  $region3: #{netg_forward.19} parent=0 // pred_check_branch
    %7 = sbr.rel (0) target = $region5
  $region4: #{netg_forward.19} parent=0 // pred_region
    _
  $region5: #{netg_forward.19} parent=0 // pred_fallthru
    _
  %p8 = scmp.eq.s32.totalorder 0, 0
  // Predicated region
  $region6: #{netg_forward.19} parent=0 // pred_check
    %p9 = pneg %p8
  $region7: #{netg_forward.19} parent=0 // pred_check_branch
    %11 = sbr.rel (%p9) target = $region9
  $region8: #{netg_forward.19} parent=0 // pred_region
    %vm12 = vcmask 58368
    %13 = vst.msk [vmem:[%s1] sm:$0x3] %vm12, 0.0
  $region9: #{netg_forward.19} parent=0 // pred_fallthru
    _
  %v14 = vld [vmem:[%s0] sm:$0xff]
  %v15 = vld [vmem:[%s0 + $0x8] sm:$0xff]
  %v16 = vld [vmem:[%s0 + $0x10] sm:$0xff]
  %v17 = vld [vmem:[%s0 + $0x18] sm:$0xff]
  %v18 = vld [vmem:[%s0 + $0x20] sm:$0xff]
  %v19 = vld [vmem:[%s0 + $0x28] sm:$0xff]
  %v20 = vld [vmem:[%s0 + $0x30] sm:$0xff]
  %v21 = vld [vmem:[%s0 + $0x38] sm:$0xff]
  %v22 = vld [vmem:[%s0 + $0x40] sm:$0xff]
  %v23 = vld [vmem:[%s0 + $0x48] sm:$0xff]
  %v24 = vld [vmem:[%s0 + $0x50] sm:$0xff]
  %v25 = vld [vmem:[%s0 + $0x58] sm:$0xff]
  %v26 = vld [vmem:[%s0 + $0x60] sm:$0xff]
  %v27 = vld [vmem:[%s0 + $0x68] sm:$0xff]
  %v28 = vld [vmem:[%s0 + $0x70] sm:$0xff]
  %v29 = vld [vmem:[%s0 + $0x78] sm:$0xff]
  %v30 = vld [vmem:[%s0 + $0x80] sm:$0xff]
  %v31 = vld [vmem:[%s0 + $0x88] sm:$0xff]
  %v32 = vld [vmem:[%s0 + $0x90] sm:$0xff]
  %v33 = vld [vmem:[%s0 + $0x98] sm:$0xff]
  %v34 = vld [vmem:[%s0 + $0xa0] sm:$0xff]
  %v35 = vld [vmem:[%s0 + $0xa8] sm:$0xff]
  %v36 = vld [vmem:[%s0 + $0xb0] sm:$0xff]
  %v37 = vld [vmem:[%s0 + $0xb8] sm:$0xff]
  %v38 = vld [vmem:[%s0 + $0xc0] sm:$0xff]
  %v39 = vld [vmem:[%s0 + $0xc8] sm:$0xff]
  %v40 = vld [vmem:[%s0 + $0xd0] sm:$0xff]
  %v41 = vld [vmem:[%s0 + $0xd8] sm:$0xff]
  %v42 = vld [vmem:[%s0 + $0xe0] sm:$0xff]
  %v43 = vld [vmem:[%s0 + $0xe8] sm:$0xff]
  %v44 = vld [vmem:[%s0 + $0xf0] sm:$0xff]
  %v45 = vld [vmem:[%s0 + $0xf8] sm:$0xff]
  %v46 = vld [vmem:[%s0 + $0x100] sm:$0xff]
  %v47 = vld [vmem:[%s0 + $0x108] sm:$0xff]
  %v48 = vld [vmem:[%s0 + $0x110] sm:$0xff]
  %v49 = vld [vmem:[%s0 + $0x118] sm:$0xff]
  %v50 = vld [vmem:[%s0 + $0x120] sm:$0xff]
  %v51 = vld [vmem:[%s0 + $0x128] sm:$0xff]
  %v52 = vld [vmem:[%s0 + $0x130] sm:$0xff]
  %v53 = vld [vmem:[%s0 + $0x138] sm:$0xff]
  %v54 = vld [vmem:[%s0 + $0x140] sm:$0xff]
  %v55 = vld [vmem:[%s0 + $0x148] sm:$0xff]
  %v56 = vld [vmem:[%s0 + $0x150] sm:$0xff]
  %v57 = vld [vmem:[%s0 + $0x158] sm:$0xff]
  %v58 = vld [vmem:[%s0 + $0x160] sm:$0xff]
  %v59 = vld [vmem:[%s0 + $0x168] sm:$0xff]
  %v60 = vld [vmem:[%s0 + $0x170] sm:$0xff]
  %v61 = vld [vmem:[%s0 + $0x178] sm:$0xff]
  %v62 = vld [vmem:[%s0 + $0x180] sm:$0xff]
  %v63 = vld [vmem:[%s0 + $0x188] sm:$0xff]
  %v64 = vld [vmem:[%s0 + $0x190] sm:$0xff]
  %v65 = vld [vmem:[%s0 + $0x198] sm:$0xff]
  %v66 = vld [vmem:[%s0 + $0x1a0] sm:$0xff]
  %v67 = vld [vmem:[%s0 + $0x1a8] sm:$0xff]
  %v68 = vld [vmem:[%s0 + $0x1b0] sm:$0xff]
  %v69 = vld [vmem:[%s0 + $0x1b8] sm:$0xff]
  %v70 = vld [vmem:[%s0 + $0x1c0] sm:$0xff]
  %v71 = vld [vmem:[%s0 + $0x1c8] sm:$0xff]
  %v72 = vld [vmem:[%s0 + $0x1d0] sm:$0xff]
  %v73 = vld [vmem:[%s0 + $0x1d8] sm:$0xff]
  %v74 = vld [vmem:[%s0 + $0x1e0] sm:$0xff]
  %v75 = vld [vmem:[%s0 + $0x1e8] sm:$0xff]
  %v76 = vld [vmem:[%s0 + $0x1f0] sm:$0xff]
  %v77 = vld [vmem:[%s0 + $0x1f8] sm:$0xff]
  %v78 = vld [vmem:[%s1] sm:$0x1]
  %vm79 = vcmask 64512
  %v80 = vsel %vm79, %v14, 0.0
  %v81 = vsel %vm79, %v15, 0.0
  %v82 = vadd.f32 %v80, %v81
  %v83 = vsel %vm79, %v16, 0.0
  %v84 = vadd.f32 %v82, %v83
  %v85 = vsel %vm79, %v17, 0.0
  %v86 = vadd.f32 %v84, %v85
  %v87 = vsel %vm79, %v18, 0.0
  %v88 = vadd.f32 %v86, %v87
  %v89 = vsel %vm79, %v19, 0.0
  %v90 = vadd.f32 %v88, %v89
  %v91 = vsel %vm79, %v20, 0.0
  %v92 = vadd.f32 %v90, %v91
  %v93 = vsel %vm79, %v21, 0.0
  %v94 = vadd.f32 %v92, %v93
  %v95 = vsel %vm79, %v22, 0.0
  %v96 = vadd.f32 %v94, %v95
  %v97 = vsel %vm79, %v23, 0.0
  %v98 = vadd.f32 %v96, %v97
  %v99 = vsel %vm79, %v24, 0.0
  %v100 = vadd.f32 %v98, %v99
  %v101 = vsel %vm79, %v25, 0.0
  %v102 = vadd.f32 %v100, %v101
  %v103 = vsel %vm79, %v26, 0.0
  %v104 = vadd.f32 %v102, %v103
  %v105 = vsel %vm79, %v27, 0.0
  %v106 = vadd.f32 %v104, %v105
  %v107 = vsel %vm79, %v28, 0.0
  %v108 = vadd.f32 %v106, %v107
  %v109 = vsel %vm79, %v29, 0.0
  %v110 = vadd.f32 %v108, %v109
  %v111 = vsel %vm79, %v30, 0.0
  %v112 = vadd.f32 %v110, %v111
  %v113 = vsel %vm79, %v31, 0.0
  %v114 = vadd.f32 %v112, %v113
  %v115 = vsel %vm79, %v32, 0.0
  %v116 = vadd.f32 %v114, %v115
  %v117 = vsel %vm79, %v33, 0.0
  %v118 = vadd.f32 %v116, %v117
  %v119 = vsel %vm79, %v34, 0.0
  %v120 = vadd.f32 %v118, %v119
  %v121 = vsel %vm79, %v35, 0.0
  %v122 = vadd.f32 %v120, %v121
  %v123 = vsel %vm79, %v36, 0.0
  %v124 = vadd.f32 %v122, %v123
  %v125 = vsel %vm79, %v37, 0.0
  %v126 = vadd.f32 %v124, %v125
  %v127 = vsel %vm79, %v38, 0.0
  %v128 = vadd.f32 %v126, %v127
  %v129 = vsel %vm79, %v39, 0.0
  %v130 = vadd.f32 %v128, %v129
  %v131 = vsel %vm79, %v40, 0.0
  %v132 = vadd.f32 %v130, %v131
  %v133 = vsel %vm79, %v41, 0.0
  %v134 = vadd.f32 %v132, %v133
  %v135 = vsel %vm79, %v42, 0.0
  %v136 = vadd.f32 %v134, %v135
  %v137 = vsel %vm79, %v43, 0.0
  %v138 = vadd.f32 %v136, %v137
  %v139 = vsel %vm79, %v44, 0.0
  %v140 = vadd.f32 %v138, %v139
  %v141 = vsel %vm79, %v45, 0.0
  %v142 = vadd.f32 %v140, %v141
  %v143 = vsel %vm79, %v46, 0.0
  %v144 = vadd.f32 %v142, %v143
  %v145 = vsel %vm79, %v47, 0.0
  %v146 = vadd.f32 %v144, %v145
  %v147 = vsel %vm79, %v48, 0.0
  %v148 = vadd.f32 %v146, %v147
  %v149 = vsel %vm79, %v49, 0.0
  %v150 = vadd.f32 %v148, %v149
  %v151 = vsel %vm79, %v50, 0.0
  %v152 = vadd.f32 %v150, %v151
  %v153 = vsel %vm79, %v51, 0.0
  %v154 = vadd.f32 %v152, %v153
  %v155 = vsel %vm79, %v52, 0.0
  %v156 = vadd.f32 %v154, %v155
  %v157 = vsel %vm79, %v53, 0.0
  %v158 = vadd.f32 %v156, %v157
  %v159 = vsel %vm79, %v54, 0.0
  %v160 = vadd.f32 %v158, %v159
  %v161 = vsel %vm79, %v55, 0.0
  %v162 = vadd.f32 %v160, %v161
  %v163 = vsel %vm79, %v56, 0.0
  %v164 = vadd.f32 %v162, %v163
  %v165 = vsel %vm79, %v57, 0.0
  %v166 = vadd.f32 %v164, %v165
  %v167 = vsel %vm79, %v58, 0.0
  %v168 = vadd.f32 %v166, %v167
  %v169 = vsel %vm79, %v59, 0.0
  %v170 = vadd.f32 %v168, %v169
  %v171 = vsel %vm79, %v60, 0.0
  %v172 = vadd.f32 %v170, %v171
  %v173 = vsel %vm79, %v61, 0.0
  %v174 = vadd.f32 %v172, %v173
  %v175 = vsel %vm79, %v62, 0.0
  %v176 = vadd.f32 %v174, %v175
  %v177 = vsel %vm79, %v63, 0.0
  %v178 = vadd.f32 %v176, %v177
  %v179 = vsel %vm79, %v64, 0.0
  %v180 = vadd.f32 %v178, %v179
  %v181 = vsel %vm79, %v65, 0.0
  %v182 = vadd.f32 %v180, %v181
  %v183 = vsel %vm79, %v66, 0.0
  %v184 = vadd.f32 %v182, %v183
  %v185 = vsel %vm79, %v67, 0.0
  %v186 = vadd.f32 %v184, %v185
  %v187 = vsel %vm79, %v68, 0.0
  %v188 = vadd.f32 %v186, %v187
  %v189 = vsel %vm79, %v69, 0.0
  %v190 = vadd.f32 %v188, %v189
  %v191 = vsel %vm79, %v70, 0.0
  %v192 = vadd.f32 %v190, %v191
  %v193 = vsel %vm79, %v71, 0.0
  %v194 = vadd.f32 %v192, %v193
  %v195 = vsel %vm79, %v72, 0.0
  %v196 = vadd.f32 %v194, %v195
  %v197 = vsel %vm79, %v73, 0.0
  %v198 = vadd.f32 %v196, %v197
  %v199 = vsel %vm79, %v74, 0.0
  %v200 = vadd.f32 %v198, %v199
  %v201 = vsel %vm79, %v75, 0.0
  %v202 = vadd.f32 %v200, %v201
  %v203 = vsel %vm79, %v76, 0.0
  %v204 = vadd.f32 %v202, %v203
  %v205 = vsel %vm79, %v77, 0.0
  %v206 = vadd.f32 %v204, %v205
  %v207 = vrot.slane %v206, 4
  %v208 = vadd.f32 %v206, %v207
  %v209 = vrot.slane %v208, 2
  %v210 = vadd.f32 %v208, %v209
  %v211 = vrot.slane %v210, 1
  %v212 = vadd.f32 %v210, %v211
  %v213 = vadd.f32 %v78, %v212
  %vm214 = vcmask 57344
  %215 = vst.msk [vmem:[%s1] sm:$0x1] %vm214, %v213
  %v216 = vld [vmem:[%s1 + $0x1] sm:$0x1]
  %v217 = vmul.f32 %v14, %v14
  %v218 = vmul.f32 %v15, %v15
  %v219 = vmul.f32 %v16, %v16
  %v220 = vmul.f32 %v17, %v17
  %v221 = vmul.f32 %v18, %v18
  %v222 = vmul.f32 %v19, %v19
  %v223 = vmul.f32 %v20, %v20
  %v224 = vmul.f32 %v21, %v21
  %v225 = vmul.f32 %v22, %v22
  %v226 = vmul.f32 %v23, %v23
  %v227 = vmul.f32 %v24, %v24
  %v228 = vmul.f32 %v25, %v25
  %v229 = vmul.f32 %v26, %v26
  %v230 = vmul.f32 %v27, %v27
  %v231 = vmul.f32 %v28, %v28
  %v232 = vmul.f32 %v29, %v29
  %v233 = vmul.f32 %v30, %v30
  %v234 = vmul.f32 %v31, %v31
  %v235 = vmul.f32 %v32, %v32
  %v236 = vmul.f32 %v33, %v33
  %v237 = vmul.f32 %v34, %v34
  %v238 = vmul.f32 %v35, %v35
  %v239 = vmul.f32 %v36, %v36
  %v240 = vmul.f32 %v37, %v37
  %v241 = vmul.f32 %v38, %v38
  %v242 = vmul.f32 %v39, %v39
  %v243 = vmul.f32 %v40, %v40
  %v244 = vmul.f32 %v41, %v41
  %v245 = vmul.f32 %v42, %v42
  %v246 = vmul.f32 %v43, %v43
  %v247 = vmul.f32 %v44, %v44
  %v248 = vmul.f32 %v45, %v45
  %v249 = vmul.f32 %v46, %v46
  %v250 = vmul.f32 %v47, %v47
  %v251 = vmul.f32 %v48, %v48
  %v252 = vmul.f32 %v49, %v49
  %v253 = vmul.f32 %v50, %v50
  %v254 = vmul.f32 %v51, %v51
  %v255 = vmul.f32 %v52, %v52
  %v256 = vmul.f32 %v53, %v53
  %v257 = vmul.f32 %v54, %v54
  %v258 = vmul.f32 %v55, %v55
  %v259 = vmul.f32 %v56, %v56
  %v260 = vmul.f32 %v57, %v57
  %v261 = vmul.f32 %v58, %v58
  %v262 = vmul.f32 %v59, %v59
  %v263 = vmul.f32 %v60, %v60
  %v264 = vmul.f32 %v61, %v61
  %v265 = vmul.f32 %v62, %v62
  %v266 = vmul.f32 %v63, %v63
  %v267 = vmul.f32 %v64, %v64
  %v268 = vmul.f32 %v65, %v65
  %v269 = vmul.f32 %v66, %v66
  %v270 = vmul.f32 %v67, %v67
  %v271 = vmul.f32 %v68, %v68
  %v272 = vmul.f32 %v69, %v69
  %v273 = vmul.f32 %v70, %v70
  %v274 = vmul.f32 %v71, %v71
  %v275 = vmul.f32 %v72, %v72
  %v276 = vmul.f32 %v73, %v73
  %v277 = vmul.f32 %v74, %v74
  %v278 = vmul.f32 %v75, %v75
  %v279 = vmul.f32 %v76, %v76
  %v280 = vmul.f32 %v77, %v77
  %v281 = vsel %vm79, %v217, 0.0
  %v282 = vsel %vm79, %v218, 0.0
  %v283 = vadd.f32 %v281, %v282
  %v284 = vsel %vm79, %v219, 0.0
  %v285 = vadd.f32 %v283, %v284
  %v286 = vsel %vm79, %v220, 0.0
  %v287 = vadd.f32 %v285, %v286
  %v288 = vsel %vm79, %v221, 0.0
  %v289 = vadd.f32 %v287, %v288
  %v290 = vsel %vm79, %v222, 0.0
  %v291 = vadd.f32 %v289, %v290
  %v292 = vsel %vm79, %v223, 0.0
  %v293 = vadd.f32 %v291, %v292
  %v294 = vsel %vm79, %v224, 0.0
  %v295 = vadd.f32 %v293, %v294
  %v296 = vsel %vm79, %v225, 0.0
  %v297 = vadd.f32 %v295, %v296
  %v298 = vsel %vm79, %v226, 0.0
  %v299 = vadd.f32 %v297, %v298
  %v300 = vsel %vm79, %v227, 0.0
  %v301 = vadd.f32 %v299, %v300
  %v302 = vsel %vm79, %v228, 0.0
  %v303 = vadd.f32 %v301, %v302
  %v304 = vsel %vm79, %v229, 0.0
  %v305 = vadd.f32 %v303, %v304
  %v306 = vsel %vm79, %v230, 0.0
  %v307 = vadd.f32 %v305, %v306
  %v308 = vsel %vm79, %v231, 0.0
  %v309 = vadd.f32 %v307, %v308
  %v310 = vsel %vm79, %v232, 0.0
  %v311 = vadd.f32 %v309, %v310
  %v312 = vsel %vm79, %v233, 0.0
  %v313 = vadd.f32 %v311, %v312
  %v314 = vsel %vm79, %v234, 0.0
  %v315 = vadd.f32 %v313, %v314
  %v316 = vsel %vm79, %v235, 0.0
  %v317 = vadd.f32 %v315, %v316
  %v318 = vsel %vm79, %v236, 0.0
  %v319 = vadd.f32 %v317, %v318
  %v320 = vsel %vm79, %v237, 0.0
  %v321 = vadd.f32 %v319, %v320
  %v322 = vsel %vm79, %v238, 0.0
  %v323 = vadd.f32 %v321, %v322
  %v324 = vsel %vm79, %v239, 0.0
  %v325 = vadd.f32 %v323, %v324
  %v326 = vsel %vm79, %v240, 0.0
  %v327 = vadd.f32 %v325, %v326
  %v328 = vsel %vm79, %v241, 0.0
  %v329 = vadd.f32 %v327, %v328
  %v330 = vsel %vm79, %v242, 0.0
  %v331 = vadd.f32 %v329, %v330
  %v332 = vsel %vm79, %v243, 0.0
  %v333 = vadd.f32 %v331, %v332
  %v334 = vsel %vm79, %v244, 0.0
  %v335 = vadd.f32 %v333, %v334
  %v336 = vsel %vm79, %v245, 0.0
  %v337 = vadd.f32 %v335, %v336
  %v338 = vsel %vm79, %v246, 0.0
  %v339 = vadd.f32 %v337, %v338
  %v340 = vsel %vm79, %v247, 0.0
  %v341 = vadd.f32 %v339, %v340
  %v342 = vsel %vm79, %v248, 0.0
  %v343 = vadd.f32 %v341, %v342
  %v344 = vsel %vm79, %v249, 0.0
  %v345 = vadd.f32 %v343, %v344
  %v346 = vsel %vm79, %v250, 0.0
  %v347 = vadd.f32 %v345, %v346
  %v348 = vsel %vm79, %v251, 0.0
  %v349 = vadd.f32 %v347, %v348
  %v350 = vsel %vm79, %v252, 0.0
  %v351 = vadd.f32 %v349, %v350
  %v352 = vsel %vm79, %v253, 0.0
  %v353 = vadd.f32 %v351, %v352
  %v354 = vsel %vm79, %v254, 0.0
  %v355 = vadd.f32 %v353, %v354
  %v356 = vsel %vm79, %v255, 0.0
  %v357 = vadd.f32 %v355, %v356
  %v358 = vsel %vm79, %v256, 0.0
  %v359 = vadd.f32 %v357, %v358
  %v360 = vsel %vm79, %v257, 0.0
  %v361 = vadd.f32 %v359, %v360
  %v362 = vsel %vm79, %v258, 0.0
  %v363 = vadd.f32 %v361, %v362
  %v364 = vsel %vm79, %v259, 0.0
  %v365 = vadd.f32 %v363, %v364
  %v366 = vsel %vm79, %v260, 0.0
  %v367 = vadd.f32 %v365, %v366
  %v368 = vsel %vm79, %v261, 0.0
  %v369 = vadd.f32 %v367, %v368
  %v370 = vsel %vm79, %v262, 0.0
  %v371 = vadd.f32 %v369, %v370
  %v372 = vsel %vm79, %v263, 0.0
  %v373 = vadd.f32 %v371, %v372
  %v374 = vsel %vm79, %v264, 0.0
  %v375 = vadd.f32 %v373, %v374
  %v376 = vsel %vm79, %v265, 0.0
  %v377 = vadd.f32 %v375, %v376
  %v378 = vsel %vm79, %v266, 0.0
  %v379 = vadd.f32 %v377, %v378
  %v380 = vsel %vm79, %v267, 0.0
  %v381 = vadd.f32 %v379, %v380
  %v382 = vsel %vm79, %v268, 0.0
  %v383 = vadd.f32 %v381, %v382
  %v384 = vsel %vm79, %v269, 0.0
  %v385 = vadd.f32 %v383, %v384
  %v386 = vsel %vm79, %v270, 0.0
  %v387 = vadd.f32 %v385, %v386
  %v388 = vsel %vm79, %v271, 0.0
  %v389 = vadd.f32 %v387, %v388
  %v390 = vsel %vm79, %v272, 0.0
  %v391 = vadd.f32 %v389, %v390
  %v392 = vsel %vm79, %v273, 0.0
  %v393 = vadd.f32 %v391, %v392
  %v394 = vsel %vm79, %v274, 0.0
  %v395 = vadd.f32 %v393, %v394
  %v396 = vsel %vm79, %v275, 0.0
  %v397 = vadd.f32 %v395, %v396
  %v398 = vsel %vm79, %v276, 0.0
  %v399 = vadd.f32 %v397, %v398
  %v400 = vsel %vm79, %v277, 0.0
  %v401 = vadd.f32 %v399, %v400
  %v402 = vsel %vm79, %v278, 0.0
  %v403 = vadd.f32 %v401, %v402
  %v404 = vsel %vm79, %v279, 0.0
  %v405 = vadd.f32 %v403, %v404
  %v406 = vsel %vm79, %v280, 0.0
  %v407 = vadd.f32 %v405, %v406
  %v408 = vrot.slane %v407, 4
  %v409 = vadd.f32 %v407, %v408
  %v410 = vrot.slane %v409, 2
  %v411 = vadd.f32 %v409, %v410
  %v412 = vrot.slane %v411, 1
  %v413 = vadd.f32 %v411, %v412
  %v414 = vadd.f32 %v216, %v413
  %415 = vst.msk [vmem:[%s1 + $0x1] sm:$0x1] %vm214, %v414
  // Predicated region
  $region10: #{netg_forward.19} parent=0 // pred_check
    _
  $region11: #{netg_forward.19} parent=0 // pred_check_branch
    %417 = sbr.rel (0) target = $region13
  $region12: #{netg_forward.19} parent=0 // pred_region
    _
  $region13: #{netg_forward.19} parent=0 // pred_fallthru
    _
  // Predicated region
  $region14: #{netg_forward.19} parent=0 // pred_check
    _
  $region15: #{netg_forward.19} parent=0 // pred_check_branch
    %419 = sbr.rel (0) target = $region17
  $region16: #{netg_forward.19} parent=0 // pred_region
    _
  $region17: #{netg_forward.19} parent=0 // pred_fallthru
    _

// kernel: netg_forward.21
$region0: #{netg_forward.21}
  #allocation0 [shape = 'u32[]', space=smem, size = 0x4, offset = 0x4, fixed_abs, tag = 'smem constant byte address 0x4 - core index']
  #allocation1 [shape = 'u32[144,128]{1,0:T(1,128)}', space=vmem, size = 0x12000, scoped, tag = 'internal scratch']
  #allocation2 [shape = 'f32[576,12]{1,0:T(8,128)}', space=vmem, size = 0x48000, scoped, tag = 'scratch operand']
  %s0 = inlined_call_operand.vmem [shape: bf16[576,24], index: 0, kind: input, shape index: {}]
  %s1 = inlined_call_operand.vmem [shape: bf16[2,16,12], index: 1, kind: input, shape index: {}]
  %s2 = inlined_call_operand.vmem [shape: f32[576,12], index: 2, kind: output, shape index: {}]
  %s3 = sld [smem:[#allocation0]]
  $region18: #{netg_forward.21} parent=0
    _
  %s5 = ssub.s32 1, %s3
  %s6 = scalar_select 0, %s5, %s3
  // Predicated region
  $region2: #{netg_forward.21} parent=0 // pred_check
    _
  $region3: #{netg_forward.21} parent=0 // pred_check_branch
    %8 = sbr.rel (0) target = $region5
  $region4: #{netg_forward.21} parent=0 // pred_region
    _
  $region5: #{netg_forward.21} parent=0 // pred_fallthru
    _
  // Predicated region
  $region6: #{netg_forward.21} parent=0 // pred_check
    _
  $region7: #{netg_forward.21} parent=0 // pred_check_branch
    %10 = sbr.rel (0) target = $region9
  $region8: #{netg_forward.21} parent=0 // pred_region
    _
  $region9: #{netg_forward.21} parent=0 // pred_fallthru
    _
  %v12 = vld [vmem:[%s0] sm:$0xf]
  %v13 = vld [vmem:[%s0 + $0x4] sm:$0xf]
  %v14 = vld [vmem:[%s0 + $0x8] sm:$0xf]
  %v15 = vld [vmem:[%s0 + $0xc] sm:$0xf]
  %v16 = vld [vmem:[%s0 + $0x10] sm:$0xf]
  %v17 = vld [vmem:[%s0 + $0x14] sm:$0xf]
  %v18 = vld [vmem:[%s0 + $0x18] sm:$0xf]
  %v19 = vld [vmem:[%s0 + $0x1c] sm:$0xf]
  %v20 = vld [vmem:[%s0 + $0x20] sm:$0xf]
  %v21 = vld [vmem:[%s0 + $0x24] sm:$0xf]
  %v22 = vld [vmem:[%s0 + $0x28] sm:$0xf]
  %v23 = vld [vmem:[%s0 + $0x2c] sm:$0xf]
  %v24 = vld [vmem:[%s0 + $0x30] sm:$0xf]
  %v25 = vld [vmem:[%s0 + $0x34] sm:$0xf]
  %v26 = vld [vmem:[%s0 + $0x38] sm:$0xf]
  %v27 = vld [vmem:[%s0 + $0x3c] sm:$0xf]
  %v28 = vld [vmem:[%s0 + $0x40] sm:$0xf]
  %v29 = vld [vmem:[%s0 + $0x44] sm:$0xf]
  %v30 = vld [vmem:[%s0 + $0x48] sm:$0xf]
  %v31 = vld [vmem:[%s0 + $0x4c] sm:$0xf]
  %v32 = vld [vmem:[%s0 + $0x50] sm:$0xf]
  %v33 = vld [vmem:[%s0 + $0x54] sm:$0xf]
  %v34 = vld [vmem:[%s0 + $0x58] sm:$0xf]
  %v35 = vld [vmem:[%s0 + $0x5c] sm:$0xf]
  %v36 = vld [vmem:[%s0 + $0x60] sm:$0xf]
  %v37 = vld [vmem:[%s0 + $0x64] sm:$0xf]
  %v38 = vld [vmem:[%s0 + $0x68] sm:$0xf]
  %v39 = vld [vmem:[%s0 + $0x6c] sm:$0xf]
  %v40 = vld [vmem:[%s0 + $0x70] sm:$0xf]
  %v41 = vld [vmem:[%s0 + $0x74] sm:$0xf]
  %v42 = vld [vmem:[%s0 + $0x78] sm:$0xf]
  %v43 = vld [vmem:[%s0 + $0x7c] sm:$0xf]
  %v44 = vld [vmem:[%s0 + $0x80] sm:$0xf]
  %v45 = vld [vmem:[%s0 + $0x84] sm:$0xf]
  %v46 = vld [vmem:[%s0 + $0x88] sm:$0xf]
  %v47 = vld [vmem:[%s0 + $0x8c] sm:$0xf]
  %v48 = vld [vmem:[%s0 + $0x90] sm:$0xf]
  %v49 = vld [vmem:[%s0 + $0x94] sm:$0xf]
  %v50 = vld [vmem:[%s0 + $0x98] sm:$0xf]
  %v51 = vld [vmem:[%s0 + $0x9c] sm:$0xf]
  %v52 = vld [vmem:[%s0 + $0xa0] sm:$0xf]
  %v53 = vld [vmem:[%s0 + $0xa4] sm:$0xf]
  %v54 = vld [vmem:[%s0 + $0xa8] sm:$0xf]
  %v55 = vld [vmem:[%s0 + $0xac] sm:$0xf]
  %v56 = vld [vmem:[%s0 + $0xb0] sm:$0xf]
  %v57 = vld [vmem:[%s0 + $0xb4] sm:$0xf]
  %v58 = vld [vmem:[%s0 + $0xb8] sm:$0xf]
  %v59 = vld [vmem:[%s0 + $0xbc] sm:$0xf]
  %v60 = vld [vmem:[%s0 + $0xc0] sm:$0xf]
  %v61 = vld [vmem:[%s0 + $0xc4] sm:$0xf]
  %v62 = vld [vmem:[%s0 + $0xc8] sm:$0xf]
  %v63 = vld [vmem:[%s0 + $0xcc] sm:$0xf]
  %v64 = vld [vmem:[%s0 + $0xd0] sm:$0xf]
  %v65 = vld [vmem:[%s0 + $0xd4] sm:$0xf]
  %v66 = vld [vmem:[%s0 + $0xd8] sm:$0xf]
  %v67 = vld [vmem:[%s0 + $0xdc] sm:$0xf]
  %v68 = vld [vmem:[%s0 + $0xe0] sm:$0xf]
  %v69 = vld [vmem:[%s0 + $0xe4] sm:$0xf]
  %v70 = vld [vmem:[%s0 + $0xe8] sm:$0xf]
  %v71 = vld [vmem:[%s0 + $0xec] sm:$0xf]
  %v72 = vld [vmem:[%s0 + $0xf0] sm:$0xf]
  %v73 = vld [vmem:[%s0 + $0xf4] sm:$0xf]
  %v74 = vld [vmem:[%s0 + $0xf8] sm:$0xf]
  %v75 = vld [vmem:[%s0 + $0xfc] sm:$0xf]
  %v76 = vld [vmem:[%s0 + $0x100] sm:$0xf]
  %v77 = vld [vmem:[%s0 + $0x104] sm:$0xf]
  %v78 = vld [vmem:[%s0 + $0x108] sm:$0xf]
  %v79 = vld [vmem:[%s0 + $0x10c] sm:$0xf]
  %v80 = vld [vmem:[%s0 + $0x110] sm:$0xf]
  %v81 = vld [vmem:[%s0 + $0x114] sm:$0xf]
  %v82 = vld [vmem:[%s0 + $0x118] sm:$0xf]
  %v83 = vld [vmem:[%s0 + $0x11c] sm:$0xf]
  %v84 = vld [vmem:[%s1] sm:$0xf]
  %v85 = vld [vmem:[%s1 + $0x4] sm:$0xf]
  %v158 = vunpack.c.l.b16 %v12
  %v159 = vunpack.c.l.b16 %v13
  %v160 = vunpack.c.l.b16 %v14
  %v161 = vunpack.c.l.b16 %v15
  %v162 = vunpack.c.l.b16 %v16
  %v163 = vunpack.c.l.b16 %v17
  %v164 = vunpack.c.l.b16 %v18
  %v165 = vunpack.c.l.b16 %v19
  %v166 = vunpack.c.l.b16 %v20
  %v167 = vunpack.c.l.b16 %v21
  %v168 = vunpack.c.l.b16 %v22
  %v169 = vunpack.c.l.b16 %v23
  %v170 = vunpack.c.l.b16 %v24
  %v171 = vunpack.c.l.b16 %v25
  %v172 = vunpack.c.l.b16 %v26
  %v173 = vunpack.c.l.b16 %v27
  %v174 = vunpack.c.l.b16 %v28
  %v175 = vunpack.c.l.b16 %v29
  %v176 = vunpack.c.l.b16 %v30
  %v177 = vunpack.c.l.b16 %v31
  %v178 = vunpack.c.l.b16 %v32
  %v179 = vunpack.c.l.b16 %v33
  %v180 = vunpack.c.l.b16 %v34
  %v181 = vunpack.c.l.b16 %v35
  %v182 = vunpack.c.l.b16 %v36
  %v183 = vunpack.c.l.b16 %v37
  %v184 = vunpack.c.l.b16 %v38
  %v185 = vunpack.c.l.b16 %v39
  %v186 = vunpack.c.l.b16 %v40
  %v187 = vunpack.c.l.b16 %v41
  %v188 = vunpack.c.l.b16 %v42
  %v189 = vunpack.c.l.b16 %v43
  %v190 = vunpack.c.l.b16 %v44
  %v191 = vunpack.c.l.b16 %v45
  %v192 = vunpack.c.l.b16 %v46
  %v193 = vunpack.c.l.b16 %v47
  %v194 = vunpack.c.l.b16 %v48
  %v195 = vunpack.c.l.b16 %v49
  %v196 = vunpack.c.l.b16 %v50
  %v197 = vunpack.c.l.b16 %v51
  %v198 = vunpack.c.l.b16 %v52
  %v199 = vunpack.c.l.b16 %v53
  %v200 = vunpack.c.l.b16 %v54
  %v201 = vunpack.c.l.b16 %v55
  %v202 = vunpack.c.l.b16 %v56
  %v203 = vunpack.c.l.b16 %v57
  %v204 = vunpack.c.l.b16 %v58
  %v205 = vunpack.c.l.b16 %v59
  %v206 = vunpack.c.l.b16 %v60
  %v207 = vunpack.c.l.b16 %v61
  %v208 = vunpack.c.l.b16 %v62
  %v209 = vunpack.c.l.b16 %v63
  %v210 = vunpack.c.l.b16 %v64
  %v211 = vunpack.c.l.b16 %v65
  %v212 = vunpack.c.l.b16 %v66
  %v213 = vunpack.c.l.b16 %v67
  %v214 = vunpack.c.l.b16 %v68
  %v215 = vunpack.c.l.b16 %v69
  %v216 = vunpack.c.l.b16 %v70
  %v217 = vunpack.c.l.b16 %v71
  %v218 = vunpack.c.l.b16 %v72
  %v219 = vunpack.c.l.b16 %v73
  %v220 = vunpack.c.l.b16 %v74
  %v221 = vunpack.c.l.b16 %v75
  %v222 = vunpack.c.l.b16 %v76
  %v223 = vunpack.c.l.b16 %v77
  %v224 = vunpack.c.l.b16 %v78
  %v225 = vunpack.c.l.b16 %v79
  %v226 = vunpack.c.l.b16 %v80
  %v227 = vunpack.c.l.b16 %v81
  %v228 = vunpack.c.l.b16 %v82
  %v229 = vunpack.c.l.b16 %v83
  %v230 = vpack.c.b16 %v159, %v158
  %v231 = vpack.c.b16 %v161, %v160
  %v232 = vpack.c.b16 %v163, %v162
  %v233 = vpack.c.b16 %v165, %v164
  %v234 = vpack.c.b16 %v167, %v166
  %v235 = vpack.c.b16 %v169, %v168
  %v236 = vpack.c.b16 %v171, %v170
  %v237 = vpack.c.b16 %v173, %v172
  %v238 = vpack.c.b16 %v175, %v174
  %v239 = vpack.c.b16 %v177, %v176
  %v240 = vpack.c.b16 %v179, %v178
  %v241 = vpack.c.b16 %v181, %v180
  %v242 = vpack.c.b16 %v183, %v182
  %v243 = vpack.c.b16 %v185, %v184
  %v244 = vpack.c.b16 %v187, %v186
  %v245 = vpack.c.b16 %v189, %v188
  %v246 = vpack.c.b16 %v191, %v190
  %v247 = vpack.c.b16 %v193, %v192
  %v248 = vpack.c.b16 %v195, %v194
  %v249 = vpack.c.b16 %v197, %v196
  %v250 = vpack.c.b16 %v199, %v198
  %v251 = vpack.c.b16 %v201, %v200
  %v252 = vpack.c.b16 %v203, %v202
  %v253 = vpack.c.b16 %v205, %v204
  %v254 = vpack.c.b16 %v207, %v206
  %v255 = vpack.c.b16 %v209, %v208
  %v256 = vpack.c.b16 %v211, %v210
  %v257 = vpack.c.b16 %v213, %v212
  %v258 = vpack.c.b16 %v215, %v214
  %v259 = vpack.c.b16 %v217, %v216
  %v260 = vpack.c.b16 %v219, %v218
  %v261 = vpack.c.b16 %v221, %v220
  %v262 = vpack.c.b16 %v223, %v222
  %v263 = vpack.c.b16 %v225, %v224
  %v264 = vpack.c.b16 %v227, %v226
  %v265 = vpack.c.b16 %v229, %v228
  %v268 = vunpack.c.l.b16 %v84
  %v269 = vunpack.c.l.b16 %v85
  %v270 = vpack.c.b16 %v269, %v268
  %vm272 = vcmask 130048
  %v274 = vsel %vm272, %v230, 0
  %v277 = vsel %vm272, %v231, 0
  %v280 = vsel %vm272, %v232, 0
  %v283 = vsel %vm272, %v233, 0
  %v286 = vsel %vm272, %v234, 0
  %v289 = vsel %vm272, %v235, 0
  %v292 = vsel %vm272, %v236, 0
  %v295 = vsel %vm272, %v237, 0
  %v298 = vsel %vm272, %v238, 0
  %v301 = vsel %vm272, %v239, 0
  %v304 = vsel %vm272, %v240, 0
  %v307 = vsel %vm272, %v241, 0
  %v310 = vsel %vm272, %v242, 0
  %v313 = vsel %vm272, %v243, 0
  %v316 = vsel %vm272, %v244, 0
  %v319 = vsel %vm272, %v245, 0
  %v322 = vsel %vm272, %v246, 0
  %v325 = vsel %vm272, %v247, 0
  %v328 = vsel %vm272, %v248, 0
  %v331 = vsel %vm272, %v249, 0
  %v334 = vsel %vm272, %v250, 0
  %v337 = vsel %vm272, %v251, 0
  %v340 = vsel %vm272, %v252, 0
  %v343 = vsel %vm272, %v253, 0
  %v346 = vsel %vm272, %v254, 0
  %v349 = vsel %vm272, %v255, 0
  %v352 = vsel %vm272, %v256, 0
  %v355 = vsel %vm272, %v257, 0
  %v358 = vsel %vm272, %v258, 0
  %v361 = vsel %vm272, %v259, 0
  %v364 = vsel %vm272, %v260, 0
  %v367 = vsel %vm272, %v261, 0
  %v370 = vsel %vm272, %v262, 0
  %v373 = vsel %vm272, %v263, 0
  %v376 = vsel %vm272, %v264, 0
  %v379 = vsel %vm272, %v265, 0
  %381 = vmatprep.subr.bf16.mxu0 0
  %382 = vmatpush1.bf16.msra.mxu0 %v270
  %383 = vmatprep.subr.bf16.mxu0 0
  %384 = vmatpush1.bf16.msra.mxu0 0
  %385 = vmatprep.subr.bf16.mxu0 0
  %386 = vmatpush1.bf16.msra.mxu0 0
  %387 = vmatprep.subr.bf16.mxu0 0
  %388 = vmatpush1.bf16.msra.mxu0 0
  %389 = vmatprep.subr.bf16.mxu0 0
  %390 = vmatpush1.bf16.msra.mxu0 0
  %391 = vmatprep.subr.bf16.mxu0 0
  %392 = vmatpush1.bf16.msra.mxu0 0
  %393 = vmatprep.subr.bf16.mxu0 0
  %394 = vmatpush1.bf16.msra.mxu0 0
  %395 = vmatprep.subr.bf16.mxu0 0
  %396 = vmatpush1.bf16.msra.mxu0 0
  %397 = vmatprep.subr.bf16.mxu0 0
  %398 = vmatpush1.bf16.msra.mxu0 0
  %399 = vmatprep.subr.bf16.mxu0 0
  %400 = vmatpush1.bf16.msra.mxu0 0
  %401 = vmatprep.subr.bf16.mxu0 0
  %402 = vmatpush1.bf16.msra.mxu0 0
  %403 = vmatprep.subr.bf16.mxu0 0
  %404 = vmatpush1.bf16.msra.mxu0 0
  %405 = vmatprep.subr.bf16.mxu0 0
  %406 = vmatpush1.bf16.msra.mxu0 0
  %407 = vmatprep.subr.bf16.mxu0 0
  %408 = vmatpush1.bf16.msra.mxu0 0
  %409 = vmatprep.subr.bf16.mxu0 0
  %410 = vmatpush1.bf16.msra.mxu0 0
  %411 = vmatprep.subr.bf16.mxu0 0
  %412 = vmatpush1.bf16.msra.mxu0 0
  %413 = vmatprep.mubr.bf16.mxu0 0
  %414 = vmatmul.mubr.bf16.gmra.mrb[0].mxu0 %v274
  %v415 = vpop.f32.mrb[0].mxu0
  %v416 = vadd.f32 0.0, %v415
  %v417 = vpop.f32.mrb[0].mxu0
  %v418 = vpop.f32.mrb[0].mxu0
  %v419 = vadd.f32 0.0, %v418
  %v420 = vpop.f32.mrb[0].mxu0
  %421 = vmatprep.mubr.bf16.mxu0 0
  %422 = vmatmul.mubr.bf16.gmra.mrb[0].mxu0 %v277
  %v423 = vpop.f32.mrb[0].mxu0
  %v424 = vadd.f32 0.0, %v423
  %v425 = vpop.f32.mrb[0].mxu0
  %v426 = vpop.f32.mrb[0].mxu0
  %v427 = vadd.f32 0.0, %v426
  %v428 = vpop.f32.mrb[0].mxu0
  %429 = vmatprep.mubr.bf16.mxu0 0
  %430 = vmatmul.mubr.bf16.gmra.mrb[0].mxu0 %v280
  %v431 = vpop.f32.mrb[0].mxu0
  %v432 = vadd.f32 0.0, %v431
  %v433 = vpop.f32.mrb[0].mxu0
  %v434 = vpop.f32.mrb[0].mxu0
  %v435 = vadd.f32 0.0, %v434
  %v436 = vpop.f32.mrb[0].mxu0
  %437 = vmatprep.mubr.bf16.mxu0 0
  %438 = vmatmul.mubr.bf16.gmra.mrb[0].mxu0 %v283
  %v439 = vpop.f32.mrb[0].mxu0
  %v440 = vadd.f32 0.0, %v439
  %v441 = vpop.f32.mrb[0].mxu0
  %v442 = vpop.f32.mrb[0].mxu0
  %v443 = vadd.f32 0.0, %v442
  %v444 = vpop.f32.mrb[0].mxu0
  %445 = vmatprep.mubr.bf16.mxu0 0
  %446 = vmatmul.mubr.bf16.gmra.mrb[0].mxu0 %v286
  %v447 = vpop.f32.mrb[0].mxu0
  %v448 = vadd.f32 0.0, %v447
  %v449 = vpop.f32.mrb[0].mxu0
  %v450 = vpop.f32.mrb[0].mxu0
  %v451 = vadd.f32 0.0, %v450
  %v452 = vpop.f32.mrb[0].mxu0
  %453 = vmatprep.mubr.bf16.mxu0 0
  %454 = vmatmul.mubr.bf16.gmra.mrb[0].mxu0 %v289
  %v455 = vpop.f32.mrb[0].mxu0
  %v456 = vadd.f32 0.0, %v455
  %v457 = vpop.f32.mrb[0].mxu0
  %v458 = vpop.f32.mrb[0].mxu0
  %v459 = vadd.f32 0.0, %v458
  %v460 = vpop.f32.mrb[0].mxu0
  %461 = vmatprep.mubr.bf16.mxu0 0
  %462 = vmatmul.mubr.bf16.gmra.mrb[0].mxu0 %v292
  %v463 = vpop.f32.mrb[0].mxu0
  %v464 = vadd.f32 0.0, %v463
  %v465 = vpop.f32.mrb[0].mxu0
  %v466 = vpop.f32.mrb[0].mxu0
  %v467 = vadd.f32 0.0, %v466
  %v468 = vpop.f32.mrb[0].mxu0
  %469 = vmatprep.mubr.bf16.mxu0 0
  %470 = vmatmul.mubr.bf16.gmra.mrb[0].mxu0 %v295
  %v471 = vpop.f32.mrb[0].mxu0
  %v472 = vadd.f32 0.0, %v471
  %v473 = vpop.f32.mrb[0].mxu0
  %v474 = vpop.f32.mrb[0].mxu0
  %v475 = vadd.f32 0.0, %v474
  %v476 = vpop.f32.mrb[0].mxu0
  %477 = vmatprep.mubr.bf16.mxu0 0
  %478 = vmatmul.mubr.bf16.gmra.mrb[0].mxu0 %v298
  %v479 = vpop.f32.mrb[0].mxu0
  %v480 = vadd.f32 0.0, %v479
  %v481 = vpop.f32.mrb[0].mxu0
  %v482 = vpop.f32.mrb[0].mxu0
  %v483 = vadd.f32 0.0, %v482
  %v484 = vpop.f32.mrb[0].mxu0
  %485 = vmatprep.mubr.bf16.mxu0 0
  %486 = vmatmul.mubr.bf16.gmra.mrb[0].mxu0 %v301
  %v487 = vpop.f32.mrb[0].mxu0
  %v488 = vadd.f32 0.0, %v487
  %v489 = vpop.f32.mrb[0].mxu0
  %v490 = vpop.f32.mrb[0].mxu0
  %v491 = vadd.f32 0.0, %v490
  %v492 = vpop.f32.mrb[0].mxu0
  %493 = vmatprep.mubr.bf16.mxu0 0
  %494 = vmatmul.mubr.bf16.gmra.mrb[0].mxu0 %v304
  %v495 = vpop.f32.mrb[0].mxu0
  %v496 = vadd.f32 0.0, %v495
  %v497 = vpop.f32.mrb[0].mxu0
  %v498 = vpop.f32.mrb[0].mxu0
  %v499 = vadd.f32 0.0, %v498
  %v500 = vpop.f32.mrb[0].mxu0
  %501 = vmatprep.mubr.bf16.mxu0 0
  %502 = vmatmul.mubr.bf16.gmra.mrb[0].mxu0 %v307
  %v503 = vpop.f32.mrb[0].mxu0
  %v504 = vadd.f32 0.0, %v503
  %v505 = vpop.f32.mrb[0].mxu0
  %v506 = vpop.f32.mrb[0].mxu0
  %v507 = vadd.f32 0.0, %v506
  %v508 = vpop.f32.mrb[0].mxu0
  %509 = vmatprep.mubr.bf16.mxu0 0
  %510 = vmatmul.mubr.bf16.gmra.mrb[0].mxu0 %v310
  %v511 = vpop.f32.mrb[0].mxu0
  %v512 = vadd.f32 0.0, %v511
  %v513 = vpop.f32.mrb[0].mxu0
  %v514 = vpop.f32.mrb[0].mxu0
  %v515 = vadd.f32 0.0, %v514
  %v516 = vpop.f32.mrb[0].mxu0
  %517 = vmatprep.mubr.bf16.mxu0 0
  %518 = vmatmul.mubr.bf16.gmra.mrb[0].mxu0 %v313
  %v519 = vpop.f32.mrb[0].mxu0
  %v520 = vadd.f32 0.0, %v519
  %v521 = vpop.f32.mrb[0].mxu0
  %v522 = vpop.f32.mrb[0].mxu0
  %v523 = vadd.f32 0.0, %v522
  %v524 = vpop.f32.mrb[0].mxu0
  %525 = vmatprep.mubr.bf16.mxu0 0
  %526 = vmatmul.mubr.bf16.gmra.mrb[0].mxu0 %v316
  %v527 = vpop.f32.mrb[0].mxu0
  %v528 = vadd.f32 0.0, %v527
  %v529 = vpop.f32.mrb[0].mxu0
  %v530 = vpop.f32.mrb[0].mxu0
  %v531 = vadd.f32 0.0, %v530
  %v532 = vpop.f32.mrb[0].mxu0
  %533 = vmatprep.mubr.bf16.mxu0 0
  %534 = vmatmul.mubr.bf16.gmra.mrb[0].mxu0 %v319
  %v535 = vpop.f32.mrb[0].mxu0
  %v536 = vadd.f32 0.0, %v535
  %v537 = vpop.f32.mrb[0].mxu0
  %v538 = vpop.f32.mrb[0].mxu0
  %v539 = vadd.f32 0.0, %v538
  %v540 = vpop.f32.mrb[0].mxu0
  %541 = vmatprep.mubr.bf16.mxu0 0
  %542 = vmatmul.mubr.bf16.gmra.mrb[0].mxu0 %v322
  %v543 = vpop.f32.mrb[0].mxu0
  %v544 = vadd.f32 0.0, %v543
  %v545 = vpop.f32.mrb[0].mxu0
  %v546 = vpop.f32.mrb[0].mxu0
  %v547 = vadd.f32 0.0, %v546
  %v548 = vpop.f32.mrb[0].mxu0
  %549 = vmatprep.mubr.bf16.mxu0 0
  %550 = vmatmul.mubr.bf16.gmra.mrb[0].mxu0 %v325
  %v551 = vpop.f32.mrb[0].mxu0
  %v552 = vadd.f32 0.0, %v551
  %v553 = vpop.f32.mrb[0].mxu0
  %v554 = vpop.f32.mrb[0].mxu0
  %v555 = vadd.f32 0.0, %v554
  %v556 = vpop.f32.mrb[0].mxu0
  %557 = vmatprep.mubr.bf16.mxu0 0
  %558 = vmatmul.mubr.bf16.gmra.mrb[0].mxu0 %v328
  %v559 = vpop.f32.mrb[0].mxu0
  %v560 = vadd.f32 0.0, %v559
  %v561 = vpop.f32.mrb[0].mxu0
  %v562 = vpop.f32.mrb[0].mxu0
  %v563 = vadd.f32 0.0, %v562
  %v564 = vpop.f32.mrb[0].mxu0
  %565 = vmatprep.mubr.bf16.mxu0 0
  %566 = vmatmul.mubr.bf16.gmra.mrb[0].mxu0 %v331
  %v567 = vpop.f32.mrb[0].mxu0
  %v568 = vadd.f32 0.0, %v567
  %v569 = vpop.f32.mrb[0].mxu0
  %v570 = vpop.f32.mrb[0].mxu0
  %v571 = vadd.f32 0.0, %v570
  %v572 = vpop.f32.mrb[0].mxu0
  %573 = vmatprep.mubr.bf16.mxu0 0
  %574 = vmatmul.mubr.bf16.gmra.mrb[0].mxu0 %v334
  %v575 = vpop.f32.mrb[0].mxu0
  %v576 = vadd.f32 0.0, %v575
  %v577 = vpop.f32.mrb[0].mxu0
  %v578 = vpop.f32.mrb[0].mxu0
  %v579 = vadd.f32 0.0, %v578
  %v580 = vpop.f32.mrb[0].mxu0
  %581 = vmatprep.mubr.bf16.mxu0 0
  %582 = vmatmul.mubr.bf16.gmra.mrb[0].mxu0 %v337
  %v583 = vpop.f32.mrb[0].mxu0
  %v584 = vadd.f32 0.0, %v583
  %v585 = vpop.f32.mrb[0].mxu0
  %v586 = vpop.f32.mrb[0].mxu0
  %v587 = vadd.f32 0.0, %v586
  %v588 = vpop.f32.mrb[0].mxu0
  %589 = vmatprep.mubr.bf16.mxu0 0
  %590 = vmatmul.mubr.bf16.gmra.mrb[0].mxu0 %v340
  %v591 = vpop.f32.mrb[0].mxu0
  %v592 = vadd.f32 0.0, %v591
  %v593 = vpop.f32.mrb[0].mxu0
  %v594 = vpop.f32.mrb[0].mxu0
  %v595 = vadd.f32 0.0, %v594
  %v596 = vpop.f32.mrb[0].mxu0
  %597 = vmatprep.mubr.bf16.mxu0 0
  %598 = vmatmul.mubr.bf16.gmra.mrb[0].mxu0 %v343
  %v599 = vpop.f32.mrb[0].mxu0
  %v600 = vadd.f32 0.0, %v599
  %v601 = vpop.f32.mrb[0].mxu0
  %v602 = vpop.f32.mrb[0].mxu0
  %v603 = vadd.f32 0.0, %v602
  %v604 = vpop.f32.mrb[0].mxu0
  %605 = vmatprep.mubr.bf16.mxu0 0
  %606 = vmatmul.mubr.bf16.gmra.mrb[0].mxu0 %v346
  %v607 = vpop.f32.mrb[0].mxu0
  %v608 = vadd.f32 0.0, %v607
  %v609 = vpop.f32.mrb[0].mxu0
  %v610 = vpop.f32.mrb[0].mxu0
  %v611 = vadd.f32 0.0, %v610
  %v612 = vpop.f32.mrb[0].mxu0
  %613 = vmatprep.mubr.bf16.mxu0 0
  %614 = vmatmul.mubr.bf16.gmra.mrb[0].mxu0 %v349
  %v615 = vpop.f32.mrb[0].mxu0
  %v616 = vadd.f32 0.0, %v615
  %v617 = vpop.f32.mrb[0].mxu0
  %v618 = vpop.f32.mrb[0].mxu0
  %v619 = vadd.f32 0.0, %v618
  %v620 = vpop.f32.mrb[0].mxu0
  %621 = vmatprep.mubr.bf16.mxu0 0
  %622 = vmatmul.mubr.bf16.gmra.mrb[0].mxu0 %v352
  %v623 = vpop.f32.mrb[0].mxu0
  %v624 = vadd.f32 0.0, %v623
  %v625 = vpop.f32.mrb[0].mxu0
  %v626 = vpop.f32.mrb[0].mxu0
  %v627 = vadd.f32 0.0, %v626
  %v628 = vpop.f32.mrb[0].mxu0
  %629 = vmatprep.mubr.bf16.mxu0 0
  %630 = vmatmul.mubr.bf16.gmra.mrb[0].mxu0 %v355
  %v631 = vpop.f32.mrb[0].mxu0
  %v632 = vadd.f32 0.0, %v631
  %v633 = vpop.f32.mrb[0].mxu0
  %v634 = vpop.f32.mrb[0].mxu0
  %v635 = vadd.f32 0.0, %v634
  %v636 = vpop.f32.mrb[0].mxu0
  %637 = vmatprep.mubr.bf16.mxu0 0
  %638 = vmatmul.mubr.bf16.gmra.mrb[0].mxu0 %v358
  %v639 = vpop.f32.mrb[0].mxu0
  %v640 = vadd.f32 0.0, %v639
  %v641 = vpop.f32.mrb[0].mxu0
  %v642 = vpop.f32.mrb[0].mxu0
  %v643 = vadd.f32 0.0, %v642
  %v644 = vpop.f32.mrb[0].mxu0
  %645 = vmatprep.mubr.bf16.mxu0 0
  %646 = vmatmul.mubr.bf16.gmra.mrb[0].mxu0 %v361
  %v647 = vpop.f32.mrb[0].mxu0
  %v648 = vadd.f32 0.0, %v647
  %v649 = vpop.f32.mrb[0].mxu0
  %v650 = vpop.f32.mrb[0].mxu0
  %v651 = vadd.f32 0.0, %v650
  %v652 = vpop.f32.mrb[0].mxu0
  %653 = vmatprep.mubr.bf16.mxu0 0
  %654 = vmatmul.mubr.bf16.gmra.mrb[0].mxu0 %v364
  %v655 = vpop.f32.mrb[0].mxu0
  %v656 = vadd.f32 0.0, %v655
  %v657 = vpop.f32.mrb[0].mxu0
  %v658 = vpop.f32.mrb[0].mxu0
  %v659 = vadd.f32 0.0, %v658
  %v660 = vpop.f32.mrb[0].mxu0
  %661 = vmatprep.mubr.bf16.mxu0 0
  %662 = vmatmul.mubr.bf16.gmra.mrb[0].mxu0 %v367
  %v663 = vpop.f32.mrb[0].mxu0
  %v664 = vadd.f32 0.0, %v663
  %v665 = vpop.f32.mrb[0].mxu0
  %v666 = vpop.f32.mrb[0].mxu0
  %v667 = vadd.f32 0.0, %v666
  %v668 = vpop.f32.mrb[0].mxu0
  %669 = vmatprep.mubr.bf16.mxu0 0
  %670 = vmatmul.mubr.bf16.gmra.mrb[0].mxu0 %v370
  %v671 = vpop.f32.mrb[0].mxu0
  %v672 = vadd.f32 0.0, %v671
  %v673 = vpop.f32.mrb[0].mxu0
  %v674 = vpop.f32.mrb[0].mxu0
  %v675 = vadd.f32 0.0, %v674
  %v676 = vpop.f32.mrb[0].mxu0
  %677 = vmatprep.mubr.bf16.mxu0 0
  %678 = vmatmul.mubr.bf16.gmra.mrb[0].mxu0 %v373
  %v679 = vpop.f32.mrb[0].mxu0
  %v680 = vadd.f32 0.0, %v679
  %v681 = vpop.f32.mrb[0].mxu0
  %v682 = vpop.f32.mrb[0].mxu0
  %v683 = vadd.f32 0.0, %v682
  %v684 = vpop.f32.mrb[0].mxu0
  %685 = vmatprep.mubr.bf16.mxu0 0
  %686 = vmatmul.mubr.bf16.gmra.mrb[0].mxu0 %v376
  %v687 = vpop.f32.mrb[0].mxu0
  %v688 = vadd.f32 0.0, %v687
  %v689 = vpop.f32.mrb[0].mxu0
  %v690 = vpop.f32.mrb[0].mxu0
  %v691 = vadd.f32 0.0, %v690
  %v692 = vpop.f32.mrb[0].mxu0
  %693 = vmatprep.mubr.bf16.mxu0 0
  %694 = vmatmul.mubr.bf16.gmra.mrb[0].mxu0 %v379
  %v695 = vpop.f32.mrb[0].mxu0
  %v696 = vadd.f32 0.0, %v695
  %v697 = vpop.f32.mrb[0].mxu0
  %v698 = vpop.f32.mrb[0].mxu0
  %v699 = vadd.f32 0.0, %v698
  %v700 = vpop.f32.mrb[0].mxu0
  %701 = vdwg.mxu0
  %vm702 = vcmask 97280
  %703 = vst.msk [vmem:[#allocation2] sm:$0xff] %vm702, %v416
  %704 = vst.msk [vmem:[#allocation2 + $0x8] sm:$0xff] %vm702, %v419
  %705 = vst.msk [vmem:[#allocation2 + $0x10] sm:$0xff] %vm702, %v424
  %706 = vst.msk [vmem:[#allocation2 + $0x18] sm:$0xff] %vm702, %v427
  %707 = vst.msk [vmem:[#allocation2 + $0x20] sm:$0xff] %vm702, %v432
  %708 = vst.msk [vmem:[#allocation2 + $0x28] sm:$0xff] %vm702, %v435
  %709 = vst.msk [vmem:[#allocation2 + $0x30] sm:$0xff] %vm702, %v440
  %710 = vst.msk [vmem:[#allocation2 + $0x38] sm:$0xff] %vm702, %v443
  %711 = vst.msk [vmem:[#allocation2 + $0x40] sm:$0xff] %vm702, %v448
  %712 = vst.msk [vmem:[#allocation2 + $0x48] sm:$0xff] %vm702, %v451
  %713 = vst.msk [vmem:[#allocation2 + $0x50] sm:$0xff] %vm702, %v456
  %714 = vst.msk [vmem:[#allocation2 + $0x58] sm:$0xff] %vm702, %v459
  %715 = vst.msk [vmem:[#allocation2 + $0x60] sm:$0xff] %vm702, %v464
  %716 = vst.msk [vmem:[#allocation2 + $0x68] sm:$0xff] %vm702, %v467
  %717 = vst.msk [vmem:[#allocation2 + $0x70] sm:$0xff] %vm702, %v472
  %718 = vst.msk [vmem:[#allocation2 + $0x78] sm:$0xff] %vm702, %v475
  %719 = vst.msk [vmem:[#allocation2 + $0x80] sm:$0xff] %vm702, %v480
  %720 = vst.msk [vmem:[#allocation2 + $0x88] sm:$0xff] %vm702, %v483
  %721 = vst.msk [vmem:[#allocation2 + $0x90] sm:$0xff] %vm702, %v488
  %722 = vst.msk [vmem:[#allocation2 + $0x98] sm:$0xff] %vm702, %v491
  %723 = vst.msk [vmem:[#allocation2 + $0xa0] sm:$0xff] %vm702, %v496
  %724 = vst.msk [vmem:[#allocation2 + $0xa8] sm:$0xff] %vm702, %v499
  %725 = vst.msk [vmem:[#allocation2 + $0xb0] sm:$0xff] %vm702, %v504
  %726 = vst.msk [vmem:[#allocation2 + $0xb8] sm:$0xff] %vm702, %v507
  %727 = vst.msk [vmem:[#allocation2 + $0xc0] sm:$0xff] %vm702, %v512
  %728 = vst.msk [vmem:[#allocation2 + $0xc8] sm:$0xff] %vm702, %v515
  %729 = vst.msk [vmem:[#allocation2 + $0xd0] sm:$0xff] %vm702, %v520
  %730 = vst.msk [vmem:[#allocation2 + $0xd8] sm:$0xff] %vm702, %v523
  %731 = vst.msk [vmem:[#allocation2 + $0xe0] sm:$0xff] %vm702, %v528
  %732 = vst.msk [vmem:[#allocation2 + $0xe8] sm:$0xff] %vm702, %v531
  %733 = vst.msk [vmem:[#allocation2 + $0xf0] sm:$0xff] %vm702, %v536
  %734 = vst.msk [vmem:[#allocation2 + $0xf8] sm:$0xff] %vm702, %v539
  %735 = vst.msk [vmem:[#allocation2 + $0x100] sm:$0xff] %vm702, %v544
  %736 = vst.msk [vmem:[#allocation2 + $0x108] sm:$0xff] %vm702, %v547
  %737 = vst.msk [vmem:[#allocation2 + $0x110] sm:$0xff] %vm702, %v552
  %738 = vst.msk [vmem:[#allocation2 + $0x118] sm:$0xff] %vm702, %v555
  %739 = vst.msk [vmem:[#allocation2 + $0x120] sm:$0xff] %vm702, %v560
  %740 = vst.msk [vmem:[#allocation2 + $0x128] sm:$0xff] %vm702, %v563
  %741 = vst.msk [vmem:[#allocation2 + $0x130] sm:$0xff] %vm702, %v568
  %742 = vst.msk [vmem:[#allocation2 + $0x138] sm:$0xff] %vm702, %v571
  %743 = vst.msk [vmem:[#allocation2 + $0x140] sm:$0xff] %vm702, %v576
  %744 = vst.msk [vmem:[#allocation2 + $0x148] sm:$0xff] %vm702, %v579
  %745 = vst.msk [vmem:[#allocation2 + $0x150] sm:$0xff] %vm702, %v584
  %746 = vst.msk [vmem:[#allocation2 + $0x158] sm:$0xff] %vm702, %v587
  %747 = vst.msk [vmem:[#allocation2 + $0x160] sm:$0xff] %vm702, %v592
  %748 = vst.msk [vmem:[#allocation2 + $0x168] sm:$0xff] %vm702, %v595
  %749 = vst.msk [vmem:[#allocation2 + $0x170] sm:$0xff] %vm702, %v600
  %750 = vst.msk [vmem:[#allocation2 + $0x178] sm:$0xff] %vm702, %v603
  %751 = vst.msk [vmem:[#allocation2 + $0x180] sm:$0xff] %vm702, %v608
  %752 = vst.msk [vmem:[#allocation2 + $0x188] sm:$0xff] %vm702, %v611
  %753 = vst.msk [vmem:[#allocation2 + $0x190] sm:$0xff] %vm702, %v616
  %754 = vst.msk [vmem:[#allocation2 + $0x198] sm:$0xff] %vm702, %v619
  %755 = vst.msk [vmem:[#allocation2 + $0x1a0] sm:$0xff] %vm702, %v624
  %756 = vst.msk [vmem:[#allocation2 + $0x1a8] sm:$0xff] %vm702, %v627
  %757 = vst.msk [vmem:[#allocation2 + $0x1b0] sm:$0xff] %vm702, %v632
  %758 = vst.msk [vmem:[#allocation2 + $0x1b8] sm:$0xff] %vm702, %v635
  %759 = vst.msk [vmem:[#allocation2 + $0x1c0] sm:$0xff] %vm702, %v640
  %760 = vst.msk [vmem:[#allocation2 + $0x1c8] sm:$0xff] %vm702, %v643
  %761 = vst.msk [vmem:[#allocation2 + $0x1d0] sm:$0xff] %vm702, %v648
  %762 = vst.msk [vmem:[#allocation2 + $0x1d8] sm:$0xff] %vm702, %v651
  %763 = vst.msk [vmem:[#allocation2 + $0x1e0] sm:$0xff] %vm702, %v656
  %764 = vst.msk [vmem:[#allocation2 + $0x1e8] sm:$0xff] %vm702, %v659
  %765 = vst.msk [vmem:[#allocation2 + $0x1f0] sm:$0xff] %vm702, %v664
  %766 = vst.msk [vmem:[#allocation2 + $0x1f8] sm:$0xff] %vm702, %v667
  %767 = vst.msk [vmem:[#allocation2 + $0x200] sm:$0xff] %vm702, %v672
  %768 = vst.msk [vmem:[#allocation2 + $0x208] sm:$0xff] %vm702, %v675
  %769 = vst.msk [vmem:[#allocation2 + $0x210] sm:$0xff] %vm702, %v680
  %770 = vst.msk [vmem:[#allocation2 + $0x218] sm:$0xff] %vm702, %v683
  %771 = vst.msk [vmem:[#allocation2 + $0x220] sm:$0xff] %vm702, %v688
  %772 = vst.msk [vmem:[#allocation2 + $0x228] sm:$0xff] %vm702, %v691
  %773 = vst.msk [vmem:[#allocation2 + $0x230] sm:$0xff] %vm702, %v696
  %774 = vst.msk [vmem:[#allocation2 + $0x238] sm:$0xff] %vm702, %v699
  %v775 = vld [vmem:[#allocation2] sm:$0xff]
  %v776 = vld [vmem:[#allocation2 + $0x8] sm:$0xff]
  %v777 = vld [vmem:[#allocation2 + $0x10] sm:$0xff]
  %v778 = vld [vmem:[#allocation2 + $0x18] sm:$0xff]
  %v779 = vld [vmem:[#allocation2 + $0x20] sm:$0xff]
  %v780 = vld [vmem:[#allocation2 + $0x28] sm:$0xff]
  %v781 = vld [vmem:[#allocation2 + $0x30] sm:$0xff]
  %v782 = vld [vmem:[#allocation2 + $0x38] sm:$0xff]
  %v783 = vld [vmem:[#allocation2 + $0x40] sm:$0xff]
  %v784 = vld [vmem:[#allocation2 + $0x48] sm:$0xff]
  %v785 = vld [vmem:[#allocation2 + $0x50] sm:$0xff]
  %v786 = vld [vmem:[#allocation2 + $0x58] sm:$0xff]
  %v787 = vld [vmem:[#allocation2 + $0x60] sm:$0xff]
  %v788 = vld [vmem:[#allocation2 + $0x68] sm:$0xff]
  %v789 = vld [vmem:[#allocation2 + $0x70] sm:$0xff]
  %v790 = vld [vmem:[#allocation2 + $0x78] sm:$0xff]
  %v791 = vld [vmem:[#allocation2 + $0x80] sm:$0xff]
  %v792 = vld [vmem:[#allocation2 + $0x88] sm:$0xff]
  %v793 = vld [vmem:[#allocation2 + $0x90] sm:$0xff]
  %v794 = vld [vmem:[#allocation2 + $0x98] sm:$0xff]
  %v795 = vld [vmem:[#allocation2 + $0xa0] sm:$0xff]
  %v796 = vld [vmem:[#allocation2 + $0xa8] sm:$0xff]
  %v797 = vld [vmem:[#allocation2 + $0xb0] sm:$0xff]
  %v798 = vld [vmem:[#allocation2 + $0xb8] sm:$0xff]
  %v799 = vld [vmem:[#allocation2 + $0xc0] sm:$0xff]
  %v800 = vld [vmem:[#allocation2 + $0xc8] sm:$0xff]
  %v801 = vld [vmem:[#allocation2 + $0xd0] sm:$0xff]
  %v802 = vld [vmem:[#allocation2 + $0xd8] sm:$0xff]
  %v803 = vld [vmem:[#allocation2 + $0xe0] sm:$0xff]
  %v804 = vld [vmem:[#allocation2 + $0xe8] sm:$0xff]
  %v805 = vld [vmem:[#allocation2 + $0xf0] sm:$0xff]
  %v806 = vld [vmem:[#allocation2 + $0xf8] sm:$0xff]
  %v807 = vld [vmem:[#allocation2 + $0x100] sm:$0xff]
  %v808 = vld [vmem:[#allocation2 + $0x108] sm:$0xff]
  %v809 = vld [vmem:[#allocation2 + $0x110] sm:$0xff]
  %v810 = vld [vmem:[#allocation2 + $0x118] sm:$0xff]
  %v811 = vld [vmem:[#allocation2 + $0x120] sm:$0xff]
  %v812 = vld [vmem:[#allocation2 + $0x128] sm:$0xff]
  %v813 = vld [vmem:[#allocation2 + $0x130] sm:$0xff]
  %v814 = vld [vmem:[#allocation2 + $0x138] sm:$0xff]
  %v815 = vld [vmem:[#allocation2 + $0x140] sm:$0xff]
  %v816 = vld [vmem:[#allocation2 + $0x148] sm:$0xff]
  %v817 = vld [vmem:[#allocation2 + $0x150] sm:$0xff]
  %v818 = vld [vmem:[#allocation2 + $0x158] sm:$0xff]
  %v819 = vld [vmem:[#allocation2 + $0x160] sm:$0xff]
  %v820 = vld [vmem:[#allocation2 + $0x168] sm:$0xff]
  %v821 = vld [vmem:[#allocation2 + $0x170] sm:$0xff]
  %v822 = vld [vmem:[#allocation2 + $0x178] sm:$0xff]
  %v823 = vld [vmem:[#allocation2 + $0x180] sm:$0xff]
  %v824 = vld [vmem:[#allocation2 + $0x188] sm:$0xff]
  %v825 = vld [vmem:[#allocation2 + $0x190] sm:$0xff]
  %v826 = vld [vmem:[#allocation2 + $0x198] sm:$0xff]
  %v827 = vld [vmem:[#allocation2 + $0x1a0] sm:$0xff]
  %v828 = vld [vmem:[#allocation2 + $0x1a8] sm:$0xff]
  %v829 = vld [vmem:[#allocation2 + $0x1b0] sm:$0xff]
  %v830 = vld [vmem:[#allocation2 + $0x1b8] sm:$0xff]
  %v831 = vld [vmem:[#allocation2 + $0x1c0] sm:$0xff]
  %v832 = vld [vmem:[#allocation2 + $0x1c8] sm:$0xff]
  %v833 = vld [vmem:[#allocation2 + $0x1d0] sm:$0xff]
  %v834 = vld [vmem:[#allocation2 + $0x1d8] sm:$0xff]
  %v835 = vld [vmem:[#allocation2 + $0x1e0] sm:$0xff]
  %v836 = vld [vmem:[#allocation2 + $0x1e8] sm:$0xff]
  %v837 = vld [vmem:[#allocation2 + $0x1f0] sm:$0xff]
  %v838 = vld [vmem:[#allocation2 + $0x1f8] sm:$0xff]
  %v839 = vld [vmem:[#allocation2 + $0x200] sm:$0xff]
  %v840 = vld [vmem:[#allocation2 + $0x208] sm:$0xff]
  %v841 = vld [vmem:[#allocation2 + $0x210] sm:$0xff]
  %v842 = vld [vmem:[#allocation2 + $0x218] sm:$0xff]
  %v843 = vld [vmem:[#allocation2 + $0x220] sm:$0xff]
  %v844 = vld [vmem:[#allocation2 + $0x228] sm:$0xff]
  %913 = vrot.lane.b32.xlu0 %v777, 125
  %v914 = vpop.permute.xlu0 %913
  %915 = vrot.lane.b32.xlu0 %v778, 125
  %v916 = vpop.permute.xlu0 %915
  %917 = vrot.lane.b32.xlu0 %v779, 125
  %v918 = vpop.permute.xlu0 %917
  %919 = vrot.lane.b32.xlu0 %v780, 125
  %v920 = vpop.permute.xlu0 %919
  %921 = vrot.lane.b32.xlu0 %v781, 125
  %v922 = vpop.permute.xlu0 %921
  %923 = vrot.lane.b32.xlu0 %v782, 125
  %v924 = vpop.permute.xlu0 %923
  %925 = vrot.lane.b32.xlu0 %v783, 125
  %v926 = vpop.permute.xlu0 %925
  %927 = vrot.lane.b32.xlu0 %v784, 125
  %v928 = vpop.permute.xlu0 %927
  %929 = vrot.lane.b32.xlu0 %v785, 125
  %v930 = vpop.permute.xlu0 %929
  %931 = vrot.lane.b32.xlu0 %v786, 125
  %v932 = vpop.permute.xlu0 %931
  %933 = vrot.lane.b32.xlu0 %v787, 125
  %v934 = vpop.permute.xlu0 %933
  %935 = vrot.lane.b32.xlu0 %v788, 125
  %v936 = vpop.permute.xlu0 %935
  %937 = vrot.lane.b32.xlu0 %v789, 125
  %v938 = vpop.permute.xlu0 %937
  %939 = vrot.lane.b32.xlu0 %v790, 125
  %v940 = vpop.permute.xlu0 %939
  %941 = vrot.lane.b32.xlu0 %v791, 125
  %v942 = vpop.permute.xlu0 %941
  %943 = vrot.lane.b32.xlu0 %v792, 125
  %v944 = vpop.permute.xlu0 %943
  %945 = vrot.lane.b32.xlu0 %v793, 125
  %v946 = vpop.permute.xlu0 %945
  %947 = vrot.lane.b32.xlu0 %v794, 125
  %v948 = vpop.permute.xlu0 %947
  %949 = vrot.lane.b32.xlu0 %v795, 125
  %v950 = vpop.permute.xlu0 %949
  %951 = vrot.lane.b32.xlu0 %v796, 125
  %v952 = vpop.permute.xlu0 %951
  %953 = vrot.lane.b32.xlu0 %v797, 125
  %v954 = vpop.permute.xlu0 %953
  %955 = vrot.lane.b32.xlu0 %v798, 125
  %v956 = vpop.permute.xlu0 %955
  %957 = vrot.lane.b32.xlu0 %v799, 125
  %v958 = vpop.permute.xlu0 %957
  %959 = vrot.lane.b32.xlu0 %v800, 125
  %v960 = vpop.permute.xlu0 %959
  %961 = vrot.lane.b32.xlu0 %v801, 125
  %v962 = vpop.permute.xlu0 %961
  %963 = vrot.lane.b32.xlu0 %v802, 125
  %v964 = vpop.permute.xlu0 %963
  %965 = vrot.lane.b32.xlu0 %v803, 125
  %v966 = vpop.permute.xlu0 %965
  %967 = vrot.lane.b32.xlu0 %v804, 125
  %v968 = vpop.permute.xlu0 %967
  %969 = vrot.lane.b32.xlu0 %v805, 125
  %v970 = vpop.permute.xlu0 %969
  %971 = vrot.lane.b32.xlu0 %v806, 125
  %v972 = vpop.permute.xlu0 %971
  %973 = vrot.lane.b32.xlu0 %v807, 125
  %v974 = vpop.permute.xlu0 %973
  %975 = vrot.lane.b32.xlu0 %v808, 125
  %v976 = vpop.permute.xlu0 %975
  %977 = vrot.lane.b32.xlu0 %v809, 125
  %v978 = vpop.permute.xlu0 %977
  %979 = vrot.lane.b32.xlu0 %v810, 125
  %v980 = vpop.permute.xlu0 %979
  %981 = vrot.lane.b32.xlu0 %v811, 125
  %v982 = vpop.permute.xlu0 %981
  %983 = vrot.lane.b32.xlu0 %v812, 125
  %v984 = vpop.permute.xlu0 %983
  %985 = vrot.lane.b32.xlu0 %v813, 125
  %v986 = vpop.permute.xlu0 %985
  %987 = vrot.lane.b32.xlu0 %v814, 125
  %v988 = vpop.permute.xlu0 %987
  %989 = vrot.lane.b32.xlu0 %v815, 125
  %v990 = vpop.permute.xlu0 %989
  %991 = vrot.lane.b32.xlu0 %v816, 125
  %v992 = vpop.permute.xlu0 %991
  %993 = vrot.lane.b32.xlu0 %v817, 125
  %v994 = vpop.permute.xlu0 %993
  %995 = vrot.lane.b32.xlu0 %v818, 125
  %v996 = vpop.permute.xlu0 %995
  %997 = vrot.lane.b32.xlu0 %v819, 125
  %v998 = vpop.permute.xlu0 %997
  %999 = vrot.lane.b32.xlu0 %v820, 125
  %v1000 = vpop.permute.xlu0 %999
  %1001 = vrot.lane.b32.xlu0 %v821, 125
  %v1002 = vpop.permute.xlu0 %1001
  %1003 = vrot.lane.b32.xlu0 %v822, 125
  %v1004 = vpop.permute.xlu0 %1003
  %1005 = vrot.lane.b32.xlu0 %v823, 125
  %v1006 = vpop.permute.xlu0 %1005
  %1007 = vrot.lane.b32.xlu0 %v824, 125
  %v1008 = vpop.permute.xlu0 %1007
  %1009 = vrot.lane.b32.xlu0 %v825, 125
  %v1010 = vpop.permute.xlu0 %1009
  %1011 = vrot.lane.b32.xlu0 %v826, 125
  %v1012 = vpop.permute.xlu0 %1011
  %1013 = vrot.lane.b32.xlu0 %v827, 125
  %v1014 = vpop.permute.xlu0 %1013
  %1015 = vrot.lane.b32.xlu0 %v828, 125
  %v1016 = vpop.permute.xlu0 %1015
  %1017 = vrot.lane.b32.xlu0 %v829, 125
  %v1018 = vpop.permute.xlu0 %1017
  %1019 = vrot.lane.b32.xlu0 %v830, 125
  %v1020 = vpop.permute.xlu0 %1019
  %1021 = vrot.lane.b32.xlu0 %v831, 125
  %v1022 = vpop.permute.xlu0 %1021
  %1023 = vrot.lane.b32.xlu0 %v832, 125
  %v1024 = vpop.permute.xlu0 %1023
  %1025 = vrot.lane.b32.xlu0 %v833, 125
  %v1026 = vpop.permute.xlu0 %1025
  %1027 = vrot.lane.b32.xlu0 %v834, 125
  %v1028 = vpop.permute.xlu0 %1027
  %1029 = vrot.lane.b32.xlu0 %v835, 125
  %v1030 = vpop.permute.xlu0 %1029
  %1031 = vrot.lane.b32.xlu0 %v836, 125
  %v1032 = vpop.permute.xlu0 %1031
  %1033 = vrot.lane.b32.xlu0 %v837, 125
  %v1034 = vpop.permute.xlu0 %1033
  %1035 = vrot.lane.b32.xlu0 %v838, 125
  %v1036 = vpop.permute.xlu0 %1035
  %1037 = vrot.lane.b32.xlu0 %v839, 125
  %v1038 = vpop.permute.xlu0 %1037
  %1039 = vrot.lane.b32.xlu0 %v840, 125
  %v1040 = vpop.permute.xlu0 %1039
  %1041 = vrot.lane.b32.xlu0 %v841, 125
  %v1042 = vpop.permute.xlu0 %1041
  %1043 = vrot.lane.b32.xlu0 %v842, 125
  %v1044 = vpop.permute.xlu0 %1043
  %1045 = vrot.lane.b32.xlu0 %v843, 125
  %v1046 = vpop.permute.xlu0 %1045
  %1047 = vrot.lane.b32.xlu0 %v844, 125
  %v1048 = vpop.permute.xlu0 %1047
  %v1117 = vadd.f32 %v775, %v914
  %v1118 = vadd.f32 %v776, %v916
  %v1119 = vadd.f32 %v777, %v918
  %v1120 = vadd.f32 %v778, %v920
  %v1121 = vadd.f32 %v779, %v922
  %v1122 = vadd.f32 %v780, %v924
  %v1123 = vadd.f32 %v781, %v926
  %v1124 = vadd.f32 %v782, %v928
  %v1125 = vadd.f32 %v783, %v930
  %v1126 = vadd.f32 %v784, %v932
  %v1127 = vadd.f32 %v785, %v934
  %v1128 = vadd.f32 %v786, %v936
  %v1129 = vadd.f32 %v787, %v938
  %v1130 = vadd.f32 %v788, %v940
  %v1131 = vadd.f32 %v789, %v942
  %v1132 = vadd.f32 %v790, %v944
  %v1133 = vadd.f32 %v791, %v946
  %v1134 = vadd.f32 %v792, %v948
  %v1135 = vadd.f32 %v793, %v950
  %v1136 = vadd.f32 %v794, %v952
  %v1137 = vadd.f32 %v795, %v954
  %v1138 = vadd.f32 %v796, %v956
  %v1139 = vadd.f32 %v797, %v958
  %v1140 = vadd.f32 %v798, %v960
  %v1141 = vadd.f32 %v799, %v962
  %v1142 = vadd.f32 %v800, %v964
  %v1143 = vadd.f32 %v801, %v966
  %v1144 = vadd.f32 %v802, %v968
  %v1145 = vadd.f32 %v803, %v970
  %v1146 = vadd.f32 %v804, %v972
  %v1147 = vadd.f32 %v805, %v974
  %v1148 = vadd.f32 %v806, %v976
  %v1149 = vadd.f32 %v807, %v978
  %v1150 = vadd.f32 %v808, %v980
  %v1151 = vadd.f32 %v809, %v982
  %v1152 = vadd.f32 %v810, %v984
  %v1153 = vadd.f32 %v811, %v986
  %v1154 = vadd.f32 %v812, %v988
  %v1155 = vadd.f32 %v813, %v990
  %v1156 = vadd.f32 %v814, %v992
  %v1157 = vadd.f32 %v815, %v994
  %v1158 = vadd.f32 %v816, %v996
  %v1159 = vadd.f32 %v817, %v998
  %v1160 = vadd.f32 %v818, %v1000
  %v1161 = vadd.f32 %v819, %v1002
  %v1162 = vadd.f32 %v820, %v1004
  %v1163 = vadd.f32 %v821, %v1006
  %v1164 = vadd.f32 %v822, %v1008
  %v1165 = vadd.f32 %v823, %v1010
  %v1166 = vadd.f32 %v824, %v1012
  %v1167 = vadd.f32 %v825, %v1014
  %v1168 = vadd.f32 %v826, %v1016
  %v1169 = vadd.f32 %v827, %v1018
  %v1170 = vadd.f32 %v828, %v1020
  %v1171 = vadd.f32 %v829, %v1022
  %v1172 = vadd.f32 %v830, %v1024
  %v1173 = vadd.f32 %v831, %v1026
  %v1174 = vadd.f32 %v832, %v1028
  %v1175 = vadd.f32 %v833, %v1030
  %v1176 = vadd.f32 %v834, %v1032
  %v1177 = vadd.f32 %v835, %v1034
  %v1178 = vadd.f32 %v836, %v1036
  %v1179 = vadd.f32 %v837, %v1038
  %v1180 = vadd.f32 %v838, %v1040
  %v1181 = vadd.f32 %v839, %v1042
  %v1182 = vadd.f32 %v840, %v1044
  %v1183 = vadd.f32 %v841, %v1046
  %v1184 = vadd.f32 %v842, %v1048
  %v1185 = vtanh.pop %v1117
  %v1186 = vtanh.pop %v1118
  %v1187 = vtanh.pop %v1119
  %v1188 = vtanh.pop %v1120
  %v1189 = vtanh.pop %v1121
  %v1190 = vtanh.pop %v1122
  %v1191 = vtanh.pop %v1123
  %v1192 = vtanh.pop %v1124
  %v1193 = vtanh.pop %v1125
  %v1194 = vtanh.pop %v1126
  %v1195 = vtanh.pop %v1127
  %v1196 = vtanh.pop %v1128
  %v1197 = vtanh.pop %v1129
  %v1198 = vtanh.pop %v1130
  %v1199 = vtanh.pop %v1131
  %v1200 = vtanh.pop %v1132
  %v1201 = vtanh.pop %v1133
  %v1202 = vtanh.pop %v1134
  %v1203 = vtanh.pop %v1135
  %v1204 = vtanh.pop %v1136
  %v1205 = vtanh.pop %v1137
  %v1206 = vtanh.pop %v1138
  %v1207 = vtanh.pop %v1139
  %v1208 = vtanh.pop %v1140
  %v1209 = vtanh.pop %v1141
  %v1210 = vtanh.pop %v1142
  %v1211 = vtanh.pop %v1143
  %v1212 = vtanh.pop %v1144
  %v1213 = vtanh.pop %v1145
  %v1214 = vtanh.pop %v1146
  %v1215 = vtanh.pop %v1147
  %v1216 = vtanh.pop %v1148
  %v1217 = vtanh.pop %v1149
  %v1218 = vtanh.pop %v1150
  %v1219 = vtanh.pop %v1151
  %v1220 = vtanh.pop %v1152
  %v1221 = vtanh.pop %v1153
  %v1222 = vtanh.pop %v1154
  %v1223 = vtanh.pop %v1155
  %v1224 = vtanh.pop %v1156
  %v1225 = vtanh.pop %v1157
  %v1226 = vtanh.pop %v1158
  %v1227 = vtanh.pop %v1159
  %v1228 = vtanh.pop %v1160
  %v1229 = vtanh.pop %v1161
  %v1230 = vtanh.pop %v1162
  %v1231 = vtanh.pop %v1163
  %v1232 = vtanh.pop %v1164
  %v1233 = vtanh.pop %v1165
  %v1234 = vtanh.pop %v1166
  %v1235 = vtanh.pop %v1167
  %v1236 = vtanh.pop %v1168
  %v1237 = vtanh.pop %v1169
  %v1238 = vtanh.pop %v1170
  %v1239 = vtanh.pop %v1171
  %v1240 = vtanh.pop %v1172
  %v1241 = vtanh.pop %v1173
  %v1242 = vtanh.pop %v1174
  %v1243 = vtanh.pop %v1175
  %v1244 = vtanh.pop %v1176
  %v1245 = vtanh.pop %v1177
  %v1246 = vtanh.pop %v1178
  %v1247 = vtanh.pop %v1179
  %v1248 = vtanh.pop %v1180
  %v1249 = vtanh.pop %v1181
  %v1250 = vtanh.pop %v1182
  %v1251 = vtanh.pop %v1183
  %v1252 = vtanh.pop %v1184
  %vm1253 = vcmask 23552
  %1254 = vst.msk [vmem:[%s2] sm:$0xff] %vm1253, %v1185
  %1255 = vst.msk [vmem:[%s2 + $0x8] sm:$0xff] %vm1253, %v1186
  %1256 = vst.msk [vmem:[%s2 + $0x10] sm:$0xff] %vm1253, %v1187
  %1257 = vst.msk [vmem:[%s2 + $0x18] sm:$0xff] %vm1253, %v1188
  %1258 = vst.msk [vmem:[%s2 + $0x20] sm:$0xff] %vm1253, %v1189
  %1259 = vst.msk [vmem:[%s2 + $0x28] sm:$0xff] %vm1253, %v1190
  %1260 = vst.msk [vmem:[%s2 + $0x30] sm:$0xff] %vm1253, %v1191
  %1261 = vst.msk [vmem:[%s2 + $0x38] sm:$0xff] %vm1253, %v1192
  %1262 = vst.msk [vmem:[%s2 + $0x40] sm:$0xff] %vm1253, %v1193
  %1263 = vst.msk [vmem:[%s2 + $0x48] sm:$0xff] %vm1253, %v1194
  %1264 = vst.msk [vmem:[%s2 + $0x50] sm:$0xff] %vm1253, %v1195
  %1265 = vst.msk [vmem:[%s2 + $0x58] sm:$0xff] %vm1253, %v1196
  %1266 = vst.msk [vmem:[%s2 + $0x60] sm:$0xff] %vm1253, %v1197
  %1267 = vst.msk [vmem:[%s2 + $0x68] sm:$0xff] %vm1253, %v1198
  %1268 = vst.msk [vmem:[%s2 + $0x70] sm:$0xff] %vm1253, %v1199
  %1269 = vst.msk [vmem:[%s2 + $0x78] sm:$0xff] %vm1253, %v1200
  %1270 = vst.msk [vmem:[%s2 + $0x80] sm:$0xff] %vm1253, %v1201
  %1271 = vst.msk [vmem:[%s2 + $0x88] sm:$0xff] %vm1253, %v1202
  %1272 = vst.msk [vmem:[%s2 + $0x90] sm:$0xff] %vm1253, %v1203
  %1273 = vst.msk [vmem:[%s2 + $0x98] sm:$0xff] %vm1253, %v1204
  %1274 = vst.msk [vmem:[%s2 + $0xa0] sm:$0xff] %vm1253, %v1205
  %1275 = vst.msk [vmem:[%s2 + $0xa8] sm:$0xff] %vm1253, %v1206
  %1276 = vst.msk [vmem:[%s2 + $0xb0] sm:$0xff] %vm1253, %v1207
  %1277 = vst.msk [vmem:[%s2 + $0xb8] sm:$0xff] %vm1253, %v1208
  %1278 = vst.msk [vmem:[%s2 + $0xc0] sm:$0xff] %vm1253, %v1209
  %1279 = vst.msk [vmem:[%s2 + $0xc8] sm:$0xff] %vm1253, %v1210
  %1280 = vst.msk [vmem:[%s2 + $0xd0] sm:$0xff] %vm1253, %v1211
  %1281 = vst.msk [vmem:[%s2 + $0xd8] sm:$0xff] %vm1253, %v1212
  %1282 = vst.msk [vmem:[%s2 + $0xe0] sm:$0xff] %vm1253, %v1213
  %1283 = vst.msk [vmem:[%s2 + $0xe8] sm:$0xff] %vm1253, %v1214
  %1284 = vst.msk [vmem:[%s2 + $0xf0] sm:$0xff] %vm1253, %v1215
  %1285 = vst.msk [vmem:[%s2 + $0xf8] sm:$0xff] %vm1253, %v1216
  %1286 = vst.msk [vmem:[%s2 + $0x100] sm:$0xff] %vm1253, %v1217
  %1287 = vst.msk [vmem:[%s2 + $0x108] sm:$0xff] %vm1253, %v1218
  %1288 = vst.msk [vmem:[%s2 + $0x110] sm:$0xff] %vm1253, %v1219
  %1289 = vst.msk [vmem:[%s2 + $0x118] sm:$0xff] %vm1253, %v1220
  %1290 = vst.msk [vmem:[%s2 + $0x120] sm:$0xff] %vm1253, %v1221
  %1291 = vst.msk [vmem:[%s2 + $0x128] sm:$0xff] %vm1253, %v1222
  %1292 = vst.msk [vmem:[%s2 + $0x130] sm:$0xff] %vm1253, %v1223
  %1293 = vst.msk [vmem:[%s2 + $0x138] sm:$0xff] %vm1253, %v1224
  %1294 = vst.msk [vmem:[%s2 + $0x140] sm:$0xff] %vm1253, %v1225
  %1295 = vst.msk [vmem:[%s2 + $0x148] sm:$0xff] %vm1253, %v1226
  %1296 = vst.msk [vmem:[%s2 + $0x150] sm:$0xff] %vm1253, %v1227
  %1297 = vst.msk [vmem:[%s2 + $0x158] sm:$0xff] %vm1253, %v1228
  %1298 = vst.msk [vmem:[%s2 + $0x160] sm:$0xff] %vm1253, %v1229
  %1299 = vst.msk [vmem:[%s2 + $0x168] sm:$0xff] %vm1253, %v1230
  %1300 = vst.msk [vmem:[%s2 + $0x170] sm:$0xff] %vm1253, %v1231
  %1301 = vst.msk [vmem:[%s2 + $0x178] sm:$0xff] %vm1253, %v1232
  %1302 = vst.msk [vmem:[%s2 + $0x180] sm:$0xff] %vm1253, %v1233
  %1303 = vst.msk [vmem:[%s2 + $0x188] sm:$0xff] %vm1253, %v1234
  %1304 = vst.msk [vmem:[%s2 + $0x190] sm:$0xff] %vm1253, %v1235
  %1305 = vst.msk [vmem:[%s2 + $0x198] sm:$0xff] %vm1253, %v1236
  %1306 = vst.msk [vmem:[%s2 + $0x1a0] sm:$0xff] %vm1253, %v1237
  %1307 = vst.msk [vmem:[%s2 + $0x1a8] sm:$0xff] %vm1253, %v1238
  %1308 = vst.msk [vmem:[%s2 + $0x1b0] sm:$0xff] %vm1253, %v1239
  %1309 = vst.msk [vmem:[%s2 + $0x1b8] sm:$0xff] %vm1253, %v1240
  %1310 = vst.msk [vmem:[%s2 + $0x1c0] sm:$0xff] %vm1253, %v1241
  %1311 = vst.msk [vmem:[%s2 + $0x1c8] sm:$0xff] %vm1253, %v1242
  %1312 = vst.msk [vmem:[%s2 + $0x1d0] sm:$0xff] %vm1253, %v1243
  %1313 = vst.msk [vmem:[%s2 + $0x1d8] sm:$0xff] %vm1253, %v1244
  %1314 = vst.msk [vmem:[%s2 + $0x1e0] sm:$0xff] %vm1253, %v1245
  %1315 = vst.msk [vmem:[%s2 + $0x1e8] sm:$0xff] %vm1253, %v1246
  %1316 = vst.msk [vmem:[%s2 + $0x1f0] sm:$0xff] %vm1253, %v1247
  %1317 = vst.msk [vmem:[%s2 + $0x1f8] sm:$0xff] %vm1253, %v1248
  %1318 = vst.msk [vmem:[%s2 + $0x200] sm:$0xff] %vm1253, %v1249
  %1319 = vst.msk [vmem:[%s2 + $0x208] sm:$0xff] %vm1253, %v1250
  %1320 = vst.msk [vmem:[%s2 + $0x210] sm:$0xff] %vm1253, %v1251
  %1321 = vst.msk [vmem:[%s2 + $0x218] sm:$0xff] %vm1253, %v1252
  %v1322 = vld [vmem:[#allocation2 + $0x10] sm:$0xff]
  %v1323 = vld [vmem:[#allocation2 + $0x18] sm:$0xff]
  %v1324 = vld [vmem:[#allocation2 + $0x20] sm:$0xff]
  %v1325 = vld [vmem:[#allocation2 + $0x28] sm:$0xff]
  %v1326 = vld [vmem:[#allocation2 + $0x30] sm:$0xff]
  %v1327 = vld [vmem:[#allocation2 + $0x38] sm:$0xff]
  %v1328 = vld [vmem:[#allocation2 + $0x40] sm:$0xff]
  %v1329 = vld [vmem:[#allocation2 + $0x48] sm:$0xff]
  %v1330 = vld [vmem:[#allocation2 + $0x50] sm:$0xff]
  %v1331 = vld [vmem:[#allocation2 + $0x58] sm:$0xff]
  %v1332 = vld [vmem:[#allocation2 + $0x60] sm:$0xff]
  %v1333 = vld [vmem:[#allocation2 + $0x68] sm:$0xff]
  %v1334 = vld [vmem:[#allocation2 + $0x70] sm:$0xff]
  %v1335 = vld [vmem:[#allocation2 + $0x78] sm:$0xff]
  %v1336 = vld [vmem:[#allocation2 + $0x80] sm:$0xff]
  %v1337 = vld [vmem:[#allocation2 + $0x88] sm:$0xff]
  %v1338 = vld [vmem:[#allocation2 + $0x90] sm:$0xff]
  %v1339 = vld [vmem:[#allocation2 + $0x98] sm:$0xff]
  %v1340 = vld [vmem:[#allocation2 + $0xa0] sm:$0xff]
  %v1341 = vld [vmem:[#allocation2 + $0xa8] sm:$0xff]
  %v1342 = vld [vmem:[#allocation2 + $0xb0] sm:$0xff]
  %v1343 = vld [vmem:[#allocation2 + $0xb8] sm:$0xff]
  %v1344 = vld [vmem:[#allocation2 + $0xc0] sm:$0xff]
  %v1345 = vld [vmem:[#allocation2 + $0xc8] sm:$0xff]
  %v1346 = vld [vmem:[#allocation2 + $0xd0] sm:$0xff]
  %v1347 = vld [vmem:[#allocation2 + $0xd8] sm:$0xff]
  %v1348 = vld [vmem:[#allocation2 + $0xe0] sm:$0xff]
  %v1349 = vld [vmem:[#allocation2 + $0xe8] sm:$0xff]
  %v1350 = vld [vmem:[#allocation2 + $0xf0] sm:$0xff]
  %v1351 = vld [vmem:[#allocation2 + $0xf8] sm:$0xff]
  %v1352 = vld [vmem:[#allocation2 + $0x100] sm:$0xff]
  %v1353 = vld [vmem:[#allocation2 + $0x108] sm:$0xff]
  %v1354 = vld [vmem:[#allocation2 + $0x110] sm:$0xff]
  %v1355 = vld [vmem:[#allocation2 + $0x118] sm:$0xff]
  %v1356 = vld [vmem:[#allocation2 + $0x120] sm:$0xff]
  %v1357 = vld [vmem:[#allocation2 + $0x128] sm:$0xff]
  %v1358 = vld [vmem:[#allocation2 + $0x130] sm:$0xff]
  %v1359 = vld [vmem:[#allocation2 + $0x138] sm:$0xff]
  %v1360 = vld [vmem:[#allocation2 + $0x140] sm:$0xff]
  %v1361 = vld [vmem:[#allocation2 + $0x148] sm:$0xff]
  %v1362 = vld [vmem:[#allocation2 + $0x150] sm:$0xff]
  %v1363 = vld [vmem:[#allocation2 + $0x158] sm:$0xff]
  %v1364 = vld [vmem:[#allocation2 + $0x160] sm:$0xff]
  %v1365 = vld [vmem:[#allocation2 + $0x168] sm:$0xff]
  %v1366 = vld [vmem:[#allocation2 + $0x170] sm:$0xff]
  %v1367 = vld [vmem:[#allocation2 + $0x178] sm:$0xff]
  %v1368 = vld [vmem:[#allocation2 + $0x180] sm:$0xff]
  %v1369 = vld [vmem:[#allocation2 + $0x188] sm:$0xff]
  %v1370 = vld [vmem:[#allocation2 + $0x190] sm:$0xff]
  %v1371 = vld [vmem:[#allocation2 + $0x198] sm:$0xff]
  %v1372 = vld [vmem:[#allocation2 + $0x1a0] sm:$0xff]
  %v1373 = vld [vmem:[#allocation2 + $0x1a8] sm:$0xff]
  %v1374 = vld [vmem:[#allocation2 + $0x1b0] sm:$0xff]
  %v1375 = vld [vmem:[#allocation2 + $0x1b8] sm:$0xff]
  %v1376 = vld [vmem:[#allocation2 + $0x1c0] sm:$0xff]
  %v1377 = vld [vmem:[#allocation2 + $0x1c8] sm:$0xff]
  %v1378 = vld [vmem:[#allocation2 + $0x1d0] sm:$0xff]
  %v1379 = vld [vmem:[#allocation2 + $0x1d8] sm:$0xff]
  %v1380 = vld [vmem:[#allocation2 + $0x1e0] sm:$0xff]
  %v1381 = vld [vmem:[#allocation2 + $0x1e8] sm:$0xff]
  %v1382 = vld [vmem:[#allocation2 + $0x1f0] sm:$0xff]
  %v1383 = vld [vmem:[#allocation2 + $0x1f8] sm:$0xff]
  %v1384 = vld [vmem:[#allocation2 + $0x200] sm:$0xff]
  %v1385 = vld [vmem:[#allocation2 + $0x208] sm:$0xff]
  %v1386 = vld [vmem:[#allocation2 + $0x210] sm:$0xff]
  %v1387 = vld [vmem:[#allocation2 + $0x218] sm:$0xff]
  %v1388 = vld [vmem:[#allocation2 + $0x220] sm:$0xff]
  %v1389 = vld [vmem:[#allocation2 + $0x228] sm:$0xff]
  %v1390 = vld [vmem:[#allocation2 + $0x230] sm:$0xff]
  %v1391 = vld [vmem:[#allocation2 + $0x238] sm:$0xff]
  %1460 = vrot.lane.b32.xlu0 %v1324, 125
  %v1461 = vpop.permute.xlu0 %1460
  %1462 = vrot.lane.b32.xlu0 %v1325, 125
  %v1463 = vpop.permute.xlu0 %1462
  %1464 = vrot.lane.b32.xlu0 %v1326, 125
  %v1465 = vpop.permute.xlu0 %1464
  %1466 = vrot.lane.b32.xlu0 %v1327, 125
  %v1467 = vpop.permute.xlu0 %1466
  %1468 = vrot.lane.b32.xlu0 %v1328, 125
  %v1469 = vpop.permute.xlu0 %1468
  %1470 = vrot.lane.b32.xlu0 %v1329, 125
  %v1471 = vpop.permute.xlu0 %1470
  %1472 = vrot.lane.b32.xlu0 %v1330, 125
  %v1473 = vpop.permute.xlu0 %1472
  %1474 = vrot.lane.b32.xlu0 %v1331, 125
  %v1475 = vpop.permute.xlu0 %1474
  %1476 = vrot.lane.b32.xlu0 %v1332, 125
  %v1477 = vpop.permute.xlu0 %1476
  %1478 = vrot.lane.b32.xlu0 %v1333, 125
  %v1479 = vpop.permute.xlu0 %1478
  %1480 = vrot.lane.b32.xlu0 %v1334, 125
  %v1481 = vpop.permute.xlu0 %1480
  %1482 = vrot.lane.b32.xlu0 %v1335, 125
  %v1483 = vpop.permute.xlu0 %1482
  %1484 = vrot.lane.b32.xlu0 %v1336, 125
  %v1485 = vpop.permute.xlu0 %1484
  %1486 = vrot.lane.b32.xlu0 %v1337, 125
  %v1487 = vpop.permute.xlu0 %1486
  %1488 = vrot.lane.b32.xlu0 %v1338, 125
  %v1489 = vpop.permute.xlu0 %1488
  %1490 = vrot.lane.b32.xlu0 %v1339, 125
  %v1491 = vpop.permute.xlu0 %1490
  %1492 = vrot.lane.b32.xlu0 %v1340, 125
  %v1493 = vpop.permute.xlu0 %1492
  %1494 = vrot.lane.b32.xlu0 %v1341, 125
  %v1495 = vpop.permute.xlu0 %1494
  %1496 = vrot.lane.b32.xlu0 %v1342, 125
  %v1497 = vpop.permute.xlu0 %1496
  %1498 = vrot.lane.b32.xlu0 %v1343, 125
  %v1499 = vpop.permute.xlu0 %1498
  %1500 = vrot.lane.b32.xlu0 %v1344, 125
  %v1501 = vpop.permute.xlu0 %1500
  %1502 = vrot.lane.b32.xlu0 %v1345, 125
  %v1503 = vpop.permute.xlu0 %1502
  %1504 = vrot.lane.b32.xlu0 %v1346, 125
  %v1505 = vpop.permute.xlu0 %1504
  %1506 = vrot.lane.b32.xlu0 %v1347, 125
  %v1507 = vpop.permute.xlu0 %1506
  %1508 = vrot.lane.b32.xlu0 %v1348, 125
  %v1509 = vpop.permute.xlu0 %1508
  %1510 = vrot.lane.b32.xlu0 %v1349, 125
  %v1511 = vpop.permute.xlu0 %1510
  %1512 = vrot.lane.b32.xlu0 %v1350, 125
  %v1513 = vpop.permute.xlu0 %1512
  %1514 = vrot.lane.b32.xlu0 %v1351, 125
  %v1515 = vpop.permute.xlu0 %1514
  %1516 = vrot.lane.b32.xlu0 %v1352, 125
  %v1517 = vpop.permute.xlu0 %1516
  %1518 = vrot.lane.b32.xlu0 %v1353, 125
  %v1519 = vpop.permute.xlu0 %1518
  %1520 = vrot.lane.b32.xlu0 %v1354, 125
  %v1521 = vpop.permute.xlu0 %1520
  %1522 = vrot.lane.b32.xlu0 %v1355, 125
  %v1523 = vpop.permute.xlu0 %1522
  %1524 = vrot.lane.b32.xlu0 %v1356, 125
  %v1525 = vpop.permute.xlu0 %1524
  %1526 = vrot.lane.b32.xlu0 %v1357, 125
  %v1527 = vpop.permute.xlu0 %1526
  %1528 = vrot.lane.b32.xlu0 %v1358, 125
  %v1529 = vpop.permute.xlu0 %1528
  %1530 = vrot.lane.b32.xlu0 %v1359, 125
  %v1531 = vpop.permute.xlu0 %1530
  %1532 = vrot.lane.b32.xlu0 %v1360, 125
  %v1533 = vpop.permute.xlu0 %1532
  %1534 = vrot.lane.b32.xlu0 %v1361, 125
  %v1535 = vpop.permute.xlu0 %1534
  %1536 = vrot.lane.b32.xlu0 %v1362, 125
  %v1537 = vpop.permute.xlu0 %1536
  %1538 = vrot.lane.b32.xlu0 %v1363, 125
  %v1539 = vpop.permute.xlu0 %1538
  %1540 = vrot.lane.b32.xlu0 %v1364, 125
  %v1541 = vpop.permute.xlu0 %1540
  %1542 = vrot.lane.b32.xlu0 %v1365, 125
  %v1543 = vpop.permute.xlu0 %1542
  %1544 = vrot.lane.b32.xlu0 %v1366, 125
  %v1545 = vpop.permute.xlu0 %1544
  %1546 = vrot.lane.b32.xlu0 %v1367, 125
  %v1547 = vpop.permute.xlu0 %1546
  %1548 = vrot.lane.b32.xlu0 %v1368, 125
  %v1549 = vpop.permute.xlu0 %1548
  %1550 = vrot.lane.b32.xlu0 %v1369, 125
  %v1551 = vpop.permute.xlu0 %1550
  %1552 = vrot.lane.b32.xlu0 %v1370, 125
  %v1553 = vpop.permute.xlu0 %1552
  %1554 = vrot.lane.b32.xlu0 %v1371, 125
  %v1555 = vpop.permute.xlu0 %1554
  %1556 = vrot.lane.b32.xlu0 %v1372, 125
  %v1557 = vpop.permute.xlu0 %1556
  %1558 = vrot.lane.b32.xlu0 %v1373, 125
  %v1559 = vpop.permute.xlu0 %1558
  %1560 = vrot.lane.b32.xlu0 %v1374, 125
  %v1561 = vpop.permute.xlu0 %1560
  %1562 = vrot.lane.b32.xlu0 %v1375, 125
  %v1563 = vpop.permute.xlu0 %1562
  %1564 = vrot.lane.b32.xlu0 %v1376, 125
  %v1565 = vpop.permute.xlu0 %1564
  %1566 = vrot.lane.b32.xlu0 %v1377, 125
  %v1567 = vpop.permute.xlu0 %1566
  %1568 = vrot.lane.b32.xlu0 %v1378, 125
  %v1569 = vpop.permute.xlu0 %1568
  %1570 = vrot.lane.b32.xlu0 %v1379, 125
  %v1571 = vpop.permute.xlu0 %1570
  %1572 = vrot.lane.b32.xlu0 %v1380, 125
  %v1573 = vpop.permute.xlu0 %1572
  %1574 = vrot.lane.b32.xlu0 %v1381, 125
  %v1575 = vpop.permute.xlu0 %1574
  %1576 = vrot.lane.b32.xlu0 %v1382, 125
  %v1577 = vpop.permute.xlu0 %1576
  %1578 = vrot.lane.b32.xlu0 %v1383, 125
  %v1579 = vpop.permute.xlu0 %1578
  %1580 = vrot.lane.b32.xlu0 %v1384, 125
  %v1581 = vpop.permute.xlu0 %1580
  %1582 = vrot.lane.b32.xlu0 %v1385, 125
  %v1583 = vpop.permute.xlu0 %1582
  %1584 = vrot.lane.b32.xlu0 %v1386, 125
  %v1585 = vpop.permute.xlu0 %1584
  %1586 = vrot.lane.b32.xlu0 %v1387, 125
  %v1587 = vpop.permute.xlu0 %1586
  %1588 = vrot.lane.b32.xlu0 %v1388, 125
  %v1589 = vpop.permute.xlu0 %1588
  %1590 = vrot.lane.b32.xlu0 %v1389, 125
  %v1591 = vpop.permute.xlu0 %1590
  %1592 = vrot.lane.b32.xlu0 %v1390, 125
  %v1593 = vpop.permute.xlu0 %1592
  %1594 = vrot.lane.b32.xlu0 %v1391, 125
  %v1595 = vpop.permute.xlu0 %1594
  %v1664 = vadd.f32 %v1322, %v1461
  %v1665 = vadd.f32 %v1323, %v1463
  %v1666 = vadd.f32 %v1324, %v1465
  %v1667 = vadd.f32 %v1325, %v1467
  %v1668 = vadd.f32 %v1326, %v1469
  %v1669 = vadd.f32 %v1327, %v1471
  %v1670 = vadd.f32 %v1328, %v1473
  %v1671 = vadd.f32 %v1329, %v1475
  %v1672 = vadd.f32 %v1330, %v1477
  %v1673 = vadd.f32 %v1331, %v1479
  %v1674 = vadd.f32 %v1332, %v1481
  %v1675 = vadd.f32 %v1333, %v1483
  %v1676 = vadd.f32 %v1334, %v1485
  %v1677 = vadd.f32 %v1335, %v1487
  %v1678 = vadd.f32 %v1336, %v1489
  %v1679 = vadd.f32 %v1337, %v1491
  %v1680 = vadd.f32 %v1338, %v1493
  %v1681 = vadd.f32 %v1339, %v1495
  %v1682 = vadd.f32 %v1340, %v1497
  %v1683 = vadd.f32 %v1341, %v1499
  %v1684 = vadd.f32 %v1342, %v1501
  %v1685 = vadd.f32 %v1343, %v1503
  %v1686 = vadd.f32 %v1344, %v1505
  %v1687 = vadd.f32 %v1345, %v1507
  %v1688 = vadd.f32 %v1346, %v1509
  %v1689 = vadd.f32 %v1347, %v1511
  %v1690 = vadd.f32 %v1348, %v1513
  %v1691 = vadd.f32 %v1349, %v1515
  %v1692 = vadd.f32 %v1350, %v1517
  %v1693 = vadd.f32 %v1351, %v1519
  %v1694 = vadd.f32 %v1352, %v1521
  %v1695 = vadd.f32 %v1353, %v1523
  %v1696 = vadd.f32 %v1354, %v1525
  %v1697 = vadd.f32 %v1355, %v1527
  %v1698 = vadd.f32 %v1356, %v1529
  %v1699 = vadd.f32 %v1357, %v1531
  %v1700 = vadd.f32 %v1358, %v1533
  %v1701 = vadd.f32 %v1359, %v1535
  %v1702 = vadd.f32 %v1360, %v1537
  %v1703 = vadd.f32 %v1361, %v1539
  %v1704 = vadd.f32 %v1362, %v1541
  %v1705 = vadd.f32 %v1363, %v1543
  %v1706 = vadd.f32 %v1364, %v1545
  %v1707 = vadd.f32 %v1365, %v1547
  %v1708 = vadd.f32 %v1366, %v1549
  %v1709 = vadd.f32 %v1367, %v1551
  %v1710 = vadd.f32 %v1368, %v1553
  %v1711 = vadd.f32 %v1369, %v1555
  %v1712 = vadd.f32 %v1370, %v1557
  %v1713 = vadd.f32 %v1371, %v1559
  %v1714 = vadd.f32 %v1372, %v1561
  %v1715 = vadd.f32 %v1373, %v1563
  %v1716 = vadd.f32 %v1374, %v1565
  %v1717 = vadd.f32 %v1375, %v1567
  %v1718 = vadd.f32 %v1376, %v1569
  %v1719 = vadd.f32 %v1377, %v1571
  %v1720 = vadd.f32 %v1378, %v1573
  %v1721 = vadd.f32 %v1379, %v1575
  %v1722 = vadd.f32 %v1380, %v1577
  %v1723 = vadd.f32 %v1381, %v1579
  %v1724 = vadd.f32 %v1382, %v1581
  %v1725 = vadd.f32 %v1383, %v1583
  %v1726 = vadd.f32 %v1384, %v1585
  %v1727 = vadd.f32 %v1385, %v1587
  %v1728 = vadd.f32 %v1386, %v1589
  %v1729 = vadd.f32 %v1387, %v1591
  %v1730 = vadd.f32 %v1388, %v1593
  %v1731 = vadd.f32 %v1389, %v1595
  %v1732 = vtanh.pop %v1664
  %v1733 = vtanh.pop %v1665
  %v1734 = vtanh.pop %v1666
  %v1735 = vtanh.pop %v1667
  %v1736 = vtanh.pop %v1668
  %v1737 = vtanh.pop %v1669
  %v1738 = vtanh.pop %v1670
  %v1739 = vtanh.pop %v1671
  %v1740 = vtanh.pop %v1672
  %v1741 = vtanh.pop %v1673
  %v1742 = vtanh.pop %v1674
  %v1743 = vtanh.pop %v1675
  %v1744 = vtanh.pop %v1676
  %v1745 = vtanh.pop %v1677
  %v1746 = vtanh.pop %v1678
  %v1747 = vtanh.pop %v1679
  %v1748 = vtanh.pop %v1680
  %v1749 = vtanh.pop %v1681
  %v1750 = vtanh.pop %v1682
  %v1751 = vtanh.pop %v1683
  %v1752 = vtanh.pop %v1684
  %v1753 = vtanh.pop %v1685
  %v1754 = vtanh.pop %v1686
  %v1755 = vtanh.pop %v1687
  %v1756 = vtanh.pop %v1688
  %v1757 = vtanh.pop %v1689
  %v1758 = vtanh.pop %v1690
  %v1759 = vtanh.pop %v1691
  %v1760 = vtanh.pop %v1692
  %v1761 = vtanh.pop %v1693
  %v1762 = vtanh.pop %v1694
  %v1763 = vtanh.pop %v1695
  %v1764 = vtanh.pop %v1696
  %v1765 = vtanh.pop %v1697
  %v1766 = vtanh.pop %v1698
  %v1767 = vtanh.pop %v1699
  %v1768 = vtanh.pop %v1700
  %v1769 = vtanh.pop %v1701
  %v1770 = vtanh.pop %v1702
  %v1771 = vtanh.pop %v1703
  %v1772 = vtanh.pop %v1704
  %v1773 = vtanh.pop %v1705
  %v1774 = vtanh.pop %v1706
  %v1775 = vtanh.pop %v1707
  %v1776 = vtanh.pop %v1708
  %v1777 = vtanh.pop %v1709
  %v1778 = vtanh.pop %v1710
  %v1779 = vtanh.pop %v1711
  %v1780 = vtanh.pop %v1712
  %v1781 = vtanh.pop %v1713
  %v1782 = vtanh.pop %v1714
  %v1783 = vtanh.pop %v1715
  %v1784 = vtanh.pop %v1716
  %v1785 = vtanh.pop %v1717
  %v1786 = vtanh.pop %v1718
  %v1787 = vtanh.pop %v1719
  %v1788 = vtanh.pop %v1720
  %v1789 = vtanh.pop %v1721
  %v1790 = vtanh.pop %v1722
  %v1791 = vtanh.pop %v1723
  %v1792 = vtanh.pop %v1724
  %v1793 = vtanh.pop %v1725
  %v1794 = vtanh.pop %v1726
  %v1795 = vtanh.pop %v1727
  %v1796 = vtanh.pop %v1728
  %v1797 = vtanh.pop %v1729
  %v1798 = vtanh.pop %v1730
  %v1799 = vtanh.pop %v1731
  %vm1800 = vcmask 72752
  %1801 = vst.msk [vmem:[%s2] sm:$0xff] %vm1800, %v1732
  %1802 = vst.msk [vmem:[%s2 + $0x8] sm:$0xff] %vm1800, %v1733
  %1803 = vst.msk [vmem:[%s2 + $0x10] sm:$0xff] %vm1800, %v1734
  %1804 = vst.msk [vmem:[%s2 + $0x18] sm:$0xff] %vm1800, %v1735
  %1805 = vst.msk [vmem:[%s2 + $0x20] sm:$0xff] %vm1800, %v1736
  %1806 = vst.msk [vmem:[%s2 + $0x28] sm:$0xff] %vm1800, %v1737
  %1807 = vst.msk [vmem:[%s2 + $0x30] sm:$0xff] %vm1800, %v1738
  %1808 = vst.msk [vmem:[%s2 + $0x38] sm:$0xff] %vm1800, %v1739
  %1809 = vst.msk [vmem:[%s2 + $0x40] sm:$0xff] %vm1800, %v1740
  %1810 = vst.msk [vmem:[%s2 + $0x48] sm:$0xff] %vm1800, %v1741
  %1811 = vst.msk [vmem:[%s2 + $0x50] sm:$0xff] %vm1800, %v1742
  %1812 = vst.msk [vmem:[%s2 + $0x58] sm:$0xff] %vm1800, %v1743
  %1813 = vst.msk [vmem:[%s2 + $0x60] sm:$0xff] %vm1800, %v1744
  %1814 = vst.msk [vmem:[%s2 + $0x68] sm:$0xff] %vm1800, %v1745
  %1815 = vst.msk [vmem:[%s2 + $0x70] sm:$0xff] %vm1800, %v1746
  %1816 = vst.msk [vmem:[%s2 + $0x78] sm:$0xff] %vm1800, %v1747
  %1817 = vst.msk [vmem:[%s2 + $0x80] sm:$0xff] %vm1800, %v1748
  %1818 = vst.msk [vmem:[%s2 + $0x88] sm:$0xff] %vm1800, %v1749
  %1819 = vst.msk [vmem:[%s2 + $0x90] sm:$0xff] %vm1800, %v1750
  %1820 = vst.msk [vmem:[%s2 + $0x98] sm:$0xff] %vm1800, %v1751
  %1821 = vst.msk [vmem:[%s2 + $0xa0] sm:$0xff] %vm1800, %v1752
  %1822 = vst.msk [vmem:[%s2 + $0xa8] sm:$0xff] %vm1800, %v1753
  %1823 = vst.msk [vmem:[%s2 + $0xb0] sm:$0xff] %vm1800, %v1754
  %1824 = vst.msk [vmem:[%s2 + $0xb8] sm:$0xff] %vm1800, %v1755
  %1825 = vst.msk [vmem:[%s2 + $0xc0] sm:$0xff] %vm1800, %v1756
  %1826 = vst.msk [vmem:[%s2 + $0xc8] sm:$0xff] %vm1800, %v1757
  %1827 = vst.msk [vmem:[%s2 + $0xd0] sm:$0xff] %vm1800, %v1758
  %1828 = vst.msk [vmem:[%s2 + $0xd8] sm:$0xff] %vm1800, %v1759
  %1829 = vst.msk [vmem:[%s2 + $0xe0] sm:$0xff] %vm1800, %v1760
  %1830 = vst.msk [vmem:[%s2 + $0xe8] sm:$0xff] %vm1800, %v1761
  %1831 = vst.msk [vmem:[%s2 + $0xf0] sm:$0xff] %vm1800, %v1762
  %1832 = vst.msk [vmem:[%s2 + $0xf8] sm:$0xff] %vm1800, %v1763
  %1833 = vst.msk [vmem:[%s2 + $0x100] sm:$0xff] %vm1800, %v1764
  %1834 = vst.msk [vmem:[%s2 + $0x108] sm:$0xff] %vm1800, %v1765
  %1835 = vst.msk [vmem:[%s2 + $0x110] sm:$0xff] %vm1800, %v1766
  %1836 = vst.msk [vmem:[%s2 + $0x118] sm:$0xff] %vm1800, %v1767
  %1837 = vst.msk [vmem:[%s2 + $0x120] sm:$0xff] %vm1800, %v1768
  %1838 = vst.msk [vmem:[%s2 + $0x128] sm:$0xff] %vm1800, %v1769
  %1839 = vst.msk [vmem:[%s2 + $0x130] sm:$0xff] %vm1800, %v1770
  %1840 = vst.msk [vmem:[%s2 + $0x138] sm:$0xff] %vm1800, %v1771
  %1841 = vst.msk [vmem:[%s2 + $0x140] sm:$0xff] %vm1800, %v1772
  %1842 = vst.msk [vmem:[%s2 + $0x148] sm:$0xff] %vm1800, %v1773
  %1843 = vst.msk [vmem:[%s2 + $0x150] sm:$0xff] %vm1800, %v1774
  %1844 = vst.msk [vmem:[%s2 + $0x158] sm:$0xff] %vm1800, %v1775
  %1845 = vst.msk [vmem:[%s2 + $0x160] sm:$0xff] %vm1800, %v1776
  %1846 = vst.msk [vmem:[%s2 + $0x168] sm:$0xff] %vm1800, %v1777
  %1847 = vst.msk [vmem:[%s2 + $0x170] sm:$0xff] %vm1800, %v1778
  %1848 = vst.msk [vmem:[%s2 + $0x178] sm:$0xff] %vm1800, %v1779
  %1849 = vst.msk [vmem:[%s2 + $0x180] sm:$0xff] %vm1800, %v1780
  %1850 = vst.msk [vmem:[%s2 + $0x188] sm:$0xff] %vm1800, %v1781
  %1851 = vst.msk [vmem:[%s2 + $0x190] sm:$0xff] %vm1800, %v1782
  %1852 = vst.msk [vmem:[%s2 + $0x198] sm:$0xff] %vm1800, %v1783
  %1853 = vst.msk [vmem:[%s2 + $0x1a0] sm:$0xff] %vm1800, %v1784
  %1854 = vst.msk [vmem:[%s2 + $0x1a8] sm:$0xff] %vm1800, %v1785
  %1855 = vst.msk [vmem:[%s2 + $0x1b0] sm:$0xff] %vm1800, %v1786
  %1856 = vst.msk [vmem:[%s2 + $0x1b8] sm:$0xff] %vm1800, %v1787
  %1857 = vst.msk [vmem:[%s2 + $0x1c0] sm:$0xff] %vm1800, %v1788
  %1858 = vst.msk [vmem:[%s2 + $0x1c8] sm:$0xff] %vm1800, %v1789
  %1859 = vst.msk [vmem:[%s2 + $0x1d0] sm:$0xff] %vm1800, %v1790
  %1860 = vst.msk [vmem:[%s2 + $0x1d8] sm:$0xff] %vm1800, %v1791
  %1861 = vst.msk [vmem:[%s2 + $0x1e0] sm:$0xff] %vm1800, %v1792
  %1862 = vst.msk [vmem:[%s2 + $0x1e8] sm:$0xff] %vm1800, %v1793
  %1863 = vst.msk [vmem:[%s2 + $0x1f0] sm:$0xff] %vm1800, %v1794
  %1864 = vst.msk [vmem:[%s2 + $0x1f8] sm:$0xff] %vm1800, %v1795
  %1865 = vst.msk [vmem:[%s2 + $0x200] sm:$0xff] %vm1800, %v1796
  %1866 = vst.msk [vmem:[%s2 + $0x208] sm:$0xff] %vm1800, %v1797
  %1867 = vst.msk [vmem:[%s2 + $0x210] sm:$0xff] %vm1800, %v1798
  %1868 = vst.msk [vmem:[%s2 + $0x218] sm:$0xff] %vm1800, %v1799
  %v1869 = vld [vmem:[%s0] sm:$0xf]
  %v1870 = vld [vmem:[%s0 + $0x4] sm:$0xf]
  %v1871 = vld [vmem:[%s0 + $0x8] sm:$0xf]
  %v1872 = vld [vmem:[%s0 + $0xc] sm:$0xf]
  %v1873 = vld [vmem:[%s0 + $0x10] sm:$0xf]
  %v1874 = vld [vmem:[%s0 + $0x14] sm:$0xf]
  %v1875 = vld [vmem:[%s0 + $0x18] sm:$0xf]
  %v1876 = vld [vmem:[%s0 + $0x1c] sm:$0xf]
  %v1877 = vld [vmem:[%s0 + $0x20] sm:$0xf]
  %v1878 = vld [vmem:[%s0 + $0x24] sm:$0xf]
  %v1879 = vld [vmem:[%s0 + $0x28] sm:$0xf]
  %v1880 = vld [vmem:[%s0 + $0x2c] sm:$0xf]
  %v1881 = vld [vmem:[%s0 + $0x30] sm:$0xf]
  %v1882 = vld [vmem:[%s0 + $0x34] sm:$0xf]
  %v1883 = vld [vmem:[%s0 + $0x38] sm:$0xf]
  %v1884 = vld [vmem:[%s0 + $0x3c] sm:$0xf]
  %v1885 = vld [vmem:[%s0 + $0x40] sm:$0xf]
  %v1886 = vld [vmem:[%s0 + $0x44] sm:$0xf]
  %v1887 = vld [vmem:[%s0 + $0x48] sm:$0xf]
  %v1888 = vld [vmem:[%s0 + $0x4c] sm:$0xf]
  %v1889 = vld [vmem:[%s0 + $0x50] sm:$0xf]
  %v1890 = vld [vmem:[%s0 + $0x54] sm:$0xf]
  %v1891 = vld [vmem:[%s0 + $0x58] sm:$0xf]
  %v1892 = vld [vmem:[%s0 + $0x5c] sm:$0xf]
  %v1893 = vld [vmem:[%s0 + $0x60] sm:$0xf]
  %v1894 = vld [vmem:[%s0 + $0x64] sm:$0xf]
  %v1895 = vld [vmem:[%s0 + $0x68] sm:$0xf]
  %v1896 = vld [vmem:[%s0 + $0x6c] sm:$0xf]
  %v1897 = vld [vmem:[%s0 + $0x70] sm:$0xf]
  %v1898 = vld [vmem:[%s0 + $0x74] sm:$0xf]
  %v1899 = vld [vmem:[%s0 + $0x78] sm:$0xf]
  %v1900 = vld [vmem:[%s0 + $0x7c] sm:$0xf]
  %v1901 = vld [vmem:[%s0 + $0x80] sm:$0xf]
  %v1902 = vld [vmem:[%s0 + $0x84] sm:$0xf]
  %v1903 = vld [vmem:[%s0 + $0x88] sm:$0xf]
  %v1904 = vld [vmem:[%s0 + $0x8c] sm:$0xf]
  %v1905 = vld [vmem:[%s0 + $0x90] sm:$0xf]
  %v1906 = vld [vmem:[%s0 + $0x94] sm:$0xf]
  %v1907 = vld [vmem:[%s0 + $0x98] sm:$0xf]
  %v1908 = vld [vmem:[%s0 + $0x9c] sm:$0xf]
  %v1909 = vld [vmem:[%s0 + $0xa0] sm:$0xf]
  %v1910 = vld [vmem:[%s0 + $0xa4] sm:$0xf]
  %v1911 = vld [vmem:[%s0 + $0xa8] sm:$0xf]
  %v1912 = vld [vmem:[%s0 + $0xac] sm:$0xf]
  %v1913 = vld [vmem:[%s0 + $0xb0] sm:$0xf]
  %v1914 = vld [vmem:[%s0 + $0xb4] sm:$0xf]
  %v1915 = vld [vmem:[%s0 + $0xb8] sm:$0xf]
  %v1916 = vld [vmem:[%s0 + $0xbc] sm:$0xf]
  %v1917 = vld [vmem:[%s0 + $0xc0] sm:$0xf]
  %v1918 = vld [vmem:[%s0 + $0xc4] sm:$0xf]
  %v1919 = vld [vmem:[%s0 + $0xc8] sm:$0xf]
  %v1920 = vld [vmem:[%s0 + $0xcc] sm:$0xf]
  %v1921 = vld [vmem:[%s0 + $0xd0] sm:$0xf]
  %v1922 = vld [vmem:[%s0 + $0xd4] sm:$0xf]
  %v1923 = vld [vmem:[%s0 + $0xd8] sm:$0xf]
  %v1924 = vld [vmem:[%s0 + $0xdc] sm:$0xf]
  %v1925 = vld [vmem:[%s0 + $0xe0] sm:$0xf]
  %v1926 = vld [vmem:[%s0 + $0xe4] sm:$0xf]
  %v1927 = vld [vmem:[%s0 + $0xe8] sm:$0xf]
  %v1928 = vld [vmem:[%s0 + $0xec] sm:$0xf]
  %v1929 = vld [vmem:[%s0 + $0xf0] sm:$0xf]
  %v1930 = vld [vmem:[%s0 + $0xf4] sm:$0xf]
  %v1931 = vld [vmem:[%s0 + $0xf8] sm:$0xf]
  %v1932 = vld [vmem:[%s0 + $0xfc] sm:$0xf]
  %v1933 = vld [vmem:[%s0 + $0x100] sm:$0xf]
  %v1934 = vld [vmem:[%s0 + $0x104] sm:$0xf]
  %v1935 = vld [vmem:[%s0 + $0x108] sm:$0xf]
  %v1936 = vld [vmem:[%s0 + $0x10c] sm:$0xf]
  %v1937 = vld [vmem:[%s0 + $0x110] sm:$0xf]
  %v1938 = vld [vmem:[%s0 + $0x114] sm:$0xf]
  %v1939 = vld [vmem:[%s0 + $0x118] sm:$0xf]
  %v1940 = vld [vmem:[%s0 + $0x11c] sm:$0xf]
  %s1941 = scalar_lea.vmem %s1, 8
  %v1942 = vld [vmem:[%s1941] sm:$0xf]
  %v1943 = vld [vmem:[%s1941 + $0x4] sm:$0xf]
  %v2016 = vunpack.c.l.b16 %v1869
  %v2017 = vunpack.c.l.b16 %v1870
  %v2018 = vunpack.c.l.b16 %v1871
  %v2019 = vunpack.c.l.b16 %v1872
  %v2020 = vunpack.c.l.b16 %v1873
  %v2021 = vunpack.c.l.b16 %v1874
  %v2022 = vunpack.c.l.b16 %v1875
  %v2023 = vunpack.c.l.b16 %v1876
  %v2024 = vunpack.c.l.b16 %v1877
  %v2025 = vunpack.c.l.b16 %v1878
  %v2026 = vunpack.c.l.b16 %v1879
  %v2027 = vunpack.c.l.b16 %v1880
  %v2028 = vunpack.c.l.b16 %v1881
  %v2029 = vunpack.c.l.b16 %v1882
  %v2030 = vunpack.c.l.b16 %v1883
  %v2031 = vunpack.c.l.b16 %v1884
  %v2032 = vunpack.c.l.b16 %v1885
  %v2033 = vunpack.c.l.b16 %v1886
  %v2034 = vunpack.c.l.b16 %v1887
  %v2035 = vunpack.c.l.b16 %v1888
  %v2036 = vunpack.c.l.b16 %v1889
  %v2037 = vunpack.c.l.b16 %v1890
  %v2038 = vunpack.c.l.b16 %v1891
  %v2039 = vunpack.c.l.b16 %v1892
  %v2040 = vunpack.c.l.b16 %v1893
  %v2041 = vunpack.c.l.b16 %v1894
  %v2042 = vunpack.c.l.b16 %v1895
  %v2043 = vunpack.c.l.b16 %v1896
  %v2044 = vunpack.c.l.b16 %v1897
  %v2045 = vunpack.c.l.b16 %v1898
  %v2046 = vunpack.c.l.b16 %v1899
  %v2047 = vunpack.c.l.b16 %v1900
  %v2048 = vunpack.c.l.b16 %v1901
  %v2049 = vunpack.c.l.b16 %v1902
  %v2050 = vunpack.c.l.b16 %v1903
  %v2051 = vunpack.c.l.b16 %v1904
  %v2052 = vunpack.c.l.b16 %v1905
  %v2053 = vunpack.c.l.b16 %v1906
  %v2054 = vunpack.c.l.b16 %v1907
  %v2055 = vunpack.c.l.b16 %v1908
  %v2056 = vunpack.c.l.b16 %v1909
  %v2057 = vunpack.c.l.b16 %v1910
  %v2058 = vunpack.c.l.b16 %v1911
  %v2059 = vunpack.c.l.b16 %v1912
  %v2060 = vunpack.c.l.b16 %v1913
  %v2061 = vunpack.c.l.b16 %v1914
  %v2062 = vunpack.c.l.b16 %v1915
  %v2063 = vunpack.c.l.b16 %v1916
  %v2064 = vunpack.c.l.b16 %v1917
  %v2065 = vunpack.c.l.b16 %v1918
  %v2066 = vunpack.c.l.b16 %v1919
  %v2067 = vunpack.c.l.b16 %v1920
  %v2068 = vunpack.c.l.b16 %v1921
  %v2069 = vunpack.c.l.b16 %v1922
  %v2070 = vunpack.c.l.b16 %v1923
  %v2071 = vunpack.c.l.b16 %v1924
  %v2072 = vunpack.c.l.b16 %v1925
  %v2073 = vunpack.c.l.b16 %v1926
  %v2074 = vunpack.c.l.b16 %v1927
  %v2075 = vunpack.c.l.b16 %v1928
  %v2076 = vunpack.c.l.b16 %v1929
  %v2077 = vunpack.c.l.b16 %v1930
  %v2078 = vunpack.c.l.b16 %v1931
  %v2079 = vunpack.c.l.b16 %v1932
  %v2080 = vunpack.c.l.b16 %v1933
  %v2081 = vunpack.c.l.b16 %v1934
  %v2082 = vunpack.c.l.b16 %v1935
  %v2083 = vunpack.c.l.b16 %v1936
  %v2084 = vunpack.c.l.b16 %v1937
  %v2085 = vunpack.c.l.b16 %v1938
  %v2086 = vunpack.c.l.b16 %v1939
  %v2087 = vunpack.c.l.b16 %v1940
  %v2088 = vpack.c.b16 %v2017, %v2016
  %v2089 = vpack.c.b16 %v2019, %v2018
  %v2090 = vpack.c.b16 %v2021, %v2020
  %v2091 = vpack.c.b16 %v2023, %v2022
  %v2092 = vpack.c.b16 %v2025, %v2024
  %v2093 = vpack.c.b16 %v2027, %v2026
  %v2094 = vpack.c.b16 %v2029, %v2028
  %v2095 = vpack.c.b16 %v2031, %v2030
  %v2096 = vpack.c.b16 %v2033, %v2032
  %v2097 = vpack.c.b16 %v2035, %v2034
  %v2098 = vpack.c.b16 %v2037, %v2036
  %v2099 = vpack.c.b16 %v2039, %v2038
  %v2100 = vpack.c.b16 %v2041, %v2040
  %v2101 = vpack.c.b16 %v2043, %v2042
  %v2102 = vpack.c.b16 %v2045, %v2044
  %v2103 = vpack.c.b16 %v2047, %v2046
  %v2104 = vpack.c.b16 %v2049, %v2048
  %v2105 = vpack.c.b16 %v2051, %v2050
  %v2106 = vpack.c.b16 %v2053, %v2052
  %v2107 = vpack.c.b16 %v2055, %v2054
  %v2108 = vpack.c.b16 %v2057, %v2056
  %v2109 = vpack.c.b16 %v2059, %v2058
  %v2110 = vpack.c.b16 %v2061, %v2060
  %v2111 = vpack.c.b16 %v2063, %v2062
  %v2112 = vpack.c.b16 %v2065, %v2064
  %v2113 = vpack.c.b16 %v2067, %v2066
  %v2114 = vpack.c.b16 %v2069, %v2068
  %v2115 = vpack.c.b16 %v2071, %v2070
  %v2116 = vpack.c.b16 %v2073, %v2072
  %v2117 = vpack.c.b16 %v2075, %v2074
  %v2118 = vpack.c.b16 %v2077, %v2076
  %v2119 = vpack.c.b16 %v2079, %v2078
  %v2120 = vpack.c.b16 %v2081, %v2080
  %v2121 = vpack.c.b16 %v2083, %v2082
  %v2122 = vpack.c.b16 %v2085, %v2084
  %v2123 = vpack.c.b16 %v2087, %v2086
  %2124 = vrot.lane.b32.xlu0 %v2088, 120
  %v2125 = vpop.permute.xlu0 %2124
  %2126 = vrot.lane.b32.xlu0 %v2089, 120
  %v2127 = vpop.permute.xlu0 %2126
  %2128 = vrot.lane.b32.xlu0 %v2090, 120
  %v2129 = vpop.permute.xlu0 %2128
  %2130 = vrot.lane.b32.xlu0 %v2091, 120
  %v2131 = vpop.permute.xlu0 %2130
  %2132 = vrot.lane.b32.xlu0 %v2092, 120
  %v2133 = vpop.permute.xlu0 %2132
  %2134 = vrot.lane.b32.xlu0 %v2093, 120
  %v2135 = vpop.permute.xlu0 %2134
  %2136 = vrot.lane.b32.xlu0 %v2094, 120
  %v2137 = vpop.permute.xlu0 %2136
  %2138 = vrot.lane.b32.xlu0 %v2095, 120
  %v2139 = vpop.permute.xlu0 %2138
  %2140 = vrot.lane.b32.xlu0 %v2096, 120
  %v2141 = vpop.permute.xlu0 %2140
  %2142 = vrot.lane.b32.xlu0 %v2097, 120
  %v2143 = vpop.permute.xlu0 %2142
  %2144 = vrot.lane.b32.xlu0 %v2098, 120
  %v2145 = vpop.permute.xlu0 %2144
  %2146 = vrot.lane.b32.xlu0 %v2099, 120
  %v2147 = vpop.permute.xlu0 %2146
  %2148 = vrot.lane.b32.xlu0 %v2100, 120
  %v2149 = vpop.permute.xlu0 %2148
  %2150 = vrot.lane.b32.xlu0 %v2101, 120
  %v2151 = vpop.permute.xlu0 %2150
  %2152 = vrot.lane.b32.xlu0 %v2102, 120
  %v2153 = vpop.permute.xlu0 %2152
  %2154 = vrot.lane.b32.xlu0 %v2103, 120
  %v2155 = vpop.permute.xlu0 %2154
  %2156 = vrot.lane.b32.xlu0 %v2104, 120
  %v2157 = vpop.permute.xlu0 %2156
  %2158 = vrot.lane.b32.xlu0 %v2105, 120
  %v2159 = vpop.permute.xlu0 %2158
  %2160 = vrot.lane.b32.xlu0 %v2106, 120
  %v2161 = vpop.permute.xlu0 %2160
  %2162 = vrot.lane.b32.xlu0 %v2107, 120
  %v2163 = vpop.permute.xlu0 %2162
  %2164 = vrot.lane.b32.xlu0 %v2108, 120
  %v2165 = vpop.permute.xlu0 %2164
  %2166 = vrot.lane.b32.xlu0 %v2109, 120
  %v2167 = vpop.permute.xlu0 %2166
  %2168 = vrot.lane.b32.xlu0 %v2110, 120
  %v2169 = vpop.permute.xlu0 %2168
  %2170 = vrot.lane.b32.xlu0 %v2111, 120
  %v2171 = vpop.permute.xlu0 %2170
  %2172 = vrot.lane.b32.xlu0 %v2112, 120
  %v2173 = vpop.permute.xlu0 %2172
  %2174 = vrot.lane.b32.xlu0 %v2113, 120
  %v2175 = vpop.permute.xlu0 %2174
  %2176 = vrot.lane.b32.xlu0 %v2114, 120
  %v2177 = vpop.permute.xlu0 %2176
  %2178 = vrot.lane.b32.xlu0 %v2115, 120
  %v2179 = vpop.permute.xlu0 %2178
  %2180 = vrot.lane.b32.xlu0 %v2116, 120
  %v2181 = vpop.permute.xlu0 %2180
  %2182 = vrot.lane.b32.xlu0 %v2117, 120
  %v2183 = vpop.permute.xlu0 %2182
  %2184 = vrot.lane.b32.xlu0 %v2118, 120
  %v2185 = vpop.permute.xlu0 %2184
  %2186 = vrot.lane.b32.xlu0 %v2119, 120
  %v2187 = vpop.permute.xlu0 %2186
  %2188 = vrot.lane.b32.xlu0 %v2120, 120
  %v2189 = vpop.permute.xlu0 %2188
  %2190 = vrot.lane.b32.xlu0 %v2121, 120
  %v2191 = vpop.permute.xlu0 %2190
  %2192 = vrot.lane.b32.xlu0 %v2122, 120
  %v2193 = vpop.permute.xlu0 %2192
  %2194 = vrot.lane.b32.xlu0 %v2123, 120
  %v2195 = vpop.permute.xlu0 %2194
  %v2198 = vunpack.c.l.b16 %v1942
  %v2199 = vunpack.c.l.b16 %v1943
  %v2200 = vpack.c.b16 %v2199, %v2198
  %v2203 = vsel %vm272, %v2125, 0
  %v2206 = vsel %vm272, %v2127, 0
  %v2209 = vsel %vm272, %v2129, 0
  %v2212 = vsel %vm272, %v2131, 0
  %v2215 = vsel %vm272, %v2133, 0
  %v2218 = vsel %vm272, %v2135, 0
  %v2221 = vsel %vm272, %v2137, 0
  %v2224 = vsel %vm272, %v2139, 0
  %v2227 = vsel %vm272, %v2141, 0
  %v2230 = vsel %vm272, %v2143, 0
  %v2233 = vsel %vm272, %v2145, 0
  %v2236 = vsel %vm272, %v2147, 0
  %v2239 = vsel %vm272, %v2149, 0
  %v2242 = vsel %vm272, %v2151, 0
  %v2245 = vsel %vm272, %v2153, 0
  %v2248 = vsel %vm272, %v2155, 0
  %v2251 = vsel %vm272, %v2157, 0
  %v2254 = vsel %vm272, %v2159, 0
  %v2257 = vsel %vm272, %v2161, 0
  %v2260 = vsel %vm272, %v2163, 0
  %v2263 = vsel %vm272, %v2165, 0
  %v2266 = vsel %vm272, %v2167, 0
  %v2269 = vsel %vm272, %v2169, 0
  %v2272 = vsel %vm272, %v2171, 0
  %v2275 = vsel %vm272, %v2173, 0
  %v2278 = vsel %vm272, %v2175, 0
  %v2281 = vsel %vm272, %v2177, 0
  %v2284 = vsel %vm272, %v2179, 0
  %v2287 = vsel %vm272, %v2181, 0
  %v2290 = vsel %vm272, %v2183, 0
  %v2293 = vsel %vm272, %v2185, 0
  %v2296 = vsel %vm272, %v2187, 0
  %v2299 = vsel %vm272, %v2189, 0
  %v2302 = vsel %vm272, %v2191, 0
  %v2305 = vsel %vm272, %v2193, 0
  %v2308 = vsel %vm272, %v2195, 0
  %2310 = vmatprep.subr.bf16.mxu0 0
  %2311 = vmatpush1.bf16.msra.mxu0 %v2200
  %2312 = vmatprep.subr.bf16.mxu0 0
  %2313 = vmatpush1.bf16.msra.mxu0 0
  %2314 = vmatprep.subr.bf16.mxu0 0
  %2315 = vmatpush1.bf16.msra.mxu0 0
  %2316 = vmatprep.subr.bf16.mxu0 0
  %2317 = vmatpush1.bf16.msra.mxu0 0
  %2318 = vmatprep.subr.bf16.mxu0 0
  %2319 = vmatpush1.bf16.msra.mxu0 0
  %2320 = vmatprep.subr.bf16.mxu0 0
  %2321 = vmatpush1.bf16.msra.mxu0 0
  %2322 = vmatprep.subr.bf16.mxu0 0
  %2323 = vmatpush1.bf16.msra.mxu0 0
  %2324 = vmatprep.subr.bf16.mxu0 0
  %2325 = vmatpush1.bf16.msra.mxu0 0
  %2326 = vmatprep.subr.bf16.mxu0 0
  %2327 = vmatpush1.bf16.msra.mxu0 0
  %2328 = vmatprep.subr.bf16.mxu0 0
  %2329 = vmatpush1.bf16.msra.mxu0 0
  %2330 = vmatprep.subr.bf16.mxu0 0
  %2331 = vmatpush1.bf16.msra.mxu0 0
  %2332 = vmatprep.subr.bf16.mxu0 0
  %2333 = vmatpush1.bf16.msra.mxu0 0
  %2334 = vmatprep.subr.bf16.mxu0 0
  %2335 = vmatpush1.bf16.msra.mxu0 0
  %2336 = vmatprep.subr.bf16.mxu0 0
  %2337 = vmatpush1.bf16.msra.mxu0 0
  %2338 = vmatprep.subr.bf16.mxu0 0
  %2339 = vmatpush1.bf16.msra.mxu0 0
  %2340 = vmatprep.subr.bf16.mxu0 0
  %2341 = vmatpush1.bf16.msra.mxu0 0
  %2342 = vmatprep.mubr.bf16.mxu0 0
  %2343 = vmatmul.mubr.bf16.gmra.mrb[0].mxu0 %v2203
  %v2344 = vpop.f32.mrb[0].mxu0
  %v2345 = vadd.f32 0.0, %v2344
  %v2346 = vpop.f32.mrb[0].mxu0
  %v2347 = vpop.f32.mrb[0].mxu0
  %v2348 = vadd.f32 0.0, %v2347
  %v2349 = vpop.f32.mrb[0].mxu0
  %2350 = vmatprep.mubr.bf16.mxu0 0
  %2351 = vmatmul.mubr.bf16.gmra.mrb[0].mxu0 %v2206
  %v2352 = vpop.f32.mrb[0].mxu0
  %v2353 = vadd.f32 0.0, %v2352
  %v2354 = vpop.f32.mrb[0].mxu0
  %v2355 = vpop.f32.mrb[0].mxu0
  %v2356 = vadd.f32 0.0, %v2355
  %v2357 = vpop.f32.mrb[0].mxu0
  %2358 = vmatprep.mubr.bf16.mxu0 0
  %2359 = vmatmul.mubr.bf16.gmra.mrb[0].mxu0 %v2209
  %v2360 = vpop.f32.mrb[0].mxu0
  %v2361 = vadd.f32 0.0, %v2360
  %v2362 = vpop.f32.mrb[0].mxu0
  %v2363 = vpop.f32.mrb[0].mxu0
  %v2364 = vadd.f32 0.0, %v2363
  %v2365 = vpop.f32.mrb[0].mxu0
  %2366 = vmatprep.mubr.bf16.mxu0 0
  %2367 = vmatmul.mubr.bf16.gmra.mrb[0].mxu0 %v2212
  %v2368 = vpop.f32.mrb[0].mxu0
  %v2369 = vadd.f32 0.0, %v2368
  %v2370 = vpop.f32.mrb[0].mxu0
  %v2371 = vpop.f32.mrb[0].mxu0
  %v2372 = vadd.f32 0.0, %v2371
  %v2373 = vpop.f32.mrb[0].mxu0
  %2374 = vmatprep.mubr.bf16.mxu0 0
  %2375 = vmatmul.mubr.bf16.gmra.mrb[0].mxu0 %v2215
  %v2376 = vpop.f32.mrb[0].mxu0
  %v2377 = vadd.f32 0.0, %v2376
  %v2378 = vpop.f32.mrb[0].mxu0
  %v2379 = vpop.f32.mrb[0].mxu0
  %v2380 = vadd.f32 0.0, %v2379
  %v2381 = vpop.f32.mrb[0].mxu0
  %2382 = vmatprep.mubr.bf16.mxu0 0
  %2383 = vmatmul.mubr.bf16.gmra.mrb[0].mxu0 %v2218
  %v2384 = vpop.f32.mrb[0].mxu0
  %v2385 = vadd.f32 0.0, %v2384
  %v2386 = vpop.f32.mrb[0].mxu0
  %v2387 = vpop.f32.mrb[0].mxu0
  %v2388 = vadd.f32 0.0, %v2387
  %v2389 = vpop.f32.mrb[0].mxu0
  %2390 = vmatprep.mubr.bf16.mxu0 0
  %2391 = vmatmul.mubr.bf16.gmra.mrb[0].mxu0 %v2221
  %v2392 = vpop.f32.mrb[0].mxu0
  %v2393 = vadd.f32 0.0, %v2392
  %v2394 = vpop.f32.mrb[0].mxu0
  %v2395 = vpop.f32.mrb[0].mxu0
  %v2396 = vadd.f32 0.0, %v2395
  %v2397 = vpop.f32.mrb[0].mxu0
  %2398 = vmatprep.mubr.bf16.mxu0 0
  %2399 = vmatmul.mubr.bf16.gmra.mrb[0].mxu0 %v2224
  %v2400 = vpop.f32.mrb[0].mxu0
  %v2401 = vadd.f32 0.0, %v2400
  %v2402 = vpop.f32.mrb[0].mxu0
  %v2403 = vpop.f32.mrb[0].mxu0
  %v2404 = vadd.f32 0.0, %v2403
  %v2405 = vpop.f32.mrb[0].mxu0
  %2406 = vmatprep.mubr.bf16.mxu0 0
  %2407 = vmatmul.mubr.bf16.gmra.mrb[0].mxu0 %v2227
  %v2408 = vpop.f32.mrb[0].mxu0
  %v2409 = vadd.f32 0.0, %v2408
  %v2410 = vpop.f32.mrb[0].mxu0
  %v2411 = vpop.f32.mrb[0].mxu0
  %v2412 = vadd.f32 0.0, %v2411
  %v2413 = vpop.f32.mrb[0].mxu0
  %2414 = vmatprep.mubr.bf16.mxu0 0
  %2415 = vmatmul.mubr.bf16.gmra.mrb[0].mxu0 %v2230
  %v2416 = vpop.f32.mrb[0].mxu0
  %v2417 = vadd.f32 0.0, %v2416
  %v2418 = vpop.f32.mrb[0].mxu0
  %v2419 = vpop.f32.mrb[0].mxu0
  %v2420 = vadd.f32 0.0, %v2419
  %v2421 = vpop.f32.mrb[0].mxu0
  %2422 = vmatprep.mubr.bf16.mxu0 0
  %2423 = vmatmul.mubr.bf16.gmra.mrb[0].mxu0 %v2233
  %v2424 = vpop.f32.mrb[0].mxu0
  %v2425 = vadd.f32 0.0, %v2424
  %v2426 = vpop.f32.mrb[0].mxu0
  %v2427 = vpop.f32.mrb[0].mxu0
  %v2428 = vadd.f32 0.0, %v2427
  %v2429 = vpop.f32.mrb[0].mxu0
  %2430 = vmatprep.mubr.bf16.mxu0 0
  %2431 = vmatmul.mubr.bf16.gmra.mrb[0].mxu0 %v2236
  %v2432 = vpop.f32.mrb[0].mxu0
  %v2433 = vadd.f32 0.0, %v2432
  %v2434 = vpop.f32.mrb[0].mxu0
  %v2435 = vpop.f32.mrb[0].mxu0
  %v2436 = vadd.f32 0.0, %v2435
  %v2437 = vpop.f32.mrb[0].mxu0
  %2438 = vmatprep.mubr.bf16.mxu0 0
  %2439 = vmatmul.mubr.bf16.gmra.mrb[0].mxu0 %v2239
  %v2440 = vpop.f32.mrb[0].mxu0
  %v2441 = vadd.f32 0.0, %v2440
  %v2442 = vpop.f32.mrb[0].mxu0
  %v2443 = vpop.f32.mrb[0].mxu0
  %v2444 = vadd.f32 0.0, %v2443
  %v2445 = vpop.f32.mrb[0].mxu0
  %2446 = vmatprep.mubr.bf16.mxu0 0
  %2447 = vmatmul.mubr.bf16.gmra.mrb[0].mxu0 %v2242
  %v2448 = vpop.f32.mrb[0].mxu0
  %v2449 = vadd.f32 0.0, %v2448
  %v2450 = vpop.f32.mrb[0].mxu0
  %v2451 = vpop.f32.mrb[0].mxu0
  %v2452 = vadd.f32 0.0, %v2451
  %v2453 = vpop.f32.mrb[0].mxu0
  %2454 = vmatprep.mubr.bf16.mxu0 0
  %2455 = vmatmul.mubr.bf16.gmra.mrb[0].mxu0 %v2245
  %v2456 = vpop.f32.mrb[0].mxu0
  %v2457 = vadd.f32 0.0, %v2456
  %v2458 = vpop.f32.mrb[0].mxu0
  %v2459 = vpop.f32.mrb[0].mxu0
  %v2460 = vadd.f32 0.0, %v2459
  %v2461 = vpop.f32.mrb[0].mxu0
  %2462 = vmatprep.mubr.bf16.mxu0 0
  %2463 = vmatmul.mubr.bf16.gmra.mrb[0].mxu0 %v2248
  %v2464 = vpop.f32.mrb[0].mxu0
  %v2465 = vadd.f32 0.0, %v2464
  %v2466 = vpop.f32.mrb[0].mxu0
  %v2467 = vpop.f32.mrb[0].mxu0
  %v2468 = vadd.f32 0.0, %v2467
  %v2469 = vpop.f32.mrb[0].mxu0
  %2470 = vmatprep.mubr.bf16.mxu0 0
  %2471 = vmatmul.mubr.bf16.gmra.mrb[0].mxu0 %v2251
  %v2472 = vpop.f32.mrb[0].mxu0
  %v2473 = vadd.f32 0.0, %v2472
  %v2474 = vpop.f32.mrb[0].mxu0
  %v2475 = vpop.f32.mrb[0].mxu0
  %v2476 = vadd.f32 0.0, %v2475
  %v2477 = vpop.f32.mrb[0].mxu0
  %2478 = vmatprep.mubr.bf16.mxu0 0
  %2479 = vmatmul.mubr.bf16.gmra.mrb[0].mxu0 %v2254
  %v2480 = vpop.f32.mrb[0].mxu0
  %v2481 = vadd.f32 0.0, %v2480
  %v2482 = vpop.f32.mrb[0].mxu0
  %v2483 = vpop.f32.mrb[0].mxu0
  %v2484 = vadd.f32 0.0, %v2483
  %v2485 = vpop.f32.mrb[0].mxu0
  %2486 = vmatprep.mubr.bf16.mxu0 0
  %2487 = vmatmul.mubr.bf16.gmra.mrb[0].mxu0 %v2257
  %v2488 = vpop.f32.mrb[0].mxu0
  %v2489 = vadd.f32 0.0, %v2488
  %v2490 = vpop.f32.mrb[0].mxu0
  %v2491 = vpop.f32.mrb[0].mxu0
  %v2492 = vadd.f32 0.0, %v2491
  %v2493 = vpop.f32.mrb[0].mxu0
  %2494 = vmatprep.mubr.bf16.mxu0 0
  %2495 = vmatmul.mubr.bf16.gmra.mrb[0].mxu0 %v2260
  %v2496 = vpop.f32.mrb[0].mxu0
  %v2497 = vadd.f32 0.0, %v2496
  %v2498 = vpop.f32.mrb[0].mxu0
  %v2499 = vpop.f32.mrb[0].mxu0
  %v2500 = vadd.f32 0.0, %v2499
  %v2501 = vpop.f32.mrb[0].mxu0
  %2502 = vmatprep.mubr.bf16.mxu0 0
  %2503 = vmatmul.mubr.bf16.gmra.mrb[0].mxu0 %v2263
  %v2504 = vpop.f32.mrb[0].mxu0
  %v2505 = vadd.f32 0.0, %v2504
  %v2506 = vpop.f32.mrb[0].mxu0
  %v2507 = vpop.f32.mrb[0].mxu0
  %v2508 = vadd.f32 0.0, %v2507
  %v2509 = vpop.f32.mrb[0].mxu0
  %2510 = vmatprep.mubr.bf16.mxu0 0
  %2511 = vmatmul.mubr.bf16.gmra.mrb[0].mxu0 %v2266
  %v2512 = vpop.f32.mrb[0].mxu0
  %v2513 = vadd.f32 0.0, %v2512
  %v2514 = vpop.f32.mrb[0].mxu0
  %v2515 = vpop.f32.mrb[0].mxu0
  %v2516 = vadd.f32 0.0, %v2515
  %v2517 = vpop.f32.mrb[0].mxu0
  %2518 = vmatprep.mubr.bf16.mxu0 0
  %2519 = vmatmul.mubr.bf16.gmra.mrb[0].mxu0 %v2269
  %v2520 = vpop.f32.mrb[0].mxu0
  %v2521 = vadd.f32 0.0, %v2520
  %v2522 = vpop.f32.mrb[0].mxu0
  %v2523 = vpop.f32.mrb[0].mxu0
  %v2524 = vadd.f32 0.0, %v2523
  %v2525 = vpop.f32.mrb[0].mxu0
  %2526 = vmatprep.mubr.bf16.mxu0 0
  %2527 = vmatmul.mubr.bf16.gmra.mrb[0].mxu0 %v2272
  %v2528 = vpop.f32.mrb[0].mxu0
  %v2529 = vadd.f32 0.0, %v2528
  %v2530 = vpop.f32.mrb[0].mxu0
  %v2531 = vpop.f32.mrb[0].mxu0
  %v2532 = vadd.f32 0.0, %v2531
  %v2533 = vpop.f32.mrb[0].mxu0
  %2534 = vmatprep.mubr.bf16.mxu0 0
  %2535 = vmatmul.mubr.bf16.gmra.mrb[0].mxu0 %v2275
  %v2536 = vpop.f32.mrb[0].mxu0
  %v2537 = vadd.f32 0.0, %v2536
  %v2538 = vpop.f32.mrb[0].mxu0
  %v2539 = vpop.f32.mrb[0].mxu0
  %v2540 = vadd.f32 0.0, %v2539
  %v2541 = vpop.f32.mrb[0].mxu0
  %2542 = vmatprep.mubr.bf16.mxu0 0
  %2543 = vmatmul.mubr.bf16.gmra.mrb[0].mxu0 %v2278
  %v2544 = vpop.f32.mrb[0].mxu0
  %v2545 = vadd.f32 0.0, %v2544
  %v2546 = vpop.f32.mrb[0].mxu0
  %v2547 = vpop.f32.mrb[0].mxu0
  %v2548 = vadd.f32 0.0, %v2547
  %v2549 = vpop.f32.mrb[0].mxu0
  %2550 = vmatprep.mubr.bf16.mxu0 0
  %2551 = vmatmul.mubr.bf16.gmra.mrb[0].mxu0 %v2281
  %v2552 = vpop.f32.mrb[0].mxu0
  %v2553 = vadd.f32 0.0, %v2552
  %v2554 = vpop.f32.mrb[0].mxu0
  %v2555 = vpop.f32.mrb[0].mxu0
  %v2556 = vadd.f32 0.0, %v2555
  %v2557 = vpop.f32.mrb[0].mxu0
  %2558 = vmatprep.mubr.bf16.mxu0 0
  %2559 = vmatmul.mubr.bf16.gmra.mrb[0].mxu0 %v2284
  %v2560 = vpop.f32.mrb[0].mxu0
  %v2561 = vadd.f32 0.0, %v2560
  %v2562 = vpop.f32.mrb[0].mxu0
  %v2563 = vpop.f32.mrb[0].mxu0
  %v2564 = vadd.f32 0.0, %v2563
  %v2565 = vpop.f32.mrb[0].mxu0
  %2566 = vmatprep.mubr.bf16.mxu0 0
  %2567 = vmatmul.mubr.bf16.gmra.mrb[0].mxu0 %v2287
  %v2568 = vpop.f32.mrb[0].mxu0
  %v2569 = vadd.f32 0.0, %v2568
  %v2570 = vpop.f32.mrb[0].mxu0
  %v2571 = vpop.f32.mrb[0].mxu0
  %v2572 = vadd.f32 0.0, %v2571
  %v2573 = vpop.f32.mrb[0].mxu0
  %2574 = vmatprep.mubr.bf16.mxu0 0
  %2575 = vmatmul.mubr.bf16.gmra.mrb[0].mxu0 %v2290
  %v2576 = vpop.f32.mrb[0].mxu0
  %v2577 = vadd.f32 0.0, %v2576
  %v2578 = vpop.f32.mrb[0].mxu0
  %v2579 = vpop.f32.mrb[0].mxu0
  %v2580 = vadd.f32 0.0, %v2579
  %v2581 = vpop.f32.mrb[0].mxu0
  %2582 = vmatprep.mubr.bf16.mxu0 0
  %2583 = vmatmul.mubr.bf16.gmra.mrb[0].mxu0 %v2293
  %v2584 = vpop.f32.mrb[0].mxu0
  %v2585 = vadd.f32 0.0, %v2584
  %v2586 = vpop.f32.mrb[0].mxu0
  %v2587 = vpop.f32.mrb[0].mxu0
  %v2588 = vadd.f32 0.0, %v2587
  %v2589 = vpop.f32.mrb[0].mxu0
  %2590 = vmatprep.mubr.bf16.mxu0 0
  %2591 = vmatmul.mubr.bf16.gmra.mrb[0].mxu0 %v2296
  %v2592 = vpop.f32.mrb[0].mxu0
  %v2593 = vadd.f32 0.0, %v2592
  %v2594 = vpop.f32.mrb[0].mxu0
  %v2595 = vpop.f32.mrb[0].mxu0
  %v2596 = vadd.f32 0.0, %v2595
  %v2597 = vpop.f32.mrb[0].mxu0
  %2598 = vmatprep.mubr.bf16.mxu0 0
  %2599 = vmatmul.mubr.bf16.gmra.mrb[0].mxu0 %v2299
  %v2600 = vpop.f32.mrb[0].mxu0
  %v2601 = vadd.f32 0.0, %v2600
  %v2602 = vpop.f32.mrb[0].mxu0
  %v2603 = vpop.f32.mrb[0].mxu0
  %v2604 = vadd.f32 0.0, %v2603
  %v2605 = vpop.f32.mrb[0].mxu0
  %2606 = vmatprep.mubr.bf16.mxu0 0
  %2607 = vmatmul.mubr.bf16.gmra.mrb[0].mxu0 %v2302
  %v2608 = vpop.f32.mrb[0].mxu0
  %v2609 = vadd.f32 0.0, %v2608
  %v2610 = vpop.f32.mrb[0].mxu0
  %v2611 = vpop.f32.mrb[0].mxu0
  %v2612 = vadd.f32 0.0, %v2611
  %v2613 = vpop.f32.mrb[0].mxu0
  %2614 = vmatprep.mubr.bf16.mxu0 0
  %2615 = vmatmul.mubr.bf16.gmra.mrb[0].mxu0 %v2305
  %v2616 = vpop.f32.mrb[0].mxu0
  %v2617 = vadd.f32 0.0, %v2616
  %v2618 = vpop.f32.mrb[0].mxu0
  %v2619 = vpop.f32.mrb[0].mxu0
  %v2620 = vadd.f32 0.0, %v2619
  %v2621 = vpop.f32.mrb[0].mxu0
  %2622 = vmatprep.mubr.bf16.mxu0 0
  %2623 = vmatmul.mubr.bf16.gmra.mrb[0].mxu0 %v2308
  %v2624 = vpop.f32.mrb[0].mxu0
  %v2625 = vadd.f32 0.0, %v2624
  %v2626 = vpop.f32.mrb[0].mxu0
  %v2627 = vpop.f32.mrb[0].mxu0
  %v2628 = vadd.f32 0.0, %v2627
  %v2629 = vpop.f32.mrb[0].mxu0
  %2630 = vdwg.mxu0
  %2631 = vst.msk [vmem:[#allocation2] sm:$0xff] %vm702, %v2345
  %2632 = vst.msk [vmem:[#allocation2 + $0x8] sm:$0xff] %vm702, %v2348
  %2633 = vst.msk [vmem:[#allocation2 + $0x10] sm:$0xff] %vm702, %v2353
  %2634 = vst.msk [vmem:[#allocation2 + $0x18] sm:$0xff] %vm702, %v2356
  %2635 = vst.msk [vmem:[#allocation2 + $0x20] sm:$0xff] %vm702, %v2361
  %2636 = vst.msk [vmem:[#allocation2 + $0x28] sm:$0xff] %vm702, %v2364
  %2637 = vst.msk [vmem:[#allocation2 + $0x30] sm:$0xff] %vm702, %v2369
  %2638 = vst.msk [vmem:[#allocation2 + $0x38] sm:$0xff] %vm702, %v2372
  %2639 = vst.msk [vmem:[#allocation2 + $0x40] sm:$0xff] %vm702, %v2377
  %2640 = vst.msk [vmem:[#allocation2 + $0x48] sm:$0xff] %vm702, %v2380
  %2641 = vst.msk [vmem:[#allocation2 + $0x50] sm:$0xff] %vm702, %v2385
  %2642 = vst.msk [vmem:[#allocation2 + $0x58] sm:$0xff] %vm702, %v2388
  %2643 = vst.msk [vmem:[#allocation2 + $0x60] sm:$0xff] %vm702, %v2393
  %2644 = vst.msk [vmem:[#allocation2 + $0x68] sm:$0xff] %vm702, %v2396
  %2645 = vst.msk [vmem:[#allocation2 + $0x70] sm:$0xff] %vm702, %v2401
  %2646 = vst.msk [vmem:[#allocation2 + $0x78] sm:$0xff] %vm702, %v2404
  %2647 = vst.msk [vmem:[#allocation2 + $0x80] sm:$0xff] %vm702, %v2409
  %2648 = vst.msk [vmem:[#allocation2 + $0x88] sm:$0xff] %vm702, %v2412
  %2649 = vst.msk [vmem:[#allocation2 + $0x90] sm:$0xff] %vm702, %v2417
  %2650 = vst.msk [vmem:[#allocation2 + $0x98] sm:$0xff] %vm702, %v2420
  %2651 = vst.msk [vmem:[#allocation2 + $0xa0] sm:$0xff] %vm702, %v2425
  %2652 = vst.msk [vmem:[#allocation2 + $0xa8] sm:$0xff] %vm702, %v2428
  %2653 = vst.msk [vmem:[#allocation2 + $0xb0] sm:$0xff] %vm702, %v2433
  %2654 = vst.msk [vmem:[#allocation2 + $0xb8] sm:$0xff] %vm702, %v2436
  %2655 = vst.msk [vmem:[#allocation2 + $0xc0] sm:$0xff] %vm702, %v2441
  %2656 = vst.msk [vmem:[#allocation2 + $0xc8] sm:$0xff] %vm702, %v2444
  %2657 = vst.msk [vmem:[#allocation2 + $0xd0] sm:$0xff] %vm702, %v2449
  %2658 = vst.msk [vmem:[#allocation2 + $0xd8] sm:$0xff] %vm702, %v2452
  %2659 = vst.msk [vmem:[#allocation2 + $0xe0] sm:$0xff] %vm702, %v2457
  %2660 = vst.msk [vmem:[#allocation2 + $0xe8] sm:$0xff] %vm702, %v2460
  %2661 = vst.msk [vmem:[#allocation2 + $0xf0] sm:$0xff] %vm702, %v2465
  %2662 = vst.msk [vmem:[#allocation2 + $0xf8] sm:$0xff] %vm702, %v2468
  %2663 = vst.msk [vmem:[#allocation2 + $0x100] sm:$0xff] %vm702, %v2473
  %2664 = vst.msk [vmem:[#allocation2 + $0x108] sm:$0xff] %vm702, %v2476
  %2665 = vst.msk [vmem:[#allocation2 + $0x110] sm:$0xff] %vm702, %v2481
  %2666 = vst.msk [vmem:[#allocation2 + $0x118] sm:$0xff] %vm702, %v2484
  %2667 = vst.msk [vmem:[#allocation2 + $0x120] sm:$0xff] %vm702, %v2489
  %2668 = vst.msk [vmem:[#allocation2 + $0x128] sm:$0xff] %vm702, %v2492
  %2669 = vst.msk [vmem:[#allocation2 + $0x130] sm:$0xff] %vm702, %v2497
  %2670 = vst.msk [vmem:[#allocation2 + $0x138] sm:$0xff] %vm702, %v2500
  %2671 = vst.msk [vmem:[#allocation2 + $0x140] sm:$0xff] %vm702, %v2505
  %2672 = vst.msk [vmem:[#allocation2 + $0x148] sm:$0xff] %vm702, %v2508
  %2673 = vst.msk [vmem:[#allocation2 + $0x150] sm:$0xff] %vm702, %v2513
  %2674 = vst.msk [vmem:[#allocation2 + $0x158] sm:$0xff] %vm702, %v2516
  %2675 = vst.msk [vmem:[#allocation2 + $0x160] sm:$0xff] %vm702, %v2521
  %2676 = vst.msk [vmem:[#allocation2 + $0x168] sm:$0xff] %vm702, %v2524
  %2677 = vst.msk [vmem:[#allocation2 + $0x170] sm:$0xff] %vm702, %v2529
  %2678 = vst.msk [vmem:[#allocation2 + $0x178] sm:$0xff] %vm702, %v2532
  %2679 = vst.msk [vmem:[#allocation2 + $0x180] sm:$0xff] %vm702, %v2537
  %2680 = vst.msk [vmem:[#allocation2 + $0x188] sm:$0xff] %vm702, %v2540
  %2681 = vst.msk [vmem:[#allocation2 + $0x190] sm:$0xff] %vm702, %v2545
  %2682 = vst.msk [vmem:[#allocation2 + $0x198] sm:$0xff] %vm702, %v2548
  %2683 = vst.msk [vmem:[#allocation2 + $0x1a0] sm:$0xff] %vm702, %v2553
  %2684 = vst.msk [vmem:[#allocation2 + $0x1a8] sm:$0xff] %vm702, %v2556
  %2685 = vst.msk [vmem:[#allocation2 + $0x1b0] sm:$0xff] %vm702, %v2561
  %2686 = vst.msk [vmem:[#allocation2 + $0x1b8] sm:$0xff] %vm702, %v2564
  %2687 = vst.msk [vmem:[#allocation2 + $0x1c0] sm:$0xff] %vm702, %v2569
  %2688 = vst.msk [vmem:[#allocation2 + $0x1c8] sm:$0xff] %vm702, %v2572
  %2689 = vst.msk [vmem:[#allocation2 + $0x1d0] sm:$0xff] %vm702, %v2577
  %2690 = vst.msk [vmem:[#allocation2 + $0x1d8] sm:$0xff] %vm702, %v2580
  %2691 = vst.msk [vmem:[#allocation2 + $0x1e0] sm:$0xff] %vm702, %v2585
  %2692 = vst.msk [vmem:[#allocation2 + $0x1e8] sm:$0xff] %vm702, %v2588
  %2693 = vst.msk [vmem:[#allocation2 + $0x1f0] sm:$0xff] %vm702, %v2593
  %2694 = vst.msk [vmem:[#allocation2 + $0x1f8] sm:$0xff] %vm702, %v2596
  %2695 = vst.msk [vmem:[#allocation2 + $0x200] sm:$0xff] %vm702, %v2601
  %2696 = vst.msk [vmem:[#allocation2 + $0x208] sm:$0xff] %vm702, %v2604
  %2697 = vst.msk [vmem:[#allocation2 + $0x210] sm:$0xff] %vm702, %v2609
  %2698 = vst.msk [vmem:[#allocation2 + $0x218] sm:$0xff] %vm702, %v2612
  %2699 = vst.msk [vmem:[#allocation2 + $0x220] sm:$0xff] %vm702, %v2617
  %2700 = vst.msk [vmem:[#allocation2 + $0x228] sm:$0xff] %vm702, %v2620
  %2701 = vst.msk [vmem:[#allocation2 + $0x230] sm:$0xff] %vm702, %v2625
  %2702 = vst.msk [vmem:[#allocation2 + $0x238] sm:$0xff] %vm702, %v2628
  %v2703 = vld [vmem:[#allocation2] sm:$0xff]
  %v2704 = vld [vmem:[#allocation2 + $0x8] sm:$0xff]
  %v2705 = vld [vmem:[#allocation2 + $0x10] sm:$0xff]
  %v2706 = vld [vmem:[#allocation2 + $0x18] sm:$0xff]
  %v2707 = vld [vmem:[#allocation2 + $0x20] sm:$0xff]
  %v2708 = vld [vmem:[#allocation2 + $0x28] sm:$0xff]
  %v2709 = vld [vmem:[#allocation2 + $0x30] sm:$0xff]
  %v2710 = vld [vmem:[#allocation2 + $0x38] sm:$0xff]
  %v2711 = vld [vmem:[#allocation2 + $0x40] sm:$0xff]
  %v2712 = vld [vmem:[#allocation2 + $0x48] sm:$0xff]
  %v2713 = vld [vmem:[#allocation2 + $0x50] sm:$0xff]
  %v2714 = vld [vmem:[#allocation2 + $0x58] sm:$0xff]
  %v2715 = vld [vmem:[#allocation2 + $0x60] sm:$0xff]
  %v2716 = vld [vmem:[#allocation2 + $0x68] sm:$0xff]
  %v2717 = vld [vmem:[#allocation2 + $0x70] sm:$0xff]
  %v2718 = vld [vmem:[#allocation2 + $0x78] sm:$0xff]
  %v2719 = vld [vmem:[#allocation2 + $0x80] sm:$0xff]
  %v2720 = vld [vmem:[#allocation2 + $0x88] sm:$0xff]
  %v2721 = vld [vmem:[#allocation2 + $0x90] sm:$0xff]
  %v2722 = vld [vmem:[#allocation2 + $0x98] sm:$0xff]
  %v2723 = vld [vmem:[#allocation2 + $0xa0] sm:$0xff]
  %v2724 = vld [vmem:[#allocation2 + $0xa8] sm:$0xff]
  %v2725 = vld [vmem:[#allocation2 + $0xb0] sm:$0xff]
  %v2726 = vld [vmem:[#allocation2 + $0xb8] sm:$0xff]
  %v2727 = vld [vmem:[#allocation2 + $0xc0] sm:$0xff]
  %v2728 = vld [vmem:[#allocation2 + $0xc8] sm:$0xff]
  %v2729 = vld [vmem:[#allocation2 + $0xd0] sm:$0xff]
  %v2730 = vld [vmem:[#allocation2 + $0xd8] sm:$0xff]
  %v2731 = vld [vmem:[#allocation2 + $0xe0] sm:$0xff]
  %v2732 = vld [vmem:[#allocation2 + $0xe8] sm:$0xff]
  %v2733 = vld [vmem:[#allocation2 + $0xf0] sm:$0xff]
  %v2734 = vld [vmem:[#allocation2 + $0xf8] sm:$0xff]
  %v2735 = vld [vmem:[#allocation2 + $0x100] sm:$0xff]
  %v2736 = vld [vmem:[#allocation2 + $0x108] sm:$0xff]
  %v2737 = vld [vmem:[#allocation2 + $0x110] sm:$0xff]
  %v2738 = vld [vmem:[#allocation2 + $0x118] sm:$0xff]
  %v2739 = vld [vmem:[#allocation2 + $0x120] sm:$0xff]
  %v2740 = vld [vmem:[#allocation2 + $0x128] sm:$0xff]
  %v2741 = vld [vmem:[#allocation2 + $0x130] sm:$0xff]
  %v2742 = vld [vmem:[#allocation2 + $0x138] sm:$0xff]
  %v2743 = vld [vmem:[#allocation2 + $0x140] sm:$0xff]
  %v2744 = vld [vmem:[#allocation2 + $0x148] sm:$0xff]
  %v2745 = vld [vmem:[#allocation2 + $0x150] sm:$0xff]
  %v2746 = vld [vmem:[#allocation2 + $0x158] sm:$0xff]
  %v2747 = vld [vmem:[#allocation2 + $0x160] sm:$0xff]
  %v2748 = vld [vmem:[#allocation2 + $0x168] sm:$0xff]
  %v2749 = vld [vmem:[#allocation2 + $0x170] sm:$0xff]
  %v2750 = vld [vmem:[#allocation2 + $0x178] sm:$0xff]
  %v2751 = vld [vmem:[#allocation2 + $0x180] sm:$0xff]
  %v2752 = vld [vmem:[#allocation2 + $0x188] sm:$0xff]
  %v2753 = vld [vmem:[#allocation2 + $0x190] sm:$0xff]
  %v2754 = vld [vmem:[#allocation2 + $0x198] sm:$0xff]
  %v2755 = vld [vmem:[#allocation2 + $0x1a0] sm:$0xff]
  %v2756 = vld [vmem:[#allocation2 + $0x1a8] sm:$0xff]
  %v2757 = vld [vmem:[#allocation2 + $0x1b0] sm:$0xff]
  %v2758 = vld [vmem:[#allocation2 + $0x1b8] sm:$0xff]
  %v2759 = vld [vmem:[#allocation2 + $0x1c0] sm:$0xff]
  %v2760 = vld [vmem:[#allocation2 + $0x1c8] sm:$0xff]
  %v2761 = vld [vmem:[#allocation2 + $0x1d0] sm:$0xff]
  %v2762 = vld [vmem:[#allocation2 + $0x1d8] sm:$0xff]
  %v2763 = vld [vmem:[#allocation2 + $0x1e0] sm:$0xff]
  %v2764 = vld [vmem:[#allocation2 + $0x1e8] sm:$0xff]
  %v2765 = vld [vmem:[#allocation2 + $0x1f0] sm:$0xff]
  %v2766 = vld [vmem:[#allocation2 + $0x1f8] sm:$0xff]
  %v2767 = vld [vmem:[#allocation2 + $0x200] sm:$0xff]
  %v2768 = vld [vmem:[#allocation2 + $0x208] sm:$0xff]
  %v2769 = vld [vmem:[#allocation2 + $0x210] sm:$0xff]
  %v2770 = vld [vmem:[#allocation2 + $0x218] sm:$0xff]
  %v2771 = vld [vmem:[#allocation2 + $0x220] sm:$0xff]
  %v2772 = vld [vmem:[#allocation2 + $0x228] sm:$0xff]
  %2841 = vrot.lane.b32.xlu0 %v2705, 125
  %v2842 = vpop.permute.xlu0 %2841
  %2843 = vrot.lane.b32.xlu0 %v2706, 125
  %v2844 = vpop.permute.xlu0 %2843
  %2845 = vrot.lane.b32.xlu0 %v2707, 125
  %v2846 = vpop.permute.xlu0 %2845
  %2847 = vrot.lane.b32.xlu0 %v2708, 125
  %v2848 = vpop.permute.xlu0 %2847
  %2849 = vrot.lane.b32.xlu0 %v2709, 125
  %v2850 = vpop.permute.xlu0 %2849
  %2851 = vrot.lane.b32.xlu0 %v2710, 125
  %v2852 = vpop.permute.xlu0 %2851
  %2853 = vrot.lane.b32.xlu0 %v2711, 125
  %v2854 = vpop.permute.xlu0 %2853
  %2855 = vrot.lane.b32.xlu0 %v2712, 125
  %v2856 = vpop.permute.xlu0 %2855
  %2857 = vrot.lane.b32.xlu0 %v2713, 125
  %v2858 = vpop.permute.xlu0 %2857
  %2859 = vrot.lane.b32.xlu0 %v2714, 125
  %v2860 = vpop.permute.xlu0 %2859
  %2861 = vrot.lane.b32.xlu0 %v2715, 125
  %v2862 = vpop.permute.xlu0 %2861
  %2863 = vrot.lane.b32.xlu0 %v2716, 125
  %v2864 = vpop.permute.xlu0 %2863
  %2865 = vrot.lane.b32.xlu0 %v2717, 125
  %v2866 = vpop.permute.xlu0 %2865
  %2867 = vrot.lane.b32.xlu0 %v2718, 125
  %v2868 = vpop.permute.xlu0 %2867
  %2869 = vrot.lane.b32.xlu0 %v2719, 125
  %v2870 = vpop.permute.xlu0 %2869
  %2871 = vrot.lane.b32.xlu0 %v2720, 125
  %v2872 = vpop.permute.xlu0 %2871
  %2873 = vrot.lane.b32.xlu0 %v2721, 125
  %v2874 = vpop.permute.xlu0 %2873
  %2875 = vrot.lane.b32.xlu0 %v2722, 125
  %v2876 = vpop.permute.xlu0 %2875
  %2877 = vrot.lane.b32.xlu0 %v2723, 125
  %v2878 = vpop.permute.xlu0 %2877
  %2879 = vrot.lane.b32.xlu0 %v2724, 125
  %v2880 = vpop.permute.xlu0 %2879
  %2881 = vrot.lane.b32.xlu0 %v2725, 125
  %v2882 = vpop.permute.xlu0 %2881
  %2883 = vrot.lane.b32.xlu0 %v2726, 125
  %v2884 = vpop.permute.xlu0 %2883
  %2885 = vrot.lane.b32.xlu0 %v2727, 125
  %v2886 = vpop.permute.xlu0 %2885
  %2887 = vrot.lane.b32.xlu0 %v2728, 125
  %v2888 = vpop.permute.xlu0 %2887
  %2889 = vrot.lane.b32.xlu0 %v2729, 125
  %v2890 = vpop.permute.xlu0 %2889
  %2891 = vrot.lane.b32.xlu0 %v2730, 125
  %v2892 = vpop.permute.xlu0 %2891
  %2893 = vrot.lane.b32.xlu0 %v2731, 125
  %v2894 = vpop.permute.xlu0 %2893
  %2895 = vrot.lane.b32.xlu0 %v2732, 125
  %v2896 = vpop.permute.xlu0 %2895
  %2897 = vrot.lane.b32.xlu0 %v2733, 125
  %v2898 = vpop.permute.xlu0 %2897
  %2899 = vrot.lane.b32.xlu0 %v2734, 125
  %v2900 = vpop.permute.xlu0 %2899
  %2901 = vrot.lane.b32.xlu0 %v2735, 125
  %v2902 = vpop.permute.xlu0 %2901
  %2903 = vrot.lane.b32.xlu0 %v2736, 125
  %v2904 = vpop.permute.xlu0 %2903
  %2905 = vrot.lane.b32.xlu0 %v2737, 125
  %v2906 = vpop.permute.xlu0 %2905
  %2907 = vrot.lane.b32.xlu0 %v2738, 125
  %v2908 = vpop.permute.xlu0 %2907
  %2909 = vrot.lane.b32.xlu0 %v2739, 125
  %v2910 = vpop.permute.xlu0 %2909
  %2911 = vrot.lane.b32.xlu0 %v2740, 125
  %v2912 = vpop.permute.xlu0 %2911
  %2913 = vrot.lane.b32.xlu0 %v2741, 125
  %v2914 = vpop.permute.xlu0 %2913
  %2915 = vrot.lane.b32.xlu0 %v2742, 125
  %v2916 = vpop.permute.xlu0 %2915
  %2917 = vrot.lane.b32.xlu0 %v2743, 125
  %v2918 = vpop.permute.xlu0 %2917
  %2919 = vrot.lane.b32.xlu0 %v2744, 125
  %v2920 = vpop.permute.xlu0 %2919
  %2921 = vrot.lane.b32.xlu0 %v2745, 125
  %v2922 = vpop.permute.xlu0 %2921
  %2923 = vrot.lane.b32.xlu0 %v2746, 125
  %v2924 = vpop.permute.xlu0 %2923
  %2925 = vrot.lane.b32.xlu0 %v2747, 125
  %v2926 = vpop.permute.xlu0 %2925
  %2927 = vrot.lane.b32.xlu0 %v2748, 125
  %v2928 = vpop.permute.xlu0 %2927
  %2929 = vrot.lane.b32.xlu0 %v2749, 125
  %v2930 = vpop.permute.xlu0 %2929
  %2931 = vrot.lane.b32.xlu0 %v2750, 125
  %v2932 = vpop.permute.xlu0 %2931
  %2933 = vrot.lane.b32.xlu0 %v2751, 125
  %v2934 = vpop.permute.xlu0 %2933
  %2935 = vrot.lane.b32.xlu0 %v2752, 125
  %v2936 = vpop.permute.xlu0 %2935
  %2937 = vrot.lane.b32.xlu0 %v2753, 125
  %v2938 = vpop.permute.xlu0 %2937
  %2939 = vrot.lane.b32.xlu0 %v2754, 125
  %v2940 = vpop.permute.xlu0 %2939
  %2941 = vrot.lane.b32.xlu0 %v2755, 125
  %v2942 = vpop.permute.xlu0 %2941
  %2943 = vrot.lane.b32.xlu0 %v2756, 125
  %v2944 = vpop.permute.xlu0 %2943
  %2945 = vrot.lane.b32.xlu0 %v2757, 125
  %v2946 = vpop.permute.xlu0 %2945
  %2947 = vrot.lane.b32.xlu0 %v2758, 125
  %v2948 = vpop.permute.xlu0 %2947
  %2949 = vrot.lane.b32.xlu0 %v2759, 125
  %v2950 = vpop.permute.xlu0 %2949
  %2951 = vrot.lane.b32.xlu0 %v2760, 125
  %v2952 = vpop.permute.xlu0 %2951
  %2953 = vrot.lane.b32.xlu0 %v2761, 125
  %v2954 = vpop.permute.xlu0 %2953
  %2955 = vrot.lane.b32.xlu0 %v2762, 125
  %v2956 = vpop.permute.xlu0 %2955
  %2957 = vrot.lane.b32.xlu0 %v2763, 125
  %v2958 = vpop.permute.xlu0 %2957
  %2959 = vrot.lane.b32.xlu0 %v2764, 125
  %v2960 = vpop.permute.xlu0 %2959
  %2961 = vrot.lane.b32.xlu0 %v2765, 125
  %v2962 = vpop.permute.xlu0 %2961
  %2963 = vrot.lane.b32.xlu0 %v2766, 125
  %v2964 = vpop.permute.xlu0 %2963
  %2965 = vrot.lane.b32.xlu0 %v2767, 125
  %v2966 = vpop.permute.xlu0 %2965
  %2967 = vrot.lane.b32.xlu0 %v2768, 125
  %v2968 = vpop.permute.xlu0 %2967
  %2969 = vrot.lane.b32.xlu0 %v2769, 125
  %v2970 = vpop.permute.xlu0 %2969
  %2971 = vrot.lane.b32.xlu0 %v2770, 125
  %v2972 = vpop.permute.xlu0 %2971
  %2973 = vrot.lane.b32.xlu0 %v2771, 125
  %v2974 = vpop.permute.xlu0 %2973
  %2975 = vrot.lane.b32.xlu0 %v2772, 125
  %v2976 = vpop.permute.xlu0 %2975
  %v3045 = vadd.f32 %v2703, %v2842
  %v3046 = vadd.f32 %v2704, %v2844
  %v3047 = vadd.f32 %v2705, %v2846
  %v3048 = vadd.f32 %v2706, %v2848
  %v3049 = vadd.f32 %v2707, %v2850
  %v3050 = vadd.f32 %v2708, %v2852
  %v3051 = vadd.f32 %v2709, %v2854
  %v3052 = vadd.f32 %v2710, %v2856
  %v3053 = vadd.f32 %v2711, %v2858
  %v3054 = vadd.f32 %v2712, %v2860
  %v3055 = vadd.f32 %v2713, %v2862
  %v3056 = vadd.f32 %v2714, %v2864
  %v3057 = vadd.f32 %v2715, %v2866
  %v3058 = vadd.f32 %v2716, %v2868
  %v3059 = vadd.f32 %v2717, %v2870
  %v3060 = vadd.f32 %v2718, %v2872
  %v3061 = vadd.f32 %v2719, %v2874
  %v3062 = vadd.f32 %v2720, %v2876
  %v3063 = vadd.f32 %v2721, %v2878
  %v3064 = vadd.f32 %v2722, %v2880
  %v3065 = vadd.f32 %v2723, %v2882
  %v3066 = vadd.f32 %v2724, %v2884
  %v3067 = vadd.f32 %v2725, %v2886
  %v3068 = vadd.f32 %v2726, %v2888
  %v3069 = vadd.f32 %v2727, %v2890
  %v3070 = vadd.f32 %v2728, %v2892
  %v3071 = vadd.f32 %v2729, %v2894
  %v3072 = vadd.f32 %v2730, %v2896
  %v3073 = vadd.f32 %v2731, %v2898
  %v3074 = vadd.f32 %v2732, %v2900
  %v3075 = vadd.f32 %v2733, %v2902
  %v3076 = vadd.f32 %v2734, %v2904
  %v3077 = vadd.f32 %v2735, %v2906
  %v3078 = vadd.f32 %v2736, %v2908
  %v3079 = vadd.f32 %v2737, %v2910
  %v3080 = vadd.f32 %v2738, %v2912
  %v3081 = vadd.f32 %v2739, %v2914
  %v3082 = vadd.f32 %v2740, %v2916
  %v3083 = vadd.f32 %v2741, %v2918
  %v3084 = vadd.f32 %v2742, %v2920
  %v3085 = vadd.f32 %v2743, %v2922
  %v3086 = vadd.f32 %v2744, %v2924
  %v3087 = vadd.f32 %v2745, %v2926
  %v3088 = vadd.f32 %v2746, %v2928
  %v3089 = vadd.f32 %v2747, %v2930
  %v3090 = vadd.f32 %v2748, %v2932
  %v3091 = vadd.f32 %v2749, %v2934
  %v3092 = vadd.f32 %v2750, %v2936
  %v3093 = vadd.f32 %v2751, %v2938
  %v3094 = vadd.f32 %v2752, %v2940
  %v3095 = vadd.f32 %v2753, %v2942
  %v3096 = vadd.f32 %v2754, %v2944
  %v3097 = vadd.f32 %v2755, %v2946
  %v3098 = vadd.f32 %v2756, %v2948
  %v3099 = vadd.f32 %v2757, %v2950
  %v3100 = vadd.f32 %v2758, %v2952
  %v3101 = vadd.f32 %v2759, %v2954
  %v3102 = vadd.f32 %v2760, %v2956
  %v3103 = vadd.f32 %v2761, %v2958
  %v3104 = vadd.f32 %v2762, %v2960
  %v3105 = vadd.f32 %v2763, %v2962
  %v3106 = vadd.f32 %v2764, %v2964
  %v3107 = vadd.f32 %v2765, %v2966
  %v3108 = vadd.f32 %v2766, %v2968
  %v3109 = vadd.f32 %v2767, %v2970
  %v3110 = vadd.f32 %v2768, %v2972
  %v3111 = vadd.f32 %v2769, %v2974
  %v3112 = vadd.f32 %v2770, %v2976
  %v3113 = vtanh.pop %v3045
  %v3114 = vtanh.pop %v3046
  %v3115 = vtanh.pop %v3047
  %v3116 = vtanh.pop %v3048
  %v3117 = vtanh.pop %v3049
  %v3118 = vtanh.pop %v3050
  %v3119 = vtanh.pop %v3051
  %v3120 = vtanh.pop %v3052
  %v3121 = vtanh.pop %v3053
  %v3122 = vtanh.pop %v3054
  %v3123 = vtanh.pop %v3055
  %v3124 = vtanh.pop %v3056
  %v3125 = vtanh.pop %v3057
  %v3126 = vtanh.pop %v3058
  %v3127 = vtanh.pop %v3059
  %v3128 = vtanh.pop %v3060
  %v3129 = vtanh.pop %v3061
  %v3130 = vtanh.pop %v3062
  %v3131 = vtanh.pop %v3063
  %v3132 = vtanh.pop %v3064
  %v3133 = vtanh.pop %v3065
  %v3134 = vtanh.pop %v3066
  %v3135 = vtanh.pop %v3067
  %v3136 = vtanh.pop %v3068
  %v3137 = vtanh.pop %v3069
  %v3138 = vtanh.pop %v3070
  %v3139 = vtanh.pop %v3071
  %v3140 = vtanh.pop %v3072
  %v3141 = vtanh.pop %v3073
  %v3142 = vtanh.pop %v3074
  %v3143 = vtanh.pop %v3075
  %v3144 = vtanh.pop %v3076
  %v3145 = vtanh.pop %v3077
  %v3146 = vtanh.pop %v3078
  %v3147 = vtanh.pop %v3079
  %v3148 = vtanh.pop %v3080
  %v3149 = vtanh.pop %v3081
  %v3150 = vtanh.pop %v3082
  %v3151 = vtanh.pop %v3083
  %v3152 = vtanh.pop %v3084
  %v3153 = vtanh.pop %v3085
  %v3154 = vtanh.pop %v3086
  %v3155 = vtanh.pop %v3087
  %v3156 = vtanh.pop %v3088
  %v3157 = vtanh.pop %v3089
  %v3158 = vtanh.pop %v3090
  %v3159 = vtanh.pop %v3091
  %v3160 = vtanh.pop %v3092
  %v3161 = vtanh.pop %v3093
  %v3162 = vtanh.pop %v3094
  %v3163 = vtanh.pop %v3095
  %v3164 = vtanh.pop %v3096
  %v3165 = vtanh.pop %v3097
  %v3166 = vtanh.pop %v3098
  %v3167 = vtanh.pop %v3099
  %v3168 = vtanh.pop %v3100
  %v3169 = vtanh.pop %v3101
  %v3170 = vtanh.pop %v3102
  %v3171 = vtanh.pop %v3103
  %v3172 = vtanh.pop %v3104
  %v3173 = vtanh.pop %v3105
  %v3174 = vtanh.pop %v3106
  %v3175 = vtanh.pop %v3107
  %v3176 = vtanh.pop %v3108
  %v3177 = vtanh.pop %v3109
  %v3178 = vtanh.pop %v3110
  %v3179 = vtanh.pop %v3111
  %v3180 = vtanh.pop %v3112
  %3249 = vrot.lane.b32.xlu0 %v3113, 3
  %v3250 = vpop.permute.xlu0 %3249
  %3251 = vrot.lane.b32.xlu0 %v3114, 3
  %v3252 = vpop.permute.xlu0 %3251
  %3253 = vrot.lane.b32.xlu0 %v3115, 3
  %v3254 = vpop.permute.xlu0 %3253
  %3255 = vrot.lane.b32.xlu0 %v3116, 3
  %v3256 = vpop.permute.xlu0 %3255
  %3257 = vrot.lane.b32.xlu0 %v3117, 3
  %v3258 = vpop.permute.xlu0 %3257
  %3259 = vrot.lane.b32.xlu0 %v3118, 3
  %v3260 = vpop.permute.xlu0 %3259
  %3261 = vrot.lane.b32.xlu0 %v3119, 3
  %v3262 = vpop.permute.xlu0 %3261
  %3263 = vrot.lane.b32.xlu0 %v3120, 3
  %v3264 = vpop.permute.xlu0 %3263
  %3265 = vrot.lane.b32.xlu0 %v3121, 3
  %v3266 = vpop.permute.xlu0 %3265
  %3267 = vrot.lane.b32.xlu0 %v3122, 3
  %v3268 = vpop.permute.xlu0 %3267
  %3269 = vrot.lane.b32.xlu0 %v3123, 3
  %v3270 = vpop.permute.xlu0 %3269
  %3271 = vrot.lane.b32.xlu0 %v3124, 3
  %v3272 = vpop.permute.xlu0 %3271
  %3273 = vrot.lane.b32.xlu0 %v3125, 3
  %v3274 = vpop.permute.xlu0 %3273
  %3275 = vrot.lane.b32.xlu0 %v3126, 3
  %v3276 = vpop.permute.xlu0 %3275
  %3277 = vrot.lane.b32.xlu0 %v3127, 3
  %v3278 = vpop.permute.xlu0 %3277
  %3279 = vrot.lane.b32.xlu0 %v3128, 3
  %v3280 = vpop.permute.xlu0 %3279
  %3281 = vrot.lane.b32.xlu0 %v3129, 3
  %v3282 = vpop.permute.xlu0 %3281
  %3283 = vrot.lane.b32.xlu0 %v3130, 3
  %v3284 = vpop.permute.xlu0 %3283
  %3285 = vrot.lane.b32.xlu0 %v3131, 3
  %v3286 = vpop.permute.xlu0 %3285
  %3287 = vrot.lane.b32.xlu0 %v3132, 3
  %v3288 = vpop.permute.xlu0 %3287
  %3289 = vrot.lane.b32.xlu0 %v3133, 3
  %v3290 = vpop.permute.xlu0 %3289
  %3291 = vrot.lane.b32.xlu0 %v3134, 3
  %v3292 = vpop.permute.xlu0 %3291
  %3293 = vrot.lane.b32.xlu0 %v3135, 3
  %v3294 = vpop.permute.xlu0 %3293
  %3295 = vrot.lane.b32.xlu0 %v3136, 3
  %v3296 = vpop.permute.xlu0 %3295
  %3297 = vrot.lane.b32.xlu0 %v3137, 3
  %v3298 = vpop.permute.xlu0 %3297
  %3299 = vrot.lane.b32.xlu0 %v3138, 3
  %v3300 = vpop.permute.xlu0 %3299
  %3301 = vrot.lane.b32.xlu0 %v3139, 3
  %v3302 = vpop.permute.xlu0 %3301
  %3303 = vrot.lane.b32.xlu0 %v3140, 3
  %v3304 = vpop.permute.xlu0 %3303
  %3305 = vrot.lane.b32.xlu0 %v3141, 3
  %v3306 = vpop.permute.xlu0 %3305
  %3307 = vrot.lane.b32.xlu0 %v3142, 3
  %v3308 = vpop.permute.xlu0 %3307
  %3309 = vrot.lane.b32.xlu0 %v3143, 3
  %v3310 = vpop.permute.xlu0 %3309
  %3311 = vrot.lane.b32.xlu0 %v3144, 3
  %v3312 = vpop.permute.xlu0 %3311
  %3313 = vrot.lane.b32.xlu0 %v3145, 3
  %v3314 = vpop.permute.xlu0 %3313
  %3315 = vrot.lane.b32.xlu0 %v3146, 3
  %v3316 = vpop.permute.xlu0 %3315
  %3317 = vrot.lane.b32.xlu0 %v3147, 3
  %v3318 = vpop.permute.xlu0 %3317
  %3319 = vrot.lane.b32.xlu0 %v3148, 3
  %v3320 = vpop.permute.xlu0 %3319
  %3321 = vrot.lane.b32.xlu0 %v3149, 3
  %v3322 = vpop.permute.xlu0 %3321
  %3323 = vrot.lane.b32.xlu0 %v3150, 3
  %v3324 = vpop.permute.xlu0 %3323
  %3325 = vrot.lane.b32.xlu0 %v3151, 3
  %v3326 = vpop.permute.xlu0 %3325
  %3327 = vrot.lane.b32.xlu0 %v3152, 3
  %v3328 = vpop.permute.xlu0 %3327
  %3329 = vrot.lane.b32.xlu0 %v3153, 3
  %v3330 = vpop.permute.xlu0 %3329
  %3331 = vrot.lane.b32.xlu0 %v3154, 3
  %v3332 = vpop.permute.xlu0 %3331
  %3333 = vrot.lane.b32.xlu0 %v3155, 3
  %v3334 = vpop.permute.xlu0 %3333
  %3335 = vrot.lane.b32.xlu0 %v3156, 3
  %v3336 = vpop.permute.xlu0 %3335
  %3337 = vrot.lane.b32.xlu0 %v3157, 3
  %v3338 = vpop.permute.xlu0 %3337
  %3339 = vrot.lane.b32.xlu0 %v3158, 3
  %v3340 = vpop.permute.xlu0 %3339
  %3341 = vrot.lane.b32.xlu0 %v3159, 3
  %v3342 = vpop.permute.xlu0 %3341
  %3343 = vrot.lane.b32.xlu0 %v3160, 3
  %v3344 = vpop.permute.xlu0 %3343
  %3345 = vrot.lane.b32.xlu0 %v3161, 3
  %v3346 = vpop.permute.xlu0 %3345
  %3347 = vrot.lane.b32.xlu0 %v3162, 3
  %v3348 = vpop.permute.xlu0 %3347
  %3349 = vrot.lane.b32.xlu0 %v3163, 3
  %v3350 = vpop.permute.xlu0 %3349
  %3351 = vrot.lane.b32.xlu0 %v3164, 3
  %v3352 = vpop.permute.xlu0 %3351
  %3353 = vrot.lane.b32.xlu0 %v3165, 3
  %v3354 = vpop.permute.xlu0 %3353
  %3355 = vrot.lane.b32.xlu0 %v3166, 3
  %v3356 = vpop.permute.xlu0 %3355
  %3357 = vrot.lane.b32.xlu0 %v3167, 3
  %v3358 = vpop.permute.xlu0 %3357
  %3359 = vrot.lane.b32.xlu0 %v3168, 3
  %v3360 = vpop.permute.xlu0 %3359
  %3361 = vrot.lane.b32.xlu0 %v3169, 3
  %v3362 = vpop.permute.xlu0 %3361
  %3363 = vrot.lane.b32.xlu0 %v3170, 3
  %v3364 = vpop.permute.xlu0 %3363
  %3365 = vrot.lane.b32.xlu0 %v3171, 3
  %v3366 = vpop.permute.xlu0 %3365
  %3367 = vrot.lane.b32.xlu0 %v3172, 3
  %v3368 = vpop.permute.xlu0 %3367
  %3369 = vrot.lane.b32.xlu0 %v3173, 3
  %v3370 = vpop.permute.xlu0 %3369
  %3371 = vrot.lane.b32.xlu0 %v3174, 3
  %v3372 = vpop.permute.xlu0 %3371
  %3373 = vrot.lane.b32.xlu0 %v3175, 3
  %v3374 = vpop.permute.xlu0 %3373
  %3375 = vrot.lane.b32.xlu0 %v3176, 3
  %v3376 = vpop.permute.xlu0 %3375
  %3377 = vrot.lane.b32.xlu0 %v3177, 3
  %v3378 = vpop.permute.xlu0 %3377
  %3379 = vrot.lane.b32.xlu0 %v3178, 3
  %v3380 = vpop.permute.xlu0 %3379
  %3381 = vrot.lane.b32.xlu0 %v3179, 3
  %v3382 = vpop.permute.xlu0 %3381
  %3383 = vrot.lane.b32.xlu0 %v3180, 3
  %v3384 = vpop.permute.xlu0 %3383
  %vm3453 = vcmask 48152
  %3454 = vst.msk [vmem:[%s2] sm:$0xff] %vm3453, %v3250
  %3455 = vst.msk [vmem:[%s2 + $0x8] sm:$0xff] %vm3453, %v3252
  %3456 = vst.msk [vmem:[%s2 + $0x10] sm:$0xff] %vm3453, %v3254
  %3457 = vst.msk [vmem:[%s2 + $0x18] sm:$0xff] %vm3453, %v3256
  %3458 = vst.msk [vmem:[%s2 + $0x20] sm:$0xff] %vm3453, %v3258
  %3459 = vst.msk [vmem:[%s2 + $0x28] sm:$0xff] %vm3453, %v3260
  %3460 = vst.msk [vmem:[%s2 + $0x30] sm:$0xff] %vm3453, %v3262
  %3461 = vst.msk [vmem:[%s2 + $0x38] sm:$0xff] %vm3453, %v3264
  %3462 = vst.msk [vmem:[%s2 + $0x40] sm:$0xff] %vm3453, %v3266
  %3463 = vst.msk [vmem:[%s2 + $0x48] sm:$0xff] %vm3453, %v3268
  %3464 = vst.msk [vmem:[%s2 + $0x50] sm:$0xff] %vm3453, %v3270
  %3465 = vst.msk [vmem:[%s2 + $0x58] sm:$0xff] %vm3453, %v3272
  %3466 = vst.msk [vmem:[%s2 + $0x60] sm:$0xff] %vm3453, %v3274
  %3467 = vst.msk [vmem:[%s2 + $0x68] sm:$0xff] %vm3453, %v3276
  %3468 = vst.msk [vmem:[%s2 + $0x70] sm:$0xff] %vm3453, %v3278
  %3469 = vst.msk [vmem:[%s2 + $0x78] sm:$0xff] %vm3453, %v3280
  %3470 = vst.msk [vmem:[%s2 + $0x80] sm:$0xff] %vm3453, %v3282
  %3471 = vst.msk [vmem:[%s2 + $0x88] sm:$0xff] %vm3453, %v3284
  %3472 = vst.msk [vmem:[%s2 + $0x90] sm:$0xff] %vm3453, %v3286
  %3473 = vst.msk [vmem:[%s2 + $0x98] sm:$0xff] %vm3453, %v3288
  %3474 = vst.msk [vmem:[%s2 + $0xa0] sm:$0xff] %vm3453, %v3290
  %3475 = vst.msk [vmem:[%s2 + $0xa8] sm:$0xff] %vm3453, %v3292
  %3476 = vst.msk [vmem:[%s2 + $0xb0] sm:$0xff] %vm3453, %v3294
  %3477 = vst.msk [vmem:[%s2 + $0xb8] sm:$0xff] %vm3453, %v3296
  %3478 = vst.msk [vmem:[%s2 + $0xc0] sm:$0xff] %vm3453, %v3298
  %3479 = vst.msk [vmem:[%s2 + $0xc8] sm:$0xff] %vm3453, %v3300
  %3480 = vst.msk [vmem:[%s2 + $0xd0] sm:$0xff] %vm3453, %v3302
  %3481 = vst.msk [vmem:[%s2 + $0xd8] sm:$0xff] %vm3453, %v3304
  %3482 = vst.msk [vmem:[%s2 + $0xe0] sm:$0xff] %vm3453, %v3306
  %3483 = vst.msk [vmem:[%s2 + $0xe8] sm:$0xff] %vm3453, %v3308
  %3484 = vst.msk [vmem:[%s2 + $0xf0] sm:$0xff] %vm3453, %v3310
  %3485 = vst.msk [vmem:[%s2 + $0xf8] sm:$0xff] %vm3453, %v3312
  %3486 = vst.msk [vmem:[%s2 + $0x100] sm:$0xff] %vm3453, %v3314
  %3487 = vst.msk [vmem:[%s2 + $0x108] sm:$0xff] %vm3453, %v3316
  %3488 = vst.msk [vmem:[%s2 + $0x110] sm:$0xff] %vm3453, %v3318
  %3489 = vst.msk [vmem:[%s2 + $0x118] sm:$0xff] %vm3453, %v3320
  %3490 = vst.msk [vmem:[%s2 + $0x120] sm:$0xff] %vm3453, %v3322
  %3491 = vst.msk [vmem:[%s2 + $0x128] sm:$0xff] %vm3453, %v3324
  %3492 = vst.msk [vmem:[%s2 + $0x130] sm:$0xff] %vm3453, %v3326
  %3493 = vst.msk [vmem:[%s2 + $0x138] sm:$0xff] %vm3453, %v3328
  %3494 = vst.msk [vmem:[%s2 + $0x140] sm:$0xff] %vm3453, %v3330
  %3495 = vst.msk [vmem:[%s2 + $0x148] sm:$0xff] %vm3453, %v3332
  %3496 = vst.msk [vmem:[%s2 + $0x150] sm:$0xff] %vm3453, %v3334
  %3497 = vst.msk [vmem:[%s2 + $0x158] sm:$0xff] %vm3453, %v3336
  %3498 = vst.msk [vmem:[%s2 + $0x160] sm:$0xff] %vm3453, %v3338
  %3499 = vst.msk [vmem:[%s2 + $0x168] sm:$0xff] %vm3453, %v3340
  %3500 = vst.msk [vmem:[%s2 + $0x170] sm:$0xff] %vm3453, %v3342
  %3501 = vst.msk [vmem:[%s2 + $0x178] sm:$0xff] %vm3453, %v3344
  %3502 = vst.msk [vmem:[%s2 + $0x180] sm:$0xff] %vm3453, %v3346
  %3503 = vst.msk [vmem:[%s2 + $0x188] sm:$0xff] %vm3453, %v3348
  %3504 = vst.msk [vmem:[%s2 + $0x190] sm:$0xff] %vm3453, %v3350
  %3505 = vst.msk [vmem:[%s2 + $0x198] sm:$0xff] %vm3453, %v3352
  %3506 = vst.msk [vmem:[%s2 + $0x1a0] sm:$0xff] %vm3453, %v3354
  %3507 = vst.msk [vmem:[%s2 + $0x1a8] sm:$0xff] %vm3453, %v3356
  %3508 = vst.msk [vmem:[%s2 + $0x1b0] sm:$0xff] %vm3453, %v3358
  %3509 = vst.msk [vmem:[%s2 + $0x1b8] sm:$0xff] %vm3453, %v3360
  %3510 = vst.msk [vmem:[%s2 + $0x1c0] sm:$0xff] %vm3453, %v3362
  %3511 = vst.msk [vmem:[%s2 + $0x1c8] sm:$0xff] %vm3453, %v3364
  %3512 = vst.msk [vmem:[%s2 + $0x1d0] sm:$0xff] %vm3453, %v3366
  %3513 = vst.msk [vmem:[%s2 + $0x1d8] sm:$0xff] %vm3453, %v3368
  %3514 = vst.msk [vmem:[%s2 + $0x1e0] sm:$0xff] %vm3453, %v3370
  %3515 = vst.msk [vmem:[%s2 + $0x1e8] sm:$0xff] %vm3453, %v3372
  %3516 = vst.msk [vmem:[%s2 + $0x1f0] sm:$0xff] %vm3453, %v3374
  %3517 = vst.msk [vmem:[%s2 + $0x1f8] sm:$0xff] %vm3453, %v3376
  %3518 = vst.msk [vmem:[%s2 + $0x200] sm:$0xff] %vm3453, %v3378
  %3519 = vst.msk [vmem:[%s2 + $0x208] sm:$0xff] %vm3453, %v3380
  %3520 = vst.msk [vmem:[%s2 + $0x210] sm:$0xff] %vm3453, %v3382
  %3521 = vst.msk [vmem:[%s2 + $0x218] sm:$0xff] %vm3453, %v3384
  %v3522 = vld [vmem:[#allocation2 + $0x10] sm:$0xff]
  %v3523 = vld [vmem:[#allocation2 + $0x18] sm:$0xff]
  %v3524 = vld [vmem:[#allocation2 + $0x20] sm:$0xff]
  %v3525 = vld [vmem:[#allocation2 + $0x28] sm:$0xff]
  %v3526 = vld [vmem:[#allocation2 + $0x30] sm:$0xff]
  %v3527 = vld [vmem:[#allocation2 + $0x38] sm:$0xff]
  %v3528 = vld [vmem:[#allocation2 + $0x40] sm:$0xff]
  %v3529 = vld [vmem:[#allocation2 + $0x48] sm:$0xff]
  %v3530 = vld [vmem:[#allocation2 + $0x50] sm:$0xff]
  %v3531 = vld [vmem:[#allocation2 + $0x58] sm:$0xff]
  %v3532 = vld [vmem:[#allocation2 + $0x60] sm:$0xff]
  %v3533 = vld [vmem:[#allocation2 + $0x68] sm:$0xff]
  %v3534 = vld [vmem:[#allocation2 + $0x70] sm:$0xff]
  %v3535 = vld [vmem:[#allocation2 + $0x78] sm:$0xff]
  %v3536 = vld [vmem:[#allocation2 + $0x80] sm:$0xff]
  %v3537 = vld [vmem:[#allocation2 + $0x88] sm:$0xff]
  %v3538 = vld [vmem:[#allocation2 + $0x90] sm:$0xff]
  %v3539 = vld [vmem:[#allocation2 + $0x98] sm:$0xff]
  %v3540 = vld [vmem:[#allocation2 + $0xa0] sm:$0xff]
  %v3541 = vld [vmem:[#allocation2 + $0xa8] sm:$0xff]
  %v3542 = vld [vmem:[#allocation2 + $0xb0] sm:$0xff]
  %v3543 = vld [vmem:[#allocation2 + $0xb8] sm:$0xff]
  %v3544 = vld [vmem:[#allocation2 + $0xc0] sm:$0xff]
  %v3545 = vld [vmem:[#allocation2 + $0xc8] sm:$0xff]
  %v3546 = vld [vmem:[#allocation2 + $0xd0] sm:$0xff]
  %v3547 = vld [vmem:[#allocation2 + $0xd8] sm:$0xff]
  %v3548 = vld [vmem:[#allocation2 + $0xe0] sm:$0xff]
  %v3549 = vld [vmem:[#allocation2 + $0xe8] sm:$0xff]
  %v3550 = vld [vmem:[#allocation2 + $0xf0] sm:$0xff]
  %v3551 = vld [vmem:[#allocation2 + $0xf8] sm:$0xff]
  %v3552 = vld [vmem:[#allocation2 + $0x100] sm:$0xff]
  %v3553 = vld [vmem:[#allocation2 + $0x108] sm:$0xff]
  %v3554 = vld [vmem:[#allocation2 + $0x110] sm:$0xff]
  %v3555 = vld [vmem:[#allocation2 + $0x118] sm:$0xff]
  %v3556 = vld [vmem:[#allocation2 + $0x120] sm:$0xff]
  %v3557 = vld [vmem:[#allocation2 + $0x128] sm:$0xff]
  %v3558 = vld [vmem:[#allocation2 + $0x130] sm:$0xff]
  %v3559 = vld [vmem:[#allocation2 + $0x138] sm:$0xff]
  %v3560 = vld [vmem:[#allocation2 + $0x140] sm:$0xff]
  %v3561 = vld [vmem:[#allocation2 + $0x148] sm:$0xff]
  %v3562 = vld [vmem:[#allocation2 + $0x150] sm:$0xff]
  %v3563 = vld [vmem:[#allocation2 + $0x158] sm:$0xff]
  %v3564 = vld [vmem:[#allocation2 + $0x160] sm:$0xff]
  %v3565 = vld [vmem:[#allocation2 + $0x168] sm:$0xff]
  %v3566 = vld [vmem:[#allocation2 + $0x170] sm:$0xff]
  %v3567 = vld [vmem:[#allocation2 + $0x178] sm:$0xff]
  %v3568 = vld [vmem:[#allocation2 + $0x180] sm:$0xff]
  %v3569 = vld [vmem:[#allocation2 + $0x188] sm:$0xff]
  %v3570 = vld [vmem:[#allocation2 + $0x190] sm:$0xff]
  %v3571 = vld [vmem:[#allocation2 + $0x198] sm:$0xff]
  %v3572 = vld [vmem:[#allocation2 + $0x1a0] sm:$0xff]
  %v3573 = vld [vmem:[#allocation2 + $0x1a8] sm:$0xff]
  %v3574 = vld [vmem:[#allocation2 + $0x1b0] sm:$0xff]
  %v3575 = vld [vmem:[#allocation2 + $0x1b8] sm:$0xff]
  %v3576 = vld [vmem:[#allocation2 + $0x1c0] sm:$0xff]
  %v3577 = vld [vmem:[#allocation2 + $0x1c8] sm:$0xff]
  %v3578 = vld [vmem:[#allocation2 + $0x1d0] sm:$0xff]
  %v3579 = vld [vmem:[#allocation2 + $0x1d8] sm:$0xff]
  %v3580 = vld [vmem:[#allocation2 + $0x1e0] sm:$0xff]
  %v3581 = vld [vmem:[#allocation2 + $0x1e8] sm:$0xff]
  %v3582 = vld [vmem:[#allocation2 + $0x1f0] sm:$0xff]
  %v3583 = vld [vmem:[#allocation2 + $0x1f8] sm:$0xff]
  %v3584 = vld [vmem:[#allocation2 + $0x200] sm:$0xff]
  %v3585 = vld [vmem:[#allocation2 + $0x208] sm:$0xff]
  %v3586 = vld [vmem:[#allocation2 + $0x210] sm:$0xff]
  %v3587 = vld [vmem:[#allocation2 + $0x218] sm:$0xff]
  %v3588 = vld [vmem:[#allocation2 + $0x220] sm:$0xff]
  %v3589 = vld [vmem:[#allocation2 + $0x228] sm:$0xff]
  %v3590 = vld [vmem:[#allocation2 + $0x230] sm:$0xff]
  %v3591 = vld [vmem:[#allocation2 + $0x238] sm:$0xff]
  %3660 = vrot.lane.b32.xlu0 %v3524, 125
  %v3661 = vpop.permute.xlu0 %3660
  %3662 = vrot.lane.b32.xlu0 %v3525, 125
  %v3663 = vpop.permute.xlu0 %3662
  %3664 = vrot.lane.b32.xlu0 %v3526, 125
  %v3665 = vpop.permute.xlu0 %3664
  %3666 = vrot.lane.b32.xlu0 %v3527, 125
  %v3667 = vpop.permute.xlu0 %3666
  %3668 = vrot.lane.b32.xlu0 %v3528, 125
  %v3669 = vpop.permute.xlu0 %3668
  %3670 = vrot.lane.b32.xlu0 %v3529, 125
  %v3671 = vpop.permute.xlu0 %3670
  %3672 = vrot.lane.b32.xlu0 %v3530, 125
  %v3673 = vpop.permute.xlu0 %3672
  %3674 = vrot.lane.b32.xlu0 %v3531, 125
  %v3675 = vpop.permute.xlu0 %3674
  %3676 = vrot.lane.b32.xlu0 %v3532, 125
  %v3677 = vpop.permute.xlu0 %3676
  %3678 = vrot.lane.b32.xlu0 %v3533, 125
  %v3679 = vpop.permute.xlu0 %3678
  %3680 = vrot.lane.b32.xlu0 %v3534, 125
  %v3681 = vpop.permute.xlu0 %3680
  %3682 = vrot.lane.b32.xlu0 %v3535, 125
  %v3683 = vpop.permute.xlu0 %3682
  %3684 = vrot.lane.b32.xlu0 %v3536, 125
  %v3685 = vpop.permute.xlu0 %3684
  %3686 = vrot.lane.b32.xlu0 %v3537, 125
  %v3687 = vpop.permute.xlu0 %3686
  %3688 = vrot.lane.b32.xlu0 %v3538, 125
  %v3689 = vpop.permute.xlu0 %3688
  %3690 = vrot.lane.b32.xlu0 %v3539, 125
  %v3691 = vpop.permute.xlu0 %3690
  %3692 = vrot.lane.b32.xlu0 %v3540, 125
  %v3693 = vpop.permute.xlu0 %3692
  %3694 = vrot.lane.b32.xlu0 %v3541, 125
  %v3695 = vpop.permute.xlu0 %3694
  %3696 = vrot.lane.b32.xlu0 %v3542, 125
  %v3697 = vpop.permute.xlu0 %3696
  %3698 = vrot.lane.b32.xlu0 %v3543, 125
  %v3699 = vpop.permute.xlu0 %3698
  %3700 = vrot.lane.b32.xlu0 %v3544, 125
  %v3701 = vpop.permute.xlu0 %3700
  %3702 = vrot.lane.b32.xlu0 %v3545, 125
  %v3703 = vpop.permute.xlu0 %3702
  %3704 = vrot.lane.b32.xlu0 %v3546, 125
  %v3705 = vpop.permute.xlu0 %3704
  %3706 = vrot.lane.b32.xlu0 %v3547, 125
  %v3707 = vpop.permute.xlu0 %3706
  %3708 = vrot.lane.b32.xlu0 %v3548, 125
  %v3709 = vpop.permute.xlu0 %3708
  %3710 = vrot.lane.b32.xlu0 %v3549, 125
  %v3711 = vpop.permute.xlu0 %3710
  %3712 = vrot.lane.b32.xlu0 %v3550, 125
  %v3713 = vpop.permute.xlu0 %3712
  %3714 = vrot.lane.b32.xlu0 %v3551, 125
  %v3715 = vpop.permute.xlu0 %3714
  %3716 = vrot.lane.b32.xlu0 %v3552, 125
  %v3717 = vpop.permute.xlu0 %3716
  %3718 = vrot.lane.b32.xlu0 %v3553, 125
  %v3719 = vpop.permute.xlu0 %3718
  %3720 = vrot.lane.b32.xlu0 %v3554, 125
  %v3721 = vpop.permute.xlu0 %3720
  %3722 = vrot.lane.b32.xlu0 %v3555, 125
  %v3723 = vpop.permute.xlu0 %3722
  %3724 = vrot.lane.b32.xlu0 %v3556, 125
  %v3725 = vpop.permute.xlu0 %3724
  %3726 = vrot.lane.b32.xlu0 %v3557, 125
  %v3727 = vpop.permute.xlu0 %3726
  %3728 = vrot.lane.b32.xlu0 %v3558, 125
  %v3729 = vpop.permute.xlu0 %3728
  %3730 = vrot.lane.b32.xlu0 %v3559, 125
  %v3731 = vpop.permute.xlu0 %3730
  %3732 = vrot.lane.b32.xlu0 %v3560, 125
  %v3733 = vpop.permute.xlu0 %3732
  %3734 = vrot.lane.b32.xlu0 %v3561, 125
  %v3735 = vpop.permute.xlu0 %3734
  %3736 = vrot.lane.b32.xlu0 %v3562, 125
  %v3737 = vpop.permute.xlu0 %3736
  %3738 = vrot.lane.b32.xlu0 %v3563, 125
  %v3739 = vpop.permute.xlu0 %3738
  %3740 = vrot.lane.b32.xlu0 %v3564, 125
  %v3741 = vpop.permute.xlu0 %3740
  %3742 = vrot.lane.b32.xlu0 %v3565, 125
  %v3743 = vpop.permute.xlu0 %3742
  %3744 = vrot.lane.b32.xlu0 %v3566, 125
  %v3745 = vpop.permute.xlu0 %3744
  %3746 = vrot.lane.b32.xlu0 %v3567, 125
  %v3747 = vpop.permute.xlu0 %3746
  %3748 = vrot.lane.b32.xlu0 %v3568, 125
  %v3749 = vpop.permute.xlu0 %3748
  %3750 = vrot.lane.b32.xlu0 %v3569, 125
  %v3751 = vpop.permute.xlu0 %3750
  %3752 = vrot.lane.b32.xlu0 %v3570, 125
  %v3753 = vpop.permute.xlu0 %3752
  %3754 = vrot.lane.b32.xlu0 %v3571, 125
  %v3755 = vpop.permute.xlu0 %3754
  %3756 = vrot.lane.b32.xlu0 %v3572, 125
  %v3757 = vpop.permute.xlu0 %3756
  %3758 = vrot.lane.b32.xlu0 %v3573, 125
  %v3759 = vpop.permute.xlu0 %3758
  %3760 = vrot.lane.b32.xlu0 %v3574, 125
  %v3761 = vpop.permute.xlu0 %3760
  %3762 = vrot.lane.b32.xlu0 %v3575, 125
  %v3763 = vpop.permute.xlu0 %3762
  %3764 = vrot.lane.b32.xlu0 %v3576, 125
  %v3765 = vpop.permute.xlu0 %3764
  %3766 = vrot.lane.b32.xlu0 %v3577, 125
  %v3767 = vpop.permute.xlu0 %3766
  %3768 = vrot.lane.b32.xlu0 %v3578, 125
  %v3769 = vpop.permute.xlu0 %3768
  %3770 = vrot.lane.b32.xlu0 %v3579, 125
  %v3771 = vpop.permute.xlu0 %3770
  %3772 = vrot.lane.b32.xlu0 %v3580, 125
  %v3773 = vpop.permute.xlu0 %3772
  %3774 = vrot.lane.b32.xlu0 %v3581, 125
  %v3775 = vpop.permute.xlu0 %3774
  %3776 = vrot.lane.b32.xlu0 %v3582, 125
  %v3777 = vpop.permute.xlu0 %3776
  %3778 = vrot.lane.b32.xlu0 %v3583, 125
  %v3779 = vpop.permute.xlu0 %3778
  %3780 = vrot.lane.b32.xlu0 %v3584, 125
  %v3781 = vpop.permute.xlu0 %3780
  %3782 = vrot.lane.b32.xlu0 %v3585, 125
  %v3783 = vpop.permute.xlu0 %3782
  %3784 = vrot.lane.b32.xlu0 %v3586, 125
  %v3785 = vpop.permute.xlu0 %3784
  %3786 = vrot.lane.b32.xlu0 %v3587, 125
  %v3787 = vpop.permute.xlu0 %3786
  %3788 = vrot.lane.b32.xlu0 %v3588, 125
  %v3789 = vpop.permute.xlu0 %3788
  %3790 = vrot.lane.b32.xlu0 %v3589, 125
  %v3791 = vpop.permute.xlu0 %3790
  %3792 = vrot.lane.b32.xlu0 %v3590, 125
  %v3793 = vpop.permute.xlu0 %3792
  %3794 = vrot.lane.b32.xlu0 %v3591, 125
  %v3795 = vpop.permute.xlu0 %3794
  %v3864 = vadd.f32 %v3522, %v3661
  %v3865 = vadd.f32 %v3523, %v3663
  %v3866 = vadd.f32 %v3524, %v3665
  %v3867 = vadd.f32 %v3525, %v3667
  %v3868 = vadd.f32 %v3526, %v3669
  %v3869 = vadd.f32 %v3527, %v3671
  %v3870 = vadd.f32 %v3528, %v3673
  %v3871 = vadd.f32 %v3529, %v3675
  %v3872 = vadd.f32 %v3530, %v3677
  %v3873 = vadd.f32 %v3531, %v3679
  %v3874 = vadd.f32 %v3532, %v3681
  %v3875 = vadd.f32 %v3533, %v3683
  %v3876 = vadd.f32 %v3534, %v3685
  %v3877 = vadd.f32 %v3535, %v3687
  %v3878 = vadd.f32 %v3536, %v3689
  %v3879 = vadd.f32 %v3537, %v3691
  %v3880 = vadd.f32 %v3538, %v3693
  %v3881 = vadd.f32 %v3539, %v3695
  %v3882 = vadd.f32 %v3540, %v3697
  %v3883 = vadd.f32 %v3541, %v3699
  %v3884 = vadd.f32 %v3542, %v3701
  %v3885 = vadd.f32 %v3543, %v3703
  %v3886 = vadd.f32 %v3544, %v3705
  %v3887 = vadd.f32 %v3545, %v3707
  %v3888 = vadd.f32 %v3546, %v3709
  %v3889 = vadd.f32 %v3547, %v3711
  %v3890 = vadd.f32 %v3548, %v3713
  %v3891 = vadd.f32 %v3549, %v3715
  %v3892 = vadd.f32 %v3550, %v3717
  %v3893 = vadd.f32 %v3551, %v3719
  %v3894 = vadd.f32 %v3552, %v3721
  %v3895 = vadd.f32 %v3553, %v3723
  %v3896 = vadd.f32 %v3554, %v3725
  %v3897 = vadd.f32 %v3555, %v3727
  %v3898 = vadd.f32 %v3556, %v3729
  %v3899 = vadd.f32 %v3557, %v3731
  %v3900 = vadd.f32 %v3558, %v3733
  %v3901 = vadd.f32 %v3559, %v3735
  %v3902 = vadd.f32 %v3560, %v3737
  %v3903 = vadd.f32 %v3561, %v3739
  %v3904 = vadd.f32 %v3562, %v3741
  %v3905 = vadd.f32 %v3563, %v3743
  %v3906 = vadd.f32 %v3564, %v3745
  %v3907 = vadd.f32 %v3565, %v3747
  %v3908 = vadd.f32 %v3566, %v3749
  %v3909 = vadd.f32 %v3567, %v3751
  %v3910 = vadd.f32 %v3568, %v3753
  %v3911 = vadd.f32 %v3569, %v3755
  %v3912 = vadd.f32 %v3570, %v3757
  %v3913 = vadd.f32 %v3571, %v3759
  %v3914 = vadd.f32 %v3572, %v3761
  %v3915 = vadd.f32 %v3573, %v3763
  %v3916 = vadd.f32 %v3574, %v3765
  %v3917 = vadd.f32 %v3575, %v3767
  %v3918 = vadd.f32 %v3576, %v3769
  %v3919 = vadd.f32 %v3577, %v3771
  %v3920 = vadd.f32 %v3578, %v3773
  %v3921 = vadd.f32 %v3579, %v3775
  %v3922 = vadd.f32 %v3580, %v3777
  %v3923 = vadd.f32 %v3581, %v3779
  %v3924 = vadd.f32 %v3582, %v3781
  %v3925 = vadd.f32 %v3583, %v3783
  %v3926 = vadd.f32 %v3584, %v3785
  %v3927 = vadd.f32 %v3585, %v3787
  %v3928 = vadd.f32 %v3586, %v3789
  %v3929 = vadd.f32 %v3587, %v3791
  %v3930 = vadd.f32 %v3588, %v3793
  %v3931 = vadd.f32 %v3589, %v3795
  %v3932 = vtanh.pop %v3864
  %v3933 = vtanh.pop %v3865
  %v3934 = vtanh.pop %v3866
  %v3935 = vtanh.pop %v3867
  %v3936 = vtanh.pop %v3868
  %v3937 = vtanh.pop %v3869
  %v3938 = vtanh.pop %v3870
  %v3939 = vtanh.pop %v3871
  %v3940 = vtanh.pop %v3872
  %v3941 = vtanh.pop %v3873
  %v3942 = vtanh.pop %v3874
  %v3943 = vtanh.pop %v3875
  %v3944 = vtanh.pop %v3876
  %v3945 = vtanh.pop %v3877
  %v3946 = vtanh.pop %v3878
  %v3947 = vtanh.pop %v3879
  %v3948 = vtanh.pop %v3880
  %v3949 = vtanh.pop %v3881
  %v3950 = vtanh.pop %v3882
  %v3951 = vtanh.pop %v3883
  %v3952 = vtanh.pop %v3884
  %v3953 = vtanh.pop %v3885
  %v3954 = vtanh.pop %v3886
  %v3955 = vtanh.pop %v3887
  %v3956 = vtanh.pop %v3888
  %v3957 = vtanh.pop %v3889
  %v3958 = vtanh.pop %v3890
  %v3959 = vtanh.pop %v3891
  %v3960 = vtanh.pop %v3892
  %v3961 = vtanh.pop %v3893
  %v3962 = vtanh.pop %v3894
  %v3963 = vtanh.pop %v3895
  %v3964 = vtanh.pop %v3896
  %v3965 = vtanh.pop %v3897
  %v3966 = vtanh.pop %v3898
  %v3967 = vtanh.pop %v3899
  %v3968 = vtanh.pop %v3900
  %v3969 = vtanh.pop %v3901
  %v3970 = vtanh.pop %v3902
  %v3971 = vtanh.pop %v3903
  %v3972 = vtanh.pop %v3904
  %v3973 = vtanh.pop %v3905
  %v3974 = vtanh.pop %v3906
  %v3975 = vtanh.pop %v3907
  %v3976 = vtanh.pop %v3908
  %v3977 = vtanh.pop %v3909
  %v3978 = vtanh.pop %v3910
  %v3979 = vtanh.pop %v3911
  %v3980 = vtanh.pop %v3912
  %v3981 = vtanh.pop %v3913
  %v3982 = vtanh.pop %v3914
  %v3983 = vtanh.pop %v3915
  %v3984 = vtanh.pop %v3916
  %v3985 = vtanh.pop %v3917
  %v3986 = vtanh.pop %v3918
  %v3987 = vtanh.pop %v3919
  %v3988 = vtanh.pop %v3920
  %v3989 = vtanh.pop %v3921
  %v3990 = vtanh.pop %v3922
  %v3991 = vtanh.pop %v3923
  %v3992 = vtanh.pop %v3924
  %v3993 = vtanh.pop %v3925
  %v3994 = vtanh.pop %v3926
  %v3995 = vtanh.pop %v3927
  %v3996 = vtanh.pop %v3928
  %v3997 = vtanh.pop %v3929
  %v3998 = vtanh.pop %v3930
  %v3999 = vtanh.pop %v3931
  %4068 = vrot.lane.b32.xlu0 %v3932, 3
  %v4069 = vpop.permute.xlu0 %4068
  %4070 = vrot.lane.b32.xlu0 %v3933, 3
  %v4071 = vpop.permute.xlu0 %4070
  %4072 = vrot.lane.b32.xlu0 %v3934, 3
  %v4073 = vpop.permute.xlu0 %4072
  %4074 = vrot.lane.b32.xlu0 %v3935, 3
  %v4075 = vpop.permute.xlu0 %4074
  %4076 = vrot.lane.b32.xlu0 %v3936, 3
  %v4077 = vpop.permute.xlu0 %4076
  %4078 = vrot.lane.b32.xlu0 %v3937, 3
  %v4079 = vpop.permute.xlu0 %4078
  %4080 = vrot.lane.b32.xlu0 %v3938, 3
  %v4081 = vpop.permute.xlu0 %4080
  %4082 = vrot.lane.b32.xlu0 %v3939, 3
  %v4083 = vpop.permute.xlu0 %4082
  %4084 = vrot.lane.b32.xlu0 %v3940, 3
  %v4085 = vpop.permute.xlu0 %4084
  %4086 = vrot.lane.b32.xlu0 %v3941, 3
  %v4087 = vpop.permute.xlu0 %4086
  %4088 = vrot.lane.b32.xlu0 %v3942, 3
  %v4089 = vpop.permute.xlu0 %4088
  %4090 = vrot.lane.b32.xlu0 %v3943, 3
  %v4091 = vpop.permute.xlu0 %4090
  %4092 = vrot.lane.b32.xlu0 %v3944, 3
  %v4093 = vpop.permute.xlu0 %4092
  %4094 = vrot.lane.b32.xlu0 %v3945, 3
  %v4095 = vpop.permute.xlu0 %4094
  %4096 = vrot.lane.b32.xlu0 %v3946, 3
  %v4097 = vpop.permute.xlu0 %4096
  %4098 = vrot.lane.b32.xlu0 %v3947, 3
  %v4099 = vpop.permute.xlu0 %4098
  %4100 = vrot.lane.b32.xlu0 %v3948, 3
  %v4101 = vpop.permute.xlu0 %4100
  %4102 = vrot.lane.b32.xlu0 %v3949, 3
  %v4103 = vpop.permute.xlu0 %4102
  %4104 = vrot.lane.b32.xlu0 %v3950, 3
  %v4105 = vpop.permute.xlu0 %4104
  %4106 = vrot.lane.b32.xlu0 %v3951, 3
  %v4107 = vpop.permute.xlu0 %4106
  %4108 = vrot.lane.b32.xlu0 %v3952, 3
  %v4109 = vpop.permute.xlu0 %4108
  %4110 = vrot.lane.b32.xlu0 %v3953, 3
  %v4111 = vpop.permute.xlu0 %4110
  %4112 = vrot.lane.b32.xlu0 %v3954, 3
  %v4113 = vpop.permute.xlu0 %4112
  %4114 = vrot.lane.b32.xlu0 %v3955, 3
  %v4115 = vpop.permute.xlu0 %4114
  %4116 = vrot.lane.b32.xlu0 %v3956, 3
  %v4117 = vpop.permute.xlu0 %4116
  %4118 = vrot.lane.b32.xlu0 %v3957, 3
  %v4119 = vpop.permute.xlu0 %4118
  %4120 = vrot.lane.b32.xlu0 %v3958, 3
  %v4121 = vpop.permute.xlu0 %4120
  %4122 = vrot.lane.b32.xlu0 %v3959, 3
  %v4123 = vpop.permute.xlu0 %4122
  %4124 = vrot.lane.b32.xlu0 %v3960, 3
  %v4125 = vpop.permute.xlu0 %4124
  %4126 = vrot.lane.b32.xlu0 %v3961, 3
  %v4127 = vpop.permute.xlu0 %4126
  %4128 = vrot.lane.b32.xlu0 %v3962, 3
  %v4129 = vpop.permute.xlu0 %4128
  %4130 = vrot.lane.b32.xlu0 %v3963, 3
  %v4131 = vpop.permute.xlu0 %4130
  %4132 = vrot.lane.b32.xlu0 %v3964, 3
  %v4133 = vpop.permute.xlu0 %4132
  %4134 = vrot.lane.b32.xlu0 %v3965, 3
  %v4135 = vpop.permute.xlu0 %4134
  %4136 = vrot.lane.b32.xlu0 %v3966, 3
  %v4137 = vpop.permute.xlu0 %4136
  %4138 = vrot.lane.b32.xlu0 %v3967, 3
  %v4139 = vpop.permute.xlu0 %4138
  %4140 = vrot.lane.b32.xlu0 %v3968, 3
  %v4141 = vpop.permute.xlu0 %4140
  %4142 = vrot.lane.b32.xlu0 %v3969, 3
  %v4143 = vpop.permute.xlu0 %4142
  %4144 = vrot.lane.b32.xlu0 %v3970, 3
  %v4145 = vpop.permute.xlu0 %4144
  %4146 = vrot.lane.b32.xlu0 %v3971, 3
  %v4147 = vpop.permute.xlu0 %4146
  %4148 = vrot.lane.b32.xlu0 %v3972, 3
  %v4149 = vpop.permute.xlu0 %4148
  %4150 = vrot.lane.b32.xlu0 %v3973, 3
  %v4151 = vpop.permute.xlu0 %4150
  %4152 = vrot.lane.b32.xlu0 %v3974, 3
  %v4153 = vpop.permute.xlu0 %4152
  %4154 = vrot.lane.b32.xlu0 %v3975, 3
  %v4155 = vpop.permute.xlu0 %4154
  %4156 = vrot.lane.b32.xlu0 %v3976, 3
  %v4157 = vpop.permute.xlu0 %4156
  %4158 = vrot.lane.b32.xlu0 %v3977, 3
  %v4159 = vpop.permute.xlu0 %4158
  %4160 = vrot.lane.b32.xlu0 %v3978, 3
  %v4161 = vpop.permute.xlu0 %4160
  %4162 = vrot.lane.b32.xlu0 %v3979, 3
  %v4163 = vpop.permute.xlu0 %4162
  %4164 = vrot.lane.b32.xlu0 %v3980, 3
  %v4165 = vpop.permute.xlu0 %4164
  %4166 = vrot.lane.b32.xlu0 %v3981, 3
  %v4167 = vpop.permute.xlu0 %4166
  %4168 = vrot.lane.b32.xlu0 %v3982, 3
  %v4169 = vpop.permute.xlu0 %4168
  %4170 = vrot.lane.b32.xlu0 %v3983, 3
  %v4171 = vpop.permute.xlu0 %4170
  %4172 = vrot.lane.b32.xlu0 %v3984, 3
  %v4173 = vpop.permute.xlu0 %4172
  %4174 = vrot.lane.b32.xlu0 %v3985, 3
  %v4175 = vpop.permute.xlu0 %4174
  %4176 = vrot.lane.b32.xlu0 %v3986, 3
  %v4177 = vpop.permute.xlu0 %4176
  %4178 = vrot.lane.b32.xlu0 %v3987, 3
  %v4179 = vpop.permute.xlu0 %4178
  %4180 = vrot.lane.b32.xlu0 %v3988, 3
  %v4181 = vpop.permute.xlu0 %4180
  %4182 = vrot.lane.b32.xlu0 %v3989, 3
  %v4183 = vpop.permute.xlu0 %4182
  %4184 = vrot.lane.b32.xlu0 %v3990, 3
  %v4185 = vpop.permute.xlu0 %4184
  %4186 = vrot.lane.b32.xlu0 %v3991, 3
  %v4187 = vpop.permute.xlu0 %4186
  %4188 = vrot.lane.b32.xlu0 %v3992, 3
  %v4189 = vpop.permute.xlu0 %4188
  %4190 = vrot.lane.b32.xlu0 %v3993, 3
  %v4191 = vpop.permute.xlu0 %4190
  %4192 = vrot.lane.b32.xlu0 %v3994, 3
  %v4193 = vpop.permute.xlu0 %4192
  %4194 = vrot.lane.b32.xlu0 %v3995, 3
  %v4195 = vpop.permute.xlu0 %4194
  %4196 = vrot.lane.b32.xlu0 %v3996, 3
  %v4197 = vpop.permute.xlu0 %4196
  %4198 = vrot.lane.b32.xlu0 %v3997, 3
  %v4199 = vpop.permute.xlu0 %4198
  %4200 = vrot.lane.b32.xlu0 %v3998, 3
  %v4201 = vpop.permute.xlu0 %4200
  %4202 = vrot.lane.b32.xlu0 %v3999, 3
  %v4203 = vpop.permute.xlu0 %4202
  %vm4272 = vcmask 97352
  %4273 = vst.msk [vmem:[%s2] sm:$0xff] %vm4272, %v4069
  %4274 = vst.msk [vmem:[%s2 + $0x8] sm:$0xff] %vm4272, %v4071
  %4275 = vst.msk [vmem:[%s2 + $0x10] sm:$0xff] %vm4272, %v4073
  %4276 = vst.msk [vmem:[%s2 + $0x18] sm:$0xff] %vm4272, %v4075
  %4277 = vst.msk [vmem:[%s2 + $0x20] sm:$0xff] %vm4272, %v4077
  %4278 = vst.msk [vmem:[%s2 + $0x28] sm:$0xff] %vm4272, %v4079
  %4279 = vst.msk [vmem:[%s2 + $0x30] sm:$0xff] %vm4272, %v4081
  %4280 = vst.msk [vmem:[%s2 + $0x38] sm:$0xff] %vm4272, %v4083
  %4281 = vst.msk [vmem:[%s2 + $0x40] sm:$0xff] %vm4272, %v4085
  %4282 = vst.msk [vmem:[%s2 + $0x48] sm:$0xff] %vm4272, %v4087
  %4283 = vst.msk [vmem:[%s2 + $0x50] sm:$0xff] %vm4272, %v4089
  %4284 = vst.msk [vmem:[%s2 + $0x58] sm:$0xff] %vm4272, %v4091
  %4285 = vst.msk [vmem:[%s2 + $0x60] sm:$0xff] %vm4272, %v4093
  %4286 = vst.msk [vmem:[%s2 + $0x68] sm:$0xff] %vm4272, %v4095
  %4287 = vst.msk [vmem:[%s2 + $0x70] sm:$0xff] %vm4272, %v4097
  %4288 = vst.msk [vmem:[%s2 + $0x78] sm:$0xff] %vm4272, %v4099
  %4289 = vst.msk [vmem:[%s2 + $0x80] sm:$0xff] %vm4272, %v4101
  %4290 = vst.msk [vmem:[%s2 + $0x88] sm:$0xff] %vm4272, %v4103
  %4291 = vst.msk [vmem:[%s2 + $0x90] sm:$0xff] %vm4272, %v4105
  %4292 = vst.msk [vmem:[%s2 + $0x98] sm:$0xff] %vm4272, %v4107
  %4293 = vst.msk [vmem:[%s2 + $0xa0] sm:$0xff] %vm4272, %v4109
  %4294 = vst.msk [vmem:[%s2 + $0xa8] sm:$0xff] %vm4272, %v4111
  %4295 = vst.msk [vmem:[%s2 + $0xb0] sm:$0xff] %vm4272, %v4113
  %4296 = vst.msk [vmem:[%s2 + $0xb8] sm:$0xff] %vm4272, %v4115
  %4297 = vst.msk [vmem:[%s2 + $0xc0] sm:$0xff] %vm4272, %v4117
  %4298 = vst.msk [vmem:[%s2 + $0xc8] sm:$0xff] %vm4272, %v4119
  %4299 = vst.msk [vmem:[%s2 + $0xd0] sm:$0xff] %vm4272, %v4121
  %4300 = vst.msk [vmem:[%s2 + $0xd8] sm:$0xff] %vm4272, %v4123
  %4301 = vst.msk [vmem:[%s2 + $0xe0] sm:$0xff] %vm4272, %v4125
  %4302 = vst.msk [vmem:[%s2 + $0xe8] sm:$0xff] %vm4272, %v4127
  %4303 = vst.msk [vmem:[%s2 + $0xf0] sm:$0xff] %vm4272, %v4129
  %4304 = vst.msk [vmem:[%s2 + $0xf8] sm:$0xff] %vm4272, %v4131
  %4305 = vst.msk [vmem:[%s2 + $0x100] sm:$0xff] %vm4272, %v4133
  %4306 = vst.msk [vmem:[%s2 + $0x108] sm:$0xff] %vm4272, %v4135
  %4307 = vst.msk [vmem:[%s2 + $0x110] sm:$0xff] %vm4272, %v4137
  %4308 = vst.msk [vmem:[%s2 + $0x118] sm:$0xff] %vm4272, %v4139
  %4309 = vst.msk [vmem:[%s2 + $0x120] sm:$0xff] %vm4272, %v4141
  %4310 = vst.msk [vmem:[%s2 + $0x128] sm:$0xff] %vm4272, %v4143
  %4311 = vst.msk [vmem:[%s2 + $0x130] sm:$0xff] %vm4272, %v4145
  %4312 = vst.msk [vmem:[%s2 + $0x138] sm:$0xff] %vm4272, %v4147
  %4313 = vst.msk [vmem:[%s2 + $0x140] sm:$0xff] %vm4272, %v4149
  %4314 = vst.msk [vmem:[%s2 + $0x148] sm:$0xff] %vm4272, %v4151
  %4315 = vst.msk [vmem:[%s2 + $0x150] sm:$0xff] %vm4272, %v4153
  %4316 = vst.msk [vmem:[%s2 + $0x158] sm:$0xff] %vm4272, %v4155
  %4317 = vst.msk [vmem:[%s2 + $0x160] sm:$0xff] %vm4272, %v4157
  %4318 = vst.msk [vmem:[%s2 + $0x168] sm:$0xff] %vm4272, %v4159
  %4319 = vst.msk [vmem:[%s2 + $0x170] sm:$0xff] %vm4272, %v4161
  %4320 = vst.msk [vmem:[%s2 + $0x178] sm:$0xff] %vm4272, %v4163
  %4321 = vst.msk [vmem:[%s2 + $0x180] sm:$0xff] %vm4272, %v4165
  %4322 = vst.msk [vmem:[%s2 + $0x188] sm:$0xff] %vm4272, %v4167
  %4323 = vst.msk [vmem:[%s2 + $0x190] sm:$0xff] %vm4272, %v4169
  %4324 = vst.msk [vmem:[%s2 + $0x198] sm:$0xff] %vm4272, %v4171
  %4325 = vst.msk [vmem:[%s2 + $0x1a0] sm:$0xff] %vm4272, %v4173
  %4326 = vst.msk [vmem:[%s2 + $0x1a8] sm:$0xff] %vm4272, %v4175
  %4327 = vst.msk [vmem:[%s2 + $0x1b0] sm:$0xff] %vm4272, %v4177
  %4328 = vst.msk [vmem:[%s2 + $0x1b8] sm:$0xff] %vm4272, %v4179
  %4329 = vst.msk [vmem:[%s2 + $0x1c0] sm:$0xff] %vm4272, %v4181
  %4330 = vst.msk [vmem:[%s2 + $0x1c8] sm:$0xff] %vm4272, %v4183
  %4331 = vst.msk [vmem:[%s2 + $0x1d0] sm:$0xff] %vm4272, %v4185
  %4332 = vst.msk [vmem:[%s2 + $0x1d8] sm:$0xff] %vm4272, %v4187
  %4333 = vst.msk [vmem:[%s2 + $0x1e0] sm:$0xff] %vm4272, %v4189
  %4334 = vst.msk [vmem:[%s2 + $0x1e8] sm:$0xff] %vm4272, %v4191
  %4335 = vst.msk [vmem:[%s2 + $0x1f0] sm:$0xff] %vm4272, %v4193
  %4336 = vst.msk [vmem:[%s2 + $0x1f8] sm:$0xff] %vm4272, %v4195
  %4337 = vst.msk [vmem:[%s2 + $0x200] sm:$0xff] %vm4272, %v4197
  %4338 = vst.msk [vmem:[%s2 + $0x208] sm:$0xff] %vm4272, %v4199
  %4339 = vst.msk [vmem:[%s2 + $0x210] sm:$0xff] %vm4272, %v4201
  %4340 = vst.msk [vmem:[%s2 + $0x218] sm:$0xff] %vm4272, %v4203
  %4341 = vst.msk [vmem:[%s2 + $0x220] sm:$0xff] %vm702, 0.0
  %4342 = vst.msk [vmem:[%s2 + $0x228] sm:$0xff] %vm702, 0.0
  %4343 = vst.msk [vmem:[%s2 + $0x230] sm:$0xff] %vm702, 0.0
  %4344 = vst.msk [vmem:[%s2 + $0x238] sm:$0xff] %vm702, 0.0
  // Predicated region
  $region10: #{netg_forward.21} parent=0 // pred_check
    _
  $region11: #{netg_forward.21} parent=0 // pred_check_branch
    %4346 = sbr.rel (0) target = $region13
  $region12: #{netg_forward.21} parent=0 // pred_region
    _
  $region13: #{netg_forward.21} parent=0 // pred_fallthru
    _
  // Predicated region
  $region14: #{netg_forward.21} parent=0 // pred_check
    _
  $region15: #{netg_forward.21} parent=0 // pred_check_branch
    %4348 = sbr.rel (0) target = $region17
  $region16: #{netg_forward.21} parent=0 // pred_region
    _
  $region17: #{netg_forward.21} parent=0 // pred_fallthru
    _

</llo_original>
